<compile_context>
chip_gen: v7x
topology: tpu7x:2x2x1
jax: 0.10.0
libtpu: 0.0.40
codegen_flags: <defaults>
</compile_context>

<pallas_src>
import jax
import jax.numpy as jnp
import numpy as np
from jax.experimental import pallas as pl
from jax.experimental.pallas import tpu as pltpu


# ----------------------------------------------------------------------------
# Host-side constant builders (one-time glue before the single fused launch)
# ----------------------------------------------------------------------------
def _stage_geom(h, w):
    """Lane-aligned guarded flat layout for one stage.

    Each image is its zero-padded (h+2, w+2) grid flattened to p=(h+2)*(w+2)
    lanes, padded with zero 'slack' lanes up to P = round_up(p, 128) so every
    per-image base (and activation write-back) is lane-aligned.  A G = 128
    (>= wp+1) guard sits at both ends of the concatenated batch so the +-1 /
    +-wp tap slices never run out of bounds.
    """
    hp, wp = h + 2, w + 2
    p = hp * wp
    P = ((p + 127) // 128) * 128
    G = 128
    assert G >= wp + 1
    return hp, wp, p, P, G


def _interior_mask(n, h, w, P):
    """(1, n*P) mask: 1.0 at real pixels, 0.0 at padding-ring / slack lanes."""
    hp, wp = h + 2, w + 2
    mi = np.zeros((hp, wp), np.float32)
    mi[1:h + 1, 1:w + 1] = 1.0
    m = np.zeros((n, P), np.float32)
    m[:, :hp * wp] = mi.reshape(-1)[None, :]
    return jnp.asarray(m.reshape(1, n * P))


def _even_selector(width):
    """(width, width//2) 0/1 matrix selecting even lane offsets 0,2,4,..."""
    e = np.zeros((width, width // 2), np.float32)
    e[2 * np.arange(width // 2), np.arange(width // 2)] = 1.0
    return jnp.asarray(e)


def _gap_selector(n, h, w, P):
    """(n*P, n) matrix: batched global-average-pool as a single MXU dot."""
    wp = w + 2
    s = np.zeros((n * P, n), np.float32)
    inv = 1.0 / float(h * w)
    for img in range(n):
        for r in range(h):
            for c in range(w):
                s[img * P + (r + 1) * wp + (c + 1), img] = inv
    return jnp.asarray(s)


def _fold_bn(w_oihw, b_conv, gamma, beta, mean, var, eps=1e-5):
    """Fold eval-mode BN into the conv; (cout, kh*kw*cin) weight with columns
    ordered [tap(dy,dx), ci] (matches the in-kernel im2col row order) and a
    (cout, 1) bias column."""
    cout, cin, kh, kw = w_oihw.shape
    scale = gamma / jnp.sqrt(var + eps)
    w = jnp.transpose(w_oihw, (0, 2, 3, 1)).reshape(cout, kh * kw * cin)
    w = w * scale[:, None]
    bias = (b_conv - mean) * scale + beta
    return w, bias.reshape(cout, 1)


def _pack_input(x_nchw, P, G):
    n, _, h, w = x_nchw.shape
    hp, wp = h + 2, w + 2
    xp = jnp.pad(x_nchw[:, 0].astype(jnp.float32), ((0, 0), (1, 1), (1, 1)))
    flat = jnp.pad(xp.reshape(n, hp * wp), ((0, 0), (0, P - hp * wp)))
    return jnp.pad(flat.reshape(1, n * P), ((0, 0), (G, G)))


# ----------------------------------------------------------------------------
# Fused forward pass: one pallas_call for the whole network
# ----------------------------------------------------------------------------
def net_forward(x_nchw, params):
    n, cin0, H1, W1 = x_nchw.shape
    assert cin0 == 1 and H1 % 4 == 0 and W1 % 4 == 0
    H2, W2 = H1 // 2, W1 // 2
    H3, W3 = H2 // 2, W2 // 2

    _, WP1, _, P1, G1 = _stage_geom(H1, W1)
    _, WP2, _, P2, G2 = _stage_geom(H2, W2)
    _, WP3, _, P3, G3 = _stage_geom(H3, W3)
    core1, core2, core3 = n * P1, n * P2, n * P3
    L1, L2, L3 = core1 + 2 * G1, core2 + 2 * G2, core3 + 2 * G3

    # ---- glue: input packing, BN folding, constant masks / selectors -------
    x_flat = _pack_input(x_nchw, P1, G1)
    w1, b1 = _fold_bn(*params["conv1"], *params["bn1"])
    w2, b2 = _fold_bn(*params["conv2"], *params["bn2"])
    w3, b3 = _fold_bn(*params["conv3"], *params["bn3"])
    w4, b4 = _fold_bn(*params["conv4"], *params["bn4"])
    w5, b5 = _fold_bn(*params["conv5"], *params["bn5"])
    w6, b6 = _fold_bn(*params["conv6"], *params["bn6"])
    w7 = params["conv7"][0].reshape(10, 16)
    b7 = params["conv7"][1].reshape(10, 1)
    # Head padded to 16 sublanes; the -1e30 bias rows can never win softmax.
    w7p = jnp.zeros((16, 16), jnp.float32).at[:10, :].set(w7)
    b7p = jnp.full((16, 1), -1e30, jnp.float32).at[:10, :].set(b7)
    m1 = _interior_mask(n, H1, W1, P1)
    m2 = _interior_mask(n, H2, W2, P2)
    m3 = _interior_mask(n, H3, W3, P3)
    e1 = _even_selector(W1)               # (2*W2, W2) pool-1 column subsample
    e2 = _even_selector(W2)               # (2*W3, W3) pool-2 column subsample
    gsel = _gap_selector(n, H3, W3, P3)   # (core3, n) batched GAP

    inputs = (x_flat, w1, b1, w2, b2, w3, b3, w4, b4, w5, b5, w6, b6,
              w7p, b7p, m1, m2, m3, e1, e2, gsel)

    KCOL = 9 * 24                         # deepest im2col (conv5: 9*cin=216)

    def kernel(x_ref, w1r, b1r, w2r, b2r, w3r, b3r, w4r, b4r, w5r, b5r,
               w6r, b6r, w7r, b7r, m1r, m2r, m3r, e1r, e2r, gr, o_ref,
               a1, a2, a3, col):
        # Zero only what must read back as zero (see module docstring).
        a1[:, 0:G1] = jnp.zeros((16, G1), jnp.float32)
        a1[:, G1 + core1:L1] = jnp.zeros((16, L1 - G1 - core1), jnp.float32)
        a2[...] = jnp.zeros_like(a2)
        a3[...] = jnp.zeros_like(a3)

        def conv3x3(src, cin, cout, wref, bref, mref, G, WP, core):
            """3x3 'same' conv on the guarded flat layout.

            in-kernel im2col: 9 shifted slices stacked on sublanes of `col`,
            then ONE (cout, 9*cin) x (9*cin, core) MXU dot with folded-BN bias
            + ReLU epilogue; the interior mask re-zeroes padding lanes."""
            if cin == 1:
                # conv1: broadcast multiply-adds beat a K=9 matmul.
                acc = jnp.zeros((cout, core), jnp.float32)
                for dy in range(3):
                    for dx in range(3):
                        t = dy * 3 + dx
                        start = G + (dy - 1) * WP + (dx - 1)
                        acc = acc + (wref[:, t:t + 1]
                                     * src[0:1, start:start + core])
                y = acc
            else:
                for dy in range(3):
                    for dx in range(3):
                        t = dy * 3 + dx
                        start = G + (dy - 1) * WP + (dx - 1)
                        col[t * cin:(t + 1) * cin, 0:core] = (
                            src[0:cin, start:start + core])
                y = jnp.dot(wref[...], col[0:9 * cin, 0:core],
                            preferred_element_type=jnp.float32)
            y = jnp.maximum(y + bref[...], 0.0)
            return y * mref[...]

        def pool2x2(src, c, G_s, P_s, WP_s, core_s, ho, wo,
                    dst, G_d, P_d, WP_d, eref):
            """2x2/stride-2 max-pool: 4-offset max over the whole core at once,
            then per-output-row even-column subsample via a tiny 0/1 selector
            dot (replaces the old dense (p_src, p_dst) selection matmul)."""
            mx = jnp.maximum(
                jnp.maximum(src[0:c, G_s:G_s + core_s],
                            src[0:c, G_s + 1:G_s + 1 + core_s]),
                jnp.maximum(src[0:c, G_s + WP_s:G_s + WP_s + core_s],
                            src[0:c, G_s + WP_s + 1:G_s + WP_s + 1 + core_s]))
            col[0:c, 0:core_s] = mx
            for img in range(n):
                for i in range(ho):
                    s0 = img * P_s + (2 * i + 1) * WP_s + 1
                    row = jnp.dot(col[0:c, s0:s0 + 2 * wo], eref[...],
                                  preferred_element_type=jnp.float32)
                    d0 = G_d + img * P_d + (i + 1) * WP_d + 1
                    dst[0:c, d0:d0 + wo] = row

        # ---- stage 1: H1 x W1 ------------------------------------------------
        y = conv3x3(x_ref, 1, 8, w1r, b1r, m1r, G1, WP1, core1)
        a1[0:8, G1:G1 + core1] = y
        y = conv3x3(a1, 8, 16, w2r, b2r, m1r, G1, WP1, core1)
        a1[0:16, G1:G1 + core1] = y
        pool2x2(a1, 16, G1, P1, WP1, core1, H2, W2,
                a2, G2, P2, WP2, e1r)                  # dropout1: identity

        # ---- stage 2: H2 x W2 ------------------------------------------------
        y = conv3x3(a2, 16, 16, w3r, b3r, m2r, G2, WP2, core2)
        a2[0:16, G2:G2 + core2] = y
        y = conv3x3(a2, 16, 24, w4r, b4r, m2r, G2, WP2, core2)
        a2[0:24, G2:G2 + core2] = y
        pool2x2(a2, 24, G2, P2, WP2, core2, H3, W3,
                a3, G3, P3, WP3, e2r)                  # dropout2: identity

        # ---- stage 3: H3 x W3 + batched head (no per-image loop) -------------
        y5 = conv3x3(a3, 24, 24, w5r, b5r, m3r, G3, WP3, core3)   # (24, core3)
        y6 = jnp.maximum(
            jnp.dot(w6r[...], y5, preferred_element_type=jnp.float32)
            + b6r[...], 0.0) * m3r[...]                           # (16, core3)
        gap = jnp.dot(y6, gr[...], preferred_element_type=jnp.float32)   # (16, n)
        logits = jnp.dot(w7r[...], gap,
                         preferred_element_type=jnp.float32) + b7r[...]  # (16, n)
        zmax = jnp.max(logits, axis=0, keepdims=True)
        z = logits - zmax
        lse = jnp.log(jnp.sum(jnp.exp(z), axis=0, keepdims=True))
        o_ref[...] = z - lse              # rows 10..15 are -1e30 filler

    out = pl.pallas_call(
        kernel,
        out_shape=jax.ShapeDtypeStruct((16, n), jnp.float32),
        grid=(1,),
        in_specs=[pl.BlockSpec(a.shape, lambda i: (0, 0)) for a in inputs],
        out_specs=pl.BlockSpec((16, n), lambda i: (0, 0)),
        scratch_shapes=[
            pltpu.VMEM((16, L1), jnp.float32),        # stage-1 activations
            pltpu.VMEM((24, L2), jnp.float32),        # stage-2 activations
            pltpu.VMEM((24, L3), jnp.float32),        # stage-3 activations
            pltpu.VMEM((KCOL, core1), jnp.float32),   # shared im2col / pool max
        ],
        compiler_params=pltpu.CompilerParams(
            dimension_semantics=("arbitrary",)),
    )(*inputs)
    return out[:10, :].T                                           # (N, 10)


# ----------------------------------------------------------------------------
# Parameter init (eval-mode BN stats) -- 7 convs * 2 + 6 BNs * 4 = 38 keys
# ----------------------------------------------------------------------------
def init_params(key):
    keys = iter(jax.random.split(key, 40))

    def conv(cout, cin, k):
        w = 0.1 * jax.random.normal(next(keys), (cout, cin, k, k), jnp.float32)
        b = 0.1 * jax.random.normal(next(keys), (cout,), jnp.float32)
        return (w, b)

    def bn(c):
        gamma = 1.0 + 0.1 * jax.random.normal(next(keys), (c,), jnp.float32)
        beta = 0.1 * jax.random.normal(next(keys), (c,), jnp.float32)
        mean = 0.1 * jax.random.normal(next(keys), (c,), jnp.float32)
        var = 1.0 + 0.1 * jnp.abs(jax.random.normal(next(keys), (c,), jnp.float32))
        return (gamma, beta, mean, var)

    return {
        "conv1": conv(8, 1, 3), "bn1": bn(8),
        "conv2": conv(16, 8, 3), "bn2": bn(16),
        "conv3": conv(16, 16, 3), "bn3": bn(16),
        "conv4": conv(24, 16, 3), "bn4": bn(24),
        "conv5": conv(24, 24, 3), "bn5": bn(24),
        "conv6": conv(16, 24, 1), "bn6": bn(16),
        "conv7": conv(10, 16, 1),
    }


# ----------------------------------------------------------------------------
# Pure-JAX reference (correctness sanity check)
# ----------------------------------------------------------------------------
def reference_forward(x_nchw, params):
    x = jnp.transpose(x_nchw, (0, 2, 3, 1)).astype(jnp.float32)

    def conv(x, w_oihw, b, pad):
        w = jnp.transpose(w_oihw, (2, 3, 1, 0))  # HWIO
        y = jax.lax.conv_general_dilated(
            x, w, (1, 1), [(pad, pad), (pad, pad)],
            dimension_numbers=("NHWC", "HWIO", "NHWC"),
            precision=jax.lax.Precision.HIGHEST)
        return y + b

    def bn(x, gamma, beta, mean, var, eps=1e-5):
        return (x - mean) / jnp.sqrt(var + eps) * gamma + beta

    def block(x, cp, bp, pad):
        return jax.nn.relu(bn(conv(x, cp[0], cp[1], pad), *bp))

    def pool(x):
        return jax.lax.reduce_window(x, -jnp.inf, jax.lax.max,
                                     (1, 2, 2, 1), (1, 2, 2, 1), "VALID")

    x = block(x, params["conv1"], params["bn1"], 1)
    x = block(x, params["conv2"], params["bn2"], 1)
    x = pool(x)
    x = block(x, params["conv3"], params["bn3"], 1)
    x = block(x, params["conv4"], params["bn4"], 1)
    x = pool(x)
    x = block(x, params["conv5"], params["bn5"], 1)
    x = block(x, params["conv6"], params["bn6"], 0)
    g = jnp.mean(x, axis=(1, 2))                                   # (N, 16)
    logits = jnp.dot(g, params["conv7"][0].reshape(10, 16).T,
                     precision=jax.lax.Precision.HIGHEST) + params["conv7"][1]
    return jax.nn.log_softmax(logits, axis=-1)


if __name__ == "__main__":
    key = jax.random.PRNGKey(0)
    k_x, k_p = jax.random.split(key)
    x = jax.random.normal(k_x, (2, 1, 16, 16), jnp.float32)  # NCHW like PyTorch
    params = init_params(k_p)

    out = jax.block_until_ready(jax.jit(net_forward)(x, params))
    ref = jax.block_until_ready(reference_forward(x, params))

    assert out.shape == (2, 10), out.shape
    assert bool(jnp.all(jnp.isfinite(out)))
    # f32 everywhere; tolerance allows for MXU multi-pass accumulation order.
    assert bool(jnp.allclose(out, ref, atol=2e-3, rtol=2e-3)), (
        f"max abs diff {float(jnp.max(jnp.abs(out - ref)))}")

    print("KERNEL_OK")
</pallas_src>

<mosaic_0001>
module attributes {stable_mosaic.version = 11 : i64} {
  func.func @kernel(%arg0: i32, %arg1: memref<1x1024xf32, #tpu.memory_space<vmem>>, %arg2: memref<8x9xf32, #tpu.memory_space<vmem>>, %arg3: memref<8x1xf32, #tpu.memory_space<vmem>>, %arg4: memref<16x72xf32, #tpu.memory_space<vmem>>, %arg5: memref<16x1xf32, #tpu.memory_space<vmem>>, %arg6: memref<16x144xf32, #tpu.memory_space<vmem>>, %arg7: memref<16x1xf32, #tpu.memory_space<vmem>>, %arg8: memref<24x144xf32, #tpu.memory_space<vmem>>, %arg9: memref<24x1xf32, #tpu.memory_space<vmem>>, %arg10: memref<24x216xf32, #tpu.memory_space<vmem>>, %arg11: memref<24x1xf32, #tpu.memory_space<vmem>>, %arg12: memref<16x24xf32, #tpu.memory_space<vmem>>, %arg13: memref<16x1xf32, #tpu.memory_space<vmem>>, %arg14: memref<16x16xf32, #tpu.memory_space<vmem>>, %arg15: memref<16x1xf32, #tpu.memory_space<vmem>>, %arg16: memref<1x768xf32, #tpu.memory_space<vmem>>, %arg17: memref<1x256xf32, #tpu.memory_space<vmem>>, %arg18: memref<1x256xf32, #tpu.memory_space<vmem>>, %arg19: memref<16x8xf32, #tpu.memory_space<vmem>>, %arg20: memref<8x4xf32, #tpu.memory_space<vmem>>, %arg21: memref<256x2xf32, #tpu.memory_space<vmem>>, %arg22: memref<16x2xf32, #tpu.memory_space<vmem>>, %arg23: memref<16x1024xf32, #tpu.memory_space<vmem>>, %arg24: memref<24x512xf32, #tpu.memory_space<vmem>>, %arg25: memref<24x512xf32, #tpu.memory_space<vmem>>, %arg26: memref<216x768xf32, #tpu.memory_space<vmem>>) attributes {dimension_semantics = [#tpu.dimension_semantics<arbitrary>], iteration_bounds = array<i64: 1>, scalar_prefetch = 0 : i64, scratch_operands = 4 : i64, tpu.core_type = #tpu.core_type<tc>, window_params = [{pipeline_mode = #tpu.pipeline_mode<synchronous>, transform_indices = @transform_0, window_bounds = array<i64: 1, 1024>}, {pipeline_mode = #tpu.pipeline_mode<synchronous>, transform_indices = @transform_1, window_bounds = array<i64: 8, 9>}, {pipeline_mode = #tpu.pipeline_mode<synchronous>, transform_indices = @transform_2, window_bounds = array<i64: 8, 1>}, {pipeline_mode = #tpu.pipeline_mode<synchronous>, transform_indices = @transform_3, window_bounds = array<i64: 16, 72>}, {pipeline_mode = #tpu.pipeline_mode<synchronous>, transform_indices = @transform_4, window_bounds = array<i64: 16, 1>}, {pipeline_mode = #tpu.pipeline_mode<synchronous>, transform_indices = @transform_5, window_bounds = array<i64: 16, 144>}, {pipeline_mode = #tpu.pipeline_mode<synchronous>, transform_indices = @transform_6, window_bounds = array<i64: 16, 1>}, {pipeline_mode = #tpu.pipeline_mode<synchronous>, transform_indices = @transform_7, window_bounds = array<i64: 24, 144>}, {pipeline_mode = #tpu.pipeline_mode<synchronous>, transform_indices = @transform_8, window_bounds = array<i64: 24, 1>}, {pipeline_mode = #tpu.pipeline_mode<synchronous>, transform_indices = @transform_9, window_bounds = array<i64: 24, 216>}, {pipeline_mode = #tpu.pipeline_mode<synchronous>, transform_indices = @transform_10, window_bounds = array<i64: 24, 1>}, {pipeline_mode = #tpu.pipeline_mode<synchronous>, transform_indices = @transform_11, window_bounds = array<i64: 16, 24>}, {pipeline_mode = #tpu.pipeline_mode<synchronous>, transform_indices = @transform_12, window_bounds = array<i64: 16, 1>}, {pipeline_mode = #tpu.pipeline_mode<synchronous>, transform_indices = @transform_13, window_bounds = array<i64: 16, 16>}, {pipeline_mode = #tpu.pipeline_mode<synchronous>, transform_indices = @transform_14, window_bounds = array<i64: 16, 1>}, {pipeline_mode = #tpu.pipeline_mode<synchronous>, transform_indices = @transform_15, window_bounds = array<i64: 1, 768>}, {pipeline_mode = #tpu.pipeline_mode<synchronous>, transform_indices = @transform_16, window_bounds = array<i64: 1, 256>}, {pipeline_mode = #tpu.pipeline_mode<synchronous>, transform_indices = @transform_17, window_bounds = array<i64: 1, 256>}, {pipeline_mode = #tpu.pipeline_mode<synchronous>, transform_indices = @transform_18, window_bounds = array<i64: 16, 8>}, {pipeline_mode = #tpu.pipeline_mode<synchronous>, transform_indices = @transform_19, window_bounds = array<i64: 8, 4>}, {pipeline_mode = #tpu.pipeline_mode<synchronous>, transform_indices = @transform_20, window_bounds = array<i64: 256, 2>}, {pipeline_mode = #tpu.pipeline_mode<synchronous>, transform_indices = @transform_21, window_bounds = array<i64: 16, 2>}]} {
    %cst = arith.constant 0.000000e+00 : f32
    %0 = vector.broadcast %cst : f32 to vector<16x128xf32>
    %c0 = arith.constant 0 : index
    %c0_0 = arith.constant 0 : index
    %1 = vector.load %arg23[%c0, %c0_0] : memref<16x1024xf32, #tpu.memory_space<vmem>>, vector<16x128xf32>
    tpu.vector_store %arg23[%c0, %c0_0], %0 {strides = array<i32>} : memref<16x1024xf32, #tpu.memory_space<vmem>>, vector<16x128xf32>,
    %cst_1 = arith.constant 0.000000e+00 : f32
    %2 = vector.broadcast %cst_1 : f32 to vector<16x128xf32>
    %c0_2 = arith.constant 0 : index
    %c896 = arith.constant 896 : index
    %3 = vector.load %arg23[%c0_2, %c896] : memref<16x1024xf32, #tpu.memory_space<vmem>>, vector<16x128xf32>
    tpu.vector_store %arg23[%c0_2, %c896], %2 {strides = array<i32>} : memref<16x1024xf32, #tpu.memory_space<vmem>>, vector<16x128xf32>,
    %cst_3 = arith.constant 0.000000e+00 : f32
    %4 = vector.broadcast %cst_3 : f32 to vector<24x512xf32>
    %c0_4 = arith.constant 0 : index
    %c0_5 = arith.constant 0 : index
    %5 = vector.load %arg24[%c0_4, %c0_5] : memref<24x512xf32, #tpu.memory_space<vmem>>, vector<24x512xf32>
    tpu.vector_store %arg24[%c0_4, %c0_5], %4 {strides = array<i32>} : memref<24x512xf32, #tpu.memory_space<vmem>>, vector<24x512xf32>,
    %cst_6 = arith.constant 0.000000e+00 : f32
    %6 = vector.broadcast %cst_6 : f32 to vector<24x512xf32>
    %c0_7 = arith.constant 0 : index
    %c0_8 = arith.constant 0 : index
    %7 = vector.load %arg25[%c0_7, %c0_8] : memref<24x512xf32, #tpu.memory_space<vmem>>, vector<24x512xf32>
    tpu.vector_store %arg25[%c0_7, %c0_8], %6 {strides = array<i32>} : memref<24x512xf32, #tpu.memory_space<vmem>>, vector<24x512xf32>,
    %cst_9 = arith.constant 0.000000e+00 : f32
    %8 = vector.broadcast %cst_9 : f32 to vector<8x768xf32>
    %c0_10 = arith.constant 0 : index
    %c0_11 = arith.constant 0 : index
    %9 = vector.load %arg2[%c0_10, %c0_11] : memref<8x9xf32, #tpu.memory_space<vmem>>, vector<8x1xf32>
    %c0_12 = arith.constant 0 : index
    %c109 = arith.constant 109 : index
    %10 = vector.load %arg1[%c0_12, %c109] : memref<1x1024xf32, #tpu.memory_space<vmem>>, vector<1x768xf32>
    %11 = vector.broadcast %9 : vector<8x1xf32> to vector<8x768xf32>
    %12 = vector.broadcast %10 : vector<1x768xf32> to vector<8x768xf32>
    %13 = arith.mulf %11, %12 : vector<8x768xf32>
    %14 = arith.addf %8, %13 : vector<8x768xf32>
    %c0_13 = arith.constant 0 : index
    %c1 = arith.constant 1 : index
    %15 = vector.load %arg2[%c0_13, %c1] : memref<8x9xf32, #tpu.memory_space<vmem>>, vector<8x1xf32>
    %c0_14 = arith.constant 0 : index
    %c110 = arith.constant 110 : index
    %16 = vector.load %arg1[%c0_14, %c110] : memref<1x1024xf32, #tpu.memory_space<vmem>>, vector<1x768xf32>
    %17 = vector.broadcast %15 : vector<8x1xf32> to vector<8x768xf32>
    %18 = vector.broadcast %16 : vector<1x768xf32> to vector<8x768xf32>
    %19 = arith.mulf %17, %18 : vector<8x768xf32>
    %20 = arith.addf %14, %19 : vector<8x768xf32>
    %c0_15 = arith.constant 0 : index
    %c2 = arith.constant 2 : index
    %21 = vector.load %arg2[%c0_15, %c2] : memref<8x9xf32, #tpu.memory_space<vmem>>, vector<8x1xf32>
    %c0_16 = arith.constant 0 : index
    %c111 = arith.constant 111 : index
    %22 = vector.load %arg1[%c0_16, %c111] : memref<1x1024xf32, #tpu.memory_space<vmem>>, vector<1x768xf32>
    %23 = vector.broadcast %21 : vector<8x1xf32> to vector<8x768xf32>
    %24 = vector.broadcast %22 : vector<1x768xf32> to vector<8x768xf32>
    %25 = arith.mulf %23, %24 : vector<8x768xf32>
    %26 = arith.addf %20, %25 : vector<8x768xf32>
    %c0_17 = arith.constant 0 : index
    %c3 = arith.constant 3 : index
    %27 = vector.load %arg2[%c0_17, %c3] : memref<8x9xf32, #tpu.memory_space<vmem>>, vector<8x1xf32>
    %c0_18 = arith.constant 0 : index
    %c127 = arith.constant 127 : index
    %28 = vector.load %arg1[%c0_18, %c127] : memref<1x1024xf32, #tpu.memory_space<vmem>>, vector<1x768xf32>
    %29 = vector.broadcast %27 : vector<8x1xf32> to vector<8x768xf32>
    %30 = vector.broadcast %28 : vector<1x768xf32> to vector<8x768xf32>
    %31 = arith.mulf %29, %30 : vector<8x768xf32>
    %32 = arith.addf %26, %31 : vector<8x768xf32>
    %c0_19 = arith.constant 0 : index
    %c4 = arith.constant 4 : index
    %33 = vector.load %arg2[%c0_19, %c4] : memref<8x9xf32, #tpu.memory_space<vmem>>, vector<8x1xf32>
    %c0_20 = arith.constant 0 : index
    %c128 = arith.constant 128 : index
    %34 = vector.load %arg1[%c0_20, %c128] : memref<1x1024xf32, #tpu.memory_space<vmem>>, vector<1x768xf32>
    %35 = vector.broadcast %33 : vector<8x1xf32> to vector<8x768xf32>
    %36 = vector.broadcast %34 : vector<1x768xf32> to vector<8x768xf32>
    %37 = arith.mulf %35, %36 : vector<8x768xf32>
    %38 = arith.addf %32, %37 : vector<8x768xf32>
    %c0_21 = arith.constant 0 : index
    %c5 = arith.constant 5 : index
    %39 = vector.load %arg2[%c0_21, %c5] : memref<8x9xf32, #tpu.memory_space<vmem>>, vector<8x1xf32>
    %c0_22 = arith.constant 0 : index
    %c129 = arith.constant 129 : index
    %40 = vector.load %arg1[%c0_22, %c129] : memref<1x1024xf32, #tpu.memory_space<vmem>>, vector<1x768xf32>
    %41 = vector.broadcast %39 : vector<8x1xf32> to vector<8x768xf32>
    %42 = vector.broadcast %40 : vector<1x768xf32> to vector<8x768xf32>
    %43 = arith.mulf %41, %42 : vector<8x768xf32>
    %44 = arith.addf %38, %43 : vector<8x768xf32>
    %c0_23 = arith.constant 0 : index
    %c6 = arith.constant 6 : index
    %45 = vector.load %arg2[%c0_23, %c6] : memref<8x9xf32, #tpu.memory_space<vmem>>, vector<8x1xf32>
    %c0_24 = arith.constant 0 : index
    %c145 = arith.constant 145 : index
    %46 = vector.load %arg1[%c0_24, %c145] : memref<1x1024xf32, #tpu.memory_space<vmem>>, vector<1x768xf32>
    %47 = vector.broadcast %45 : vector<8x1xf32> to vector<8x768xf32>
    %48 = vector.broadcast %46 : vector<1x768xf32> to vector<8x768xf32>
    %49 = arith.mulf %47, %48 : vector<8x768xf32>
    %50 = arith.addf %44, %49 : vector<8x768xf32>
    %c0_25 = arith.constant 0 : index
    %c7 = arith.constant 7 : index
    %51 = vector.load %arg2[%c0_25, %c7] : memref<8x9xf32, #tpu.memory_space<vmem>>, vector<8x1xf32>
    %c0_26 = arith.constant 0 : index
    %c146 = arith.constant 146 : index
    %52 = vector.load %arg1[%c0_26, %c146] : memref<1x1024xf32, #tpu.memory_space<vmem>>, vector<1x768xf32>
    %53 = vector.broadcast %51 : vector<8x1xf32> to vector<8x768xf32>
    %54 = vector.broadcast %52 : vector<1x768xf32> to vector<8x768xf32>
    %55 = arith.mulf %53, %54 : vector<8x768xf32>
    %56 = arith.addf %50, %55 : vector<8x768xf32>
    %c0_27 = arith.constant 0 : index
    %c8 = arith.constant 8 : index
    %57 = vector.load %arg2[%c0_27, %c8] : memref<8x9xf32, #tpu.memory_space<vmem>>, vector<8x1xf32>
    %c0_28 = arith.constant 0 : index
    %c147 = arith.constant 147 : index
    %58 = vector.load %arg1[%c0_28, %c147] : memref<1x1024xf32, #tpu.memory_space<vmem>>, vector<1x768xf32>
    %59 = vector.broadcast %57 : vector<8x1xf32> to vector<8x768xf32>
    %60 = vector.broadcast %58 : vector<1x768xf32> to vector<8x768xf32>
    %61 = arith.mulf %59, %60 : vector<8x768xf32>
    %62 = arith.addf %56, %61 : vector<8x768xf32>
    %c0_29 = arith.constant 0 : index
    %c0_30 = arith.constant 0 : index
    %63 = vector.load %arg3[%c0_29, %c0_30] : memref<8x1xf32, #tpu.memory_space<vmem>>, vector<8x1xf32>
    %64 = vector.broadcast %63 : vector<8x1xf32> to vector<8x768xf32>
    %65 = arith.addf %62, %64 : vector<8x768xf32>
    %cst_31 = arith.constant 0.000000e+00 : f32
    %66 = vector.broadcast %cst_31 : f32 to vector<8x768xf32>
    %67 = arith.maximumf %65, %66 : vector<8x768xf32>
    %c0_32 = arith.constant 0 : index
    %c0_33 = arith.constant 0 : index
    %68 = vector.load %arg16[%c0_32, %c0_33] : memref<1x768xf32, #tpu.memory_space<vmem>>, vector<1x768xf32>
    %69 = vector.broadcast %68 : vector<1x768xf32> to vector<8x768xf32>
    %70 = arith.mulf %67, %69 : vector<8x768xf32>
    %c0_34 = arith.constant 0 : index
    %c128_35 = arith.constant 128 : index
    %71 = vector.load %arg23[%c0_34, %c128_35] : memref<16x1024xf32, #tpu.memory_space<vmem>>, vector<8x768xf32>
    tpu.vector_store %arg23[%c0_34, %c128_35], %70 {strides = array<i32>} : memref<16x1024xf32, #tpu.memory_space<vmem>>, vector<8x768xf32>,
    %c0_36 = arith.constant 0 : index
    %c109_37 = arith.constant 109 : index
    %72 = vector.load %arg23[%c0_36, %c109_37] : memref<16x1024xf32, #tpu.memory_space<vmem>>, vector<8x768xf32>
    %c0_38 = arith.constant 0 : index
    %c0_39 = arith.constant 0 : index
    %73 = vector.load %arg26[%c0_38, %c0_39] : memref<216x768xf32, #tpu.memory_space<vmem>>, vector<8x768xf32>
    tpu.vector_store %arg26[%c0_38, %c0_39], %72 {strides = array<i32>} : memref<216x768xf32, #tpu.memory_space<vmem>>, vector<8x768xf32>,
    %c0_40 = arith.constant 0 : index
    %c110_41 = arith.constant 110 : index
    %74 = vector.load %arg23[%c0_40, %c110_41] : memref<16x1024xf32, #tpu.memory_space<vmem>>, vector<8x768xf32>
    %c8_42 = arith.constant 8 : index
    %c0_43 = arith.constant 0 : index
    %75 = vector.load %arg26[%c8_42, %c0_43] : memref<216x768xf32, #tpu.memory_space<vmem>>, vector<8x768xf32>
    tpu.vector_store %arg26[%c8_42, %c0_43], %74 {strides = array<i32>} : memref<216x768xf32, #tpu.memory_space<vmem>>, vector<8x768xf32>,
    %c0_44 = arith.constant 0 : index
    %c111_45 = arith.constant 111 : index
    %76 = vector.load %arg23[%c0_44, %c111_45] : memref<16x1024xf32, #tpu.memory_space<vmem>>, vector<8x768xf32>
    %c16 = arith.constant 16 : index
    %c0_46 = arith.constant 0 : index
    %77 = vector.load %arg26[%c16, %c0_46] : memref<216x768xf32, #tpu.memory_space<vmem>>, vector<8x768xf32>
    tpu.vector_store %arg26[%c16, %c0_46], %76 {strides = array<i32>} : memref<216x768xf32, #tpu.memory_space<vmem>>, vector<8x768xf32>,
    %c0_47 = arith.constant 0 : index
    %c127_48 = arith.constant 127 : index
    %78 = vector.load %arg23[%c0_47, %c127_48] : memref<16x1024xf32, #tpu.memory_space<vmem>>, vector<8x768xf32>
    %c24 = arith.constant 24 : index
    %c0_49 = arith.constant 0 : index
    %79 = vector.load %arg26[%c24, %c0_49] : memref<216x768xf32, #tpu.memory_space<vmem>>, vector<8x768xf32>
    tpu.vector_store %arg26[%c24, %c0_49], %78 {strides = array<i32>} : memref<216x768xf32, #tpu.memory_space<vmem>>, vector<8x768xf32>,
    %c0_50 = arith.constant 0 : index
    %c128_51 = arith.constant 128 : index
    %80 = vector.load %arg23[%c0_50, %c128_51] : memref<16x1024xf32, #tpu.memory_space<vmem>>, vector<8x768xf32>
    %c32 = arith.constant 32 : index
    %c0_52 = arith.constant 0 : index
    %81 = vector.load %arg26[%c32, %c0_52] : memref<216x768xf32, #tpu.memory_space<vmem>>, vector<8x768xf32>
    tpu.vector_store %arg26[%c32, %c0_52], %80 {strides = array<i32>} : memref<216x768xf32, #tpu.memory_space<vmem>>, vector<8x768xf32>,
    %c0_53 = arith.constant 0 : index
    %c129_54 = arith.constant 129 : index
    %82 = vector.load %arg23[%c0_53, %c129_54] : memref<16x1024xf32, #tpu.memory_space<vmem>>, vector<8x768xf32>
    %c40 = arith.constant 40 : index
    %c0_55 = arith.constant 0 : index
    %83 = vector.load %arg26[%c40, %c0_55] : memref<216x768xf32, #tpu.memory_space<vmem>>, vector<8x768xf32>
    tpu.vector_store %arg26[%c40, %c0_55], %82 {strides = array<i32>} : memref<216x768xf32, #tpu.memory_space<vmem>>, vector<8x768xf32>,
    %c0_56 = arith.constant 0 : index
    %c145_57 = arith.constant 145 : index
    %84 = vector.load %arg23[%c0_56, %c145_57] : memref<16x1024xf32, #tpu.memory_space<vmem>>, vector<8x768xf32>
    %c48 = arith.constant 48 : index
    %c0_58 = arith.constant 0 : index
    %85 = vector.load %arg26[%c48, %c0_58] : memref<216x768xf32, #tpu.memory_space<vmem>>, vector<8x768xf32>
    tpu.vector_store %arg26[%c48, %c0_58], %84 {strides = array<i32>} : memref<216x768xf32, #tpu.memory_space<vmem>>, vector<8x768xf32>,
    %c0_59 = arith.constant 0 : index
    %c146_60 = arith.constant 146 : index
    %86 = vector.load %arg23[%c0_59, %c146_60] : memref<16x1024xf32, #tpu.memory_space<vmem>>, vector<8x768xf32>
    %c56 = arith.constant 56 : index
    %c0_61 = arith.constant 0 : index
    %87 = vector.load %arg26[%c56, %c0_61] : memref<216x768xf32, #tpu.memory_space<vmem>>, vector<8x768xf32>
    tpu.vector_store %arg26[%c56, %c0_61], %86 {strides = array<i32>} : memref<216x768xf32, #tpu.memory_space<vmem>>, vector<8x768xf32>,
    %c0_62 = arith.constant 0 : index
    %c147_63 = arith.constant 147 : index
    %88 = vector.load %arg23[%c0_62, %c147_63] : memref<16x1024xf32, #tpu.memory_space<vmem>>, vector<8x768xf32>
    %c64 = arith.constant 64 : index
    %c0_64 = arith.constant 0 : index
    %89 = vector.load %arg26[%c64, %c0_64] : memref<216x768xf32, #tpu.memory_space<vmem>>, vector<8x768xf32>
    tpu.vector_store %arg26[%c64, %c0_64], %88 {strides = array<i32>} : memref<216x768xf32, #tpu.memory_space<vmem>>, vector<8x768xf32>,
    %c0_65 = arith.constant 0 : index
    %c0_66 = arith.constant 0 : index
    %90 = vector.load %arg4[%c0_65, %c0_66] : memref<16x72xf32, #tpu.memory_space<vmem>>, vector<16x72xf32>
    %c0_67 = arith.constant 0 : index
    %c0_68 = arith.constant 0 : index
    %91 = vector.load %arg26[%c0_67, %c0_68] : memref<216x768xf32, #tpu.memory_space<vmem>>, vector<72x768xf32>
    %cst_69 = arith.constant dense<0.000000e+00> : vector<16x768xf32>
    %92 = tpu.matmul %90, %91, %cst_69 {dimension_numbers = #tpu.dot_dimension_numbers<[1], [0], [0], [1], [0, 0, 1, 1], [], []>} : vector<16x72xf32>, vector<72x768xf32>, vector<16x768xf32> -> vector<16x768xf32>
    %c0_70 = arith.constant 0 : index
    %c0_71 = arith.constant 0 : index
    %93 = vector.load %arg5[%c0_70, %c0_71] : memref<16x1xf32, #tpu.memory_space<vmem>>, vector<16x1xf32>
    %94 = vector.broadcast %93 : vector<16x1xf32> to vector<16x768xf32>
    %95 = arith.addf %92, %94 : vector<16x768xf32>
    %cst_72 = arith.constant 0.000000e+00 : f32
    %96 = vector.broadcast %cst_72 : f32 to vector<16x768xf32>
    %97 = arith.maximumf %95, %96 : vector<16x768xf32>
    %c0_73 = arith.constant 0 : index
    %c0_74 = arith.constant 0 : index
    %98 = vector.load %arg16[%c0_73, %c0_74] : memref<1x768xf32, #tpu.memory_space<vmem>>, vector<1x768xf32>
    %99 = vector.broadcast %98 : vector<1x768xf32> to vector<16x768xf32>
    %100 = arith.mulf %97, %99 : vector<16x768xf32>
    %c0_75 = arith.constant 0 : index
    %c128_76 = arith.constant 128 : index
    %101 = vector.load %arg23[%c0_75, %c128_76] : memref<16x1024xf32, #tpu.memory_space<vmem>>, vector<16x768xf32>
    tpu.vector_store %arg23[%c0_75, %c128_76], %100 {strides = array<i32>} : memref<16x1024xf32, #tpu.memory_space<vmem>>, vector<16x768xf32>,
    %c0_77 = arith.constant 0 : index
    %c128_78 = arith.constant 128 : index
    %102 = vector.load %arg23[%c0_77, %c128_78] : memref<16x1024xf32, #tpu.memory_space<vmem>>, vector<16x768xf32>
    %c0_79 = arith.constant 0 : index
    %c129_80 = arith.constant 129 : index
    %103 = vector.load %arg23[%c0_79, %c129_80] : memref<16x1024xf32, #tpu.memory_space<vmem>>, vector<16x768xf32>
    %104 = arith.maximumf %102, %103 : vector<16x768xf32>
    %c0_81 = arith.constant 0 : index
    %c146_82 = arith.constant 146 : index
    %105 = vector.load %arg23[%c0_81, %c146_82] : memref<16x1024xf32, #tpu.memory_space<vmem>>, vector<16x768xf32>
    %c0_83 = arith.constant 0 : index
    %c147_84 = arith.constant 147 : index
    %106 = vector.load %arg23[%c0_83, %c147_84] : memref<16x1024xf32, #tpu.memory_space<vmem>>, vector<16x768xf32>
    %107 = arith.maximumf %105, %106 : vector<16x768xf32>
    %108 = arith.maximumf %104, %107 : vector<16x768xf32>
    %c0_85 = arith.constant 0 : index
    %c0_86 = arith.constant 0 : index
    %109 = vector.load %arg26[%c0_85, %c0_86] : memref<216x768xf32, #tpu.memory_space<vmem>>, vector<16x768xf32>
    tpu.vector_store %arg26[%c0_85, %c0_86], %108 {strides = array<i32>} : memref<216x768xf32, #tpu.memory_space<vmem>>, vector<16x768xf32>,
    %c0_87 = arith.constant 0 : index
    %c19 = arith.constant 19 : index
    %110 = vector.load %arg26[%c0_87, %c19] : memref<216x768xf32, #tpu.memory_space<vmem>>, vector<16x16xf32>
    %c0_88 = arith.constant 0 : index
    %c0_89 = arith.constant 0 : index
    %111 = vector.load %arg19[%c0_88, %c0_89] : memref<16x8xf32, #tpu.memory_space<vmem>>, vector<16x8xf32>
    %cst_90 = arith.constant dense<0.000000e+00> : vector<16x8xf32>
    %112 = tpu.matmul %110, %111, %cst_90 {dimension_numbers = #tpu.dot_dimension_numbers<[1], [0], [0], [1], [0, 0, 1, 1], [], []>} : vector<16x16xf32>, vector<16x8xf32>, vector<16x8xf32> -> vector<16x8xf32>
    %c0_91 = arith.constant 0 : index
    %c139 = arith.constant 139 : index
    %113 = vector.load %arg24[%c0_91, %c139] : memref<24x512xf32, #tpu.memory_space<vmem>>, vector<16x8xf32>
    tpu.vector_store %arg24[%c0_91, %c139], %112 {strides = array<i32>} : memref<24x512xf32, #tpu.memory_space<vmem>>, vector<16x8xf32>,
    %c0_92 = arith.constant 0 : index
    %c55 = arith.constant 55 : index
    %114 = vector.load %arg26[%c0_92, %c55] : memref<216x768xf32, #tpu.memory_space<vmem>>, vector<16x16xf32>
    %c0_93 = arith.constant 0 : index
    %c0_94 = arith.constant 0 : index
    %115 = vector.load %arg19[%c0_93, %c0_94] : memref<16x8xf32, #tpu.memory_space<vmem>>, vector<16x8xf32>
    %cst_95 = arith.constant dense<0.000000e+00> : vector<16x8xf32>
    %116 = tpu.matmul %114, %115, %cst_95 {dimension_numbers = #tpu.dot_dimension_numbers<[1], [0], [0], [1], [0, 0, 1, 1], [], []>} : vector<16x16xf32>, vector<16x8xf32>, vector<16x8xf32> -> vector<16x8xf32>
    %c0_96 = arith.constant 0 : index
    %c149 = arith.constant 149 : index
    %117 = vector.load %arg24[%c0_96, %c149] : memref<24x512xf32, #tpu.memory_space<vmem>>, vector<16x8xf32>
    tpu.vector_store %arg24[%c0_96, %c149], %116 {strides = array<i32>} : memref<24x512xf32, #tpu.memory_space<vmem>>, vector<16x8xf32>,
    %c0_97 = arith.constant 0 : index
    %c91 = arith.constant 91 : index
    %118 = vector.load %arg26[%c0_97, %c91] : memref<216x768xf32, #tpu.memory_space<vmem>>, vector<16x16xf32>
    %c0_98 = arith.constant 0 : index
    %c0_99 = arith.constant 0 : index
    %119 = vector.load %arg19[%c0_98, %c0_99] : memref<16x8xf32, #tpu.memory_space<vmem>>, vector<16x8xf32>
    %cst_100 = arith.constant dense<0.000000e+00> : vector<16x8xf32>
    %120 = tpu.matmul %118, %119, %cst_100 {dimension_numbers = #tpu.dot_dimension_numbers<[1], [0], [0], [1], [0, 0, 1, 1], [], []>} : vector<16x16xf32>, vector<16x8xf32>, vector<16x8xf32> -> vector<16x8xf32>
    %c0_101 = arith.constant 0 : index
    %c159 = arith.constant 159 : index
    %121 = vector.load %arg24[%c0_101, %c159] : memref<24x512xf32, #tpu.memory_space<vmem>>, vector<16x8xf32>
    tpu.vector_store %arg24[%c0_101, %c159], %120 {strides = array<i32>} : memref<24x512xf32, #tpu.memory_space<vmem>>, vector<16x8xf32>,
    %c0_102 = arith.constant 0 : index
    %c127_103 = arith.constant 127 : index
    %122 = vector.load %arg26[%c0_102, %c127_103] : memref<216x768xf32, #tpu.memory_space<vmem>>, vector<16x16xf32>
    %c0_104 = arith.constant 0 : index
    %c0_105 = arith.constant 0 : index
    %123 = vector.load %arg19[%c0_104, %c0_105] : memref<16x8xf32, #tpu.memory_space<vmem>>, vector<16x8xf32>
    %cst_106 = arith.constant dense<0.000000e+00> : vector<16x8xf32>
    %124 = tpu.matmul %122, %123, %cst_106 {dimension_numbers = #tpu.dot_dimension_numbers<[1], [0], [0], [1], [0, 0, 1, 1], [], []>} : vector<16x16xf32>, vector<16x8xf32>, vector<16x8xf32> -> vector<16x8xf32>
    %c0_107 = arith.constant 0 : index
    %c169 = arith.constant 169 : index
    %125 = vector.load %arg24[%c0_107, %c169] : memref<24x512xf32, #tpu.memory_space<vmem>>, vector<16x8xf32>
    tpu.vector_store %arg24[%c0_107, %c169], %124 {strides = array<i32>} : memref<24x512xf32, #tpu.memory_space<vmem>>, vector<16x8xf32>,
    %c0_108 = arith.constant 0 : index
    %c163 = arith.constant 163 : index
    %126 = vector.load %arg26[%c0_108, %c163] : memref<216x768xf32, #tpu.memory_space<vmem>>, vector<16x16xf32>
    %c0_109 = arith.constant 0 : index
    %c0_110 = arith.constant 0 : index
    %127 = vector.load %arg19[%c0_109, %c0_110] : memref<16x8xf32, #tpu.memory_space<vmem>>, vector<16x8xf32>
    %cst_111 = arith.constant dense<0.000000e+00> : vector<16x8xf32>
    %128 = tpu.matmul %126, %127, %cst_111 {dimension_numbers = #tpu.dot_dimension_numbers<[1], [0], [0], [1], [0, 0, 1, 1], [], []>} : vector<16x16xf32>, vector<16x8xf32>, vector<16x8xf32> -> vector<16x8xf32>
    %c0_112 = arith.constant 0 : index
    %c179 = arith.constant 179 : index
    %129 = vector.load %arg24[%c0_112, %c179] : memref<24x512xf32, #tpu.memory_space<vmem>>, vector<16x8xf32>
    tpu.vector_store %arg24[%c0_112, %c179], %128 {strides = array<i32>} : memref<24x512xf32, #tpu.memory_space<vmem>>, vector<16x8xf32>,
    %c0_113 = arith.constant 0 : index
    %c199 = arith.constant 199 : index
    %130 = vector.load %arg26[%c0_113, %c199] : memref<216x768xf32, #tpu.memory_space<vmem>>, vector<16x16xf32>
    %c0_114 = arith.constant 0 : index
    %c0_115 = arith.constant 0 : index
    %131 = vector.load %arg19[%c0_114, %c0_115] : memref<16x8xf32, #tpu.memory_space<vmem>>, vector<16x8xf32>
    %cst_116 = arith.constant dense<0.000000e+00> : vector<16x8xf32>
    %132 = tpu.matmul %130, %131, %cst_116 {dimension_numbers = #tpu.dot_dimension_numbers<[1], [0], [0], [1], [0, 0, 1, 1], [], []>} : vector<16x16xf32>, vector<16x8xf32>, vector<16x8xf32> -> vector<16x8xf32>
    %c0_117 = arith.constant 0 : index
    %c189 = arith.constant 189 : index
    %133 = vector.load %arg24[%c0_117, %c189] : memref<24x512xf32, #tpu.memory_space<vmem>>, vector<16x8xf32>
    tpu.vector_store %arg24[%c0_117, %c189], %132 {strides = array<i32>} : memref<24x512xf32, #tpu.memory_space<vmem>>, vector<16x8xf32>,
    %c0_118 = arith.constant 0 : index
    %c235 = arith.constant 235 : index
    %134 = vector.load %arg26[%c0_118, %c235] : memref<216x768xf32, #tpu.memory_space<vmem>>, vector<16x16xf32>
    %c0_119 = arith.constant 0 : index
    %c0_120 = arith.constant 0 : index
    %135 = vector.load %arg19[%c0_119, %c0_120] : memref<16x8xf32, #tpu.memory_space<vmem>>, vector<16x8xf32>
    %cst_121 = arith.constant dense<0.000000e+00> : vector<16x8xf32>
    %136 = tpu.matmul %134, %135, %cst_121 {dimension_numbers = #tpu.dot_dimension_numbers<[1], [0], [0], [1], [0, 0, 1, 1], [], []>} : vector<16x16xf32>, vector<16x8xf32>, vector<16x8xf32> -> vector<16x8xf32>
    %c0_122 = arith.constant 0 : index
    %c199_123 = arith.constant 199 : index
    %137 = vector.load %arg24[%c0_122, %c199_123] : memref<24x512xf32, #tpu.memory_space<vmem>>, vector<16x8xf32>
    tpu.vector_store %arg24[%c0_122, %c199_123], %136 {strides = array<i32>} : memref<24x512xf32, #tpu.memory_space<vmem>>, vector<16x8xf32>,
    %c0_124 = arith.constant 0 : index
    %c271 = arith.constant 271 : index
    %138 = vector.load %arg26[%c0_124, %c271] : memref<216x768xf32, #tpu.memory_space<vmem>>, vector<16x16xf32>
    %c0_125 = arith.constant 0 : index
    %c0_126 = arith.constant 0 : index
    %139 = vector.load %arg19[%c0_125, %c0_126] : memref<16x8xf32, #tpu.memory_space<vmem>>, vector<16x8xf32>
    %cst_127 = arith.constant dense<0.000000e+00> : vector<16x8xf32>
    %140 = tpu.matmul %138, %139, %cst_127 {dimension_numbers = #tpu.dot_dimension_numbers<[1], [0], [0], [1], [0, 0, 1, 1], [], []>} : vector<16x16xf32>, vector<16x8xf32>, vector<16x8xf32> -> vector<16x8xf32>
    %c0_128 = arith.constant 0 : index
    %c209 = arith.constant 209 : index
    %141 = vector.load %arg24[%c0_128, %c209] : memref<24x512xf32, #tpu.memory_space<vmem>>, vector<16x8xf32>
    tpu.vector_store %arg24[%c0_128, %c209], %140 {strides = array<i32>} : memref<24x512xf32, #tpu.memory_space<vmem>>, vector<16x8xf32>,
    %c0_129 = arith.constant 0 : index
    %c403 = arith.constant 403 : index
    %142 = vector.load %arg26[%c0_129, %c403] : memref<216x768xf32, #tpu.memory_space<vmem>>, vector<16x16xf32>
    %c0_130 = arith.constant 0 : index
    %c0_131 = arith.constant 0 : index
    %143 = vector.load %arg19[%c0_130, %c0_131] : memref<16x8xf32, #tpu.memory_space<vmem>>, vector<16x8xf32>
    %cst_132 = arith.constant dense<0.000000e+00> : vector<16x8xf32>
    %144 = tpu.matmul %142, %143, %cst_132 {dimension_numbers = #tpu.dot_dimension_numbers<[1], [0], [0], [1], [0, 0, 1, 1], [], []>} : vector<16x16xf32>, vector<16x8xf32>, vector<16x8xf32> -> vector<16x8xf32>
    %c0_133 = arith.constant 0 : index
    %c267 = arith.constant 267 : index
    %145 = vector.load %arg24[%c0_133, %c267] : memref<24x512xf32, #tpu.memory_space<vmem>>, vector<16x8xf32>
    tpu.vector_store %arg24[%c0_133, %c267], %144 {strides = array<i32>} : memref<24x512xf32, #tpu.memory_space<vmem>>, vector<16x8xf32>,
    %c0_134 = arith.constant 0 : index
    %c439 = arith.constant 439 : index
    %146 = vector.load %arg26[%c0_134, %c439] : memref<216x768xf32, #tpu.memory_space<vmem>>, vector<16x16xf32>
    %c0_135 = arith.constant 0 : index
    %c0_136 = arith.constant 0 : index
    %147 = vector.load %arg19[%c0_135, %c0_136] : memref<16x8xf32, #tpu.memory_space<vmem>>, vector<16x8xf32>
    %cst_137 = arith.constant dense<0.000000e+00> : vector<16x8xf32>
    %148 = tpu.matmul %146, %147, %cst_137 {dimension_numbers = #tpu.dot_dimension_numbers<[1], [0], [0], [1], [0, 0, 1, 1], [], []>} : vector<16x16xf32>, vector<16x8xf32>, vector<16x8xf32> -> vector<16x8xf32>
    %c0_138 = arith.constant 0 : index
    %c277 = arith.constant 277 : index
    %149 = vector.load %arg24[%c0_138, %c277] : memref<24x512xf32, #tpu.memory_space<vmem>>, vector<16x8xf32>
    tpu.vector_store %arg24[%c0_138, %c277], %148 {strides = array<i32>} : memref<24x512xf32, #tpu.memory_space<vmem>>, vector<16x8xf32>,
    %c0_139 = arith.constant 0 : index
    %c475 = arith.constant 475 : index
    %150 = vector.load %arg26[%c0_139, %c475] : memref<216x768xf32, #tpu.memory_space<vmem>>, vector<16x16xf32>
    %c0_140 = arith.constant 0 : index
    %c0_141 = arith.constant 0 : index
    %151 = vector.load %arg19[%c0_140, %c0_141] : memref<16x8xf32, #tpu.memory_space<vmem>>, vector<16x8xf32>
    %cst_142 = arith.constant dense<0.000000e+00> : vector<16x8xf32>
    %152 = tpu.matmul %150, %151, %cst_142 {dimension_numbers = #tpu.dot_dimension_numbers<[1], [0], [0], [1], [0, 0, 1, 1], [], []>} : vector<16x16xf32>, vector<16x8xf32>, vector<16x8xf32> -> vector<16x8xf32>
    %c0_143 = arith.constant 0 : index
    %c287 = arith.constant 287 : index
    %153 = vector.load %arg24[%c0_143, %c287] : memref<24x512xf32, #tpu.memory_space<vmem>>, vector<16x8xf32>
    tpu.vector_store %arg24[%c0_143, %c287], %152 {strides = array<i32>} : memref<24x512xf32, #tpu.memory_space<vmem>>, vector<16x8xf32>,
    %c0_144 = arith.constant 0 : index
    %c511 = arith.constant 511 : index
    %154 = vector.load %arg26[%c0_144, %c511] : memref<216x768xf32, #tpu.memory_space<vmem>>, vector<16x16xf32>
    %c0_145 = arith.constant 0 : index
    %c0_146 = arith.constant 0 : index
    %155 = vector.load %arg19[%c0_145, %c0_146] : memref<16x8xf32, #tpu.memory_space<vmem>>, vector<16x8xf32>
    %cst_147 = arith.constant dense<0.000000e+00> : vector<16x8xf32>
    %156 = tpu.matmul %154, %155, %cst_147 {dimension_numbers = #tpu.dot_dimension_numbers<[1], [0], [0], [1], [0, 0, 1, 1], [], []>} : vector<16x16xf32>, vector<16x8xf32>, vector<16x8xf32> -> vector<16x8xf32>
    %c0_148 = arith.constant 0 : index
    %c297 = arith.constant 297 : index
    %157 = vector.load %arg24[%c0_148, %c297] : memref<24x512xf32, #tpu.memory_space<vmem>>, vector<16x8xf32>
    tpu.vector_store %arg24[%c0_148, %c297], %156 {strides = array<i32>} : memref<24x512xf32, #tpu.memory_space<vmem>>, vector<16x8xf32>,
    %c0_149 = arith.constant 0 : index
    %c547 = arith.constant 547 : index
    %158 = vector.load %arg26[%c0_149, %c547] : memref<216x768xf32, #tpu.memory_space<vmem>>, vector<16x16xf32>
    %c0_150 = arith.constant 0 : index
    %c0_151 = arith.constant 0 : index
    %159 = vector.load %arg19[%c0_150, %c0_151] : memref<16x8xf32, #tpu.memory_space<vmem>>, vector<16x8xf32>
    %cst_152 = arith.constant dense<0.000000e+00> : vector<16x8xf32>
    %160 = tpu.matmul %158, %159, %cst_152 {dimension_numbers = #tpu.dot_dimension_numbers<[1], [0], [0], [1], [0, 0, 1, 1], [], []>} : vector<16x16xf32>, vector<16x8xf32>, vector<16x8xf32> -> vector<16x8xf32>
    %c0_153 = arith.constant 0 : index
    %c307 = arith.constant 307 : index
    %161 = vector.load %arg24[%c0_153, %c307] : memref<24x512xf32, #tpu.memory_space<vmem>>, vector<16x8xf32>
    tpu.vector_store %arg24[%c0_153, %c307], %160 {strides = array<i32>} : memref<24x512xf32, #tpu.memory_space<vmem>>, vector<16x8xf32>,
    %c0_154 = arith.constant 0 : index
    %c583 = arith.constant 583 : index
    %162 = vector.load %arg26[%c0_154, %c583] : memref<216x768xf32, #tpu.memory_space<vmem>>, vector<16x16xf32>
    %c0_155 = arith.constant 0 : index
    %c0_156 = arith.constant 0 : index
    %163 = vector.load %arg19[%c0_155, %c0_156] : memref<16x8xf32, #tpu.memory_space<vmem>>, vector<16x8xf32>
    %cst_157 = arith.constant dense<0.000000e+00> : vector<16x8xf32>
    %164 = tpu.matmul %162, %163, %cst_157 {dimension_numbers = #tpu.dot_dimension_numbers<[1], [0], [0], [1], [0, 0, 1, 1], [], []>} : vector<16x16xf32>, vector<16x8xf32>, vector<16x8xf32> -> vector<16x8xf32>
    %c0_158 = arith.constant 0 : index
    %c317 = arith.constant 317 : index
    %165 = vector.load %arg24[%c0_158, %c317] : memref<24x512xf32, #tpu.memory_space<vmem>>, vector<16x8xf32>
    tpu.vector_store %arg24[%c0_158, %c317], %164 {strides = array<i32>} : memref<24x512xf32, #tpu.memory_space<vmem>>, vector<16x8xf32>,
    %c0_159 = arith.constant 0 : index
    %c619 = arith.constant 619 : index
    %166 = vector.load %arg26[%c0_159, %c619] : memref<216x768xf32, #tpu.memory_space<vmem>>, vector<16x16xf32>
    %c0_160 = arith.constant 0 : index
    %c0_161 = arith.constant 0 : index
    %167 = vector.load %arg19[%c0_160, %c0_161] : memref<16x8xf32, #tpu.memory_space<vmem>>, vector<16x8xf32>
    %cst_162 = arith.constant dense<0.000000e+00> : vector<16x8xf32>
    %168 = tpu.matmul %166, %167, %cst_162 {dimension_numbers = #tpu.dot_dimension_numbers<[1], [0], [0], [1], [0, 0, 1, 1], [], []>} : vector<16x16xf32>, vector<16x8xf32>, vector<16x8xf32> -> vector<16x8xf32>
    %c0_163 = arith.constant 0 : index
    %c327 = arith.constant 327 : index
    %169 = vector.load %arg24[%c0_163, %c327] : memref<24x512xf32, #tpu.memory_space<vmem>>, vector<16x8xf32>
    tpu.vector_store %arg24[%c0_163, %c327], %168 {strides = array<i32>} : memref<24x512xf32, #tpu.memory_space<vmem>>, vector<16x8xf32>,
    %c0_164 = arith.constant 0 : index
    %c655 = arith.constant 655 : index
    %170 = vector.load %arg26[%c0_164, %c655] : memref<216x768xf32, #tpu.memory_space<vmem>>, vector<16x16xf32>
    %c0_165 = arith.constant 0 : index
    %c0_166 = arith.constant 0 : index
    %171 = vector.load %arg19[%c0_165, %c0_166] : memref<16x8xf32, #tpu.memory_space<vmem>>, vector<16x8xf32>
    %cst_167 = arith.constant dense<0.000000e+00> : vector<16x8xf32>
    %172 = tpu.matmul %170, %171, %cst_167 {dimension_numbers = #tpu.dot_dimension_numbers<[1], [0], [0], [1], [0, 0, 1, 1], [], []>} : vector<16x16xf32>, vector<16x8xf32>, vector<16x8xf32> -> vector<16x8xf32>
    %c0_168 = arith.constant 0 : index
    %c337 = arith.constant 337 : index
    %173 = vector.load %arg24[%c0_168, %c337] : memref<24x512xf32, #tpu.memory_space<vmem>>, vector<16x8xf32>
    tpu.vector_store %arg24[%c0_168, %c337], %172 {strides = array<i32>} : memref<24x512xf32, #tpu.memory_space<vmem>>, vector<16x8xf32>,
    %c0_169 = arith.constant 0 : index
    %c117 = arith.constant 117 : index
    %174 = vector.load %arg24[%c0_169, %c117] : memref<24x512xf32, #tpu.memory_space<vmem>>, vector<16x256xf32>
    %c0_170 = arith.constant 0 : index
    %c0_171 = arith.constant 0 : index
    %175 = vector.load %arg26[%c0_170, %c0_171] : memref<216x768xf32, #tpu.memory_space<vmem>>, vector<16x256xf32>
    tpu.vector_store %arg26[%c0_170, %c0_171], %174 {strides = array<i32>} : memref<216x768xf32, #tpu.memory_space<vmem>>, vector<16x256xf32>,
    %c0_172 = arith.constant 0 : index
    %c118 = arith.constant 118 : index
    %176 = vector.load %arg24[%c0_172, %c118] : memref<24x512xf32, #tpu.memory_space<vmem>>, vector<16x256xf32>
    %c16_173 = arith.constant 16 : index
    %c0_174 = arith.constant 0 : index
    %177 = vector.load %arg26[%c16_173, %c0_174] : memref<216x768xf32, #tpu.memory_space<vmem>>, vector<16x256xf32>
    tpu.vector_store %arg26[%c16_173, %c0_174], %176 {strides = array<i32>} : memref<216x768xf32, #tpu.memory_space<vmem>>, vector<16x256xf32>,
    %c0_175 = arith.constant 0 : index
    %c119 = arith.constant 119 : index
    %178 = vector.load %arg24[%c0_175, %c119] : memref<24x512xf32, #tpu.memory_space<vmem>>, vector<16x256xf32>
    %c32_176 = arith.constant 32 : index
    %c0_177 = arith.constant 0 : index
    %179 = vector.load %arg26[%c32_176, %c0_177] : memref<216x768xf32, #tpu.memory_space<vmem>>, vector<16x256xf32>
    tpu.vector_store %arg26[%c32_176, %c0_177], %178 {strides = array<i32>} : memref<216x768xf32, #tpu.memory_space<vmem>>, vector<16x256xf32>,
    %c0_178 = arith.constant 0 : index
    %c127_179 = arith.constant 127 : index
    %180 = vector.load %arg24[%c0_178, %c127_179] : memref<24x512xf32, #tpu.memory_space<vmem>>, vector<16x256xf32>
    %c48_180 = arith.constant 48 : index
    %c0_181 = arith.constant 0 : index
    %181 = vector.load %arg26[%c48_180, %c0_181] : memref<216x768xf32, #tpu.memory_space<vmem>>, vector<16x256xf32>
    tpu.vector_store %arg26[%c48_180, %c0_181], %180 {strides = array<i32>} : memref<216x768xf32, #tpu.memory_space<vmem>>, vector<16x256xf32>,
    %c0_182 = arith.constant 0 : index
    %c128_183 = arith.constant 128 : index
    %182 = vector.load %arg24[%c0_182, %c128_183] : memref<24x512xf32, #tpu.memory_space<vmem>>, vector<16x256xf32>
    %c64_184 = arith.constant 64 : index
    %c0_185 = arith.constant 0 : index
    %183 = vector.load %arg26[%c64_184, %c0_185] : memref<216x768xf32, #tpu.memory_space<vmem>>, vector<16x256xf32>
    tpu.vector_store %arg26[%c64_184, %c0_185], %182 {strides = array<i32>} : memref<216x768xf32, #tpu.memory_space<vmem>>, vector<16x256xf32>,
    %c0_186 = arith.constant 0 : index
    %c129_187 = arith.constant 129 : index
    %184 = vector.load %arg24[%c0_186, %c129_187] : memref<24x512xf32, #tpu.memory_space<vmem>>, vector<16x256xf32>
    %c80 = arith.constant 80 : index
    %c0_188 = arith.constant 0 : index
    %185 = vector.load %arg26[%c80, %c0_188] : memref<216x768xf32, #tpu.memory_space<vmem>>, vector<16x256xf32>
    tpu.vector_store %arg26[%c80, %c0_188], %184 {strides = array<i32>} : memref<216x768xf32, #tpu.memory_space<vmem>>, vector<16x256xf32>,
    %c0_189 = arith.constant 0 : index
    %c137 = arith.constant 137 : index
    %186 = vector.load %arg24[%c0_189, %c137] : memref<24x512xf32, #tpu.memory_space<vmem>>, vector<16x256xf32>
    %c96 = arith.constant 96 : index
    %c0_190 = arith.constant 0 : index
    %187 = vector.load %arg26[%c96, %c0_190] : memref<216x768xf32, #tpu.memory_space<vmem>>, vector<16x256xf32>
    tpu.vector_store %arg26[%c96, %c0_190], %186 {strides = array<i32>} : memref<216x768xf32, #tpu.memory_space<vmem>>, vector<16x256xf32>,
    %c0_191 = arith.constant 0 : index
    %c138 = arith.constant 138 : index
    %188 = vector.load %arg24[%c0_191, %c138] : memref<24x512xf32, #tpu.memory_space<vmem>>, vector<16x256xf32>
    %c112 = arith.constant 112 : index
    %c0_192 = arith.constant 0 : index
    %189 = vector.load %arg26[%c112, %c0_192] : memref<216x768xf32, #tpu.memory_space<vmem>>, vector<16x256xf32>
    tpu.vector_store %arg26[%c112, %c0_192], %188 {strides = array<i32>} : memref<216x768xf32, #tpu.memory_space<vmem>>, vector<16x256xf32>,
    %c0_193 = arith.constant 0 : index
    %c139_194 = arith.constant 139 : index
    %190 = vector.load %arg24[%c0_193, %c139_194] : memref<24x512xf32, #tpu.memory_space<vmem>>, vector<16x256xf32>
    %c128_195 = arith.constant 128 : index
    %c0_196 = arith.constant 0 : index
    %191 = vector.load %arg26[%c128_195, %c0_196] : memref<216x768xf32, #tpu.memory_space<vmem>>, vector<16x256xf32>
    tpu.vector_store %arg26[%c128_195, %c0_196], %190 {strides = array<i32>} : memref<216x768xf32, #tpu.memory_space<vmem>>, vector<16x256xf32>,
    %c0_197 = arith.constant 0 : index
    %c0_198 = arith.constant 0 : index
    %192 = vector.load %arg6[%c0_197, %c0_198] : memref<16x144xf32, #tpu.memory_space<vmem>>, vector<16x144xf32>
    %c0_199 = arith.constant 0 : index
    %c0_200 = arith.constant 0 : index
    %193 = vector.load %arg26[%c0_199, %c0_200] : memref<216x768xf32, #tpu.memory_space<vmem>>, vector<144x256xf32>
    %cst_201 = arith.constant dense<0.000000e+00> : vector<16x256xf32>
    %194 = tpu.matmul %192, %193, %cst_201 {dimension_numbers = #tpu.dot_dimension_numbers<[1], [0], [0], [1], [0, 0, 1, 1], [], []>} : vector<16x144xf32>, vector<144x256xf32>, vector<16x256xf32> -> vector<16x256xf32>
    %c0_202 = arith.constant 0 : index
    %c0_203 = arith.constant 0 : index
    %195 = vector.load %arg7[%c0_202, %c0_203] : memref<16x1xf32, #tpu.memory_space<vmem>>, vector<16x1xf32>
    %196 = vector.broadcast %195 : vector<16x1xf32> to vector<16x256xf32>
    %197 = arith.addf %194, %196 : vector<16x256xf32>
    %cst_204 = arith.constant 0.000000e+00 : f32
    %198 = vector.broadcast %cst_204 : f32 to vector<16x256xf32>
    %199 = arith.maximumf %197, %198 : vector<16x256xf32>
    %c0_205 = arith.constant 0 : index
    %c0_206 = arith.constant 0 : index
    %200 = vector.load %arg17[%c0_205, %c0_206] : memref<1x256xf32, #tpu.memory_space<vmem>>, vector<1x256xf32>
    %201 = vector.broadcast %200 : vector<1x256xf32> to vector<16x256xf32>
    %202 = arith.mulf %199, %201 : vector<16x256xf32>
    %c0_207 = arith.constant 0 : index
    %c128_208 = arith.constant 128 : index
    %203 = vector.load %arg24[%c0_207, %c128_208] : memref<24x512xf32, #tpu.memory_space<vmem>>, vector<16x256xf32>
    tpu.vector_store %arg24[%c0_207, %c128_208], %202 {strides = array<i32>} : memref<24x512xf32, #tpu.memory_space<vmem>>, vector<16x256xf32>,
    %c0_209 = arith.constant 0 : index
    %c117_210 = arith.constant 117 : index
    %204 = vector.load %arg24[%c0_209, %c117_210] : memref<24x512xf32, #tpu.memory_space<vmem>>, vector<16x256xf32>
    %c0_211 = arith.constant 0 : index
    %c0_212 = arith.constant 0 : index
    %205 = vector.load %arg26[%c0_211, %c0_212] : memref<216x768xf32, #tpu.memory_space<vmem>>, vector<16x256xf32>
    tpu.vector_store %arg26[%c0_211, %c0_212], %204 {strides = array<i32>} : memref<216x768xf32, #tpu.memory_space<vmem>>, vector<16x256xf32>,
    %c0_213 = arith.constant 0 : index
    %c118_214 = arith.constant 118 : index
    %206 = vector.load %arg24[%c0_213, %c118_214] : memref<24x512xf32, #tpu.memory_space<vmem>>, vector<16x256xf32>
    %c16_215 = arith.constant 16 : index
    %c0_216 = arith.constant 0 : index
    %207 = vector.load %arg26[%c16_215, %c0_216] : memref<216x768xf32, #tpu.memory_space<vmem>>, vector<16x256xf32>
    tpu.vector_store %arg26[%c16_215, %c0_216], %206 {strides = array<i32>} : memref<216x768xf32, #tpu.memory_space<vmem>>, vector<16x256xf32>,
    %c0_217 = arith.constant 0 : index
    %c119_218 = arith.constant 119 : index
    %208 = vector.load %arg24[%c0_217, %c119_218] : memref<24x512xf32, #tpu.memory_space<vmem>>, vector<16x256xf32>
    %c32_219 = arith.constant 32 : index
    %c0_220 = arith.constant 0 : index
    %209 = vector.load %arg26[%c32_219, %c0_220] : memref<216x768xf32, #tpu.memory_space<vmem>>, vector<16x256xf32>
    tpu.vector_store %arg26[%c32_219, %c0_220], %208 {strides = array<i32>} : memref<216x768xf32, #tpu.memory_space<vmem>>, vector<16x256xf32>,
    %c0_221 = arith.constant 0 : index
    %c127_222 = arith.constant 127 : index
    %210 = vector.load %arg24[%c0_221, %c127_222] : memref<24x512xf32, #tpu.memory_space<vmem>>, vector<16x256xf32>
    %c48_223 = arith.constant 48 : index
    %c0_224 = arith.constant 0 : index
    %211 = vector.load %arg26[%c48_223, %c0_224] : memref<216x768xf32, #tpu.memory_space<vmem>>, vector<16x256xf32>
    tpu.vector_store %arg26[%c48_223, %c0_224], %210 {strides = array<i32>} : memref<216x768xf32, #tpu.memory_space<vmem>>, vector<16x256xf32>,
    %c0_225 = arith.constant 0 : index
    %c128_226 = arith.constant 128 : index
    %212 = vector.load %arg24[%c0_225, %c128_226] : memref<24x512xf32, #tpu.memory_space<vmem>>, vector<16x256xf32>
    %c64_227 = arith.constant 64 : index
    %c0_228 = arith.constant 0 : index
    %213 = vector.load %arg26[%c64_227, %c0_228] : memref<216x768xf32, #tpu.memory_space<vmem>>, vector<16x256xf32>
    tpu.vector_store %arg26[%c64_227, %c0_228], %212 {strides = array<i32>} : memref<216x768xf32, #tpu.memory_space<vmem>>, vector<16x256xf32>,
    %c0_229 = arith.constant 0 : index
    %c129_230 = arith.constant 129 : index
    %214 = vector.load %arg24[%c0_229, %c129_230] : memref<24x512xf32, #tpu.memory_space<vmem>>, vector<16x256xf32>
    %c80_231 = arith.constant 80 : index
    %c0_232 = arith.constant 0 : index
    %215 = vector.load %arg26[%c80_231, %c0_232] : memref<216x768xf32, #tpu.memory_space<vmem>>, vector<16x256xf32>
    tpu.vector_store %arg26[%c80_231, %c0_232], %214 {strides = array<i32>} : memref<216x768xf32, #tpu.memory_space<vmem>>, vector<16x256xf32>,
    %c0_233 = arith.constant 0 : index
    %c137_234 = arith.constant 137 : index
    %216 = vector.load %arg24[%c0_233, %c137_234] : memref<24x512xf32, #tpu.memory_space<vmem>>, vector<16x256xf32>
    %c96_235 = arith.constant 96 : index
    %c0_236 = arith.constant 0 : index
    %217 = vector.load %arg26[%c96_235, %c0_236] : memref<216x768xf32, #tpu.memory_space<vmem>>, vector<16x256xf32>
    tpu.vector_store %arg26[%c96_235, %c0_236], %216 {strides = array<i32>} : memref<216x768xf32, #tpu.memory_space<vmem>>, vector<16x256xf32>,
    %c0_237 = arith.constant 0 : index
    %c138_238 = arith.constant 138 : index
    %218 = vector.load %arg24[%c0_237, %c138_238] : memref<24x512xf32, #tpu.memory_space<vmem>>, vector<16x256xf32>
    %c112_239 = arith.constant 112 : index
    %c0_240 = arith.constant 0 : index
    %219 = vector.load %arg26[%c112_239, %c0_240] : memref<216x768xf32, #tpu.memory_space<vmem>>, vector<16x256xf32>
    tpu.vector_store %arg26[%c112_239, %c0_240], %218 {strides = array<i32>} : memref<216x768xf32, #tpu.memory_space<vmem>>, vector<16x256xf32>,
    %c0_241 = arith.constant 0 : index
    %c139_242 = arith.constant 139 : index
    %220 = vector.load %arg24[%c0_241, %c139_242] : memref<24x512xf32, #tpu.memory_space<vmem>>, vector<16x256xf32>
    %c128_243 = arith.constant 128 : index
    %c0_244 = arith.constant 0 : index
    %221 = vector.load %arg26[%c128_243, %c0_244] : memref<216x768xf32, #tpu.memory_space<vmem>>, vector<16x256xf32>
    tpu.vector_store %arg26[%c128_243, %c0_244], %220 {strides = array<i32>} : memref<216x768xf32, #tpu.memory_space<vmem>>, vector<16x256xf32>,
    %c0_245 = arith.constant 0 : index
    %c0_246 = arith.constant 0 : index
    %222 = vector.load %arg8[%c0_245, %c0_246] : memref<24x144xf32, #tpu.memory_space<vmem>>, vector<24x144xf32>
    %c0_247 = arith.constant 0 : index
    %c0_248 = arith.constant 0 : index
    %223 = vector.load %arg26[%c0_247, %c0_248] : memref<216x768xf32, #tpu.memory_space<vmem>>, vector<144x256xf32>
    %cst_249 = arith.constant dense<0.000000e+00> : vector<24x256xf32>
    %224 = tpu.matmul %222, %223, %cst_249 {dimension_numbers = #tpu.dot_dimension_numbers<[1], [0], [0], [1], [0, 0, 1, 1], [], []>} : vector<24x144xf32>, vector<144x256xf32>, vector<24x256xf32> -> vector<24x256xf32>
    %c0_250 = arith.constant 0 : index
    %c0_251 = arith.constant 0 : index
    %225 = vector.load %arg9[%c0_250, %c0_251] : memref<24x1xf32, #tpu.memory_space<vmem>>, vector<24x1xf32>
    %226 = vector.broadcast %225 : vector<24x1xf32> to vector<24x256xf32>
    %227 = arith.addf %224, %226 : vector<24x256xf32>
    %cst_252 = arith.constant 0.000000e+00 : f32
    %228 = vector.broadcast %cst_252 : f32 to vector<24x256xf32>
    %229 = arith.maximumf %227, %228 : vector<24x256xf32>
    %c0_253 = arith.constant 0 : index
    %c0_254 = arith.constant 0 : index
    %230 = vector.load %arg17[%c0_253, %c0_254] : memref<1x256xf32, #tpu.memory_space<vmem>>, vector<1x256xf32>
    %231 = vector.broadcast %230 : vector<1x256xf32> to vector<24x256xf32>
    %232 = arith.mulf %229, %231 : vector<24x256xf32>
    %c0_255 = arith.constant 0 : index
    %c128_256 = arith.constant 128 : index
    %233 = vector.load %arg24[%c0_255, %c128_256] : memref<24x512xf32, #tpu.memory_space<vmem>>, vector<24x256xf32>
    tpu.vector_store %arg24[%c0_255, %c128_256], %232 {strides = array<i32>} : memref<24x512xf32, #tpu.memory_space<vmem>>, vector<24x256xf32>,
    %c0_257 = arith.constant 0 : index
    %c128_258 = arith.constant 128 : index
    %234 = vector.load %arg24[%c0_257, %c128_258] : memref<24x512xf32, #tpu.memory_space<vmem>>, vector<24x256xf32>
    %c0_259 = arith.constant 0 : index
    %c129_260 = arith.constant 129 : index
    %235 = vector.load %arg24[%c0_259, %c129_260] : memref<24x512xf32, #tpu.memory_space<vmem>>, vector<24x256xf32>
    %236 = arith.maximumf %234, %235 : vector<24x256xf32>
    %c0_261 = arith.constant 0 : index
    %c138_262 = arith.constant 138 : index
    %237 = vector.load %arg24[%c0_261, %c138_262] : memref<24x512xf32, #tpu.memory_space<vmem>>, vector<24x256xf32>
    %c0_263 = arith.constant 0 : index
    %c139_264 = arith.constant 139 : index
    %238 = vector.load %arg24[%c0_263, %c139_264] : memref<24x512xf32, #tpu.memory_space<vmem>>, vector<24x256xf32>
    %239 = arith.maximumf %237, %238 : vector<24x256xf32>
    %240 = arith.maximumf %236, %239 : vector<24x256xf32>
    %c0_265 = arith.constant 0 : index
    %c0_266 = arith.constant 0 : index
    %241 = vector.load %arg26[%c0_265, %c0_266] : memref<216x768xf32, #tpu.memory_space<vmem>>, vector<24x256xf32>
    tpu.vector_store %arg26[%c0_265, %c0_266], %240 {strides = array<i32>} : memref<216x768xf32, #tpu.memory_space<vmem>>, vector<24x256xf32>,
    %c0_267 = arith.constant 0 : index
    %c11 = arith.constant 11 : index
    %242 = vector.load %arg26[%c0_267, %c11] : memref<216x768xf32, #tpu.memory_space<vmem>>, vector<24x8xf32>
    %c0_268 = arith.constant 0 : index
    %c0_269 = arith.constant 0 : index
    %243 = vector.load %arg20[%c0_268, %c0_269] : memref<8x4xf32, #tpu.memory_space<vmem>>, vector<8x4xf32>
    %cst_270 = arith.constant dense<0.000000e+00> : vector<24x4xf32>
    %244 = tpu.matmul %242, %243, %cst_270 {dimension_numbers = #tpu.dot_dimension_numbers<[1], [0], [0], [1], [0, 0, 1, 1], [], []>} : vector<24x8xf32>, vector<8x4xf32>, vector<24x4xf32> -> vector<24x4xf32>
    %c0_271 = arith.constant 0 : index
    %c135 = arith.constant 135 : index
    %245 = vector.load %arg25[%c0_271, %c135] : memref<24x512xf32, #tpu.memory_space<vmem>>, vector<24x4xf32>
    tpu.vector_store %arg25[%c0_271, %c135], %244 {strides = array<i32>} : memref<24x512xf32, #tpu.memory_space<vmem>>, vector<24x4xf32>,
    %c0_272 = arith.constant 0 : index
    %c31 = arith.constant 31 : index
    %246 = vector.load %arg26[%c0_272, %c31] : memref<216x768xf32, #tpu.memory_space<vmem>>, vector<24x8xf32>
    %c0_273 = arith.constant 0 : index
    %c0_274 = arith.constant 0 : index
    %247 = vector.load %arg20[%c0_273, %c0_274] : memref<8x4xf32, #tpu.memory_space<vmem>>, vector<8x4xf32>
    %cst_275 = arith.constant dense<0.000000e+00> : vector<24x4xf32>
    %248 = tpu.matmul %246, %247, %cst_275 {dimension_numbers = #tpu.dot_dimension_numbers<[1], [0], [0], [1], [0, 0, 1, 1], [], []>} : vector<24x8xf32>, vector<8x4xf32>, vector<24x4xf32> -> vector<24x4xf32>
    %c0_276 = arith.constant 0 : index
    %c141 = arith.constant 141 : index
    %249 = vector.load %arg25[%c0_276, %c141] : memref<24x512xf32, #tpu.memory_space<vmem>>, vector<24x4xf32>
    tpu.vector_store %arg25[%c0_276, %c141], %248 {strides = array<i32>} : memref<24x512xf32, #tpu.memory_space<vmem>>, vector<24x4xf32>,
    %c0_277 = arith.constant 0 : index
    %c51 = arith.constant 51 : index
    %250 = vector.load %arg26[%c0_277, %c51] : memref<216x768xf32, #tpu.memory_space<vmem>>, vector<24x8xf32>
    %c0_278 = arith.constant 0 : index
    %c0_279 = arith.constant 0 : index
    %251 = vector.load %arg20[%c0_278, %c0_279] : memref<8x4xf32, #tpu.memory_space<vmem>>, vector<8x4xf32>
    %cst_280 = arith.constant dense<0.000000e+00> : vector<24x4xf32>
    %252 = tpu.matmul %250, %251, %cst_280 {dimension_numbers = #tpu.dot_dimension_numbers<[1], [0], [0], [1], [0, 0, 1, 1], [], []>} : vector<24x8xf32>, vector<8x4xf32>, vector<24x4xf32> -> vector<24x4xf32>
    %c0_281 = arith.constant 0 : index
    %c147_282 = arith.constant 147 : index
    %253 = vector.load %arg25[%c0_281, %c147_282] : memref<24x512xf32, #tpu.memory_space<vmem>>, vector<24x4xf32>
    tpu.vector_store %arg25[%c0_281, %c147_282], %252 {strides = array<i32>} : memref<24x512xf32, #tpu.memory_space<vmem>>, vector<24x4xf32>,
    %c0_283 = arith.constant 0 : index
    %c71 = arith.constant 71 : index
    %254 = vector.load %arg26[%c0_283, %c71] : memref<216x768xf32, #tpu.memory_space<vmem>>, vector<24x8xf32>
    %c0_284 = arith.constant 0 : index
    %c0_285 = arith.constant 0 : index
    %255 = vector.load %arg20[%c0_284, %c0_285] : memref<8x4xf32, #tpu.memory_space<vmem>>, vector<8x4xf32>
    %cst_286 = arith.constant dense<0.000000e+00> : vector<24x4xf32>
    %256 = tpu.matmul %254, %255, %cst_286 {dimension_numbers = #tpu.dot_dimension_numbers<[1], [0], [0], [1], [0, 0, 1, 1], [], []>} : vector<24x8xf32>, vector<8x4xf32>, vector<24x4xf32> -> vector<24x4xf32>
    %c0_287 = arith.constant 0 : index
    %c153 = arith.constant 153 : index
    %257 = vector.load %arg25[%c0_287, %c153] : memref<24x512xf32, #tpu.memory_space<vmem>>, vector<24x4xf32>
    tpu.vector_store %arg25[%c0_287, %c153], %256 {strides = array<i32>} : memref<24x512xf32, #tpu.memory_space<vmem>>, vector<24x4xf32>,
    %c0_288 = arith.constant 0 : index
    %c139_289 = arith.constant 139 : index
    %258 = vector.load %arg26[%c0_288, %c139_289] : memref<216x768xf32, #tpu.memory_space<vmem>>, vector<24x8xf32>
    %c0_290 = arith.constant 0 : index
    %c0_291 = arith.constant 0 : index
    %259 = vector.load %arg20[%c0_290, %c0_291] : memref<8x4xf32, #tpu.memory_space<vmem>>, vector<8x4xf32>
    %cst_292 = arith.constant dense<0.000000e+00> : vector<24x4xf32>
    %260 = tpu.matmul %258, %259, %cst_292 {dimension_numbers = #tpu.dot_dimension_numbers<[1], [0], [0], [1], [0, 0, 1, 1], [], []>} : vector<24x8xf32>, vector<8x4xf32>, vector<24x4xf32> -> vector<24x4xf32>
    %c0_293 = arith.constant 0 : index
    %c263 = arith.constant 263 : index
    %261 = vector.load %arg25[%c0_293, %c263] : memref<24x512xf32, #tpu.memory_space<vmem>>, vector<24x4xf32>
    tpu.vector_store %arg25[%c0_293, %c263], %260 {strides = array<i32>} : memref<24x512xf32, #tpu.memory_space<vmem>>, vector<24x4xf32>,
    %c0_294 = arith.constant 0 : index
    %c159_295 = arith.constant 159 : index
    %262 = vector.load %arg26[%c0_294, %c159_295] : memref<216x768xf32, #tpu.memory_space<vmem>>, vector<24x8xf32>
    %c0_296 = arith.constant 0 : index
    %c0_297 = arith.constant 0 : index
    %263 = vector.load %arg20[%c0_296, %c0_297] : memref<8x4xf32, #tpu.memory_space<vmem>>, vector<8x4xf32>
    %cst_298 = arith.constant dense<0.000000e+00> : vector<24x4xf32>
    %264 = tpu.matmul %262, %263, %cst_298 {dimension_numbers = #tpu.dot_dimension_numbers<[1], [0], [0], [1], [0, 0, 1, 1], [], []>} : vector<24x8xf32>, vector<8x4xf32>, vector<24x4xf32> -> vector<24x4xf32>
    %c0_299 = arith.constant 0 : index
    %c269 = arith.constant 269 : index
    %265 = vector.load %arg25[%c0_299, %c269] : memref<24x512xf32, #tpu.memory_space<vmem>>, vector<24x4xf32>
    tpu.vector_store %arg25[%c0_299, %c269], %264 {strides = array<i32>} : memref<24x512xf32, #tpu.memory_space<vmem>>, vector<24x4xf32>,
    %c0_300 = arith.constant 0 : index
    %c179_301 = arith.constant 179 : index
    %266 = vector.load %arg26[%c0_300, %c179_301] : memref<216x768xf32, #tpu.memory_space<vmem>>, vector<24x8xf32>
    %c0_302 = arith.constant 0 : index
    %c0_303 = arith.constant 0 : index
    %267 = vector.load %arg20[%c0_302, %c0_303] : memref<8x4xf32, #tpu.memory_space<vmem>>, vector<8x4xf32>
    %cst_304 = arith.constant dense<0.000000e+00> : vector<24x4xf32>
    %268 = tpu.matmul %266, %267, %cst_304 {dimension_numbers = #tpu.dot_dimension_numbers<[1], [0], [0], [1], [0, 0, 1, 1], [], []>} : vector<24x8xf32>, vector<8x4xf32>, vector<24x4xf32> -> vector<24x4xf32>
    %c0_305 = arith.constant 0 : index
    %c275 = arith.constant 275 : index
    %269 = vector.load %arg25[%c0_305, %c275] : memref<24x512xf32, #tpu.memory_space<vmem>>, vector<24x4xf32>
    tpu.vector_store %arg25[%c0_305, %c275], %268 {strides = array<i32>} : memref<24x512xf32, #tpu.memory_space<vmem>>, vector<24x4xf32>,
    %c0_306 = arith.constant 0 : index
    %c199_307 = arith.constant 199 : index
    %270 = vector.load %arg26[%c0_306, %c199_307] : memref<216x768xf32, #tpu.memory_space<vmem>>, vector<24x8xf32>
    %c0_308 = arith.constant 0 : index
    %c0_309 = arith.constant 0 : index
    %271 = vector.load %arg20[%c0_308, %c0_309] : memref<8x4xf32, #tpu.memory_space<vmem>>, vector<8x4xf32>
    %cst_310 = arith.constant dense<0.000000e+00> : vector<24x4xf32>
    %272 = tpu.matmul %270, %271, %cst_310 {dimension_numbers = #tpu.dot_dimension_numbers<[1], [0], [0], [1], [0, 0, 1, 1], [], []>} : vector<24x8xf32>, vector<8x4xf32>, vector<24x4xf32> -> vector<24x4xf32>
    %c0_311 = arith.constant 0 : index
    %c281 = arith.constant 281 : index
    %273 = vector.load %arg25[%c0_311, %c281] : memref<24x512xf32, #tpu.memory_space<vmem>>, vector<24x4xf32>
    tpu.vector_store %arg25[%c0_311, %c281], %272 {strides = array<i32>} : memref<24x512xf32, #tpu.memory_space<vmem>>, vector<24x4xf32>,
    %c0_312 = arith.constant 0 : index
    %c121 = arith.constant 121 : index
    %274 = vector.load %arg25[%c0_312, %c121] : memref<24x512xf32, #tpu.memory_space<vmem>>, vector<24x256xf32>
    %c0_313 = arith.constant 0 : index
    %c0_314 = arith.constant 0 : index
    %275 = vector.load %arg26[%c0_313, %c0_314] : memref<216x768xf32, #tpu.memory_space<vmem>>, vector<24x256xf32>
    tpu.vector_store %arg26[%c0_313, %c0_314], %274 {strides = array<i32>} : memref<216x768xf32, #tpu.memory_space<vmem>>, vector<24x256xf32>,
    %c0_315 = arith.constant 0 : index
    %c122 = arith.constant 122 : index
    %276 = vector.load %arg25[%c0_315, %c122] : memref<24x512xf32, #tpu.memory_space<vmem>>, vector<24x256xf32>
    %c24_316 = arith.constant 24 : index
    %c0_317 = arith.constant 0 : index
    %277 = vector.load %arg26[%c24_316, %c0_317] : memref<216x768xf32, #tpu.memory_space<vmem>>, vector<24x256xf32>
    tpu.vector_store %arg26[%c24_316, %c0_317], %276 {strides = array<i32>} : memref<216x768xf32, #tpu.memory_space<vmem>>, vector<24x256xf32>,
    %c0_318 = arith.constant 0 : index
    %c123 = arith.constant 123 : index
    %278 = vector.load %arg25[%c0_318, %c123] : memref<24x512xf32, #tpu.memory_space<vmem>>, vector<24x256xf32>
    %c48_319 = arith.constant 48 : index
    %c0_320 = arith.constant 0 : index
    %279 = vector.load %arg26[%c48_319, %c0_320] : memref<216x768xf32, #tpu.memory_space<vmem>>, vector<24x256xf32>
    tpu.vector_store %arg26[%c48_319, %c0_320], %278 {strides = array<i32>} : memref<216x768xf32, #tpu.memory_space<vmem>>, vector<24x256xf32>,
    %c0_321 = arith.constant 0 : index
    %c127_322 = arith.constant 127 : index
    %280 = vector.load %arg25[%c0_321, %c127_322] : memref<24x512xf32, #tpu.memory_space<vmem>>, vector<24x256xf32>
    %c72 = arith.constant 72 : index
    %c0_323 = arith.constant 0 : index
    %281 = vector.load %arg26[%c72, %c0_323] : memref<216x768xf32, #tpu.memory_space<vmem>>, vector<24x256xf32>
    tpu.vector_store %arg26[%c72, %c0_323], %280 {strides = array<i32>} : memref<216x768xf32, #tpu.memory_space<vmem>>, vector<24x256xf32>,
    %c0_324 = arith.constant 0 : index
    %c128_325 = arith.constant 128 : index
    %282 = vector.load %arg25[%c0_324, %c128_325] : memref<24x512xf32, #tpu.memory_space<vmem>>, vector<24x256xf32>
    %c96_326 = arith.constant 96 : index
    %c0_327 = arith.constant 0 : index
    %283 = vector.load %arg26[%c96_326, %c0_327] : memref<216x768xf32, #tpu.memory_space<vmem>>, vector<24x256xf32>
    tpu.vector_store %arg26[%c96_326, %c0_327], %282 {strides = array<i32>} : memref<216x768xf32, #tpu.memory_space<vmem>>, vector<24x256xf32>,
    %c0_328 = arith.constant 0 : index
    %c129_329 = arith.constant 129 : index
    %284 = vector.load %arg25[%c0_328, %c129_329] : memref<24x512xf32, #tpu.memory_space<vmem>>, vector<24x256xf32>
    %c120 = arith.constant 120 : index
    %c0_330 = arith.constant 0 : index
    %285 = vector.load %arg26[%c120, %c0_330] : memref<216x768xf32, #tpu.memory_space<vmem>>, vector<24x256xf32>
    tpu.vector_store %arg26[%c120, %c0_330], %284 {strides = array<i32>} : memref<216x768xf32, #tpu.memory_space<vmem>>, vector<24x256xf32>,
    %c0_331 = arith.constant 0 : index
    %c133 = arith.constant 133 : index
    %286 = vector.load %arg25[%c0_331, %c133] : memref<24x512xf32, #tpu.memory_space<vmem>>, vector<24x256xf32>
    %c144 = arith.constant 144 : index
    %c0_332 = arith.constant 0 : index
    %287 = vector.load %arg26[%c144, %c0_332] : memref<216x768xf32, #tpu.memory_space<vmem>>, vector<24x256xf32>
    tpu.vector_store %arg26[%c144, %c0_332], %286 {strides = array<i32>} : memref<216x768xf32, #tpu.memory_space<vmem>>, vector<24x256xf32>,
    %c0_333 = arith.constant 0 : index
    %c134 = arith.constant 134 : index
    %288 = vector.load %arg25[%c0_333, %c134] : memref<24x512xf32, #tpu.memory_space<vmem>>, vector<24x256xf32>
    %c168 = arith.constant 168 : index
    %c0_334 = arith.constant 0 : index
    %289 = vector.load %arg26[%c168, %c0_334] : memref<216x768xf32, #tpu.memory_space<vmem>>, vector<24x256xf32>
    tpu.vector_store %arg26[%c168, %c0_334], %288 {strides = array<i32>} : memref<216x768xf32, #tpu.memory_space<vmem>>, vector<24x256xf32>,
    %c0_335 = arith.constant 0 : index
    %c135_336 = arith.constant 135 : index
    %290 = vector.load %arg25[%c0_335, %c135_336] : memref<24x512xf32, #tpu.memory_space<vmem>>, vector<24x256xf32>
    %c192 = arith.constant 192 : index
    %c0_337 = arith.constant 0 : index
    %291 = vector.load %arg26[%c192, %c0_337] : memref<216x768xf32, #tpu.memory_space<vmem>>, vector<24x256xf32>
    tpu.vector_store %arg26[%c192, %c0_337], %290 {strides = array<i32>} : memref<216x768xf32, #tpu.memory_space<vmem>>, vector<24x256xf32>,
    %c0_338 = arith.constant 0 : index
    %c0_339 = arith.constant 0 : index
    %292 = vector.load %arg10[%c0_338, %c0_339] : memref<24x216xf32, #tpu.memory_space<vmem>>, vector<24x216xf32>
    %c0_340 = arith.constant 0 : index
    %c0_341 = arith.constant 0 : index
    %293 = vector.load %arg26[%c0_340, %c0_341] : memref<216x768xf32, #tpu.memory_space<vmem>>, vector<216x256xf32>
    %cst_342 = arith.constant dense<0.000000e+00> : vector<24x256xf32>
    %294 = tpu.matmul %292, %293, %cst_342 {dimension_numbers = #tpu.dot_dimension_numbers<[1], [0], [0], [1], [0, 0, 1, 1], [], []>} : vector<24x216xf32>, vector<216x256xf32>, vector<24x256xf32> -> vector<24x256xf32>
    %c0_343 = arith.constant 0 : index
    %c0_344 = arith.constant 0 : index
    %295 = vector.load %arg11[%c0_343, %c0_344] : memref<24x1xf32, #tpu.memory_space<vmem>>, vector<24x1xf32>
    %296 = vector.broadcast %295 : vector<24x1xf32> to vector<24x256xf32>
    %297 = arith.addf %294, %296 : vector<24x256xf32>
    %cst_345 = arith.constant 0.000000e+00 : f32
    %298 = vector.broadcast %cst_345 : f32 to vector<24x256xf32>
    %299 = arith.maximumf %297, %298 : vector<24x256xf32>
    %c0_346 = arith.constant 0 : index
    %c0_347 = arith.constant 0 : index
    %300 = vector.load %arg18[%c0_346, %c0_347] : memref<1x256xf32, #tpu.memory_space<vmem>>, vector<1x256xf32>
    %301 = vector.broadcast %300 : vector<1x256xf32> to vector<24x256xf32>
    %302 = arith.mulf %299, %301 : vector<24x256xf32>
    %c0_348 = arith.constant 0 : index
    %c0_349 = arith.constant 0 : index
    %303 = vector.load %arg12[%c0_348, %c0_349] : memref<16x24xf32, #tpu.memory_space<vmem>>, vector<16x24xf32>
    %cst_350 = arith.constant dense<0.000000e+00> : vector<16x256xf32>
    %304 = tpu.matmul %303, %302, %cst_350 {dimension_numbers = #tpu.dot_dimension_numbers<[1], [0], [0], [1], [0, 0, 1, 1], [], []>} : vector<16x24xf32>, vector<24x256xf32>, vector<16x256xf32> -> vector<16x256xf32>
    %c0_351 = arith.constant 0 : index
    %c0_352 = arith.constant 0 : index
    %305 = vector.load %arg13[%c0_351, %c0_352] : memref<16x1xf32, #tpu.memory_space<vmem>>, vector<16x1xf32>
    %306 = vector.broadcast %305 : vector<16x1xf32> to vector<16x256xf32>
    %307 = arith.addf %304, %306 : vector<16x256xf32>
    %cst_353 = arith.constant 0.000000e+00 : f32
    %308 = vector.broadcast %cst_353 : f32 to vector<16x256xf32>
    %309 = arith.maximumf %307, %308 : vector<16x256xf32>
    %c0_354 = arith.constant 0 : index
    %c0_355 = arith.constant 0 : index
    %310 = vector.load %arg18[%c0_354, %c0_355] : memref<1x256xf32, #tpu.memory_space<vmem>>, vector<1x256xf32>
    %311 = vector.broadcast %310 : vector<1x256xf32> to vector<16x256xf32>
    %312 = arith.mulf %309, %311 : vector<16x256xf32>
    %c0_356 = arith.constant 0 : index
    %c0_357 = arith.constant 0 : index
    %313 = vector.load %arg21[%c0_356, %c0_357] : memref<256x2xf32, #tpu.memory_space<vmem>>, vector<256x2xf32>
    %cst_358 = arith.constant dense<0.000000e+00> : vector<16x2xf32>
    %314 = tpu.matmul %312, %313, %cst_358 {dimension_numbers = #tpu.dot_dimension_numbers<[1], [0], [0], [1], [0, 0, 1, 1], [], []>} : vector<16x256xf32>, vector<256x2xf32>, vector<16x2xf32> -> vector<16x2xf32>
    %c0_359 = arith.constant 0 : index
    %c0_360 = arith.constant 0 : index
    %315 = vector.load %arg14[%c0_359, %c0_360] : memref<16x16xf32, #tpu.memory_space<vmem>>, vector<16x16xf32>
    %cst_361 = arith.constant dense<0.000000e+00> : vector<16x2xf32>
    %316 = tpu.matmul %315, %314, %cst_361 {dimension_numbers = #tpu.dot_dimension_numbers<[1], [0], [0], [1], [0, 0, 1, 1], [], []>} : vector<16x16xf32>, vector<16x2xf32>, vector<16x2xf32> -> vector<16x2xf32>
    %c0_362 = arith.constant 0 : index
    %c0_363 = arith.constant 0 : index
    %317 = vector.load %arg15[%c0_362, %c0_363] : memref<16x1xf32, #tpu.memory_space<vmem>>, vector<16x1xf32>
    %318 = vector.broadcast %317 : vector<16x1xf32> to vector<16x2xf32>
    %319 = arith.addf %316, %318 : vector<16x2xf32>
    %cst_364 = arith.constant dense<0xFF800000> : vector<2xf32>
    %320 = vector.multi_reduction <maximumf>, %319, %cst_364 [0] : vector<16x2xf32> to vector<2xf32>
    %321 = vector.shape_cast %320 : vector<2xf32> to vector<1x2xf32>
    %322 = vector.broadcast %321 : vector<1x2xf32> to vector<16x2xf32>
    %323 = arith.subf %319, %322 : vector<16x2xf32>
    %324 = math.exp %323 : vector<16x2xf32>
    %cst_365 = arith.constant dense<0.000000e+00> : vector<2xf32>
    %325 = vector.multi_reduction <add>, %324, %cst_365 [0] : vector<16x2xf32> to vector<2xf32>
    %326 = vector.shape_cast %325 : vector<2xf32> to vector<1x2xf32>
    %327 = math.log %326 : vector<1x2xf32>
    %328 = vector.broadcast %327 : vector<1x2xf32> to vector<16x2xf32>
    %329 = arith.subf %323, %328 : vector<16x2xf32>
    %c0_366 = arith.constant 0 : index
    %c0_367 = arith.constant 0 : index
    %330 = vector.load %arg22[%c0_366, %c0_367] : memref<16x2xf32, #tpu.memory_space<vmem>>, vector<16x2xf32>
    tpu.vector_store %arg22[%c0_366, %c0_367], %329 {strides = array<i32>} : memref<16x2xf32, #tpu.memory_space<vmem>>, vector<16x2xf32>,
    return
  }
  func.func @transform_0(%arg0: i32) -> (i32, i32) {
    %c0_i32 = arith.constant 0 : i32
    %c0_i32_0 = arith.constant 0 : i32
    %c0_i32_1 = arith.constant 0 : i32
    return %c0_i32, %c0_i32_0 : i32, i32
  }
  func.func @transform_1(%arg0: i32) -> (i32, i32) {
    %c0_i32 = arith.constant 0 : i32
    %c0_i32_0 = arith.constant 0 : i32
    %c0_i32_1 = arith.constant 0 : i32
    return %c0_i32, %c0_i32_0 : i32, i32
  }
  func.func @transform_2(%arg0: i32) -> (i32, i32) {
    %c0_i32 = arith.constant 0 : i32
    %c0_i32_0 = arith.constant 0 : i32
    %c0_i32_1 = arith.constant 0 : i32
    return %c0_i32, %c0_i32_0 : i32, i32
  }
  func.func @transform_3(%arg0: i32) -> (i32, i32) {
    %c0_i32 = arith.constant 0 : i32
    %c0_i32_0 = arith.constant 0 : i32
    %c0_i32_1 = arith.constant 0 : i32
    return %c0_i32, %c0_i32_0 : i32, i32
  }
  func.func @transform_4(%arg0: i32) -> (i32, i32) {
    %c0_i32 = arith.constant 0 : i32
    %c0_i32_0 = arith.constant 0 : i32
    %c0_i32_1 = arith.constant 0 : i32
    return %c0_i32, %c0_i32_0 : i32, i32
  }
  func.func @transform_5(%arg0: i32) -> (i32, i32) {
    %c0_i32 = arith.constant 0 : i32
    %c0_i32_0 = arith.constant 0 : i32
    %c0_i32_1 = arith.constant 0 : i32
    return %c0_i32, %c0_i32_0 : i32, i32
  }
  func.func @transform_6(%arg0: i32) -> (i32, i32) {
    %c0_i32 = arith.constant 0 : i32
    %c0_i32_0 = arith.constant 0 : i32
    %c0_i32_1 = arith.constant 0 : i32
    return %c0_i32, %c0_i32_0 : i32, i32
  }
  func.func @transform_7(%arg0: i32) -> (i32, i32) {
    %c0_i32 = arith.constant 0 : i32
    %c0_i32_0 = arith.constant 0 : i32
    %c0_i32_1 = arith.constant 0 : i32
    return %c0_i32, %c0_i32_0 : i32, i32
  }
  func.func @transform_8(%arg0: i32) -> (i32, i32) {
    %c0_i32 = arith.constant 0 : i32
    %c0_i32_0 = arith.constant 0 : i32
    %c0_i32_1 = arith.constant 0 : i32
    return %c0_i32, %c0_i32_0 : i32, i32
  }
  func.func @transform_9(%arg0: i32) -> (i32, i32) {
    %c0_i32 = arith.constant 0 : i32
    %c0_i32_0 = arith.constant 0 : i32
    %c0_i32_1 = arith.constant 0 : i32
    return %c0_i32, %c0_i32_0 : i32, i32
  }
  func.func @transform_10(%arg0: i32) -> (i32, i32) {
    %c0_i32 = arith.constant 0 : i32
    %c0_i32_0 = arith.constant 0 : i32
    %c0_i32_1 = arith.constant 0 : i32
    return %c0_i32, %c0_i32_0 : i32, i32
  }
  func.func @transform_11(%arg0: i32) -> (i32, i32) {
    %c0_i32 = arith.constant 0 : i32
    %c0_i32_0 = arith.constant 0 : i32
    %c0_i32_1 = arith.constant 0 : i32
    return %c0_i32, %c0_i32_0 : i32, i32
  }
  func.func @transform_12(%arg0: i32) -> (i32, i32) {
    %c0_i32 = arith.constant 0 : i32
    %c0_i32_0 = arith.constant 0 : i32
    %c0_i32_1 = arith.constant 0 : i32
    return %c0_i32, %c0_i32_0 : i32, i32
  }
  func.func @transform_13(%arg0: i32) -> (i32, i32) {
    %c0_i32 = arith.constant 0 : i32
    %c0_i32_0 = arith.constant 0 : i32
    %c0_i32_1 = arith.constant 0 : i32
    return %c0_i32, %c0_i32_0 : i32, i32
  }
  func.func @transform_14(%arg0: i32) -> (i32, i32) {
    %c0_i32 = arith.constant 0 : i32
    %c0_i32_0 = arith.constant 0 : i32
    %c0_i32_1 = arith.constant 0 : i32
    return %c0_i32, %c0_i32_0 : i32, i32
  }
  func.func @transform_15(%arg0: i32) -> (i32, i32) {
    %c0_i32 = arith.constant 0 : i32
    %c0_i32_0 = arith.constant 0 : i32
    %c0_i32_1 = arith.constant 0 : i32
    return %c0_i32, %c0_i32_0 : i32, i32
  }
  func.func @transform_16(%arg0: i32) -> (i32, i32) {
    %c0_i32 = arith.constant 0 : i32
    %c0_i32_0 = arith.constant 0 : i32
    %c0_i32_1 = arith.constant 0 : i32
    return %c0_i32, %c0_i32_0 : i32, i32
  }
  func.func @transform_17(%arg0: i32) -> (i32, i32) {
    %c0_i32 = arith.constant 0 : i32
    %c0_i32_0 = arith.constant 0 : i32
    %c0_i32_1 = arith.constant 0 : i32
    return %c0_i32, %c0_i32_0 : i32, i32
  }
  func.func @transform_18(%arg0: i32) -> (i32, i32) {
    %c0_i32 = arith.constant 0 : i32
    %c0_i32_0 = arith.constant 0 : i32
    %c0_i32_1 = arith.constant 0 : i32
    return %c0_i32, %c0_i32_0 : i32, i32
  }
  func.func @transform_19(%arg0: i32) -> (i32, i32) {
    %c0_i32 = arith.constant 0 : i32
    %c0_i32_0 = arith.constant 0 : i32
    %c0_i32_1 = arith.constant 0 : i32
    return %c0_i32, %c0_i32_0 : i32, i32
  }
  func.func @transform_20(%arg0: i32) -> (i32, i32) {
    %c0_i32 = arith.constant 0 : i32
    %c0_i32_0 = arith.constant 0 : i32
    %c0_i32_1 = arith.constant 0 : i32
    return %c0_i32, %c0_i32_0 : i32, i32
  }
  func.func @transform_21(%arg0: i32) -> (i32, i32) {
    %c0_i32 = arith.constant 0 : i32
    %c0_i32_0 = arith.constant 0 : i32
    %c0_i32_1 = arith.constant 0 : i32
    return %c0_i32, %c0_i32_0 : i32, i32
  }
}

</mosaic_0001>

<llo_original>
// kernel: net_forward.1
$region0: #{net_forward.1}
  #allocation0 [shape = 'u32[]', space=smem, size = 0x4, offset = 0x4, fixed_abs, tag = 'smem constant byte address 0x4 - core index']
  #allocation1 [shape = 'u32[144,128]{1,0:T(1,128)}', space=vmem, size = 0x12000, scoped, tag = 'internal scratch']
  #allocation2 [shape = 'f32[16,1024]{1,0:T(8,128)}', space=vmem, size = 0x10000, scoped, tag = 'scratch operand']
  #allocation3 [shape = 'f32[24,512]{1,0:T(8,128)}', space=vmem, size = 0xc000, scoped, tag = 'scratch operand']
  #allocation4 [shape = 'f32[24,512]{1,0:T(8,128)}', space=vmem, size = 0xc000, scoped, tag = 'scratch operand']
  #allocation5 [shape = 'f32[216,768]{1,0:T(8,128)}', space=vmem, size = 0xa2000, scoped, tag = 'scratch operand']
  %s0 = inlined_call_operand.vmem [shape: f32[1,1024], index: 0, kind: input, shape index: {}]
  %s1 = inlined_call_operand.vmem [shape: f32[8,9], index: 1, kind: input, shape index: {}]
  %s2 = inlined_call_operand.vmem [shape: f32[8,1], index: 2, kind: input, shape index: {}]
  %s3 = inlined_call_operand.vmem [shape: f32[16,72], index: 3, kind: input, shape index: {}]
  %s4 = inlined_call_operand.vmem [shape: f32[16,1], index: 4, kind: input, shape index: {}]
  %s5 = inlined_call_operand.vmem [shape: f32[16,144], index: 5, kind: input, shape index: {}]
  %s6 = inlined_call_operand.vmem [shape: f32[16,1], index: 6, kind: input, shape index: {}]
  %s7 = inlined_call_operand.vmem [shape: f32[24,144], index: 7, kind: input, shape index: {}]
  %s8 = inlined_call_operand.vmem [shape: f32[24,1], index: 8, kind: input, shape index: {}]
  %s9 = inlined_call_operand.vmem [shape: f32[24,216], index: 9, kind: input, shape index: {}]
  %s10 = inlined_call_operand.vmem [shape: f32[24,1], index: 10, kind: input, shape index: {}]
  %s11 = inlined_call_operand.vmem [shape: f32[16,24], index: 11, kind: input, shape index: {}]
  %s12 = inlined_call_operand.vmem [shape: f32[16,1], index: 12, kind: input, shape index: {}]
  %s13 = inlined_call_operand.vmem [shape: f32[16,16], index: 13, kind: input, shape index: {}]
  %s14 = inlined_call_operand.vmem [shape: f32[16,1], index: 14, kind: input, shape index: {}]
  %s15 = inlined_call_operand.vmem [shape: f32[1,768], index: 15, kind: input, shape index: {}]
  %s16 = inlined_call_operand.vmem [shape: f32[1,256], index: 16, kind: input, shape index: {}]
  %s17 = inlined_call_operand.vmem [shape: f32[1,256], index: 17, kind: input, shape index: {}]
  %s18 = inlined_call_operand.vmem [shape: f32[16,8], index: 18, kind: input, shape index: {}]
  %s19 = inlined_call_operand.vmem [shape: f32[8,4], index: 19, kind: input, shape index: {}]
  %s20 = inlined_call_operand.vmem [shape: f32[256,2], index: 20, kind: input, shape index: {}]
  %s21 = inlined_call_operand.vmem [shape: f32[16,2], index: 21, kind: output, shape index: {}]
  %s22 = sld [smem:[#allocation0]]
  $region94: #{net_forward.1} parent=0
    _
  %s24 = ssub.s32 1, %s22
  %s25 = scalar_select 0, %s24, %s22
  // Predicated region
  $region2: #{net_forward.1} parent=0 // pred_check
    _
  $region3: #{net_forward.1} parent=0 // pred_check_branch
    %27 = sbr.rel (0) target = $region5
  $region4: #{net_forward.1} parent=0 // pred_region
    _
  $region5: #{net_forward.1} parent=0 // pred_fallthru
    _
  // Predicated region
  $region6: #{net_forward.1} parent=0 // pred_check
    _
  $region7: #{net_forward.1} parent=0 // pred_check_branch
    %29 = sbr.rel (0) target = $region9
  $region8: #{net_forward.1} parent=0 // pred_region
    _
  $region9: #{net_forward.1} parent=0 // pred_fallthru
    _
  // Predicated region
  $region10: #{net_forward.1} parent=0 // pred_check
    _
  $region11: #{net_forward.1} parent=0 // pred_check_branch
    %31 = sbr.rel (0) target = $region13
  $region12: #{net_forward.1} parent=0 // pred_region
    _
  $region13: #{net_forward.1} parent=0 // pred_fallthru
    _
  // Predicated region
  $region14: #{net_forward.1} parent=0 // pred_check
    _
  $region15: #{net_forward.1} parent=0 // pred_check_branch
    %33 = sbr.rel (0) target = $region17
  $region16: #{net_forward.1} parent=0 // pred_region
    _
  $region17: #{net_forward.1} parent=0 // pred_fallthru
    _
  // Predicated region
  $region18: #{net_forward.1} parent=0 // pred_check
    _
  $region19: #{net_forward.1} parent=0 // pred_check_branch
    %35 = sbr.rel (0) target = $region21
  $region20: #{net_forward.1} parent=0 // pred_region
    _
  $region21: #{net_forward.1} parent=0 // pred_fallthru
    _
  // Predicated region
  $region22: #{net_forward.1} parent=0 // pred_check
    _
  $region23: #{net_forward.1} parent=0 // pred_check_branch
    %37 = sbr.rel (0) target = $region25
  $region24: #{net_forward.1} parent=0 // pred_region
    _
  $region25: #{net_forward.1} parent=0 // pred_fallthru
    _
  // Predicated region
  $region26: #{net_forward.1} parent=0 // pred_check
    _
  $region27: #{net_forward.1} parent=0 // pred_check_branch
    %39 = sbr.rel (0) target = $region29
  $region28: #{net_forward.1} parent=0 // pred_region
    _
  $region29: #{net_forward.1} parent=0 // pred_fallthru
    _
  // Predicated region
  $region30: #{net_forward.1} parent=0 // pred_check
    _
  $region31: #{net_forward.1} parent=0 // pred_check_branch
    %41 = sbr.rel (0) target = $region33
  $region32: #{net_forward.1} parent=0 // pred_region
    _
  $region33: #{net_forward.1} parent=0 // pred_fallthru
    _
  // Predicated region
  $region34: #{net_forward.1} parent=0 // pred_check
    _
  $region35: #{net_forward.1} parent=0 // pred_check_branch
    %43 = sbr.rel (0) target = $region37
  $region36: #{net_forward.1} parent=0 // pred_region
    _
  $region37: #{net_forward.1} parent=0 // pred_fallthru
    _
  // Predicated region
  $region38: #{net_forward.1} parent=0 // pred_check
    _
  $region39: #{net_forward.1} parent=0 // pred_check_branch
    %45 = sbr.rel (0) target = $region41
  $region40: #{net_forward.1} parent=0 // pred_region
    _
  $region41: #{net_forward.1} parent=0 // pred_fallthru
    _
  // Predicated region
  $region42: #{net_forward.1} parent=0 // pred_check
    _
  $region43: #{net_forward.1} parent=0 // pred_check_branch
    %47 = sbr.rel (0) target = $region45
  $region44: #{net_forward.1} parent=0 // pred_region
    _
  $region45: #{net_forward.1} parent=0 // pred_fallthru
    _
  // Predicated region
  $region46: #{net_forward.1} parent=0 // pred_check
    _
  $region47: #{net_forward.1} parent=0 // pred_check_branch
    %49 = sbr.rel (0) target = $region49
  $region48: #{net_forward.1} parent=0 // pred_region
    _
  $region49: #{net_forward.1} parent=0 // pred_fallthru
    _
  // Predicated region
  $region50: #{net_forward.1} parent=0 // pred_check
    _
  $region51: #{net_forward.1} parent=0 // pred_check_branch
    %51 = sbr.rel (0) target = $region53
  $region52: #{net_forward.1} parent=0 // pred_region
    _
  $region53: #{net_forward.1} parent=0 // pred_fallthru
    _
  // Predicated region
  $region54: #{net_forward.1} parent=0 // pred_check
    _
  $region55: #{net_forward.1} parent=0 // pred_check_branch
    %53 = sbr.rel (0) target = $region57
  $region56: #{net_forward.1} parent=0 // pred_region
    _
  $region57: #{net_forward.1} parent=0 // pred_fallthru
    _
  // Predicated region
  $region58: #{net_forward.1} parent=0 // pred_check
    _
  $region59: #{net_forward.1} parent=0 // pred_check_branch
    %55 = sbr.rel (0) target = $region61
  $region60: #{net_forward.1} parent=0 // pred_region
    _
  $region61: #{net_forward.1} parent=0 // pred_fallthru
    _
  // Predicated region
  $region62: #{net_forward.1} parent=0 // pred_check
    _
  $region63: #{net_forward.1} parent=0 // pred_check_branch
    %57 = sbr.rel (0) target = $region65
  $region64: #{net_forward.1} parent=0 // pred_region
    _
  $region65: #{net_forward.1} parent=0 // pred_fallthru
    _
  // Predicated region
  $region66: #{net_forward.1} parent=0 // pred_check
    _
  $region67: #{net_forward.1} parent=0 // pred_check_branch
    %59 = sbr.rel (0) target = $region69
  $region68: #{net_forward.1} parent=0 // pred_region
    _
  $region69: #{net_forward.1} parent=0 // pred_fallthru
    _
  // Predicated region
  $region70: #{net_forward.1} parent=0 // pred_check
    _
  $region71: #{net_forward.1} parent=0 // pred_check_branch
    %61 = sbr.rel (0) target = $region73
  $region72: #{net_forward.1} parent=0 // pred_region
    _
  $region73: #{net_forward.1} parent=0 // pred_fallthru
    _
  // Predicated region
  $region74: #{net_forward.1} parent=0 // pred_check
    _
  $region75: #{net_forward.1} parent=0 // pred_check_branch
    %63 = sbr.rel (0) target = $region77
  $region76: #{net_forward.1} parent=0 // pred_region
    _
  $region77: #{net_forward.1} parent=0 // pred_fallthru
    _
  // Predicated region
  $region78: #{net_forward.1} parent=0 // pred_check
    _
  $region79: #{net_forward.1} parent=0 // pred_check_branch
    %65 = sbr.rel (0) target = $region81
  $region80: #{net_forward.1} parent=0 // pred_region
    _
  $region81: #{net_forward.1} parent=0 // pred_fallthru
    _
  // Predicated region
  $region82: #{net_forward.1} parent=0 // pred_check
    _
  $region83: #{net_forward.1} parent=0 // pred_check_branch
    %67 = sbr.rel (0) target = $region85
  $region84: #{net_forward.1} parent=0 // pred_region
    _
  $region85: #{net_forward.1} parent=0 // pred_fallthru
    _
  %68 = vst [vmem:[#allocation2] sm:$0xff] 0.0
  %69 = vst [vmem:[#allocation2 + $0x40] sm:$0xff] 0.0
  %70 = vst [vmem:[#allocation2 + $0x38] sm:$0xff] 0.0
  %71 = vst [vmem:[#allocation2 + $0x78] sm:$0xff] 0.0
  %72 = vst [vmem:[#allocation3] sm:$0xff] 0.0
  %73 = vst [vmem:[#allocation3 + $0x8] sm:$0xff] 0.0
  %74 = vst [vmem:[#allocation3 + $0x10] sm:$0xff] 0.0
  %75 = vst [vmem:[#allocation3 + $0x18] sm:$0xff] 0.0
  %76 = vst [vmem:[#allocation3 + $0x20] sm:$0xff] 0.0
  %77 = vst [vmem:[#allocation3 + $0x28] sm:$0xff] 0.0
  %78 = vst [vmem:[#allocation3 + $0x30] sm:$0xff] 0.0
  %79 = vst [vmem:[#allocation3 + $0x38] sm:$0xff] 0.0
  %80 = vst [vmem:[#allocation3 + $0x40] sm:$0xff] 0.0
  %81 = vst [vmem:[#allocation3 + $0x48] sm:$0xff] 0.0
  %82 = vst [vmem:[#allocation3 + $0x50] sm:$0xff] 0.0
  %83 = vst [vmem:[#allocation3 + $0x58] sm:$0xff] 0.0
  %84 = vst [vmem:[#allocation4] sm:$0xff] 0.0
  %85 = vst [vmem:[#allocation4 + $0x8] sm:$0xff] 0.0
  %86 = vst [vmem:[#allocation4 + $0x10] sm:$0xff] 0.0
  %87 = vst [vmem:[#allocation4 + $0x18] sm:$0xff] 0.0
  %88 = vst [vmem:[#allocation4 + $0x20] sm:$0xff] 0.0
  %89 = vst [vmem:[#allocation4 + $0x28] sm:$0xff] 0.0
  %90 = vst [vmem:[#allocation4 + $0x30] sm:$0xff] 0.0
  %91 = vst [vmem:[#allocation4 + $0x38] sm:$0xff] 0.0
  %92 = vst [vmem:[#allocation4 + $0x40] sm:$0xff] 0.0
  %93 = vst [vmem:[#allocation4 + $0x48] sm:$0xff] 0.0
  %94 = vst [vmem:[#allocation4 + $0x50] sm:$0xff] 0.0
  %95 = vst [vmem:[#allocation4 + $0x58] sm:$0xff] 0.0
  %v96 = vld [vmem:[%s1] sm:$0xff]
  %v97 = vld [vmem:[%s0] sm:$0x7f]
  %99 = vset.pattern.permute.xlu0 0
  %100 = vperm.xlu0 %99, %v96
  %v101 = vpop.permute.xlu0 %100
  %v104 = vlaneseq
  %v105 = vshrl.u32 %v104, 7
  %v106 = vsub.s32 0, %v105
  %v107 = vrot.slane %v97, %v106
  %v108 = vlaneseq
  %v109 = vshrl.u32 %v108, 7
  %v110 = vsub.s32 1, %v109
  %v111 = vrot.slane %v97, %v110
  %v112 = vlaneseq
  %v113 = vshrl.u32 %v112, 7
  %v114 = vsub.s32 2, %v113
  %v115 = vrot.slane %v97, %v114
  %v116 = vlaneseq
  %v117 = vshrl.u32 %v116, 7
  %v118 = vsub.s32 3, %v117
  %v119 = vrot.slane %v97, %v118
  %v120 = vlaneseq
  %v121 = vshrl.u32 %v120, 7
  %v122 = vsub.s32 4, %v121
  %v123 = vrot.slane %v97, %v122
  %v124 = vlaneseq
  %v125 = vshrl.u32 %v124, 7
  %v126 = vsub.s32 5, %v125
  %v127 = vrot.slane %v97, %v126
  %v128 = vlaneseq
  %v129 = vshrl.u32 %v128, 7
  %v130 = vsub.s32 6, %v129
  %v131 = vrot.slane %v97, %v130
  %v139 = vmul.f32 %v101, %v107
  %v140 = vmul.f32 %v101, %v111
  %v141 = vmul.f32 %v101, %v115
  %v142 = vmul.f32 %v101, %v119
  %v143 = vmul.f32 %v101, %v123
  %v144 = vmul.f32 %v101, %v127
  %v145 = vmul.f32 %v101, %v131
  %v146 = vadd.f32 %v139, 0.0
  %v147 = vadd.f32 %v140, 0.0
  %v148 = vadd.f32 %v141, 0.0
  %v149 = vadd.f32 %v142, 0.0
  %v150 = vadd.f32 %v143, 0.0
  %v151 = vadd.f32 %v144, 0.0
  %v152 = vadd.f32 %v145, 0.0
  %153 = vset.pattern.permute.xlu0 1
  %154 = vperm.xlu0 %153, %v96
  %v155 = vpop.permute.xlu0 %154
  %v157 = vmul.f32 %v155, %v107
  %v158 = vmul.f32 %v155, %v111
  %v159 = vmul.f32 %v155, %v115
  %v160 = vmul.f32 %v155, %v119
  %v161 = vmul.f32 %v155, %v123
  %v162 = vmul.f32 %v155, %v127
  %v163 = vmul.f32 %v155, %v131
  %171 = vrot.lane.b32.xlu0 %v157, 127
  %v172 = vpop.permute.xlu0 %171
  %173 = vrot.lane.b32.xlu0 %v158, 127
  %v174 = vpop.permute.xlu0 %173
  %175 = vrot.lane.b32.xlu0 %v159, 127
  %v176 = vpop.permute.xlu0 %175
  %177 = vrot.lane.b32.xlu0 %v160, 127
  %v178 = vpop.permute.xlu0 %177
  %179 = vrot.lane.b32.xlu0 %v161, 127
  %v180 = vpop.permute.xlu0 %179
  %181 = vrot.lane.b32.xlu0 %v162, 127
  %v182 = vpop.permute.xlu0 %181
  %183 = vrot.lane.b32.xlu0 %v163, 127
  %v184 = vpop.permute.xlu0 %183
  %vm185 = vcmask 1039360
  %v186 = vsel %vm185, %v172, %v174
  %v187 = vsel %vm185, %v174, %v176
  %v188 = vsel %vm185, %v176, %v178
  %v189 = vsel %vm185, %v178, %v180
  %v190 = vsel %vm185, %v180, %v182
  %v191 = vsel %vm185, %v182, %v184
  %v199 = vadd.f32 %v146, %v186
  %v200 = vadd.f32 %v147, %v187
  %v201 = vadd.f32 %v148, %v188
  %v202 = vadd.f32 %v149, %v189
  %v203 = vadd.f32 %v150, %v190
  %v204 = vadd.f32 %v151, %v191
  %v205 = vadd.f32 %v152, %v184
  %206 = vset.pattern.permute.xlu0 2
  %207 = vperm.xlu0 %206, %v96
  %v208 = vpop.permute.xlu0 %207
  %v210 = vmul.f32 %v208, %v107
  %v211 = vmul.f32 %v208, %v111
  %v212 = vmul.f32 %v208, %v115
  %v213 = vmul.f32 %v208, %v119
  %v214 = vmul.f32 %v208, %v123
  %v215 = vmul.f32 %v208, %v127
  %v216 = vmul.f32 %v208, %v131
  %224 = vrot.lane.b32.xlu0 %v210, 126
  %v225 = vpop.permute.xlu0 %224
  %226 = vrot.lane.b32.xlu0 %v211, 126
  %v227 = vpop.permute.xlu0 %226
  %228 = vrot.lane.b32.xlu0 %v212, 126
  %v229 = vpop.permute.xlu0 %228
  %230 = vrot.lane.b32.xlu0 %v213, 126
  %v231 = vpop.permute.xlu0 %230
  %232 = vrot.lane.b32.xlu0 %v214, 126
  %v233 = vpop.permute.xlu0 %232
  %234 = vrot.lane.b32.xlu0 %v215, 126
  %v235 = vpop.permute.xlu0 %234
  %236 = vrot.lane.b32.xlu0 %v216, 126
  %v237 = vpop.permute.xlu0 %236
  %vm238 = vcmask 1031168
  %v239 = vsel %vm238, %v225, %v227
  %v240 = vsel %vm238, %v227, %v229
  %v241 = vsel %vm238, %v229, %v231
  %v242 = vsel %vm238, %v231, %v233
  %v243 = vsel %vm238, %v233, %v235
  %v244 = vsel %vm238, %v235, %v237
  %v252 = vadd.f32 %v199, %v239
  %v253 = vadd.f32 %v200, %v240
  %v254 = vadd.f32 %v201, %v241
  %v255 = vadd.f32 %v202, %v242
  %v256 = vadd.f32 %v203, %v243
  %v257 = vadd.f32 %v204, %v244
  %v258 = vadd.f32 %v205, %v237
  %259 = vset.pattern.permute.xlu0 3
  %260 = vperm.xlu0 %259, %v96
  %v261 = vpop.permute.xlu0 %260
  %v263 = vmul.f32 %v261, %v107
  %v264 = vmul.f32 %v261, %v111
  %v265 = vmul.f32 %v261, %v115
  %v266 = vmul.f32 %v261, %v119
  %v267 = vmul.f32 %v261, %v123
  %v268 = vmul.f32 %v261, %v127
  %v269 = vmul.f32 %v261, %v131
  %277 = vrot.lane.b32.xlu0 %v263, 110
  %v278 = vpop.permute.xlu0 %277
  %279 = vrot.lane.b32.xlu0 %v264, 110
  %v280 = vpop.permute.xlu0 %279
  %281 = vrot.lane.b32.xlu0 %v265, 110
  %v282 = vpop.permute.xlu0 %281
  %283 = vrot.lane.b32.xlu0 %v266, 110
  %v284 = vpop.permute.xlu0 %283
  %285 = vrot.lane.b32.xlu0 %v267, 110
  %v286 = vpop.permute.xlu0 %285
  %287 = vrot.lane.b32.xlu0 %v268, 110
  %v288 = vpop.permute.xlu0 %287
  %289 = vrot.lane.b32.xlu0 %v269, 110
  %v290 = vpop.permute.xlu0 %289
  %vm291 = vcmask 900096
  %v292 = vsel %vm291, %v278, %v280
  %v293 = vsel %vm291, %v280, %v282
  %v294 = vsel %vm291, %v282, %v284
  %v295 = vsel %vm291, %v284, %v286
  %v296 = vsel %vm291, %v286, %v288
  %v297 = vsel %vm291, %v288, %v290
  %v305 = vadd.f32 %v252, %v292
  %v306 = vadd.f32 %v253, %v293
  %v307 = vadd.f32 %v254, %v294
  %v308 = vadd.f32 %v255, %v295
  %v309 = vadd.f32 %v256, %v296
  %v310 = vadd.f32 %v257, %v297
  %v311 = vadd.f32 %v258, %v290
  %v312 = vld [vmem:[%s0 + $0x1] sm:$0x3f]
  %313 = vset.pattern.permute.xlu0 4
  %314 = vperm.xlu0 %313, %v96
  %v315 = vpop.permute.xlu0 %314
  %v318 = vlaneseq
  %v319 = vshrl.u32 %v318, 7
  %v320 = vsub.s32 0, %v319
  %v321 = vrot.slane %v312, %v320
  %v322 = vlaneseq
  %v323 = vshrl.u32 %v322, 7
  %v324 = vsub.s32 1, %v323
  %v325 = vrot.slane %v312, %v324
  %v326 = vlaneseq
  %v327 = vshrl.u32 %v326, 7
  %v328 = vsub.s32 2, %v327
  %v329 = vrot.slane %v312, %v328
  %v330 = vlaneseq
  %v331 = vshrl.u32 %v330, 7
  %v332 = vsub.s32 3, %v331
  %v333 = vrot.slane %v312, %v332
  %v334 = vlaneseq
  %v335 = vshrl.u32 %v334, 7
  %v336 = vsub.s32 4, %v335
  %v337 = vrot.slane %v312, %v336
  %v338 = vlaneseq
  %v339 = vshrl.u32 %v338, 7
  %v340 = vsub.s32 5, %v339
  %v341 = vrot.slane %v312, %v340
  %v348 = vmul.f32 %v315, %v321
  %v349 = vmul.f32 %v315, %v325
  %v350 = vmul.f32 %v315, %v329
  %v351 = vmul.f32 %v315, %v333
  %v352 = vmul.f32 %v315, %v337
  %v353 = vmul.f32 %v315, %v341
  %360 = vrot.lane.b32.xlu0 %v348, 109
  %v361 = vpop.permute.xlu0 %360
  %362 = vrot.lane.b32.xlu0 %v349, 109
  %v363 = vpop.permute.xlu0 %362
  %364 = vrot.lane.b32.xlu0 %v350, 109
  %v365 = vpop.permute.xlu0 %364
  %366 = vrot.lane.b32.xlu0 %v351, 109
  %v367 = vpop.permute.xlu0 %366
  %368 = vrot.lane.b32.xlu0 %v352, 109
  %v369 = vpop.permute.xlu0 %368
  %370 = vrot.lane.b32.xlu0 %v353, 109
  %v371 = vpop.permute.xlu0 %370
  %vm372 = vcmask 891904
  %v373 = vsel %vm372, %v361, %v363
  %v374 = vsel %vm372, %v363, %v365
  %v375 = vsel %vm372, %v365, %v367
  %v376 = vsel %vm372, %v367, %v369
  %v377 = vsel %vm372, %v369, %v371
  %v385 = vadd.f32 %v305, %v361
  %v386 = vadd.f32 %v306, %v373
  %v387 = vadd.f32 %v307, %v374
  %v388 = vadd.f32 %v308, %v375
  %v389 = vadd.f32 %v309, %v376
  %v390 = vadd.f32 %v310, %v377
  %v391 = vadd.f32 %v311, %v371
  %v392 = vld [vmem:[%s0 + $0x1] sm:$0x7f]
  %393 = vset.pattern.permute.xlu0 5
  %394 = vperm.xlu0 %393, %v96
  %v395 = vpop.permute.xlu0 %394
  %v398 = vlaneseq
  %v399 = vshrl.u32 %v398, 7
  %v400 = vsub.s32 0, %v399
  %v401 = vrot.slane %v392, %v400
  %v402 = vlaneseq
  %v403 = vshrl.u32 %v402, 7
  %v404 = vsub.s32 1, %v403
  %v405 = vrot.slane %v392, %v404
  %v406 = vlaneseq
  %v407 = vshrl.u32 %v406, 7
  %v408 = vsub.s32 2, %v407
  %v409 = vrot.slane %v392, %v408
  %v410 = vlaneseq
  %v411 = vshrl.u32 %v410, 7
  %v412 = vsub.s32 3, %v411
  %v413 = vrot.slane %v392, %v412
  %v414 = vlaneseq
  %v415 = vshrl.u32 %v414, 7
  %v416 = vsub.s32 4, %v415
  %v417 = vrot.slane %v392, %v416
  %v418 = vlaneseq
  %v419 = vshrl.u32 %v418, 7
  %v420 = vsub.s32 5, %v419
  %v421 = vrot.slane %v392, %v420
  %v422 = vlaneseq
  %v423 = vshrl.u32 %v422, 7
  %v424 = vsub.s32 6, %v423
  %v425 = vrot.slane %v392, %v424
  %v433 = vmul.f32 %v395, %v401
  %v434 = vmul.f32 %v395, %v405
  %v435 = vmul.f32 %v395, %v409
  %v436 = vmul.f32 %v395, %v413
  %v437 = vmul.f32 %v395, %v417
  %v438 = vmul.f32 %v395, %v421
  %v439 = vmul.f32 %v395, %v425
  %447 = vrot.lane.b32.xlu0 %v433, 108
  %v448 = vpop.permute.xlu0 %447
  %449 = vrot.lane.b32.xlu0 %v434, 108
  %v450 = vpop.permute.xlu0 %449
  %451 = vrot.lane.b32.xlu0 %v435, 108
  %v452 = vpop.permute.xlu0 %451
  %453 = vrot.lane.b32.xlu0 %v436, 108
  %v454 = vpop.permute.xlu0 %453
  %455 = vrot.lane.b32.xlu0 %v437, 108
  %v456 = vpop.permute.xlu0 %455
  %457 = vrot.lane.b32.xlu0 %v438, 108
  %v458 = vpop.permute.xlu0 %457
  %459 = vrot.lane.b32.xlu0 %v439, 108
  %v460 = vpop.permute.xlu0 %459
  %vm461 = vcmask 883712
  %v462 = vsel %vm461, %v448, %v450
  %v463 = vsel %vm461, %v450, %v452
  %v464 = vsel %vm461, %v452, %v454
  %v465 = vsel %vm461, %v454, %v456
  %v466 = vsel %vm461, %v456, %v458
  %v467 = vsel %vm461, %v458, %v460
  %v475 = vadd.f32 %v385, %v448
  %v476 = vadd.f32 %v386, %v462
  %v477 = vadd.f32 %v387, %v463
  %v478 = vadd.f32 %v388, %v464
  %v479 = vadd.f32 %v389, %v465
  %v480 = vadd.f32 %v390, %v466
  %v481 = vadd.f32 %v391, %v467
  %482 = vset.pattern.permute.xlu0 6
  %483 = vperm.xlu0 %482, %v96
  %v484 = vpop.permute.xlu0 %483
  %v486 = vmul.f32 %v484, %v401
  %v487 = vmul.f32 %v484, %v405
  %v488 = vmul.f32 %v484, %v409
  %v489 = vmul.f32 %v484, %v413
  %v490 = vmul.f32 %v484, %v417
  %v491 = vmul.f32 %v484, %v421
  %v492 = vmul.f32 %v484, %v425
  %500 = vrot.lane.b32.xlu0 %v486, 92
  %v501 = vpop.permute.xlu0 %500
  %502 = vrot.lane.b32.xlu0 %v487, 92
  %v503 = vpop.permute.xlu0 %502
  %504 = vrot.lane.b32.xlu0 %v488, 92
  %v505 = vpop.permute.xlu0 %504
  %506 = vrot.lane.b32.xlu0 %v489, 92
  %v507 = vpop.permute.xlu0 %506
  %508 = vrot.lane.b32.xlu0 %v490, 92
  %v509 = vpop.permute.xlu0 %508
  %510 = vrot.lane.b32.xlu0 %v491, 92
  %v511 = vpop.permute.xlu0 %510
  %512 = vrot.lane.b32.xlu0 %v492, 92
  %v513 = vpop.permute.xlu0 %512
  %vm514 = vcmask 752640
  %v515 = vsel %vm514, %v501, %v503
  %v516 = vsel %vm514, %v503, %v505
  %v517 = vsel %vm514, %v505, %v507
  %v518 = vsel %vm514, %v507, %v509
  %v519 = vsel %vm514, %v509, %v511
  %v520 = vsel %vm514, %v511, %v513
  %v528 = vadd.f32 %v475, %v501
  %v529 = vadd.f32 %v476, %v515
  %v530 = vadd.f32 %v477, %v516
  %v531 = vadd.f32 %v478, %v517
  %v532 = vadd.f32 %v479, %v518
  %v533 = vadd.f32 %v480, %v519
  %v534 = vadd.f32 %v481, %v520
  %535 = vset.pattern.permute.xlu0 7
  %536 = vperm.xlu0 %535, %v96
  %v537 = vpop.permute.xlu0 %536
  %v539 = vmul.f32 %v537, %v401
  %v540 = vmul.f32 %v537, %v405
  %v541 = vmul.f32 %v537, %v409
  %v542 = vmul.f32 %v537, %v413
  %v543 = vmul.f32 %v537, %v417
  %v544 = vmul.f32 %v537, %v421
  %v545 = vmul.f32 %v537, %v425
  %553 = vrot.lane.b32.xlu0 %v539, 91
  %v554 = vpop.permute.xlu0 %553
  %555 = vrot.lane.b32.xlu0 %v540, 91
  %v556 = vpop.permute.xlu0 %555
  %557 = vrot.lane.b32.xlu0 %v541, 91
  %v558 = vpop.permute.xlu0 %557
  %559 = vrot.lane.b32.xlu0 %v542, 91
  %v560 = vpop.permute.xlu0 %559
  %561 = vrot.lane.b32.xlu0 %v543, 91
  %v562 = vpop.permute.xlu0 %561
  %563 = vrot.lane.b32.xlu0 %v544, 91
  %v564 = vpop.permute.xlu0 %563
  %565 = vrot.lane.b32.xlu0 %v545, 91
  %v566 = vpop.permute.xlu0 %565
  %vm567 = vcmask 744448
  %v568 = vsel %vm567, %v554, %v556
  %v569 = vsel %vm567, %v556, %v558
  %v570 = vsel %vm567, %v558, %v560
  %v571 = vsel %vm567, %v560, %v562
  %v572 = vsel %vm567, %v562, %v564
  %v573 = vsel %vm567, %v564, %v566
  %v581 = vadd.f32 %v528, %v554
  %v582 = vadd.f32 %v529, %v568
  %v583 = vadd.f32 %v530, %v569
  %v584 = vadd.f32 %v531, %v570
  %v585 = vadd.f32 %v532, %v571
  %v586 = vadd.f32 %v533, %v572
  %v587 = vadd.f32 %v534, %v573
  %588 = vset.pattern.permute.xlu0 8
  %589 = vperm.xlu0 %588, %v96
  %v590 = vpop.permute.xlu0 %589
  %v592 = vmul.f32 %v590, %v401
  %v593 = vmul.f32 %v590, %v405
  %v594 = vmul.f32 %v590, %v409
  %v595 = vmul.f32 %v590, %v413
  %v596 = vmul.f32 %v590, %v417
  %v597 = vmul.f32 %v590, %v421
  %v598 = vmul.f32 %v590, %v425
  %606 = vrot.lane.b32.xlu0 %v592, 90
  %v607 = vpop.permute.xlu0 %606
  %608 = vrot.lane.b32.xlu0 %v593, 90
  %v609 = vpop.permute.xlu0 %608
  %610 = vrot.lane.b32.xlu0 %v594, 90
  %v611 = vpop.permute.xlu0 %610
  %612 = vrot.lane.b32.xlu0 %v595, 90
  %v613 = vpop.permute.xlu0 %612
  %614 = vrot.lane.b32.xlu0 %v596, 90
  %v615 = vpop.permute.xlu0 %614
  %616 = vrot.lane.b32.xlu0 %v597, 90
  %v617 = vpop.permute.xlu0 %616
  %618 = vrot.lane.b32.xlu0 %v598, 90
  %v619 = vpop.permute.xlu0 %618
  %vm620 = vcmask 736256
  %v621 = vsel %vm620, %v607, %v609
  %v622 = vsel %vm620, %v609, %v611
  %v623 = vsel %vm620, %v611, %v613
  %v624 = vsel %vm620, %v613, %v615
  %v625 = vsel %vm620, %v615, %v617
  %v626 = vsel %vm620, %v617, %v619
  %v634 = vadd.f32 %v581, %v607
  %v635 = vadd.f32 %v582, %v621
  %v636 = vadd.f32 %v583, %v622
  %v637 = vadd.f32 %v584, %v623
  %v638 = vadd.f32 %v585, %v624
  %v639 = vadd.f32 %v586, %v625
  %v640 = vadd.f32 %v587, %v626
  %v641 = vld [vmem:[%s2] sm:$0xff]
  %643 = vset.pattern.permute.xlu0 0
  %644 = vperm.xlu0 %643, %v641
  %v645 = vpop.permute.xlu0 %644
  %v647 = vadd.f32 %v634, %v645
  %v648 = vadd.f32 %v635, %v645
  %v649 = vadd.f32 %v636, %v645
  %v650 = vadd.f32 %v637, %v645
  %v651 = vadd.f32 %v638, %v645
  %v652 = vadd.f32 %v639, %v645
  %v653 = vadd.f32 %v640, %v645
  %v654 = vmax.f32 %v647, 0.0
  %v655 = vmax.f32 %v648, 0.0
  %v656 = vmax.f32 %v649, 0.0
  %v657 = vmax.f32 %v650, 0.0
  %v658 = vmax.f32 %v651, 0.0
  %v659 = vmax.f32 %v652, 0.0
  %v660 = vmax.f32 %v653, 0.0
  %v661 = vld [vmem:[%s15] sm:$0x3f]
  %v663 = vlaneseq
  %v664 = vshrl.u32 %v663, 7
  %v665 = vsub.s32 0, %v664
  %v666 = vrot.slane %v661, %v665
  %v667 = vlaneseq
  %v668 = vshrl.u32 %v667, 7
  %v669 = vsub.s32 1, %v668
  %v670 = vrot.slane %v661, %v669
  %v671 = vlaneseq
  %v672 = vshrl.u32 %v671, 7
  %v673 = vsub.s32 2, %v672
  %v674 = vrot.slane %v661, %v673
  %v675 = vlaneseq
  %v676 = vshrl.u32 %v675, 7
  %v677 = vsub.s32 3, %v676
  %v678 = vrot.slane %v661, %v677
  %v679 = vlaneseq
  %v680 = vshrl.u32 %v679, 7
  %v681 = vsub.s32 4, %v680
  %v682 = vrot.slane %v661, %v681
  %v683 = vlaneseq
  %v684 = vshrl.u32 %v683, 7
  %v685 = vsub.s32 5, %v684
  %v686 = vrot.slane %v661, %v685
  %687 = vrot.lane.b32.xlu0 %v666, 109
  %v688 = vpop.permute.xlu0 %687
  %689 = vrot.lane.b32.xlu0 %v670, 109
  %v690 = vpop.permute.xlu0 %689
  %691 = vrot.lane.b32.xlu0 %v674, 109
  %v692 = vpop.permute.xlu0 %691
  %693 = vrot.lane.b32.xlu0 %v678, 109
  %v694 = vpop.permute.xlu0 %693
  %695 = vrot.lane.b32.xlu0 %v682, 109
  %v696 = vpop.permute.xlu0 %695
  %697 = vrot.lane.b32.xlu0 %v686, 109
  %v698 = vpop.permute.xlu0 %697
  %v699 = vsel %vm372, %v688, %v690
  %v700 = vsel %vm372, %v690, %v692
  %v701 = vsel %vm372, %v692, %v694
  %v702 = vsel %vm372, %v694, %v696
  %v703 = vsel %vm372, %v696, %v698
  %v711 = vmul.f32 %v654, %v688
  %v712 = vmul.f32 %v655, %v699
  %v713 = vmul.f32 %v656, %v700
  %v714 = vmul.f32 %v657, %v701
  %v715 = vmul.f32 %v658, %v702
  %v716 = vmul.f32 %v659, %v703
  %v717 = vmul.f32 %v660, %v698
  %725 = vrot.lane.b32.xlu0 %v711, 19
  %v726 = vpop.permute.xlu0 %725
  %727 = vrot.lane.b32.xlu0 %v712, 19
  %v728 = vpop.permute.xlu0 %727
  %729 = vrot.lane.b32.xlu0 %v713, 19
  %v730 = vpop.permute.xlu0 %729
  %731 = vrot.lane.b32.xlu0 %v714, 19
  %v732 = vpop.permute.xlu0 %731
  %733 = vrot.lane.b32.xlu0 %v715, 19
  %v734 = vpop.permute.xlu0 %733
  %735 = vrot.lane.b32.xlu0 %v716, 19
  %v736 = vpop.permute.xlu0 %735
  %737 = vrot.lane.b32.xlu0 %v717, 19
  %v738 = vpop.permute.xlu0 %737
  %vm739 = vcmask 154624
  %v740 = vsel %vm739, %v726, %v728
  %v741 = vsel %vm739, %v728, %v730
  %v742 = vsel %vm739, %v730, %v732
  %v743 = vsel %vm739, %v732, %v734
  %v744 = vsel %vm739, %v734, %v736
  %v745 = vsel %vm739, %v736, %v738
  %752 = vst [vmem:[#allocation2 + $0x8] sm:$0xff] %v740
  %753 = vst [vmem:[#allocation2 + $0x10] sm:$0xff] %v741
  %754 = vst [vmem:[#allocation2 + $0x18] sm:$0xff] %v742
  %755 = vst [vmem:[#allocation2 + $0x20] sm:$0xff] %v743
  %756 = vst [vmem:[#allocation2 + $0x28] sm:$0xff] %v744
  %757 = vst [vmem:[#allocation2 + $0x30] sm:$0xff] %v745
  %v758 = vld [vmem:[#allocation2] sm:$0xff]
  %v759 = vld [vmem:[#allocation2 + $0x8] sm:$0xff]
  %v760 = vld [vmem:[#allocation2 + $0x10] sm:$0xff]
  %v761 = vld [vmem:[#allocation2 + $0x18] sm:$0xff]
  %v762 = vld [vmem:[#allocation2 + $0x20] sm:$0xff]
  %v763 = vld [vmem:[#allocation2 + $0x28] sm:$0xff]
  %v764 = vld [vmem:[#allocation2 + $0x30] sm:$0xff]
  %772 = vrot.lane.b32.xlu0 %v758, 19
  %v773 = vpop.permute.xlu0 %772
  %774 = vrot.lane.b32.xlu0 %v759, 19
  %v775 = vpop.permute.xlu0 %774
  %776 = vrot.lane.b32.xlu0 %v760, 19
  %v777 = vpop.permute.xlu0 %776
  %778 = vrot.lane.b32.xlu0 %v761, 19
  %v779 = vpop.permute.xlu0 %778
  %780 = vrot.lane.b32.xlu0 %v762, 19
  %v781 = vpop.permute.xlu0 %780
  %782 = vrot.lane.b32.xlu0 %v763, 19
  %v783 = vpop.permute.xlu0 %782
  %784 = vrot.lane.b32.xlu0 %v764, 19
  %v785 = vpop.permute.xlu0 %784
  %v786 = vsel %vm739, %v773, %v775
  %v787 = vsel %vm739, %v775, %v777
  %v788 = vsel %vm739, %v777, %v779
  %v789 = vsel %vm739, %v779, %v781
  %v790 = vsel %vm739, %v781, %v783
  %v791 = vsel %vm739, %v783, %v785
  %798 = vst [vmem:[#allocation5] sm:$0xff] %v786
  %799 = vst [vmem:[#allocation5 + $0x8] sm:$0xff] %v787
  %800 = vst [vmem:[#allocation5 + $0x10] sm:$0xff] %v788
  %801 = vst [vmem:[#allocation5 + $0x18] sm:$0xff] %v789
  %802 = vst [vmem:[#allocation5 + $0x20] sm:$0xff] %v790
  %803 = vst [vmem:[#allocation5 + $0x28] sm:$0xff] %v791
  %v804 = vld [vmem:[#allocation2] sm:$0xff]
  %v805 = vld [vmem:[#allocation2 + $0x8] sm:$0xff]
  %v806 = vld [vmem:[#allocation2 + $0x10] sm:$0xff]
  %v807 = vld [vmem:[#allocation2 + $0x18] sm:$0xff]
  %v808 = vld [vmem:[#allocation2 + $0x20] sm:$0xff]
  %v809 = vld [vmem:[#allocation2 + $0x28] sm:$0xff]
  %v810 = vld [vmem:[#allocation2 + $0x30] sm:$0xff]
  %818 = vrot.lane.b32.xlu0 %v804, 18
  %v819 = vpop.permute.xlu0 %818
  %820 = vrot.lane.b32.xlu0 %v805, 18
  %v821 = vpop.permute.xlu0 %820
  %822 = vrot.lane.b32.xlu0 %v806, 18
  %v823 = vpop.permute.xlu0 %822
  %824 = vrot.lane.b32.xlu0 %v807, 18
  %v825 = vpop.permute.xlu0 %824
  %826 = vrot.lane.b32.xlu0 %v808, 18
  %v827 = vpop.permute.xlu0 %826
  %828 = vrot.lane.b32.xlu0 %v809, 18
  %v829 = vpop.permute.xlu0 %828
  %830 = vrot.lane.b32.xlu0 %v810, 18
  %v831 = vpop.permute.xlu0 %830
  %vm832 = vcmask 146432
  %v833 = vsel %vm832, %v819, %v821
  %v834 = vsel %vm832, %v821, %v823
  %v835 = vsel %vm832, %v823, %v825
  %v836 = vsel %vm832, %v825, %v827
  %v837 = vsel %vm832, %v827, %v829
  %v838 = vsel %vm832, %v829, %v831
  %845 = vst [vmem:[#allocation5 + $0x30] sm:$0xff] %v833
  %846 = vst [vmem:[#allocation5 + $0x38] sm:$0xff] %v834
  %847 = vst [vmem:[#allocation5 + $0x40] sm:$0xff] %v835
  %848 = vst [vmem:[#allocation5 + $0x48] sm:$0xff] %v836
  %849 = vst [vmem:[#allocation5 + $0x50] sm:$0xff] %v837
  %850 = vst [vmem:[#allocation5 + $0x58] sm:$0xff] %v838
  %v851 = vld [vmem:[#allocation2] sm:$0xff]
  %v852 = vld [vmem:[#allocation2 + $0x8] sm:$0xff]
  %v853 = vld [vmem:[#allocation2 + $0x10] sm:$0xff]
  %v854 = vld [vmem:[#allocation2 + $0x18] sm:$0xff]
  %v855 = vld [vmem:[#allocation2 + $0x20] sm:$0xff]
  %v856 = vld [vmem:[#allocation2 + $0x28] sm:$0xff]
  %v857 = vld [vmem:[#allocation2 + $0x30] sm:$0xff]
  %865 = vrot.lane.b32.xlu0 %v851, 17
  %v866 = vpop.permute.xlu0 %865
  %867 = vrot.lane.b32.xlu0 %v852, 17
  %v868 = vpop.permute.xlu0 %867
  %869 = vrot.lane.b32.xlu0 %v853, 17
  %v870 = vpop.permute.xlu0 %869
  %871 = vrot.lane.b32.xlu0 %v854, 17
  %v872 = vpop.permute.xlu0 %871
  %873 = vrot.lane.b32.xlu0 %v855, 17
  %v874 = vpop.permute.xlu0 %873
  %875 = vrot.lane.b32.xlu0 %v856, 17
  %v876 = vpop.permute.xlu0 %875
  %877 = vrot.lane.b32.xlu0 %v857, 17
  %v878 = vpop.permute.xlu0 %877
  %vm879 = vcmask 138240
  %v880 = vsel %vm879, %v866, %v868
  %v881 = vsel %vm879, %v868, %v870
  %v882 = vsel %vm879, %v870, %v872
  %v883 = vsel %vm879, %v872, %v874
  %v884 = vsel %vm879, %v874, %v876
  %v885 = vsel %vm879, %v876, %v878
  %892 = vst [vmem:[#allocation5 + $0x60] sm:$0xff] %v880
  %893 = vst [vmem:[#allocation5 + $0x68] sm:$0xff] %v881
  %894 = vst [vmem:[#allocation5 + $0x70] sm:$0xff] %v882
  %895 = vst [vmem:[#allocation5 + $0x78] sm:$0xff] %v883
  %896 = vst [vmem:[#allocation5 + $0x80] sm:$0xff] %v884
  %897 = vst [vmem:[#allocation5 + $0x88] sm:$0xff] %v885
  %v898 = vld [vmem:[#allocation2] sm:$0xff]
  %v899 = vld [vmem:[#allocation2 + $0x8] sm:$0xff]
  %v900 = vld [vmem:[#allocation2 + $0x10] sm:$0xff]
  %v901 = vld [vmem:[#allocation2 + $0x18] sm:$0xff]
  %v902 = vld [vmem:[#allocation2 + $0x20] sm:$0xff]
  %v903 = vld [vmem:[#allocation2 + $0x28] sm:$0xff]
  %v904 = vld [vmem:[#allocation2 + $0x30] sm:$0xff]
  %912 = vrot.lane.b32.xlu0 %v898, 1
  %v913 = vpop.permute.xlu0 %912
  %914 = vrot.lane.b32.xlu0 %v899, 1
  %v915 = vpop.permute.xlu0 %914
  %916 = vrot.lane.b32.xlu0 %v900, 1
  %v917 = vpop.permute.xlu0 %916
  %918 = vrot.lane.b32.xlu0 %v901, 1
  %v919 = vpop.permute.xlu0 %918
  %920 = vrot.lane.b32.xlu0 %v902, 1
  %v921 = vpop.permute.xlu0 %920
  %922 = vrot.lane.b32.xlu0 %v903, 1
  %v923 = vpop.permute.xlu0 %922
  %924 = vrot.lane.b32.xlu0 %v904, 1
  %v925 = vpop.permute.xlu0 %924
  %vm926 = vcmask 7168
  %v927 = vsel %vm926, %v913, %v915
  %v928 = vsel %vm926, %v915, %v917
  %v929 = vsel %vm926, %v917, %v919
  %v930 = vsel %vm926, %v919, %v921
  %v931 = vsel %vm926, %v921, %v923
  %v932 = vsel %vm926, %v923, %v925
  %939 = vst [vmem:[#allocation5 + $0x90] sm:$0xff] %v927
  %940 = vst [vmem:[#allocation5 + $0x98] sm:$0xff] %v928
  %941 = vst [vmem:[#allocation5 + $0xa0] sm:$0xff] %v929
  %942 = vst [vmem:[#allocation5 + $0xa8] sm:$0xff] %v930
  %943 = vst [vmem:[#allocation5 + $0xb0] sm:$0xff] %v931
  %944 = vst [vmem:[#allocation5 + $0xb8] sm:$0xff] %v932
  %v945 = vld [vmem:[#allocation2 + $0x8] sm:$0xff]
  %v946 = vld [vmem:[#allocation2 + $0x10] sm:$0xff]
  %v947 = vld [vmem:[#allocation2 + $0x18] sm:$0xff]
  %v948 = vld [vmem:[#allocation2 + $0x20] sm:$0xff]
  %v949 = vld [vmem:[#allocation2 + $0x28] sm:$0xff]
  %v950 = vld [vmem:[#allocation2 + $0x30] sm:$0xff]
  %951 = vst [vmem:[#allocation5 + $0xc0] sm:$0xff] %v945
  %952 = vst [vmem:[#allocation5 + $0xc8] sm:$0xff] %v946
  %953 = vst [vmem:[#allocation5 + $0xd0] sm:$0xff] %v947
  %954 = vst [vmem:[#allocation5 + $0xd8] sm:$0xff] %v948
  %955 = vst [vmem:[#allocation5 + $0xe0] sm:$0xff] %v949
  %956 = vst [vmem:[#allocation5 + $0xe8] sm:$0xff] %v950
  %v957 = vld [vmem:[#allocation2 + $0x8] sm:$0xff]
  %v958 = vld [vmem:[#allocation2 + $0x10] sm:$0xff]
  %v959 = vld [vmem:[#allocation2 + $0x18] sm:$0xff]
  %v960 = vld [vmem:[#allocation2 + $0x20] sm:$0xff]
  %v961 = vld [vmem:[#allocation2 + $0x28] sm:$0xff]
  %v962 = vld [vmem:[#allocation2 + $0x30] sm:$0xff]
  %v963 = vld [vmem:[#allocation2 + $0x38] sm:$0xff]
  %971 = vrot.lane.b32.xlu0 %v957, 127
  %v972 = vpop.permute.xlu0 %971
  %973 = vrot.lane.b32.xlu0 %v958, 127
  %v974 = vpop.permute.xlu0 %973
  %975 = vrot.lane.b32.xlu0 %v959, 127
  %v976 = vpop.permute.xlu0 %975
  %977 = vrot.lane.b32.xlu0 %v960, 127
  %v978 = vpop.permute.xlu0 %977
  %979 = vrot.lane.b32.xlu0 %v961, 127
  %v980 = vpop.permute.xlu0 %979
  %981 = vrot.lane.b32.xlu0 %v962, 127
  %v982 = vpop.permute.xlu0 %981
  %983 = vrot.lane.b32.xlu0 %v963, 127
  %v984 = vpop.permute.xlu0 %983
  %v985 = vsel %vm185, %v972, %v974
  %v986 = vsel %vm185, %v974, %v976
  %v987 = vsel %vm185, %v976, %v978
  %v988 = vsel %vm185, %v978, %v980
  %v989 = vsel %vm185, %v980, %v982
  %v990 = vsel %vm185, %v982, %v984
  %997 = vst [vmem:[#allocation5 + $0xf0] sm:$0xff] %v985
  %998 = vst [vmem:[#allocation5 + $0xf8] sm:$0xff] %v986
  %999 = vst [vmem:[#allocation5 + $0x100] sm:$0xff] %v987
  %1000 = vst [vmem:[#allocation5 + $0x108] sm:$0xff] %v988
  %1001 = vst [vmem:[#allocation5 + $0x110] sm:$0xff] %v989
  %1002 = vst [vmem:[#allocation5 + $0x118] sm:$0xff] %v990
  %v1003 = vld [vmem:[#allocation2 + $0x8] sm:$0xff]
  %v1004 = vld [vmem:[#allocation2 + $0x10] sm:$0xff]
  %v1005 = vld [vmem:[#allocation2 + $0x18] sm:$0xff]
  %v1006 = vld [vmem:[#allocation2 + $0x20] sm:$0xff]
  %v1007 = vld [vmem:[#allocation2 + $0x28] sm:$0xff]
  %v1008 = vld [vmem:[#allocation2 + $0x30] sm:$0xff]
  %v1009 = vld [vmem:[#allocation2 + $0x38] sm:$0xff]
  %1017 = vrot.lane.b32.xlu0 %v1003, 111
  %v1018 = vpop.permute.xlu0 %1017
  %1019 = vrot.lane.b32.xlu0 %v1004, 111
  %v1020 = vpop.permute.xlu0 %1019
  %1021 = vrot.lane.b32.xlu0 %v1005, 111
  %v1022 = vpop.permute.xlu0 %1021
  %1023 = vrot.lane.b32.xlu0 %v1006, 111
  %v1024 = vpop.permute.xlu0 %1023
  %1025 = vrot.lane.b32.xlu0 %v1007, 111
  %v1026 = vpop.permute.xlu0 %1025
  %1027 = vrot.lane.b32.xlu0 %v1008, 111
  %v1028 = vpop.permute.xlu0 %1027
  %1029 = vrot.lane.b32.xlu0 %v1009, 111
  %v1030 = vpop.permute.xlu0 %1029
  %vm1031 = vcmask 908288
  %v1032 = vsel %vm1031, %v1018, %v1020
  %v1033 = vsel %vm1031, %v1020, %v1022
  %v1034 = vsel %vm1031, %v1022, %v1024
  %v1035 = vsel %vm1031, %v1024, %v1026
  %v1036 = vsel %vm1031, %v1026, %v1028
  %v1037 = vsel %vm1031, %v1028, %v1030
  %1044 = vst [vmem:[#allocation5 + $0x120] sm:$0xff] %v1032
  %1045 = vst [vmem:[#allocation5 + $0x128] sm:$0xff] %v1033
  %1046 = vst [vmem:[#allocation5 + $0x130] sm:$0xff] %v1034
  %1047 = vst [vmem:[#allocation5 + $0x138] sm:$0xff] %v1035
  %1048 = vst [vmem:[#allocation5 + $0x140] sm:$0xff] %v1036
  %1049 = vst [vmem:[#allocation5 + $0x148] sm:$0xff] %v1037
  %v1050 = vld [vmem:[#allocation2 + $0x8] sm:$0xff]
  %v1051 = vld [vmem:[#allocation2 + $0x10] sm:$0xff]
  %v1052 = vld [vmem:[#allocation2 + $0x18] sm:$0xff]
  %v1053 = vld [vmem:[#allocation2 + $0x20] sm:$0xff]
  %v1054 = vld [vmem:[#allocation2 + $0x28] sm:$0xff]
  %v1055 = vld [vmem:[#allocation2 + $0x30] sm:$0xff]
  %v1056 = vld [vmem:[#allocation2 + $0x38] sm:$0xff]
  %1064 = vrot.lane.b32.xlu0 %v1050, 110
  %v1065 = vpop.permute.xlu0 %1064
  %1066 = vrot.lane.b32.xlu0 %v1051, 110
  %v1067 = vpop.permute.xlu0 %1066
  %1068 = vrot.lane.b32.xlu0 %v1052, 110
  %v1069 = vpop.permute.xlu0 %1068
  %1070 = vrot.lane.b32.xlu0 %v1053, 110
  %v1071 = vpop.permute.xlu0 %1070
  %1072 = vrot.lane.b32.xlu0 %v1054, 110
  %v1073 = vpop.permute.xlu0 %1072
  %1074 = vrot.lane.b32.xlu0 %v1055, 110
  %v1075 = vpop.permute.xlu0 %1074
  %1076 = vrot.lane.b32.xlu0 %v1056, 110
  %v1077 = vpop.permute.xlu0 %1076
  %v1078 = vsel %vm291, %v1065, %v1067
  %v1079 = vsel %vm291, %v1067, %v1069
  %v1080 = vsel %vm291, %v1069, %v1071
  %v1081 = vsel %vm291, %v1071, %v1073
  %v1082 = vsel %vm291, %v1073, %v1075
  %v1083 = vsel %vm291, %v1075, %v1077
  %1090 = vst [vmem:[#allocation5 + $0x150] sm:$0xff] %v1078
  %1091 = vst [vmem:[#allocation5 + $0x158] sm:$0xff] %v1079
  %1092 = vst [vmem:[#allocation5 + $0x160] sm:$0xff] %v1080
  %1093 = vst [vmem:[#allocation5 + $0x168] sm:$0xff] %v1081
  %1094 = vst [vmem:[#allocation5 + $0x170] sm:$0xff] %v1082
  %1095 = vst [vmem:[#allocation5 + $0x178] sm:$0xff] %v1083
  %v1096 = vld [vmem:[#allocation2 + $0x8] sm:$0xff]
  %v1097 = vld [vmem:[#allocation2 + $0x10] sm:$0xff]
  %v1098 = vld [vmem:[#allocation2 + $0x18] sm:$0xff]
  %v1099 = vld [vmem:[#allocation2 + $0x20] sm:$0xff]
  %v1100 = vld [vmem:[#allocation2 + $0x28] sm:$0xff]
  %v1101 = vld [vmem:[#allocation2 + $0x30] sm:$0xff]
  %v1102 = vld [vmem:[#allocation2 + $0x38] sm:$0xff]
  %1110 = vrot.lane.b32.xlu0 %v1096, 109
  %v1111 = vpop.permute.xlu0 %1110
  %1112 = vrot.lane.b32.xlu0 %v1097, 109
  %v1113 = vpop.permute.xlu0 %1112
  %1114 = vrot.lane.b32.xlu0 %v1098, 109
  %v1115 = vpop.permute.xlu0 %1114
  %1116 = vrot.lane.b32.xlu0 %v1099, 109
  %v1117 = vpop.permute.xlu0 %1116
  %1118 = vrot.lane.b32.xlu0 %v1100, 109
  %v1119 = vpop.permute.xlu0 %1118
  %1120 = vrot.lane.b32.xlu0 %v1101, 109
  %v1121 = vpop.permute.xlu0 %1120
  %1122 = vrot.lane.b32.xlu0 %v1102, 109
  %v1123 = vpop.permute.xlu0 %1122
  %v1124 = vsel %vm372, %v1111, %v1113
  %v1125 = vsel %vm372, %v1113, %v1115
  %v1126 = vsel %vm372, %v1115, %v1117
  %v1127 = vsel %vm372, %v1117, %v1119
  %v1128 = vsel %vm372, %v1119, %v1121
  %v1129 = vsel %vm372, %v1121, %v1123
  %1136 = vst [vmem:[#allocation5 + $0x180] sm:$0xff] %v1124
  %1137 = vst [vmem:[#allocation5 + $0x188] sm:$0xff] %v1125
  %1138 = vst [vmem:[#allocation5 + $0x190] sm:$0xff] %v1126
  %1139 = vst [vmem:[#allocation5 + $0x198] sm:$0xff] %v1127
  %1140 = vst [vmem:[#allocation5 + $0x1a0] sm:$0xff] %v1128
  %1141 = vst [vmem:[#allocation5 + $0x1a8] sm:$0xff] %v1129
  %v1142 = vld [vmem:[%s3] sm:$0xff]
  %v1143 = vld [vmem:[%s3 + $0x8] sm:$0xff]
  %v1144 = vld [vmem:[#allocation5] sm:$0xff]
  %v1145 = vld [vmem:[#allocation5 + $0x8] sm:$0xff]
  %v1146 = vld [vmem:[#allocation5 + $0x10] sm:$0xff]
  %v1147 = vld [vmem:[#allocation5 + $0x18] sm:$0xff]
  %v1148 = vld [vmem:[#allocation5 + $0x20] sm:$0xff]
  %v1149 = vld [vmem:[#allocation5 + $0x28] sm:$0xff]
  %v1150 = vld [vmem:[#allocation5 + $0x30] sm:$0xff]
  %v1151 = vld [vmem:[#allocation5 + $0x38] sm:$0xff]
  %v1152 = vld [vmem:[#allocation5 + $0x40] sm:$0xff]
  %v1153 = vld [vmem:[#allocation5 + $0x48] sm:$0xff]
  %v1154 = vld [vmem:[#allocation5 + $0x50] sm:$0xff]
  %v1155 = vld [vmem:[#allocation5 + $0x58] sm:$0xff]
  %v1156 = vld [vmem:[#allocation5 + $0x60] sm:$0xff]
  %v1157 = vld [vmem:[#allocation5 + $0x68] sm:$0xff]
  %v1158 = vld [vmem:[#allocation5 + $0x70] sm:$0xff]
  %v1159 = vld [vmem:[#allocation5 + $0x78] sm:$0xff]
  %v1160 = vld [vmem:[#allocation5 + $0x80] sm:$0xff]
  %v1161 = vld [vmem:[#allocation5 + $0x88] sm:$0xff]
  %v1162 = vld [vmem:[#allocation5 + $0x90] sm:$0xff]
  %v1163 = vld [vmem:[#allocation5 + $0x98] sm:$0xff]
  %v1164 = vld [vmem:[#allocation5 + $0xa0] sm:$0xff]
  %v1165 = vld [vmem:[#allocation5 + $0xa8] sm:$0xff]
  %v1166 = vld [vmem:[#allocation5 + $0xb0] sm:$0xff]
  %v1167 = vld [vmem:[#allocation5 + $0xb8] sm:$0xff]
  %v1168 = vld [vmem:[#allocation5 + $0xc0] sm:$0xff]
  %v1169 = vld [vmem:[#allocation5 + $0xc8] sm:$0xff]
  %v1170 = vld [vmem:[#allocation5 + $0xd0] sm:$0xff]
  %v1171 = vld [vmem:[#allocation5 + $0xd8] sm:$0xff]
  %v1172 = vld [vmem:[#allocation5 + $0xe0] sm:$0xff]
  %v1173 = vld [vmem:[#allocation5 + $0xe8] sm:$0xff]
  %v1174 = vld [vmem:[#allocation5 + $0xf0] sm:$0xff]
  %v1175 = vld [vmem:[#allocation5 + $0xf8] sm:$0xff]
  %v1176 = vld [vmem:[#allocation5 + $0x100] sm:$0xff]
  %v1177 = vld [vmem:[#allocation5 + $0x108] sm:$0xff]
  %v1178 = vld [vmem:[#allocation5 + $0x110] sm:$0xff]
  %v1179 = vld [vmem:[#allocation5 + $0x118] sm:$0xff]
  %v1180 = vld [vmem:[#allocation5 + $0x120] sm:$0xff]
  %v1181 = vld [vmem:[#allocation5 + $0x128] sm:$0xff]
  %v1182 = vld [vmem:[#allocation5 + $0x130] sm:$0xff]
  %v1183 = vld [vmem:[#allocation5 + $0x138] sm:$0xff]
  %v1184 = vld [vmem:[#allocation5 + $0x140] sm:$0xff]
  %v1185 = vld [vmem:[#allocation5 + $0x148] sm:$0xff]
  %v1186 = vld [vmem:[#allocation5 + $0x150] sm:$0xff]
  %v1187 = vld [vmem:[#allocation5 + $0x158] sm:$0xff]
  %v1188 = vld [vmem:[#allocation5 + $0x160] sm:$0xff]
  %v1189 = vld [vmem:[#allocation5 + $0x168] sm:$0xff]
  %v1190 = vld [vmem:[#allocation5 + $0x170] sm:$0xff]
  %v1191 = vld [vmem:[#allocation5 + $0x178] sm:$0xff]
  %v1192 = vld [vmem:[#allocation5 + $0x180] sm:$0xff]
  %v1193 = vld [vmem:[#allocation5 + $0x188] sm:$0xff]
  %v1194 = vld [vmem:[#allocation5 + $0x190] sm:$0xff]
  %v1195 = vld [vmem:[#allocation5 + $0x198] sm:$0xff]
  %v1196 = vld [vmem:[#allocation5 + $0x1a0] sm:$0xff]
  %v1197 = vld [vmem:[#allocation5 + $0x1a8] sm:$0xff]
  %v1198 = vld [vmem:[%s4] sm:$0xff]
  %v1199 = vld [vmem:[%s4 + $0x8] sm:$0xff]
  %1201 = vset.pattern.permute.xlu0 0
  %1202 = vperm.xlu0 %1201, %v1198
  %v1203 = vpop.permute.xlu0 %1202
  %1206 = vset.pattern.permute.xlu0 0
  %1207 = vperm.xlu0 %1206, %v1199
  %v1208 = vpop.permute.xlu0 %1207
  %vm1210 = vcmask 588800
  %v1212 = vsel %vm1210, %v1142, 0
  %v1215 = vsel %vm1210, %v1143, 0
  %1217 = vmatprep.subr.mxu0 %v1145
  %1218 = vmatpush1.msra.mxu0 %v1144
  %1219 = vmatprep.subr.mxu0 %v1151
  %1220 = vmatpush1.msra.mxu0 %v1150
  %1221 = vmatprep.subr.mxu0 %v1157
  %1222 = vmatpush1.msra.mxu0 %v1156
  %1223 = vmatprep.subr.mxu0 %v1163
  %1224 = vmatpush1.msra.mxu0 %v1162
  %1225 = vmatprep.subr.mxu0 %v1169
  %1226 = vmatpush1.msra.mxu0 %v1168
  %1227 = vmatprep.subr.mxu0 %v1175
  %1228 = vmatpush1.msra.mxu0 %v1174
  %1229 = vmatprep.subr.mxu0 %v1181
  %1230 = vmatpush1.msra.mxu0 %v1180
  %1231 = vmatprep.subr.mxu0 %v1187
  %1232 = vmatpush1.msra.mxu0 %v1186
  %1233 = vmatprep.subr.mxu0 %v1193
  %1234 = vmatpush1.msra.mxu0 %v1192
  %1235 = vmatprep.subr.mxu0 0.0
  %1236 = vmatpush1.msra.mxu0 0.0
  %1237 = vmatprep.subr.mxu0 0.0
  %1238 = vmatpush1.msra.mxu0 0.0
  %1239 = vmatprep.subr.mxu0 0.0
  %1240 = vmatpush1.msra.mxu0 0.0
  %1241 = vmatprep.subr.mxu0 0.0
  %1242 = vmatpush1.msra.mxu0 0.0
  %1243 = vmatprep.subr.mxu0 0.0
  %1244 = vmatpush1.msra.mxu0 0.0
  %1245 = vmatprep.subr.mxu0 0.0
  %1246 = vmatpush1.msra.mxu0 0.0
  %1247 = vmatprep.subr.mxu0 0.0
  %1248 = vmatpush1.msra.mxu0 0.0
  %1249 = vmatprep.subr.mxu0 0.0
  %1250 = vmatpush1.msra.mxu0 0.0
  %1251 = vmatprep.subr.mxu0 0.0
  %1252 = vmatpush1.msra.mxu0 0.0
  %1253 = vmatprep.subr.mxu0 0.0
  %1254 = vmatpush1.msra.mxu0 0.0
  %1255 = vmatprep.subr.mxu0 0.0
  %1256 = vmatpush1.msra.mxu0 0.0
  %1257 = vmatprep.subr.mxu0 0.0
  %1258 = vmatpush1.msra.mxu0 0.0
  %1259 = vmatprep.subr.mxu0 0.0
  %1260 = vmatpush1.msra.mxu0 0.0
  %1261 = vmatprep.subr.mxu0 0.0
  %1262 = vmatpush1.msra.mxu0 0.0
  %1263 = vmatprep.subr.mxu0 0.0
  %1264 = vmatpush1.msra.mxu0 0.0
  %1265 = vmatprep.subr.mxu0 0.0
  %1266 = vmatpush1.msra.mxu0 0.0
  %1267 = vmatprep.subr.mxu0 0.0
  %1268 = vmatpush1.msra.mxu0 0.0
  %1269 = vmatprep.subr.mxu0 0.0
  %1270 = vmatpush1.msra.mxu0 0.0
  %1271 = vmatprep.subr.mxu0 0.0
  %1272 = vmatpush1.msra.mxu0 0.0
  %1273 = vmatprep.subr.mxu0 0.0
  %1274 = vmatpush1.msra.mxu0 0.0
  %1275 = vmatprep.subr.mxu0 0.0
  %1276 = vmatpush1.msra.mxu0 0.0
  %1277 = vmatprep.subr.mxu0 0.0
  %1278 = vmatpush1.msra.mxu0 0.0
  %1279 = vmatprep.subr.mxu0 0.0
  %1280 = vmatpush1.msra.mxu0 0.0
  %1281 = vmatprep.mubr.f32.mxu0 0.0
  %1282 = vmatmul.mubr.f32.gmra.mrb[0].mxu0 %v1212
  %v1283 = vpop.f32.mrb[0].mxu0
  %v1284 = vadd.f32 %v1203, %v1283
  %v1285 = vpop.f32.mrb[0].mxu0
  %v1286 = vadd.f32 %v1203, %v1285
  %1287 = vmatprep.mubr.f32.mxu0 0.0
  %1288 = vmatmul.mubr.f32.gmra.mrb[0].mxu0 %v1215
  %v1289 = vpop.f32.mrb[0].mxu0
  %v1290 = vadd.f32 %v1208, %v1289
  %v1291 = vpop.f32.mrb[0].mxu0
  %v1292 = vadd.f32 %v1208, %v1291
  %1293 = vdwg.mxu0
  %1294 = vmatprep.subr.mxu0 %v1147
  %1295 = vmatpush1.msra.mxu0 %v1146
  %1296 = vmatprep.subr.mxu0 %v1153
  %1297 = vmatpush1.msra.mxu0 %v1152
  %1298 = vmatprep.subr.mxu0 %v1159
  %1299 = vmatpush1.msra.mxu0 %v1158
  %1300 = vmatprep.subr.mxu0 %v1165
  %1301 = vmatpush1.msra.mxu0 %v1164
  %1302 = vmatprep.subr.mxu0 %v1171
  %1303 = vmatpush1.msra.mxu0 %v1170
  %1304 = vmatprep.subr.mxu0 %v1177
  %1305 = vmatpush1.msra.mxu0 %v1176
  %1306 = vmatprep.subr.mxu0 %v1183
  %1307 = vmatpush1.msra.mxu0 %v1182
  %1308 = vmatprep.subr.mxu0 %v1189
  %1309 = vmatpush1.msra.mxu0 %v1188
  %1310 = vmatprep.subr.mxu0 %v1195
  %1311 = vmatpush1.msra.mxu0 %v1194
  %1312 = vmatprep.subr.mxu0 0.0
  %1313 = vmatpush1.msra.mxu0 0.0
  %1314 = vmatprep.subr.mxu0 0.0
  %1315 = vmatpush1.msra.mxu0 0.0
  %1316 = vmatprep.subr.mxu0 0.0
  %1317 = vmatpush1.msra.mxu0 0.0
  %1318 = vmatprep.subr.mxu0 0.0
  %1319 = vmatpush1.msra.mxu0 0.0
  %1320 = vmatprep.subr.mxu0 0.0
  %1321 = vmatpush1.msra.mxu0 0.0
  %1322 = vmatprep.subr.mxu0 0.0
  %1323 = vmatpush1.msra.mxu0 0.0
  %1324 = vmatprep.subr.mxu0 0.0
  %1325 = vmatpush1.msra.mxu0 0.0
  %1326 = vmatprep.subr.mxu0 0.0
  %1327 = vmatpush1.msra.mxu0 0.0
  %1328 = vmatprep.subr.mxu0 0.0
  %1329 = vmatpush1.msra.mxu0 0.0
  %1330 = vmatprep.subr.mxu0 0.0
  %1331 = vmatpush1.msra.mxu0 0.0
  %1332 = vmatprep.subr.mxu0 0.0
  %1333 = vmatpush1.msra.mxu0 0.0
  %1334 = vmatprep.subr.mxu0 0.0
  %1335 = vmatpush1.msra.mxu0 0.0
  %1336 = vmatprep.subr.mxu0 0.0
  %1337 = vmatpush1.msra.mxu0 0.0
  %1338 = vmatprep.subr.mxu0 0.0
  %1339 = vmatpush1.msra.mxu0 0.0
  %1340 = vmatprep.subr.mxu0 0.0
  %1341 = vmatpush1.msra.mxu0 0.0
  %1342 = vmatprep.subr.mxu0 0.0
  %1343 = vmatpush1.msra.mxu0 0.0
  %1344 = vmatprep.subr.mxu0 0.0
  %1345 = vmatpush1.msra.mxu0 0.0
  %1346 = vmatprep.subr.mxu0 0.0
  %1347 = vmatpush1.msra.mxu0 0.0
  %1348 = vmatprep.subr.mxu0 0.0
  %1349 = vmatpush1.msra.mxu0 0.0
  %1350 = vmatprep.subr.mxu0 0.0
  %1351 = vmatpush1.msra.mxu0 0.0
  %1352 = vmatprep.subr.mxu0 0.0
  %1353 = vmatpush1.msra.mxu0 0.0
  %1354 = vmatprep.subr.mxu0 0.0
  %1355 = vmatpush1.msra.mxu0 0.0
  %1356 = vmatprep.subr.mxu0 0.0
  %1357 = vmatpush1.msra.mxu0 0.0
  %1358 = vmatprep.mubr.f32.mxu0 0.0
  %1359 = vmatmul.mubr.f32.gmra.mrb[0].mxu0 %v1212
  %v1360 = vpop.f32.mrb[0].mxu0
  %v1361 = vadd.f32 %v1203, %v1360
  %v1362 = vpop.f32.mrb[0].mxu0
  %v1363 = vadd.f32 %v1203, %v1362
  %1364 = vmatprep.mubr.f32.mxu0 0.0
  %1365 = vmatmul.mubr.f32.gmra.mrb[0].mxu0 %v1215
  %v1366 = vpop.f32.mrb[0].mxu0
  %v1367 = vadd.f32 %v1208, %v1366
  %v1368 = vpop.f32.mrb[0].mxu0
  %v1369 = vadd.f32 %v1208, %v1368
  %1370 = vdwg.mxu0
  %1371 = vmatprep.subr.mxu0 %v1149
  %1372 = vmatpush1.msra.mxu0 %v1148
  %1373 = vmatprep.subr.mxu0 %v1155
  %1374 = vmatpush1.msra.mxu0 %v1154
  %1375 = vmatprep.subr.mxu0 %v1161
  %1376 = vmatpush1.msra.mxu0 %v1160
  %1377 = vmatprep.subr.mxu0 %v1167
  %1378 = vmatpush1.msra.mxu0 %v1166
  %1379 = vmatprep.subr.mxu0 %v1173
  %1380 = vmatpush1.msra.mxu0 %v1172
  %1381 = vmatprep.subr.mxu0 %v1179
  %1382 = vmatpush1.msra.mxu0 %v1178
  %1383 = vmatprep.subr.mxu0 %v1185
  %1384 = vmatpush1.msra.mxu0 %v1184
  %1385 = vmatprep.subr.mxu0 %v1191
  %1386 = vmatpush1.msra.mxu0 %v1190
  %1387 = vmatprep.subr.mxu0 %v1197
  %1388 = vmatpush1.msra.mxu0 %v1196
  %1389 = vmatprep.subr.mxu0 0.0
  %1390 = vmatpush1.msra.mxu0 0.0
  %1391 = vmatprep.subr.mxu0 0.0
  %1392 = vmatpush1.msra.mxu0 0.0
  %1393 = vmatprep.subr.mxu0 0.0
  %1394 = vmatpush1.msra.mxu0 0.0
  %1395 = vmatprep.subr.mxu0 0.0
  %1396 = vmatpush1.msra.mxu0 0.0
  %1397 = vmatprep.subr.mxu0 0.0
  %1398 = vmatpush1.msra.mxu0 0.0
  %1399 = vmatprep.subr.mxu0 0.0
  %1400 = vmatpush1.msra.mxu0 0.0
  %1401 = vmatprep.subr.mxu0 0.0
  %1402 = vmatpush1.msra.mxu0 0.0
  %1403 = vmatprep.subr.mxu0 0.0
  %1404 = vmatpush1.msra.mxu0 0.0
  %1405 = vmatprep.subr.mxu0 0.0
  %1406 = vmatpush1.msra.mxu0 0.0
  %1407 = vmatprep.subr.mxu0 0.0
  %1408 = vmatpush1.msra.mxu0 0.0
  %1409 = vmatprep.subr.mxu0 0.0
  %1410 = vmatpush1.msra.mxu0 0.0
  %1411 = vmatprep.subr.mxu0 0.0
  %1412 = vmatpush1.msra.mxu0 0.0
  %1413 = vmatprep.subr.mxu0 0.0
  %1414 = vmatpush1.msra.mxu0 0.0
  %1415 = vmatprep.subr.mxu0 0.0
  %1416 = vmatpush1.msra.mxu0 0.0
  %1417 = vmatprep.subr.mxu0 0.0
  %1418 = vmatpush1.msra.mxu0 0.0
  %1419 = vmatprep.subr.mxu0 0.0
  %1420 = vmatpush1.msra.mxu0 0.0
  %1421 = vmatprep.subr.mxu0 0.0
  %1422 = vmatpush1.msra.mxu0 0.0
  %1423 = vmatprep.subr.mxu0 0.0
  %1424 = vmatpush1.msra.mxu0 0.0
  %1425 = vmatprep.subr.mxu0 0.0
  %1426 = vmatpush1.msra.mxu0 0.0
  %1427 = vmatprep.subr.mxu0 0.0
  %1428 = vmatpush1.msra.mxu0 0.0
  %1429 = vmatprep.subr.mxu0 0.0
  %1430 = vmatpush1.msra.mxu0 0.0
  %1431 = vmatprep.subr.mxu0 0.0
  %1432 = vmatpush1.msra.mxu0 0.0
  %1433 = vmatprep.subr.mxu0 0.0
  %1434 = vmatpush1.msra.mxu0 0.0
  %1435 = vmatprep.mubr.f32.mxu0 0.0
  %1436 = vmatmul.mubr.f32.gmra.mrb[0].mxu0 %v1212
  %v1437 = vpop.f32.mrb[0].mxu0
  %v1438 = vadd.f32 %v1203, %v1437
  %v1439 = vpop.f32.mrb[0].mxu0
  %v1440 = vadd.f32 %v1203, %v1439
  %1441 = vmatprep.mubr.f32.mxu0 0.0
  %1442 = vmatmul.mubr.f32.gmra.mrb[0].mxu0 %v1215
  %v1443 = vpop.f32.mrb[0].mxu0
  %v1444 = vadd.f32 %v1208, %v1443
  %v1445 = vpop.f32.mrb[0].mxu0
  %v1446 = vadd.f32 %v1208, %v1445
  %1447 = vdwg.mxu0
  %v1448 = vmax.f32 %v1284, 0.0
  %v1449 = vmax.f32 %v1286, 0.0
  %v1450 = vmax.f32 %v1361, 0.0
  %v1451 = vmax.f32 %v1363, 0.0
  %v1452 = vmax.f32 %v1438, 0.0
  %v1453 = vmax.f32 %v1440, 0.0
  %v1454 = vmax.f32 %v1290, 0.0
  %v1455 = vmax.f32 %v1292, 0.0
  %v1456 = vmax.f32 %v1367, 0.0
  %v1457 = vmax.f32 %v1369, 0.0
  %v1458 = vmax.f32 %v1444, 0.0
  %v1459 = vmax.f32 %v1446, 0.0
  %v1460 = vld [vmem:[%s15] sm:$0x3f]
  %v1462 = vlaneseq
  %v1463 = vshrl.u32 %v1462, 7
  %v1464 = vsub.s32 0, %v1463
  %v1465 = vrot.slane %v1460, %v1464
  %v1466 = vlaneseq
  %v1467 = vshrl.u32 %v1466, 7
  %v1468 = vsub.s32 1, %v1467
  %v1469 = vrot.slane %v1460, %v1468
  %v1470 = vlaneseq
  %v1471 = vshrl.u32 %v1470, 7
  %v1472 = vsub.s32 2, %v1471
  %v1473 = vrot.slane %v1460, %v1472
  %v1474 = vlaneseq
  %v1475 = vshrl.u32 %v1474, 7
  %v1476 = vsub.s32 3, %v1475
  %v1477 = vrot.slane %v1460, %v1476
  %v1478 = vlaneseq
  %v1479 = vshrl.u32 %v1478, 7
  %v1480 = vsub.s32 4, %v1479
  %v1481 = vrot.slane %v1460, %v1480
  %v1482 = vlaneseq
  %v1483 = vshrl.u32 %v1482, 7
  %v1484 = vsub.s32 5, %v1483
  %v1485 = vrot.slane %v1460, %v1484
  %v1492 = vmul.f32 %v1448, %v1465
  %v1493 = vmul.f32 %v1449, %v1469
  %v1494 = vmul.f32 %v1450, %v1473
  %v1495 = vmul.f32 %v1451, %v1477
  %v1496 = vmul.f32 %v1452, %v1481
  %v1497 = vmul.f32 %v1453, %v1485
  %v1498 = vmul.f32 %v1454, %v1465
  %v1499 = vmul.f32 %v1455, %v1469
  %v1500 = vmul.f32 %v1456, %v1473
  %v1501 = vmul.f32 %v1457, %v1477
  %v1502 = vmul.f32 %v1458, %v1481
  %v1503 = vmul.f32 %v1459, %v1485
  %1504 = vst [vmem:[#allocation2 + $0x8] sm:$0xff] %v1492
  %1505 = vst [vmem:[#allocation2 + $0x10] sm:$0xff] %v1493
  %1506 = vst [vmem:[#allocation2 + $0x18] sm:$0xff] %v1494
  %1507 = vst [vmem:[#allocation2 + $0x20] sm:$0xff] %v1495
  %1508 = vst [vmem:[#allocation2 + $0x28] sm:$0xff] %v1496
  %1509 = vst [vmem:[#allocation2 + $0x30] sm:$0xff] %v1497
  %1510 = vst [vmem:[#allocation2 + $0x48] sm:$0xff] %v1498
  %1511 = vst [vmem:[#allocation2 + $0x50] sm:$0xff] %v1499
  %1512 = vst [vmem:[#allocation2 + $0x58] sm:$0xff] %v1500
  %1513 = vst [vmem:[#allocation2 + $0x60] sm:$0xff] %v1501
  %1514 = vst [vmem:[#allocation2 + $0x68] sm:$0xff] %v1502
  %1515 = vst [vmem:[#allocation2 + $0x70] sm:$0xff] %v1503
  %v1516 = vld [vmem:[#allocation2 + $0x8] sm:$0xff]
  %v1517 = vld [vmem:[#allocation2 + $0x10] sm:$0xff]
  %v1518 = vld [vmem:[#allocation2 + $0x18] sm:$0xff]
  %v1519 = vld [vmem:[#allocation2 + $0x20] sm:$0xff]
  %v1520 = vld [vmem:[#allocation2 + $0x28] sm:$0xff]
  %v1521 = vld [vmem:[#allocation2 + $0x30] sm:$0xff]
  %v1522 = vld [vmem:[#allocation2 + $0x48] sm:$0xff]
  %v1523 = vld [vmem:[#allocation2 + $0x50] sm:$0xff]
  %v1524 = vld [vmem:[#allocation2 + $0x58] sm:$0xff]
  %v1525 = vld [vmem:[#allocation2 + $0x60] sm:$0xff]
  %v1526 = vld [vmem:[#allocation2 + $0x68] sm:$0xff]
  %v1527 = vld [vmem:[#allocation2 + $0x70] sm:$0xff]
  %v1528 = vld [vmem:[#allocation2 + $0x8] sm:$0xff]
  %v1529 = vld [vmem:[#allocation2 + $0x10] sm:$0xff]
  %v1530 = vld [vmem:[#allocation2 + $0x18] sm:$0xff]
  %v1531 = vld [vmem:[#allocation2 + $0x20] sm:$0xff]
  %v1532 = vld [vmem:[#allocation2 + $0x28] sm:$0xff]
  %v1533 = vld [vmem:[#allocation2 + $0x30] sm:$0xff]
  %v1534 = vld [vmem:[#allocation2 + $0x38] sm:$0xff]
  %v1535 = vld [vmem:[#allocation2 + $0x48] sm:$0xff]
  %v1536 = vld [vmem:[#allocation2 + $0x50] sm:$0xff]
  %v1537 = vld [vmem:[#allocation2 + $0x58] sm:$0xff]
  %v1538 = vld [vmem:[#allocation2 + $0x60] sm:$0xff]
  %v1539 = vld [vmem:[#allocation2 + $0x68] sm:$0xff]
  %v1540 = vld [vmem:[#allocation2 + $0x70] sm:$0xff]
  %v1541 = vld [vmem:[#allocation2 + $0x78] sm:$0xff]
  %1556 = vrot.lane.b32.xlu0 %v1528, 127
  %v1557 = vpop.permute.xlu0 %1556
  %1558 = vrot.lane.b32.xlu0 %v1529, 127
  %v1559 = vpop.permute.xlu0 %1558
  %1560 = vrot.lane.b32.xlu0 %v1530, 127
  %v1561 = vpop.permute.xlu0 %1560
  %1562 = vrot.lane.b32.xlu0 %v1531, 127
  %v1563 = vpop.permute.xlu0 %1562
  %1564 = vrot.lane.b32.xlu0 %v1532, 127
  %v1565 = vpop.permute.xlu0 %1564
  %1566 = vrot.lane.b32.xlu0 %v1533, 127
  %v1567 = vpop.permute.xlu0 %1566
  %1568 = vrot.lane.b32.xlu0 %v1534, 127
  %v1569 = vpop.permute.xlu0 %1568
  %1570 = vrot.lane.b32.xlu0 %v1535, 127
  %v1571 = vpop.permute.xlu0 %1570
  %1572 = vrot.lane.b32.xlu0 %v1536, 127
  %v1573 = vpop.permute.xlu0 %1572
  %1574 = vrot.lane.b32.xlu0 %v1537, 127
  %v1575 = vpop.permute.xlu0 %1574
  %1576 = vrot.lane.b32.xlu0 %v1538, 127
  %v1577 = vpop.permute.xlu0 %1576
  %1578 = vrot.lane.b32.xlu0 %v1539, 127
  %v1579 = vpop.permute.xlu0 %1578
  %1580 = vrot.lane.b32.xlu0 %v1540, 127
  %v1581 = vpop.permute.xlu0 %1580
  %1582 = vrot.lane.b32.xlu0 %v1541, 127
  %v1583 = vpop.permute.xlu0 %1582
  %v1584 = vsel %vm185, %v1557, %v1559
  %v1585 = vsel %vm185, %v1559, %v1561
  %v1586 = vsel %vm185, %v1561, %v1563
  %v1587 = vsel %vm185, %v1563, %v1565
  %v1588 = vsel %vm185, %v1565, %v1567
  %v1589 = vsel %vm185, %v1567, %v1569
  %v1590 = vsel %vm185, %v1571, %v1573
  %v1591 = vsel %vm185, %v1573, %v1575
  %v1592 = vsel %vm185, %v1575, %v1577
  %v1593 = vsel %vm185, %v1577, %v1579
  %v1594 = vsel %vm185, %v1579, %v1581
  %v1595 = vsel %vm185, %v1581, %v1583
  %v1608 = vmax.f32 %v1516, %v1584
  %v1609 = vmax.f32 %v1517, %v1585
  %v1610 = vmax.f32 %v1518, %v1586
  %v1611 = vmax.f32 %v1519, %v1587
  %v1612 = vmax.f32 %v1520, %v1588
  %v1613 = vmax.f32 %v1521, %v1589
  %v1614 = vmax.f32 %v1522, %v1590
  %v1615 = vmax.f32 %v1523, %v1591
  %v1616 = vmax.f32 %v1524, %v1592
  %v1617 = vmax.f32 %v1525, %v1593
  %v1618 = vmax.f32 %v1526, %v1594
  %v1619 = vmax.f32 %v1527, %v1595
  %v1622 = vmax.f32 %v1528, %v1584
  %v1623 = vmax.f32 %v1529, %v1585
  %v1624 = vmax.f32 %v1530, %v1586
  %v1625 = vmax.f32 %v1531, %v1587
  %v1626 = vmax.f32 %v1532, %v1588
  %v1627 = vmax.f32 %v1533, %v1589
  %v1628 = vmax.f32 %v1534, %v1569
  %v1629 = vmax.f32 %v1535, %v1590
  %v1630 = vmax.f32 %v1536, %v1591
  %v1631 = vmax.f32 %v1537, %v1592
  %v1632 = vmax.f32 %v1538, %v1593
  %v1633 = vmax.f32 %v1539, %v1594
  %v1634 = vmax.f32 %v1540, %v1595
  %v1635 = vmax.f32 %v1541, %v1583
  %1650 = vrot.lane.b32.xlu0 %v1622, 110
  %v1651 = vpop.permute.xlu0 %1650
  %1652 = vrot.lane.b32.xlu0 %v1623, 110
  %v1653 = vpop.permute.xlu0 %1652
  %1654 = vrot.lane.b32.xlu0 %v1624, 110
  %v1655 = vpop.permute.xlu0 %1654
  %1656 = vrot.lane.b32.xlu0 %v1625, 110
  %v1657 = vpop.permute.xlu0 %1656
  %1658 = vrot.lane.b32.xlu0 %v1626, 110
  %v1659 = vpop.permute.xlu0 %1658
  %1660 = vrot.lane.b32.xlu0 %v1627, 110
  %v1661 = vpop.permute.xlu0 %1660
  %1662 = vrot.lane.b32.xlu0 %v1628, 110
  %v1663 = vpop.permute.xlu0 %1662
  %1664 = vrot.lane.b32.xlu0 %v1629, 110
  %v1665 = vpop.permute.xlu0 %1664
  %1666 = vrot.lane.b32.xlu0 %v1630, 110
  %v1667 = vpop.permute.xlu0 %1666
  %1668 = vrot.lane.b32.xlu0 %v1631, 110
  %v1669 = vpop.permute.xlu0 %1668
  %1670 = vrot.lane.b32.xlu0 %v1632, 110
  %v1671 = vpop.permute.xlu0 %1670
  %1672 = vrot.lane.b32.xlu0 %v1633, 110
  %v1673 = vpop.permute.xlu0 %1672
  %1674 = vrot.lane.b32.xlu0 %v1634, 110
  %v1675 = vpop.permute.xlu0 %1674
  %1676 = vrot.lane.b32.xlu0 %v1635, 110
  %v1677 = vpop.permute.xlu0 %1676
  %v1678 = vsel %vm291, %v1651, %v1653
  %v1679 = vsel %vm291, %v1653, %v1655
  %v1680 = vsel %vm291, %v1655, %v1657
  %v1681 = vsel %vm291, %v1657, %v1659
  %v1682 = vsel %vm291, %v1659, %v1661
  %v1683 = vsel %vm291, %v1661, %v1663
  %v1684 = vsel %vm291, %v1665, %v1667
  %v1685 = vsel %vm291, %v1667, %v1669
  %v1686 = vsel %vm291, %v1669, %v1671
  %v1687 = vsel %vm291, %v1671, %v1673
  %v1688 = vsel %vm291, %v1673, %v1675
  %v1689 = vsel %vm291, %v1675, %v1677
  %v1702 = vmax.f32 %v1608, %v1678
  %v1703 = vmax.f32 %v1609, %v1679
  %v1704 = vmax.f32 %v1610, %v1680
  %v1705 = vmax.f32 %v1611, %v1681
  %v1706 = vmax.f32 %v1612, %v1682
  %v1707 = vmax.f32 %v1613, %v1683
  %v1708 = vmax.f32 %v1614, %v1684
  %v1709 = vmax.f32 %v1615, %v1685
  %v1710 = vmax.f32 %v1616, %v1686
  %v1711 = vmax.f32 %v1617, %v1687
  %v1712 = vmax.f32 %v1618, %v1688
  %v1713 = vmax.f32 %v1619, %v1689
  %1714 = vst [vmem:[#allocation5] sm:$0xff] %v1702
  %1715 = vst [vmem:[#allocation5 + $0x8] sm:$0xff] %v1703
  %1716 = vst [vmem:[#allocation5 + $0x10] sm:$0xff] %v1704
  %1717 = vst [vmem:[#allocation5 + $0x18] sm:$0xff] %v1705
  %1718 = vst [vmem:[#allocation5 + $0x20] sm:$0xff] %v1706
  %1719 = vst [vmem:[#allocation5 + $0x28] sm:$0xff] %v1707
  %1720 = vst [vmem:[#allocation5 + $0x30] sm:$0xff] %v1708
  %1721 = vst [vmem:[#allocation5 + $0x38] sm:$0xff] %v1709
  %1722 = vst [vmem:[#allocation5 + $0x40] sm:$0xff] %v1710
  %1723 = vst [vmem:[#allocation5 + $0x48] sm:$0xff] %v1711
  %1724 = vst [vmem:[#allocation5 + $0x50] sm:$0xff] %v1712
  %1725 = vst [vmem:[#allocation5 + $0x58] sm:$0xff] %v1713
  %v1726 = vld [vmem:[#allocation5] sm:$0xff]
  %v1727 = vld [vmem:[#allocation5 + $0x30] sm:$0xff]
  %v1728 = vld [vmem:[%s18] sm:$0xff]
  %v1729 = vld [vmem:[%s18 + $0x8] sm:$0xff]
  %1732 = vrot.lane.b32.xlu0 %v1726, 109
  %v1733 = vpop.permute.xlu0 %1732
  %1734 = vrot.lane.b32.xlu0 %v1727, 109
  %v1735 = vpop.permute.xlu0 %1734
  %vm1736 = vcmask 130048
  %v1737 = vsel %vm1736, %v1733, 0
  %v1739 = vsel %vm1736, %v1735, 0
  %1741 = vmatprep.subr.mxu0 0.0
  %1742 = vmatpush1.msra.mxu0 %v1728
  %1743 = vmatprep.subr.mxu0 0.0
  %1744 = vmatpush1.msra.mxu0 %v1729
  %1745 = vmatprep.subr.mxu0 0.0
  %1746 = vmatpush1.msra.mxu0 0.0
  %1747 = vmatprep.subr.mxu0 0.0
  %1748 = vmatpush1.msra.mxu0 0.0
  %1749 = vmatprep.subr.mxu0 0.0
  %1750 = vmatpush1.msra.mxu0 0.0
  %1751 = vmatprep.subr.mxu0 0.0
  %1752 = vmatpush1.msra.mxu0 0.0
  %1753 = vmatprep.subr.mxu0 0.0
  %1754 = vmatpush1.msra.mxu0 0.0
  %1755 = vmatprep.subr.mxu0 0.0
  %1756 = vmatpush1.msra.mxu0 0.0
  %1757 = vmatprep.subr.mxu0 0.0
  %1758 = vmatpush1.msra.mxu0 0.0
  %1759 = vmatprep.subr.mxu0 0.0
  %1760 = vmatpush1.msra.mxu0 0.0
  %1761 = vmatprep.subr.mxu0 0.0
  %1762 = vmatpush1.msra.mxu0 0.0
  %1763 = vmatprep.subr.mxu0 0.0
  %1764 = vmatpush1.msra.mxu0 0.0
  %1765 = vmatprep.subr.mxu0 0.0
  %1766 = vmatpush1.msra.mxu0 0.0
  %1767 = vmatprep.subr.mxu0 0.0
  %1768 = vmatpush1.msra.mxu0 0.0
  %1769 = vmatprep.subr.mxu0 0.0
  %1770 = vmatpush1.msra.mxu0 0.0
  %1771 = vmatprep.subr.mxu0 0.0
  %1772 = vmatpush1.msra.mxu0 0.0
  %1773 = vmatprep.subr.mxu0 0.0
  %1774 = vmatpush1.msra.mxu0 0.0
  %1775 = vmatprep.subr.mxu0 0.0
  %1776 = vmatpush1.msra.mxu0 0.0
  %1777 = vmatprep.subr.mxu0 0.0
  %1778 = vmatpush1.msra.mxu0 0.0
  %1779 = vmatprep.subr.mxu0 0.0
  %1780 = vmatpush1.msra.mxu0 0.0
  %1781 = vmatprep.subr.mxu0 0.0
  %1782 = vmatpush1.msra.mxu0 0.0
  %1783 = vmatprep.subr.mxu0 0.0
  %1784 = vmatpush1.msra.mxu0 0.0
  %1785 = vmatprep.subr.mxu0 0.0
  %1786 = vmatpush1.msra.mxu0 0.0
  %1787 = vmatprep.subr.mxu0 0.0
  %1788 = vmatpush1.msra.mxu0 0.0
  %1789 = vmatprep.subr.mxu0 0.0
  %1790 = vmatpush1.msra.mxu0 0.0
  %1791 = vmatprep.subr.mxu0 0.0
  %1792 = vmatpush1.msra.mxu0 0.0
  %1793 = vmatprep.subr.mxu0 0.0
  %1794 = vmatpush1.msra.mxu0 0.0
  %1795 = vmatprep.subr.mxu0 0.0
  %1796 = vmatpush1.msra.mxu0 0.0
  %1797 = vmatprep.subr.mxu0 0.0
  %1798 = vmatpush1.msra.mxu0 0.0
  %1799 = vmatprep.subr.mxu0 0.0
  %1800 = vmatpush1.msra.mxu0 0.0
  %1801 = vmatprep.subr.mxu0 0.0
  %1802 = vmatpush1.msra.mxu0 0.0
  %1803 = vmatprep.subr.mxu0 0.0
  %1804 = vmatpush1.msra.mxu0 0.0
  %1805 = vmatprep.mubr.f32.mxu0 0.0
  %1806 = vmatmul.mubr.f32.gmra.mrb[0].mxu0 %v1737
  %v1807 = vpop.f32.mrb[0].mxu0
  %v1808 = vadd.f32 0.0, %v1807
  %v1809 = vpop.f32.mrb[0].mxu0
  %1810 = vmatprep.mubr.f32.mxu0 0.0
  %1811 = vmatmul.mubr.f32.gmra.mrb[0].mxu0 %v1739
  %v1812 = vpop.f32.mrb[0].mxu0
  %v1813 = vadd.f32 0.0, %v1812
  %v1814 = vpop.f32.mrb[0].mxu0
  %1815 = vdwg.mxu0
  %1818 = vrot.lane.b32.xlu0 %v1808, 11
  %v1819 = vpop.permute.xlu0 %1818
  %1820 = vrot.lane.b32.xlu0 %v1813, 11
  %v1821 = vpop.permute.xlu0 %1820
  %vm1824 = vcmask 154712
  %1825 = vst.msk [vmem:[#allocation3 + $0x8] sm:$0xff] %vm1824, %v1819
  %1826 = vst.msk [vmem:[#allocation3 + $0x28] sm:$0xff] %vm1824, %v1821
  %v1827 = vld [vmem:[#allocation5] sm:$0xff]
  %v1828 = vld [vmem:[#allocation5 + $0x30] sm:$0xff]
  %v1829 = vld [vmem:[%s18] sm:$0xff]
  %v1830 = vld [vmem:[%s18 + $0x8] sm:$0xff]
  %1833 = vrot.lane.b32.xlu0 %v1827, 73
  %v1834 = vpop.permute.xlu0 %1833
  %1835 = vrot.lane.b32.xlu0 %v1828, 73
  %v1836 = vpop.permute.xlu0 %1835
  %v1837 = vsel %vm1736, %v1834, 0
  %v1839 = vsel %vm1736, %v1836, 0
  %1841 = vmatprep.subr.mxu0 0.0
  %1842 = vmatpush1.msra.mxu0 %v1829
  %1843 = vmatprep.subr.mxu0 0.0
  %1844 = vmatpush1.msra.mxu0 %v1830
  %1845 = vmatprep.subr.mxu0 0.0
  %1846 = vmatpush1.msra.mxu0 0.0
  %1847 = vmatprep.subr.mxu0 0.0
  %1848 = vmatpush1.msra.mxu0 0.0
  %1849 = vmatprep.subr.mxu0 0.0
  %1850 = vmatpush1.msra.mxu0 0.0
  %1851 = vmatprep.subr.mxu0 0.0
  %1852 = vmatpush1.msra.mxu0 0.0
  %1853 = vmatprep.subr.mxu0 0.0
  %1854 = vmatpush1.msra.mxu0 0.0
  %1855 = vmatprep.subr.mxu0 0.0
  %1856 = vmatpush1.msra.mxu0 0.0
  %1857 = vmatprep.subr.mxu0 0.0
  %1858 = vmatpush1.msra.mxu0 0.0
  %1859 = vmatprep.subr.mxu0 0.0
  %1860 = vmatpush1.msra.mxu0 0.0
  %1861 = vmatprep.subr.mxu0 0.0
  %1862 = vmatpush1.msra.mxu0 0.0
  %1863 = vmatprep.subr.mxu0 0.0
  %1864 = vmatpush1.msra.mxu0 0.0
  %1865 = vmatprep.subr.mxu0 0.0
  %1866 = vmatpush1.msra.mxu0 0.0
  %1867 = vmatprep.subr.mxu0 0.0
  %1868 = vmatpush1.msra.mxu0 0.0
  %1869 = vmatprep.subr.mxu0 0.0
  %1870 = vmatpush1.msra.mxu0 0.0
  %1871 = vmatprep.subr.mxu0 0.0
  %1872 = vmatpush1.msra.mxu0 0.0
  %1873 = vmatprep.subr.mxu0 0.0
  %1874 = vmatpush1.msra.mxu0 0.0
  %1875 = vmatprep.subr.mxu0 0.0
  %1876 = vmatpush1.msra.mxu0 0.0
  %1877 = vmatprep.subr.mxu0 0.0
  %1878 = vmatpush1.msra.mxu0 0.0
  %1879 = vmatprep.subr.mxu0 0.0
  %1880 = vmatpush1.msra.mxu0 0.0
  %1881 = vmatprep.subr.mxu0 0.0
  %1882 = vmatpush1.msra.mxu0 0.0
  %1883 = vmatprep.subr.mxu0 0.0
  %1884 = vmatpush1.msra.mxu0 0.0
  %1885 = vmatprep.subr.mxu0 0.0
  %1886 = vmatpush1.msra.mxu0 0.0
  %1887 = vmatprep.subr.mxu0 0.0
  %1888 = vmatpush1.msra.mxu0 0.0
  %1889 = vmatprep.subr.mxu0 0.0
  %1890 = vmatpush1.msra.mxu0 0.0
  %1891 = vmatprep.subr.mxu0 0.0
  %1892 = vmatpush1.msra.mxu0 0.0
  %1893 = vmatprep.subr.mxu0 0.0
  %1894 = vmatpush1.msra.mxu0 0.0
  %1895 = vmatprep.subr.mxu0 0.0
  %1896 = vmatpush1.msra.mxu0 0.0
  %1897 = vmatprep.subr.mxu0 0.0
  %1898 = vmatpush1.msra.mxu0 0.0
  %1899 = vmatprep.subr.mxu0 0.0
  %1900 = vmatpush1.msra.mxu0 0.0
  %1901 = vmatprep.subr.mxu0 0.0
  %1902 = vmatpush1.msra.mxu0 0.0
  %1903 = vmatprep.subr.mxu0 0.0
  %1904 = vmatpush1.msra.mxu0 0.0
  %1905 = vmatprep.mubr.f32.mxu0 0.0
  %1906 = vmatmul.mubr.f32.gmra.mrb[0].mxu0 %v1837
  %v1907 = vpop.f32.mrb[0].mxu0
  %v1908 = vadd.f32 0.0, %v1907
  %v1909 = vpop.f32.mrb[0].mxu0
  %1910 = vmatprep.mubr.f32.mxu0 0.0
  %1911 = vmatmul.mubr.f32.gmra.mrb[0].mxu0 %v1839
  %v1912 = vpop.f32.mrb[0].mxu0
  %v1913 = vadd.f32 0.0, %v1912
  %v1914 = vpop.f32.mrb[0].mxu0
  %1915 = vdwg.mxu0
  %1918 = vrot.lane.b32.xlu0 %v1908, 21
  %v1919 = vpop.permute.xlu0 %1918
  %1920 = vrot.lane.b32.xlu0 %v1913, 21
  %v1921 = vpop.permute.xlu0 %1920
  %vm1924 = vcmask 236712
  %1925 = vst.msk [vmem:[#allocation3 + $0x8] sm:$0xff] %vm1924, %v1919
  %1926 = vst.msk [vmem:[#allocation3 + $0x28] sm:$0xff] %vm1924, %v1921
  %v1927 = vld [vmem:[#allocation5] sm:$0xff]
  %v1928 = vld [vmem:[#allocation5 + $0x30] sm:$0xff]
  %v1929 = vld [vmem:[%s18] sm:$0xff]
  %v1930 = vld [vmem:[%s18 + $0x8] sm:$0xff]
  %1933 = vrot.lane.b32.xlu0 %v1927, 37
  %v1934 = vpop.permute.xlu0 %1933
  %1935 = vrot.lane.b32.xlu0 %v1928, 37
  %v1936 = vpop.permute.xlu0 %1935
  %v1937 = vsel %vm1736, %v1934, 0
  %v1939 = vsel %vm1736, %v1936, 0
  %1941 = vmatprep.subr.mxu0 0.0
  %1942 = vmatpush1.msra.mxu0 %v1929
  %1943 = vmatprep.subr.mxu0 0.0
  %1944 = vmatpush1.msra.mxu0 %v1930
  %1945 = vmatprep.subr.mxu0 0.0
  %1946 = vmatpush1.msra.mxu0 0.0
  %1947 = vmatprep.subr.mxu0 0.0
  %1948 = vmatpush1.msra.mxu0 0.0
  %1949 = vmatprep.subr.mxu0 0.0
  %1950 = vmatpush1.msra.mxu0 0.0
  %1951 = vmatprep.subr.mxu0 0.0
  %1952 = vmatpush1.msra.mxu0 0.0
  %1953 = vmatprep.subr.mxu0 0.0
  %1954 = vmatpush1.msra.mxu0 0.0
  %1955 = vmatprep.subr.mxu0 0.0
  %1956 = vmatpush1.msra.mxu0 0.0
  %1957 = vmatprep.subr.mxu0 0.0
  %1958 = vmatpush1.msra.mxu0 0.0
  %1959 = vmatprep.subr.mxu0 0.0
  %1960 = vmatpush1.msra.mxu0 0.0
  %1961 = vmatprep.subr.mxu0 0.0
  %1962 = vmatpush1.msra.mxu0 0.0
  %1963 = vmatprep.subr.mxu0 0.0
  %1964 = vmatpush1.msra.mxu0 0.0
  %1965 = vmatprep.subr.mxu0 0.0
  %1966 = vmatpush1.msra.mxu0 0.0
  %1967 = vmatprep.subr.mxu0 0.0
  %1968 = vmatpush1.msra.mxu0 0.0
  %1969 = vmatprep.subr.mxu0 0.0
  %1970 = vmatpush1.msra.mxu0 0.0
  %1971 = vmatprep.subr.mxu0 0.0
  %1972 = vmatpush1.msra.mxu0 0.0
  %1973 = vmatprep.subr.mxu0 0.0
  %1974 = vmatpush1.msra.mxu0 0.0
  %1975 = vmatprep.subr.mxu0 0.0
  %1976 = vmatpush1.msra.mxu0 0.0
  %1977 = vmatprep.subr.mxu0 0.0
  %1978 = vmatpush1.msra.mxu0 0.0
  %1979 = vmatprep.subr.mxu0 0.0
  %1980 = vmatpush1.msra.mxu0 0.0
  %1981 = vmatprep.subr.mxu0 0.0
  %1982 = vmatpush1.msra.mxu0 0.0
  %1983 = vmatprep.subr.mxu0 0.0
  %1984 = vmatpush1.msra.mxu0 0.0
  %1985 = vmatprep.subr.mxu0 0.0
  %1986 = vmatpush1.msra.mxu0 0.0
  %1987 = vmatprep.subr.mxu0 0.0
  %1988 = vmatpush1.msra.mxu0 0.0
  %1989 = vmatprep.subr.mxu0 0.0
  %1990 = vmatpush1.msra.mxu0 0.0
  %1991 = vmatprep.subr.mxu0 0.0
  %1992 = vmatpush1.msra.mxu0 0.0
  %1993 = vmatprep.subr.mxu0 0.0
  %1994 = vmatpush1.msra.mxu0 0.0
  %1995 = vmatprep.subr.mxu0 0.0
  %1996 = vmatpush1.msra.mxu0 0.0
  %1997 = vmatprep.subr.mxu0 0.0
  %1998 = vmatpush1.msra.mxu0 0.0
  %1999 = vmatprep.subr.mxu0 0.0
  %2000 = vmatpush1.msra.mxu0 0.0
  %2001 = vmatprep.subr.mxu0 0.0
  %2002 = vmatpush1.msra.mxu0 0.0
  %2003 = vmatprep.subr.mxu0 0.0
  %2004 = vmatpush1.msra.mxu0 0.0
  %2005 = vmatprep.mubr.f32.mxu0 0.0
  %2006 = vmatmul.mubr.f32.gmra.mrb[0].mxu0 %v1937
  %v2007 = vpop.f32.mrb[0].mxu0
  %v2008 = vadd.f32 0.0, %v2007
  %v2009 = vpop.f32.mrb[0].mxu0
  %2010 = vmatprep.mubr.f32.mxu0 0.0
  %2011 = vmatmul.mubr.f32.gmra.mrb[0].mxu0 %v1939
  %v2012 = vpop.f32.mrb[0].mxu0
  %v2013 = vadd.f32 0.0, %v2012
  %v2014 = vpop.f32.mrb[0].mxu0
  %2015 = vdwg.mxu0
  %2018 = vrot.lane.b32.xlu0 %v2008, 31
  %v2019 = vpop.permute.xlu0 %2018
  %2020 = vrot.lane.b32.xlu0 %v2013, 31
  %v2021 = vpop.permute.xlu0 %2020
  %vm2024 = vcmask 318712
  %2025 = vst.msk [vmem:[#allocation3 + $0x8] sm:$0xff] %vm2024, %v2019
  %2026 = vst.msk [vmem:[#allocation3 + $0x28] sm:$0xff] %vm2024, %v2021
  %v2027 = vld [vmem:[#allocation5] sm:$0xff]
  %v2028 = vld [vmem:[#allocation5 + $0x8] sm:$0xff]
  %v2029 = vld [vmem:[#allocation5 + $0x30] sm:$0xff]
  %v2030 = vld [vmem:[#allocation5 + $0x38] sm:$0xff]
  %v2031 = vld [vmem:[%s18] sm:$0xff]
  %v2032 = vld [vmem:[%s18 + $0x8] sm:$0xff]
  %2037 = vrot.lane.b32.xlu0 %v2027, 1
  %v2038 = vpop.permute.xlu0 %2037
  %2039 = vrot.lane.b32.xlu0 %v2028, 1
  %v2040 = vpop.permute.xlu0 %2039
  %2041 = vrot.lane.b32.xlu0 %v2029, 1
  %v2042 = vpop.permute.xlu0 %2041
  %2043 = vrot.lane.b32.xlu0 %v2030, 1
  %v2044 = vpop.permute.xlu0 %2043
  %v2045 = vsel %vm926, %v2038, %v2040
  %v2046 = vsel %vm926, %v2042, %v2044
  %v2047 = vsel %vm1736, %v2045, 0
  %v2049 = vsel %vm1736, %v2046, 0
  %2051 = vmatprep.subr.mxu0 0.0
  %2052 = vmatpush1.msra.mxu0 %v2031
  %2053 = vmatprep.subr.mxu0 0.0
  %2054 = vmatpush1.msra.mxu0 %v2032
  %2055 = vmatprep.subr.mxu0 0.0
  %2056 = vmatpush1.msra.mxu0 0.0
  %2057 = vmatprep.subr.mxu0 0.0
  %2058 = vmatpush1.msra.mxu0 0.0
  %2059 = vmatprep.subr.mxu0 0.0
  %2060 = vmatpush1.msra.mxu0 0.0
  %2061 = vmatprep.subr.mxu0 0.0
  %2062 = vmatpush1.msra.mxu0 0.0
  %2063 = vmatprep.subr.mxu0 0.0
  %2064 = vmatpush1.msra.mxu0 0.0
  %2065 = vmatprep.subr.mxu0 0.0
  %2066 = vmatpush1.msra.mxu0 0.0
  %2067 = vmatprep.subr.mxu0 0.0
  %2068 = vmatpush1.msra.mxu0 0.0
  %2069 = vmatprep.subr.mxu0 0.0
  %2070 = vmatpush1.msra.mxu0 0.0
  %2071 = vmatprep.subr.mxu0 0.0
  %2072 = vmatpush1.msra.mxu0 0.0
  %2073 = vmatprep.subr.mxu0 0.0
  %2074 = vmatpush1.msra.mxu0 0.0
  %2075 = vmatprep.subr.mxu0 0.0
  %2076 = vmatpush1.msra.mxu0 0.0
  %2077 = vmatprep.subr.mxu0 0.0
  %2078 = vmatpush1.msra.mxu0 0.0
  %2079 = vmatprep.subr.mxu0 0.0
  %2080 = vmatpush1.msra.mxu0 0.0
  %2081 = vmatprep.subr.mxu0 0.0
  %2082 = vmatpush1.msra.mxu0 0.0
  %2083 = vmatprep.subr.mxu0 0.0
  %2084 = vmatpush1.msra.mxu0 0.0
  %2085 = vmatprep.subr.mxu0 0.0
  %2086 = vmatpush1.msra.mxu0 0.0
  %2087 = vmatprep.subr.mxu0 0.0
  %2088 = vmatpush1.msra.mxu0 0.0
  %2089 = vmatprep.subr.mxu0 0.0
  %2090 = vmatpush1.msra.mxu0 0.0
  %2091 = vmatprep.subr.mxu0 0.0
  %2092 = vmatpush1.msra.mxu0 0.0
  %2093 = vmatprep.subr.mxu0 0.0
  %2094 = vmatpush1.msra.mxu0 0.0
  %2095 = vmatprep.subr.mxu0 0.0
  %2096 = vmatpush1.msra.mxu0 0.0
  %2097 = vmatprep.subr.mxu0 0.0
  %2098 = vmatpush1.msra.mxu0 0.0
  %2099 = vmatprep.subr.mxu0 0.0
  %2100 = vmatpush1.msra.mxu0 0.0
  %2101 = vmatprep.subr.mxu0 0.0
  %2102 = vmatpush1.msra.mxu0 0.0
  %2103 = vmatprep.subr.mxu0 0.0
  %2104 = vmatpush1.msra.mxu0 0.0
  %2105 = vmatprep.subr.mxu0 0.0
  %2106 = vmatpush1.msra.mxu0 0.0
  %2107 = vmatprep.subr.mxu0 0.0
  %2108 = vmatpush1.msra.mxu0 0.0
  %2109 = vmatprep.subr.mxu0 0.0
  %2110 = vmatpush1.msra.mxu0 0.0
  %2111 = vmatprep.subr.mxu0 0.0
  %2112 = vmatpush1.msra.mxu0 0.0
  %2113 = vmatprep.subr.mxu0 0.0
  %2114 = vmatpush1.msra.mxu0 0.0
  %2115 = vmatprep.mubr.f32.mxu0 0.0
  %2116 = vmatmul.mubr.f32.gmra.mrb[0].mxu0 %v2047
  %v2117 = vpop.f32.mrb[0].mxu0
  %v2118 = vadd.f32 0.0, %v2117
  %v2119 = vpop.f32.mrb[0].mxu0
  %2120 = vmatprep.mubr.f32.mxu0 0.0
  %2121 = vmatmul.mubr.f32.gmra.mrb[0].mxu0 %v2049
  %v2122 = vpop.f32.mrb[0].mxu0
  %v2123 = vadd.f32 0.0, %v2122
  %v2124 = vpop.f32.mrb[0].mxu0
  %2125 = vdwg.mxu0
  %2128 = vrot.lane.b32.xlu0 %v2118, 41
  %v2129 = vpop.permute.xlu0 %2128
  %2130 = vrot.lane.b32.xlu0 %v2123, 41
  %v2131 = vpop.permute.xlu0 %2130
  %vm2134 = vcmask 400712
  %2135 = vst.msk [vmem:[#allocation3 + $0x8] sm:$0xff] %vm2134, %v2129
  %2136 = vst.msk [vmem:[#allocation3 + $0x28] sm:$0xff] %vm2134, %v2131
  %v2137 = vld [vmem:[#allocation5 + $0x8] sm:$0xff]
  %v2138 = vld [vmem:[#allocation5 + $0x38] sm:$0xff]
  %v2139 = vld [vmem:[%s18] sm:$0xff]
  %v2140 = vld [vmem:[%s18 + $0x8] sm:$0xff]
  %2143 = vrot.lane.b32.xlu0 %v2137, 93
  %v2144 = vpop.permute.xlu0 %2143
  %2145 = vrot.lane.b32.xlu0 %v2138, 93
  %v2146 = vpop.permute.xlu0 %2145
  %v2147 = vsel %vm1736, %v2144, 0
  %v2149 = vsel %vm1736, %v2146, 0
  %2151 = vmatprep.subr.mxu0 0.0
  %2152 = vmatpush1.msra.mxu0 %v2139
  %2153 = vmatprep.subr.mxu0 0.0
  %2154 = vmatpush1.msra.mxu0 %v2140
  %2155 = vmatprep.subr.mxu0 0.0
  %2156 = vmatpush1.msra.mxu0 0.0
  %2157 = vmatprep.subr.mxu0 0.0
  %2158 = vmatpush1.msra.mxu0 0.0
  %2159 = vmatprep.subr.mxu0 0.0
  %2160 = vmatpush1.msra.mxu0 0.0
  %2161 = vmatprep.subr.mxu0 0.0
  %2162 = vmatpush1.msra.mxu0 0.0
  %2163 = vmatprep.subr.mxu0 0.0
  %2164 = vmatpush1.msra.mxu0 0.0
  %2165 = vmatprep.subr.mxu0 0.0
  %2166 = vmatpush1.msra.mxu0 0.0
  %2167 = vmatprep.subr.mxu0 0.0
  %2168 = vmatpush1.msra.mxu0 0.0
  %2169 = vmatprep.subr.mxu0 0.0
  %2170 = vmatpush1.msra.mxu0 0.0
  %2171 = vmatprep.subr.mxu0 0.0
  %2172 = vmatpush1.msra.mxu0 0.0
  %2173 = vmatprep.subr.mxu0 0.0
  %2174 = vmatpush1.msra.mxu0 0.0
  %2175 = vmatprep.subr.mxu0 0.0
  %2176 = vmatpush1.msra.mxu0 0.0
  %2177 = vmatprep.subr.mxu0 0.0
  %2178 = vmatpush1.msra.mxu0 0.0
  %2179 = vmatprep.subr.mxu0 0.0
  %2180 = vmatpush1.msra.mxu0 0.0
  %2181 = vmatprep.subr.mxu0 0.0
  %2182 = vmatpush1.msra.mxu0 0.0
  %2183 = vmatprep.subr.mxu0 0.0
  %2184 = vmatpush1.msra.mxu0 0.0
  %2185 = vmatprep.subr.mxu0 0.0
  %2186 = vmatpush1.msra.mxu0 0.0
  %2187 = vmatprep.subr.mxu0 0.0
  %2188 = vmatpush1.msra.mxu0 0.0
  %2189 = vmatprep.subr.mxu0 0.0
  %2190 = vmatpush1.msra.mxu0 0.0
  %2191 = vmatprep.subr.mxu0 0.0
  %2192 = vmatpush1.msra.mxu0 0.0
  %2193 = vmatprep.subr.mxu0 0.0
  %2194 = vmatpush1.msra.mxu0 0.0
  %2195 = vmatprep.subr.mxu0 0.0
  %2196 = vmatpush1.msra.mxu0 0.0
  %2197 = vmatprep.subr.mxu0 0.0
  %2198 = vmatpush1.msra.mxu0 0.0
  %2199 = vmatprep.subr.mxu0 0.0
  %2200 = vmatpush1.msra.mxu0 0.0
  %2201 = vmatprep.subr.mxu0 0.0
  %2202 = vmatpush1.msra.mxu0 0.0
  %2203 = vmatprep.subr.mxu0 0.0
  %2204 = vmatpush1.msra.mxu0 0.0
  %2205 = vmatprep.subr.mxu0 0.0
  %2206 = vmatpush1.msra.mxu0 0.0
  %2207 = vmatprep.subr.mxu0 0.0
  %2208 = vmatpush1.msra.mxu0 0.0
  %2209 = vmatprep.subr.mxu0 0.0
  %2210 = vmatpush1.msra.mxu0 0.0
  %2211 = vmatprep.subr.mxu0 0.0
  %2212 = vmatpush1.msra.mxu0 0.0
  %2213 = vmatprep.subr.mxu0 0.0
  %2214 = vmatpush1.msra.mxu0 0.0
  %2215 = vmatprep.mubr.f32.mxu0 0.0
  %2216 = vmatmul.mubr.f32.gmra.mrb[0].mxu0 %v2147
  %v2217 = vpop.f32.mrb[0].mxu0
  %v2218 = vadd.f32 0.0, %v2217
  %v2219 = vpop.f32.mrb[0].mxu0
  %2220 = vmatprep.mubr.f32.mxu0 0.0
  %2221 = vmatmul.mubr.f32.gmra.mrb[0].mxu0 %v2149
  %v2222 = vpop.f32.mrb[0].mxu0
  %v2223 = vadd.f32 0.0, %v2222
  %v2224 = vpop.f32.mrb[0].mxu0
  %2225 = vdwg.mxu0
  %2228 = vrot.lane.b32.xlu0 %v2218, 51
  %v2229 = vpop.permute.xlu0 %2228
  %2230 = vrot.lane.b32.xlu0 %v2223, 51
  %v2231 = vpop.permute.xlu0 %2230
  %vm2234 = vcmask 482712
  %2235 = vst.msk [vmem:[#allocation3 + $0x8] sm:$0xff] %vm2234, %v2229
  %2236 = vst.msk [vmem:[#allocation3 + $0x28] sm:$0xff] %vm2234, %v2231
  %v2237 = vld [vmem:[#allocation5 + $0x8] sm:$0xff]
  %v2238 = vld [vmem:[#allocation5 + $0x38] sm:$0xff]
  %v2239 = vld [vmem:[%s18] sm:$0xff]
  %v2240 = vld [vmem:[%s18 + $0x8] sm:$0xff]
  %2243 = vrot.lane.b32.xlu0 %v2237, 57
  %v2244 = vpop.permute.xlu0 %2243
  %2245 = vrot.lane.b32.xlu0 %v2238, 57
  %v2246 = vpop.permute.xlu0 %2245
  %v2247 = vsel %vm1736, %v2244, 0
  %v2249 = vsel %vm1736, %v2246, 0
  %2251 = vmatprep.subr.mxu0 0.0
  %2252 = vmatpush1.msra.mxu0 %v2239
  %2253 = vmatprep.subr.mxu0 0.0
  %2254 = vmatpush1.msra.mxu0 %v2240
  %2255 = vmatprep.subr.mxu0 0.0
  %2256 = vmatpush1.msra.mxu0 0.0
  %2257 = vmatprep.subr.mxu0 0.0
  %2258 = vmatpush1.msra.mxu0 0.0
  %2259 = vmatprep.subr.mxu0 0.0
  %2260 = vmatpush1.msra.mxu0 0.0
  %2261 = vmatprep.subr.mxu0 0.0
  %2262 = vmatpush1.msra.mxu0 0.0
  %2263 = vmatprep.subr.mxu0 0.0
  %2264 = vmatpush1.msra.mxu0 0.0
  %2265 = vmatprep.subr.mxu0 0.0
  %2266 = vmatpush1.msra.mxu0 0.0
  %2267 = vmatprep.subr.mxu0 0.0
  %2268 = vmatpush1.msra.mxu0 0.0
  %2269 = vmatprep.subr.mxu0 0.0
  %2270 = vmatpush1.msra.mxu0 0.0
  %2271 = vmatprep.subr.mxu0 0.0
  %2272 = vmatpush1.msra.mxu0 0.0
  %2273 = vmatprep.subr.mxu0 0.0
  %2274 = vmatpush1.msra.mxu0 0.0
  %2275 = vmatprep.subr.mxu0 0.0
  %2276 = vmatpush1.msra.mxu0 0.0
  %2277 = vmatprep.subr.mxu0 0.0
  %2278 = vmatpush1.msra.mxu0 0.0
  %2279 = vmatprep.subr.mxu0 0.0
  %2280 = vmatpush1.msra.mxu0 0.0
  %2281 = vmatprep.subr.mxu0 0.0
  %2282 = vmatpush1.msra.mxu0 0.0
  %2283 = vmatprep.subr.mxu0 0.0
  %2284 = vmatpush1.msra.mxu0 0.0
  %2285 = vmatprep.subr.mxu0 0.0
  %2286 = vmatpush1.msra.mxu0 0.0
  %2287 = vmatprep.subr.mxu0 0.0
  %2288 = vmatpush1.msra.mxu0 0.0
  %2289 = vmatprep.subr.mxu0 0.0
  %2290 = vmatpush1.msra.mxu0 0.0
  %2291 = vmatprep.subr.mxu0 0.0
  %2292 = vmatpush1.msra.mxu0 0.0
  %2293 = vmatprep.subr.mxu0 0.0
  %2294 = vmatpush1.msra.mxu0 0.0
  %2295 = vmatprep.subr.mxu0 0.0
  %2296 = vmatpush1.msra.mxu0 0.0
  %2297 = vmatprep.subr.mxu0 0.0
  %2298 = vmatpush1.msra.mxu0 0.0
  %2299 = vmatprep.subr.mxu0 0.0
  %2300 = vmatpush1.msra.mxu0 0.0
  %2301 = vmatprep.subr.mxu0 0.0
  %2302 = vmatpush1.msra.mxu0 0.0
  %2303 = vmatprep.subr.mxu0 0.0
  %2304 = vmatpush1.msra.mxu0 0.0
  %2305 = vmatprep.subr.mxu0 0.0
  %2306 = vmatpush1.msra.mxu0 0.0
  %2307 = vmatprep.subr.mxu0 0.0
  %2308 = vmatpush1.msra.mxu0 0.0
  %2309 = vmatprep.subr.mxu0 0.0
  %2310 = vmatpush1.msra.mxu0 0.0
  %2311 = vmatprep.subr.mxu0 0.0
  %2312 = vmatpush1.msra.mxu0 0.0
  %2313 = vmatprep.subr.mxu0 0.0
  %2314 = vmatpush1.msra.mxu0 0.0
  %2315 = vmatprep.mubr.f32.mxu0 0.0
  %2316 = vmatmul.mubr.f32.gmra.mrb[0].mxu0 %v2247
  %v2317 = vpop.f32.mrb[0].mxu0
  %v2318 = vadd.f32 0.0, %v2317
  %v2319 = vpop.f32.mrb[0].mxu0
  %2320 = vmatprep.mubr.f32.mxu0 0.0
  %2321 = vmatmul.mubr.f32.gmra.mrb[0].mxu0 %v2249
  %v2322 = vpop.f32.mrb[0].mxu0
  %v2323 = vadd.f32 0.0, %v2322
  %v2324 = vpop.f32.mrb[0].mxu0
  %2325 = vdwg.mxu0
  %2328 = vrot.lane.b32.xlu0 %v2318, 61
  %v2329 = vpop.permute.xlu0 %2328
  %2330 = vrot.lane.b32.xlu0 %v2323, 61
  %v2331 = vpop.permute.xlu0 %2330
  %vm2334 = vcmask 564712
  %2335 = vst.msk [vmem:[#allocation3 + $0x8] sm:$0xff] %vm2334, %v2329
  %2336 = vst.msk [vmem:[#allocation3 + $0x28] sm:$0xff] %vm2334, %v2331
  %v2337 = vld [vmem:[#allocation5 + $0x8] sm:$0xff]
  %v2338 = vld [vmem:[#allocation5 + $0x38] sm:$0xff]
  %v2339 = vld [vmem:[%s18] sm:$0xff]
  %v2340 = vld [vmem:[%s18 + $0x8] sm:$0xff]
  %2343 = vrot.lane.b32.xlu0 %v2337, 21
  %v2344 = vpop.permute.xlu0 %2343
  %2345 = vrot.lane.b32.xlu0 %v2338, 21
  %v2346 = vpop.permute.xlu0 %2345
  %v2347 = vsel %vm1736, %v2344, 0
  %v2349 = vsel %vm1736, %v2346, 0
  %2351 = vmatprep.subr.mxu0 0.0
  %2352 = vmatpush1.msra.mxu0 %v2339
  %2353 = vmatprep.subr.mxu0 0.0
  %2354 = vmatpush1.msra.mxu0 %v2340
  %2355 = vmatprep.subr.mxu0 0.0
  %2356 = vmatpush1.msra.mxu0 0.0
  %2357 = vmatprep.subr.mxu0 0.0
  %2358 = vmatpush1.msra.mxu0 0.0
  %2359 = vmatprep.subr.mxu0 0.0
  %2360 = vmatpush1.msra.mxu0 0.0
  %2361 = vmatprep.subr.mxu0 0.0
  %2362 = vmatpush1.msra.mxu0 0.0
  %2363 = vmatprep.subr.mxu0 0.0
  %2364 = vmatpush1.msra.mxu0 0.0
  %2365 = vmatprep.subr.mxu0 0.0
  %2366 = vmatpush1.msra.mxu0 0.0
  %2367 = vmatprep.subr.mxu0 0.0
  %2368 = vmatpush1.msra.mxu0 0.0
  %2369 = vmatprep.subr.mxu0 0.0
  %2370 = vmatpush1.msra.mxu0 0.0
  %2371 = vmatprep.subr.mxu0 0.0
  %2372 = vmatpush1.msra.mxu0 0.0
  %2373 = vmatprep.subr.mxu0 0.0
  %2374 = vmatpush1.msra.mxu0 0.0
  %2375 = vmatprep.subr.mxu0 0.0
  %2376 = vmatpush1.msra.mxu0 0.0
  %2377 = vmatprep.subr.mxu0 0.0
  %2378 = vmatpush1.msra.mxu0 0.0
  %2379 = vmatprep.subr.mxu0 0.0
  %2380 = vmatpush1.msra.mxu0 0.0
  %2381 = vmatprep.subr.mxu0 0.0
  %2382 = vmatpush1.msra.mxu0 0.0
  %2383 = vmatprep.subr.mxu0 0.0
  %2384 = vmatpush1.msra.mxu0 0.0
  %2385 = vmatprep.subr.mxu0 0.0
  %2386 = vmatpush1.msra.mxu0 0.0
  %2387 = vmatprep.subr.mxu0 0.0
  %2388 = vmatpush1.msra.mxu0 0.0
  %2389 = vmatprep.subr.mxu0 0.0
  %2390 = vmatpush1.msra.mxu0 0.0
  %2391 = vmatprep.subr.mxu0 0.0
  %2392 = vmatpush1.msra.mxu0 0.0
  %2393 = vmatprep.subr.mxu0 0.0
  %2394 = vmatpush1.msra.mxu0 0.0
  %2395 = vmatprep.subr.mxu0 0.0
  %2396 = vmatpush1.msra.mxu0 0.0
  %2397 = vmatprep.subr.mxu0 0.0
  %2398 = vmatpush1.msra.mxu0 0.0
  %2399 = vmatprep.subr.mxu0 0.0
  %2400 = vmatpush1.msra.mxu0 0.0
  %2401 = vmatprep.subr.mxu0 0.0
  %2402 = vmatpush1.msra.mxu0 0.0
  %2403 = vmatprep.subr.mxu0 0.0
  %2404 = vmatpush1.msra.mxu0 0.0
  %2405 = vmatprep.subr.mxu0 0.0
  %2406 = vmatpush1.msra.mxu0 0.0
  %2407 = vmatprep.subr.mxu0 0.0
  %2408 = vmatpush1.msra.mxu0 0.0
  %2409 = vmatprep.subr.mxu0 0.0
  %2410 = vmatpush1.msra.mxu0 0.0
  %2411 = vmatprep.subr.mxu0 0.0
  %2412 = vmatpush1.msra.mxu0 0.0
  %2413 = vmatprep.subr.mxu0 0.0
  %2414 = vmatpush1.msra.mxu0 0.0
  %2415 = vmatprep.mubr.f32.mxu0 0.0
  %2416 = vmatmul.mubr.f32.gmra.mrb[0].mxu0 %v2347
  %v2417 = vpop.f32.mrb[0].mxu0
  %v2418 = vadd.f32 0.0, %v2417
  %v2419 = vpop.f32.mrb[0].mxu0
  %2420 = vmatprep.mubr.f32.mxu0 0.0
  %2421 = vmatmul.mubr.f32.gmra.mrb[0].mxu0 %v2349
  %v2422 = vpop.f32.mrb[0].mxu0
  %v2423 = vadd.f32 0.0, %v2422
  %v2424 = vpop.f32.mrb[0].mxu0
  %2425 = vdwg.mxu0
  %2428 = vrot.lane.b32.xlu0 %v2418, 71
  %v2429 = vpop.permute.xlu0 %2428
  %2430 = vrot.lane.b32.xlu0 %v2423, 71
  %v2431 = vpop.permute.xlu0 %2430
  %vm2434 = vcmask 646712
  %2435 = vst.msk [vmem:[#allocation3 + $0x8] sm:$0xff] %vm2434, %v2429
  %2436 = vst.msk [vmem:[#allocation3 + $0x28] sm:$0xff] %vm2434, %v2431
  %v2437 = vld [vmem:[#allocation5 + $0x10] sm:$0xff]
  %v2438 = vld [vmem:[#allocation5 + $0x40] sm:$0xff]
  %v2439 = vld [vmem:[%s18] sm:$0xff]
  %v2440 = vld [vmem:[%s18 + $0x8] sm:$0xff]
  %2443 = vrot.lane.b32.xlu0 %v2437, 113
  %v2444 = vpop.permute.xlu0 %2443
  %2445 = vrot.lane.b32.xlu0 %v2438, 113
  %v2446 = vpop.permute.xlu0 %2445
  %v2447 = vsel %vm1736, %v2444, 0
  %v2449 = vsel %vm1736, %v2446, 0
  %2451 = vmatprep.subr.mxu0 0.0
  %2452 = vmatpush1.msra.mxu0 %v2439
  %2453 = vmatprep.subr.mxu0 0.0
  %2454 = vmatpush1.msra.mxu0 %v2440
  %2455 = vmatprep.subr.mxu0 0.0
  %2456 = vmatpush1.msra.mxu0 0.0
  %2457 = vmatprep.subr.mxu0 0.0
  %2458 = vmatpush1.msra.mxu0 0.0
  %2459 = vmatprep.subr.mxu0 0.0
  %2460 = vmatpush1.msra.mxu0 0.0
  %2461 = vmatprep.subr.mxu0 0.0
  %2462 = vmatpush1.msra.mxu0 0.0
  %2463 = vmatprep.subr.mxu0 0.0
  %2464 = vmatpush1.msra.mxu0 0.0
  %2465 = vmatprep.subr.mxu0 0.0
  %2466 = vmatpush1.msra.mxu0 0.0
  %2467 = vmatprep.subr.mxu0 0.0
  %2468 = vmatpush1.msra.mxu0 0.0
  %2469 = vmatprep.subr.mxu0 0.0
  %2470 = vmatpush1.msra.mxu0 0.0
  %2471 = vmatprep.subr.mxu0 0.0
  %2472 = vmatpush1.msra.mxu0 0.0
  %2473 = vmatprep.subr.mxu0 0.0
  %2474 = vmatpush1.msra.mxu0 0.0
  %2475 = vmatprep.subr.mxu0 0.0
  %2476 = vmatpush1.msra.mxu0 0.0
  %2477 = vmatprep.subr.mxu0 0.0
  %2478 = vmatpush1.msra.mxu0 0.0
  %2479 = vmatprep.subr.mxu0 0.0
  %2480 = vmatpush1.msra.mxu0 0.0
  %2481 = vmatprep.subr.mxu0 0.0
  %2482 = vmatpush1.msra.mxu0 0.0
  %2483 = vmatprep.subr.mxu0 0.0
  %2484 = vmatpush1.msra.mxu0 0.0
  %2485 = vmatprep.subr.mxu0 0.0
  %2486 = vmatpush1.msra.mxu0 0.0
  %2487 = vmatprep.subr.mxu0 0.0
  %2488 = vmatpush1.msra.mxu0 0.0
  %2489 = vmatprep.subr.mxu0 0.0
  %2490 = vmatpush1.msra.mxu0 0.0
  %2491 = vmatprep.subr.mxu0 0.0
  %2492 = vmatpush1.msra.mxu0 0.0
  %2493 = vmatprep.subr.mxu0 0.0
  %2494 = vmatpush1.msra.mxu0 0.0
  %2495 = vmatprep.subr.mxu0 0.0
  %2496 = vmatpush1.msra.mxu0 0.0
  %2497 = vmatprep.subr.mxu0 0.0
  %2498 = vmatpush1.msra.mxu0 0.0
  %2499 = vmatprep.subr.mxu0 0.0
  %2500 = vmatpush1.msra.mxu0 0.0
  %2501 = vmatprep.subr.mxu0 0.0
  %2502 = vmatpush1.msra.mxu0 0.0
  %2503 = vmatprep.subr.mxu0 0.0
  %2504 = vmatpush1.msra.mxu0 0.0
  %2505 = vmatprep.subr.mxu0 0.0
  %2506 = vmatpush1.msra.mxu0 0.0
  %2507 = vmatprep.subr.mxu0 0.0
  %2508 = vmatpush1.msra.mxu0 0.0
  %2509 = vmatprep.subr.mxu0 0.0
  %2510 = vmatpush1.msra.mxu0 0.0
  %2511 = vmatprep.subr.mxu0 0.0
  %2512 = vmatpush1.msra.mxu0 0.0
  %2513 = vmatprep.subr.mxu0 0.0
  %2514 = vmatpush1.msra.mxu0 0.0
  %2515 = vmatprep.mubr.f32.mxu0 0.0
  %2516 = vmatmul.mubr.f32.gmra.mrb[0].mxu0 %v2447
  %v2517 = vpop.f32.mrb[0].mxu0
  %v2518 = vadd.f32 0.0, %v2517
  %v2519 = vpop.f32.mrb[0].mxu0
  %2520 = vmatprep.mubr.f32.mxu0 0.0
  %2521 = vmatmul.mubr.f32.gmra.mrb[0].mxu0 %v2449
  %v2522 = vpop.f32.mrb[0].mxu0
  %v2523 = vadd.f32 0.0, %v2522
  %v2524 = vpop.f32.mrb[0].mxu0
  %2525 = vdwg.mxu0
  %2528 = vrot.lane.b32.xlu0 %v2518, 81
  %v2529 = vpop.permute.xlu0 %2528
  %2530 = vrot.lane.b32.xlu0 %v2523, 81
  %v2531 = vpop.permute.xlu0 %2530
  %vm2534 = vcmask 728712
  %2535 = vst.msk [vmem:[#allocation3 + $0x8] sm:$0xff] %vm2534, %v2529
  %2536 = vst.msk [vmem:[#allocation3 + $0x28] sm:$0xff] %vm2534, %v2531
  %v2537 = vld [vmem:[#allocation5 + $0x18] sm:$0xff]
  %v2538 = vld [vmem:[#allocation5 + $0x48] sm:$0xff]
  %v2539 = vld [vmem:[%s18] sm:$0xff]
  %v2540 = vld [vmem:[%s18 + $0x8] sm:$0xff]
  %2543 = vrot.lane.b32.xlu0 %v2537, 109
  %v2544 = vpop.permute.xlu0 %2543
  %2545 = vrot.lane.b32.xlu0 %v2538, 109
  %v2546 = vpop.permute.xlu0 %2545
  %v2547 = vsel %vm1736, %v2544, 0
  %v2549 = vsel %vm1736, %v2546, 0
  %2551 = vmatprep.subr.mxu0 0.0
  %2552 = vmatpush1.msra.mxu0 %v2539
  %2553 = vmatprep.subr.mxu0 0.0
  %2554 = vmatpush1.msra.mxu0 %v2540
  %2555 = vmatprep.subr.mxu0 0.0
  %2556 = vmatpush1.msra.mxu0 0.0
  %2557 = vmatprep.subr.mxu0 0.0
  %2558 = vmatpush1.msra.mxu0 0.0
  %2559 = vmatprep.subr.mxu0 0.0
  %2560 = vmatpush1.msra.mxu0 0.0
  %2561 = vmatprep.subr.mxu0 0.0
  %2562 = vmatpush1.msra.mxu0 0.0
  %2563 = vmatprep.subr.mxu0 0.0
  %2564 = vmatpush1.msra.mxu0 0.0
  %2565 = vmatprep.subr.mxu0 0.0
  %2566 = vmatpush1.msra.mxu0 0.0
  %2567 = vmatprep.subr.mxu0 0.0
  %2568 = vmatpush1.msra.mxu0 0.0
  %2569 = vmatprep.subr.mxu0 0.0
  %2570 = vmatpush1.msra.mxu0 0.0
  %2571 = vmatprep.subr.mxu0 0.0
  %2572 = vmatpush1.msra.mxu0 0.0
  %2573 = vmatprep.subr.mxu0 0.0
  %2574 = vmatpush1.msra.mxu0 0.0
  %2575 = vmatprep.subr.mxu0 0.0
  %2576 = vmatpush1.msra.mxu0 0.0
  %2577 = vmatprep.subr.mxu0 0.0
  %2578 = vmatpush1.msra.mxu0 0.0
  %2579 = vmatprep.subr.mxu0 0.0
  %2580 = vmatpush1.msra.mxu0 0.0
  %2581 = vmatprep.subr.mxu0 0.0
  %2582 = vmatpush1.msra.mxu0 0.0
  %2583 = vmatprep.subr.mxu0 0.0
  %2584 = vmatpush1.msra.mxu0 0.0
  %2585 = vmatprep.subr.mxu0 0.0
  %2586 = vmatpush1.msra.mxu0 0.0
  %2587 = vmatprep.subr.mxu0 0.0
  %2588 = vmatpush1.msra.mxu0 0.0
  %2589 = vmatprep.subr.mxu0 0.0
  %2590 = vmatpush1.msra.mxu0 0.0
  %2591 = vmatprep.subr.mxu0 0.0
  %2592 = vmatpush1.msra.mxu0 0.0
  %2593 = vmatprep.subr.mxu0 0.0
  %2594 = vmatpush1.msra.mxu0 0.0
  %2595 = vmatprep.subr.mxu0 0.0
  %2596 = vmatpush1.msra.mxu0 0.0
  %2597 = vmatprep.subr.mxu0 0.0
  %2598 = vmatpush1.msra.mxu0 0.0
  %2599 = vmatprep.subr.mxu0 0.0
  %2600 = vmatpush1.msra.mxu0 0.0
  %2601 = vmatprep.subr.mxu0 0.0
  %2602 = vmatpush1.msra.mxu0 0.0
  %2603 = vmatprep.subr.mxu0 0.0
  %2604 = vmatpush1.msra.mxu0 0.0
  %2605 = vmatprep.subr.mxu0 0.0
  %2606 = vmatpush1.msra.mxu0 0.0
  %2607 = vmatprep.subr.mxu0 0.0
  %2608 = vmatpush1.msra.mxu0 0.0
  %2609 = vmatprep.subr.mxu0 0.0
  %2610 = vmatpush1.msra.mxu0 0.0
  %2611 = vmatprep.subr.mxu0 0.0
  %2612 = vmatpush1.msra.mxu0 0.0
  %2613 = vmatprep.subr.mxu0 0.0
  %2614 = vmatpush1.msra.mxu0 0.0
  %2615 = vmatprep.mubr.f32.mxu0 0.0
  %2616 = vmatmul.mubr.f32.gmra.mrb[0].mxu0 %v2547
  %v2617 = vpop.f32.mrb[0].mxu0
  %v2618 = vadd.f32 0.0, %v2617
  %v2619 = vpop.f32.mrb[0].mxu0
  %2620 = vmatprep.mubr.f32.mxu0 0.0
  %2621 = vmatmul.mubr.f32.gmra.mrb[0].mxu0 %v2549
  %v2622 = vpop.f32.mrb[0].mxu0
  %v2623 = vadd.f32 0.0, %v2622
  %v2624 = vpop.f32.mrb[0].mxu0
  %2625 = vdwg.mxu0
  %2628 = vrot.lane.b32.xlu0 %v2618, 11
  %v2629 = vpop.permute.xlu0 %2628
  %2630 = vrot.lane.b32.xlu0 %v2623, 11
  %v2631 = vpop.permute.xlu0 %2630
  %2634 = vst.msk [vmem:[#allocation3 + $0x10] sm:$0xff] %vm1824, %v2629
  %2635 = vst.msk [vmem:[#allocation3 + $0x30] sm:$0xff] %vm1824, %v2631
  %v2636 = vld [vmem:[#allocation5 + $0x18] sm:$0xff]
  %v2637 = vld [vmem:[#allocation5 + $0x48] sm:$0xff]
  %v2638 = vld [vmem:[%s18] sm:$0xff]
  %v2639 = vld [vmem:[%s18 + $0x8] sm:$0xff]
  %2642 = vrot.lane.b32.xlu0 %v2636, 73
  %v2643 = vpop.permute.xlu0 %2642
  %2644 = vrot.lane.b32.xlu0 %v2637, 73
  %v2645 = vpop.permute.xlu0 %2644
  %v2646 = vsel %vm1736, %v2643, 0
  %v2648 = vsel %vm1736, %v2645, 0
  %2650 = vmatprep.subr.mxu0 0.0
  %2651 = vmatpush1.msra.mxu0 %v2638
  %2652 = vmatprep.subr.mxu0 0.0
  %2653 = vmatpush1.msra.mxu0 %v2639
  %2654 = vmatprep.subr.mxu0 0.0
  %2655 = vmatpush1.msra.mxu0 0.0
  %2656 = vmatprep.subr.mxu0 0.0
  %2657 = vmatpush1.msra.mxu0 0.0
  %2658 = vmatprep.subr.mxu0 0.0
  %2659 = vmatpush1.msra.mxu0 0.0
  %2660 = vmatprep.subr.mxu0 0.0
  %2661 = vmatpush1.msra.mxu0 0.0
  %2662 = vmatprep.subr.mxu0 0.0
  %2663 = vmatpush1.msra.mxu0 0.0
  %2664 = vmatprep.subr.mxu0 0.0
  %2665 = vmatpush1.msra.mxu0 0.0
  %2666 = vmatprep.subr.mxu0 0.0
  %2667 = vmatpush1.msra.mxu0 0.0
  %2668 = vmatprep.subr.mxu0 0.0
  %2669 = vmatpush1.msra.mxu0 0.0
  %2670 = vmatprep.subr.mxu0 0.0
  %2671 = vmatpush1.msra.mxu0 0.0
  %2672 = vmatprep.subr.mxu0 0.0
  %2673 = vmatpush1.msra.mxu0 0.0
  %2674 = vmatprep.subr.mxu0 0.0
  %2675 = vmatpush1.msra.mxu0 0.0
  %2676 = vmatprep.subr.mxu0 0.0
  %2677 = vmatpush1.msra.mxu0 0.0
  %2678 = vmatprep.subr.mxu0 0.0
  %2679 = vmatpush1.msra.mxu0 0.0
  %2680 = vmatprep.subr.mxu0 0.0
  %2681 = vmatpush1.msra.mxu0 0.0
  %2682 = vmatprep.subr.mxu0 0.0
  %2683 = vmatpush1.msra.mxu0 0.0
  %2684 = vmatprep.subr.mxu0 0.0
  %2685 = vmatpush1.msra.mxu0 0.0
  %2686 = vmatprep.subr.mxu0 0.0
  %2687 = vmatpush1.msra.mxu0 0.0
  %2688 = vmatprep.subr.mxu0 0.0
  %2689 = vmatpush1.msra.mxu0 0.0
  %2690 = vmatprep.subr.mxu0 0.0
  %2691 = vmatpush1.msra.mxu0 0.0
  %2692 = vmatprep.subr.mxu0 0.0
  %2693 = vmatpush1.msra.mxu0 0.0
  %2694 = vmatprep.subr.mxu0 0.0
  %2695 = vmatpush1.msra.mxu0 0.0
  %2696 = vmatprep.subr.mxu0 0.0
  %2697 = vmatpush1.msra.mxu0 0.0
  %2698 = vmatprep.subr.mxu0 0.0
  %2699 = vmatpush1.msra.mxu0 0.0
  %2700 = vmatprep.subr.mxu0 0.0
  %2701 = vmatpush1.msra.mxu0 0.0
  %2702 = vmatprep.subr.mxu0 0.0
  %2703 = vmatpush1.msra.mxu0 0.0
  %2704 = vmatprep.subr.mxu0 0.0
  %2705 = vmatpush1.msra.mxu0 0.0
  %2706 = vmatprep.subr.mxu0 0.0
  %2707 = vmatpush1.msra.mxu0 0.0
  %2708 = vmatprep.subr.mxu0 0.0
  %2709 = vmatpush1.msra.mxu0 0.0
  %2710 = vmatprep.subr.mxu0 0.0
  %2711 = vmatpush1.msra.mxu0 0.0
  %2712 = vmatprep.subr.mxu0 0.0
  %2713 = vmatpush1.msra.mxu0 0.0
  %2714 = vmatprep.mubr.f32.mxu0 0.0
  %2715 = vmatmul.mubr.f32.gmra.mrb[0].mxu0 %v2646
  %v2716 = vpop.f32.mrb[0].mxu0
  %v2717 = vadd.f32 0.0, %v2716
  %v2718 = vpop.f32.mrb[0].mxu0
  %2719 = vmatprep.mubr.f32.mxu0 0.0
  %2720 = vmatmul.mubr.f32.gmra.mrb[0].mxu0 %v2648
  %v2721 = vpop.f32.mrb[0].mxu0
  %v2722 = vadd.f32 0.0, %v2721
  %v2723 = vpop.f32.mrb[0].mxu0
  %2724 = vdwg.mxu0
  %2727 = vrot.lane.b32.xlu0 %v2717, 21
  %v2728 = vpop.permute.xlu0 %2727
  %2729 = vrot.lane.b32.xlu0 %v2722, 21
  %v2730 = vpop.permute.xlu0 %2729
  %2733 = vst.msk [vmem:[#allocation3 + $0x10] sm:$0xff] %vm1924, %v2728
  %2734 = vst.msk [vmem:[#allocation3 + $0x30] sm:$0xff] %vm1924, %v2730
  %v2735 = vld [vmem:[#allocation5 + $0x18] sm:$0xff]
  %v2736 = vld [vmem:[#allocation5 + $0x48] sm:$0xff]
  %v2737 = vld [vmem:[%s18] sm:$0xff]
  %v2738 = vld [vmem:[%s18 + $0x8] sm:$0xff]
  %2741 = vrot.lane.b32.xlu0 %v2735, 37
  %v2742 = vpop.permute.xlu0 %2741
  %2743 = vrot.lane.b32.xlu0 %v2736, 37
  %v2744 = vpop.permute.xlu0 %2743
  %v2745 = vsel %vm1736, %v2742, 0
  %v2747 = vsel %vm1736, %v2744, 0
  %2749 = vmatprep.subr.mxu0 0.0
  %2750 = vmatpush1.msra.mxu0 %v2737
  %2751 = vmatprep.subr.mxu0 0.0
  %2752 = vmatpush1.msra.mxu0 %v2738
  %2753 = vmatprep.subr.mxu0 0.0
  %2754 = vmatpush1.msra.mxu0 0.0
  %2755 = vmatprep.subr.mxu0 0.0
  %2756 = vmatpush1.msra.mxu0 0.0
  %2757 = vmatprep.subr.mxu0 0.0
  %2758 = vmatpush1.msra.mxu0 0.0
  %2759 = vmatprep.subr.mxu0 0.0
  %2760 = vmatpush1.msra.mxu0 0.0
  %2761 = vmatprep.subr.mxu0 0.0
  %2762 = vmatpush1.msra.mxu0 0.0
  %2763 = vmatprep.subr.mxu0 0.0
  %2764 = vmatpush1.msra.mxu0 0.0
  %2765 = vmatprep.subr.mxu0 0.0
  %2766 = vmatpush1.msra.mxu0 0.0
  %2767 = vmatprep.subr.mxu0 0.0
  %2768 = vmatpush1.msra.mxu0 0.0
  %2769 = vmatprep.subr.mxu0 0.0
  %2770 = vmatpush1.msra.mxu0 0.0
  %2771 = vmatprep.subr.mxu0 0.0
  %2772 = vmatpush1.msra.mxu0 0.0
  %2773 = vmatprep.subr.mxu0 0.0
  %2774 = vmatpush1.msra.mxu0 0.0
  %2775 = vmatprep.subr.mxu0 0.0
  %2776 = vmatpush1.msra.mxu0 0.0
  %2777 = vmatprep.subr.mxu0 0.0
  %2778 = vmatpush1.msra.mxu0 0.0
  %2779 = vmatprep.subr.mxu0 0.0
  %2780 = vmatpush1.msra.mxu0 0.0
  %2781 = vmatprep.subr.mxu0 0.0
  %2782 = vmatpush1.msra.mxu0 0.0
  %2783 = vmatprep.subr.mxu0 0.0
  %2784 = vmatpush1.msra.mxu0 0.0
  %2785 = vmatprep.subr.mxu0 0.0
  %2786 = vmatpush1.msra.mxu0 0.0
  %2787 = vmatprep.subr.mxu0 0.0
  %2788 = vmatpush1.msra.mxu0 0.0
  %2789 = vmatprep.subr.mxu0 0.0
  %2790 = vmatpush1.msra.mxu0 0.0
  %2791 = vmatprep.subr.mxu0 0.0
  %2792 = vmatpush1.msra.mxu0 0.0
  %2793 = vmatprep.subr.mxu0 0.0
  %2794 = vmatpush1.msra.mxu0 0.0
  %2795 = vmatprep.subr.mxu0 0.0
  %2796 = vmatpush1.msra.mxu0 0.0
  %2797 = vmatprep.subr.mxu0 0.0
  %2798 = vmatpush1.msra.mxu0 0.0
  %2799 = vmatprep.subr.mxu0 0.0
  %2800 = vmatpush1.msra.mxu0 0.0
  %2801 = vmatprep.subr.mxu0 0.0
  %2802 = vmatpush1.msra.mxu0 0.0
  %2803 = vmatprep.subr.mxu0 0.0
  %2804 = vmatpush1.msra.mxu0 0.0
  %2805 = vmatprep.subr.mxu0 0.0
  %2806 = vmatpush1.msra.mxu0 0.0
  %2807 = vmatprep.subr.mxu0 0.0
  %2808 = vmatpush1.msra.mxu0 0.0
  %2809 = vmatprep.subr.mxu0 0.0
  %2810 = vmatpush1.msra.mxu0 0.0
  %2811 = vmatprep.subr.mxu0 0.0
  %2812 = vmatpush1.msra.mxu0 0.0
  %2813 = vmatprep.mubr.f32.mxu0 0.0
  %2814 = vmatmul.mubr.f32.gmra.mrb[0].mxu0 %v2745
  %v2815 = vpop.f32.mrb[0].mxu0
  %v2816 = vadd.f32 0.0, %v2815
  %v2817 = vpop.f32.mrb[0].mxu0
  %2818 = vmatprep.mubr.f32.mxu0 0.0
  %2819 = vmatmul.mubr.f32.gmra.mrb[0].mxu0 %v2747
  %v2820 = vpop.f32.mrb[0].mxu0
  %v2821 = vadd.f32 0.0, %v2820
  %v2822 = vpop.f32.mrb[0].mxu0
  %2823 = vdwg.mxu0
  %2826 = vrot.lane.b32.xlu0 %v2816, 31
  %v2827 = vpop.permute.xlu0 %2826
  %2828 = vrot.lane.b32.xlu0 %v2821, 31
  %v2829 = vpop.permute.xlu0 %2828
  %2832 = vst.msk [vmem:[#allocation3 + $0x10] sm:$0xff] %vm2024, %v2827
  %2833 = vst.msk [vmem:[#allocation3 + $0x30] sm:$0xff] %vm2024, %v2829
  %v2834 = vld [vmem:[#allocation5 + $0x18] sm:$0xff]
  %v2835 = vld [vmem:[#allocation5 + $0x20] sm:$0xff]
  %v2836 = vld [vmem:[#allocation5 + $0x48] sm:$0xff]
  %v2837 = vld [vmem:[#allocation5 + $0x50] sm:$0xff]
  %v2838 = vld [vmem:[%s18] sm:$0xff]
  %v2839 = vld [vmem:[%s18 + $0x8] sm:$0xff]
  %2844 = vrot.lane.b32.xlu0 %v2834, 1
  %v2845 = vpop.permute.xlu0 %2844
  %2846 = vrot.lane.b32.xlu0 %v2835, 1
  %v2847 = vpop.permute.xlu0 %2846
  %2848 = vrot.lane.b32.xlu0 %v2836, 1
  %v2849 = vpop.permute.xlu0 %2848
  %2850 = vrot.lane.b32.xlu0 %v2837, 1
  %v2851 = vpop.permute.xlu0 %2850
  %v2852 = vsel %vm926, %v2845, %v2847
  %v2853 = vsel %vm926, %v2849, %v2851
  %v2854 = vsel %vm1736, %v2852, 0
  %v2856 = vsel %vm1736, %v2853, 0
  %2858 = vmatprep.subr.mxu0 0.0
  %2859 = vmatpush1.msra.mxu0 %v2838
  %2860 = vmatprep.subr.mxu0 0.0
  %2861 = vmatpush1.msra.mxu0 %v2839
  %2862 = vmatprep.subr.mxu0 0.0
  %2863 = vmatpush1.msra.mxu0 0.0
  %2864 = vmatprep.subr.mxu0 0.0
  %2865 = vmatpush1.msra.mxu0 0.0
  %2866 = vmatprep.subr.mxu0 0.0
  %2867 = vmatpush1.msra.mxu0 0.0
  %2868 = vmatprep.subr.mxu0 0.0
  %2869 = vmatpush1.msra.mxu0 0.0
  %2870 = vmatprep.subr.mxu0 0.0
  %2871 = vmatpush1.msra.mxu0 0.0
  %2872 = vmatprep.subr.mxu0 0.0
  %2873 = vmatpush1.msra.mxu0 0.0
  %2874 = vmatprep.subr.mxu0 0.0
  %2875 = vmatpush1.msra.mxu0 0.0
  %2876 = vmatprep.subr.mxu0 0.0
  %2877 = vmatpush1.msra.mxu0 0.0
  %2878 = vmatprep.subr.mxu0 0.0
  %2879 = vmatpush1.msra.mxu0 0.0
  %2880 = vmatprep.subr.mxu0 0.0
  %2881 = vmatpush1.msra.mxu0 0.0
  %2882 = vmatprep.subr.mxu0 0.0
  %2883 = vmatpush1.msra.mxu0 0.0
  %2884 = vmatprep.subr.mxu0 0.0
  %2885 = vmatpush1.msra.mxu0 0.0
  %2886 = vmatprep.subr.mxu0 0.0
  %2887 = vmatpush1.msra.mxu0 0.0
  %2888 = vmatprep.subr.mxu0 0.0
  %2889 = vmatpush1.msra.mxu0 0.0
  %2890 = vmatprep.subr.mxu0 0.0
  %2891 = vmatpush1.msra.mxu0 0.0
  %2892 = vmatprep.subr.mxu0 0.0
  %2893 = vmatpush1.msra.mxu0 0.0
  %2894 = vmatprep.subr.mxu0 0.0
  %2895 = vmatpush1.msra.mxu0 0.0
  %2896 = vmatprep.subr.mxu0 0.0
  %2897 = vmatpush1.msra.mxu0 0.0
  %2898 = vmatprep.subr.mxu0 0.0
  %2899 = vmatpush1.msra.mxu0 0.0
  %2900 = vmatprep.subr.mxu0 0.0
  %2901 = vmatpush1.msra.mxu0 0.0
  %2902 = vmatprep.subr.mxu0 0.0
  %2903 = vmatpush1.msra.mxu0 0.0
  %2904 = vmatprep.subr.mxu0 0.0
  %2905 = vmatpush1.msra.mxu0 0.0
  %2906 = vmatprep.subr.mxu0 0.0
  %2907 = vmatpush1.msra.mxu0 0.0
  %2908 = vmatprep.subr.mxu0 0.0
  %2909 = vmatpush1.msra.mxu0 0.0
  %2910 = vmatprep.subr.mxu0 0.0
  %2911 = vmatpush1.msra.mxu0 0.0
  %2912 = vmatprep.subr.mxu0 0.0
  %2913 = vmatpush1.msra.mxu0 0.0
  %2914 = vmatprep.subr.mxu0 0.0
  %2915 = vmatpush1.msra.mxu0 0.0
  %2916 = vmatprep.subr.mxu0 0.0
  %2917 = vmatpush1.msra.mxu0 0.0
  %2918 = vmatprep.subr.mxu0 0.0
  %2919 = vmatpush1.msra.mxu0 0.0
  %2920 = vmatprep.subr.mxu0 0.0
  %2921 = vmatpush1.msra.mxu0 0.0
  %2922 = vmatprep.mubr.f32.mxu0 0.0
  %2923 = vmatmul.mubr.f32.gmra.mrb[0].mxu0 %v2854
  %v2924 = vpop.f32.mrb[0].mxu0
  %v2925 = vadd.f32 0.0, %v2924
  %v2926 = vpop.f32.mrb[0].mxu0
  %2927 = vmatprep.mubr.f32.mxu0 0.0
  %2928 = vmatmul.mubr.f32.gmra.mrb[0].mxu0 %v2856
  %v2929 = vpop.f32.mrb[0].mxu0
  %v2930 = vadd.f32 0.0, %v2929
  %v2931 = vpop.f32.mrb[0].mxu0
  %2932 = vdwg.mxu0
  %2935 = vrot.lane.b32.xlu0 %v2925, 41
  %v2936 = vpop.permute.xlu0 %2935
  %2937 = vrot.lane.b32.xlu0 %v2930, 41
  %v2938 = vpop.permute.xlu0 %2937
  %2941 = vst.msk [vmem:[#allocation3 + $0x10] sm:$0xff] %vm2134, %v2936
  %2942 = vst.msk [vmem:[#allocation3 + $0x30] sm:$0xff] %vm2134, %v2938
  %v2943 = vld [vmem:[#allocation5 + $0x20] sm:$0xff]
  %v2944 = vld [vmem:[#allocation5 + $0x50] sm:$0xff]
  %v2945 = vld [vmem:[%s18] sm:$0xff]
  %v2946 = vld [vmem:[%s18 + $0x8] sm:$0xff]
  %2949 = vrot.lane.b32.xlu0 %v2943, 93
  %v2950 = vpop.permute.xlu0 %2949
  %2951 = vrot.lane.b32.xlu0 %v2944, 93
  %v2952 = vpop.permute.xlu0 %2951
  %v2953 = vsel %vm1736, %v2950, 0
  %v2955 = vsel %vm1736, %v2952, 0
  %2957 = vmatprep.subr.mxu0 0.0
  %2958 = vmatpush1.msra.mxu0 %v2945
  %2959 = vmatprep.subr.mxu0 0.0
  %2960 = vmatpush1.msra.mxu0 %v2946
  %2961 = vmatprep.subr.mxu0 0.0
  %2962 = vmatpush1.msra.mxu0 0.0
  %2963 = vmatprep.subr.mxu0 0.0
  %2964 = vmatpush1.msra.mxu0 0.0
  %2965 = vmatprep.subr.mxu0 0.0
  %2966 = vmatpush1.msra.mxu0 0.0
  %2967 = vmatprep.subr.mxu0 0.0
  %2968 = vmatpush1.msra.mxu0 0.0
  %2969 = vmatprep.subr.mxu0 0.0
  %2970 = vmatpush1.msra.mxu0 0.0
  %2971 = vmatprep.subr.mxu0 0.0
  %2972 = vmatpush1.msra.mxu0 0.0
  %2973 = vmatprep.subr.mxu0 0.0
  %2974 = vmatpush1.msra.mxu0 0.0
  %2975 = vmatprep.subr.mxu0 0.0
  %2976 = vmatpush1.msra.mxu0 0.0
  %2977 = vmatprep.subr.mxu0 0.0
  %2978 = vmatpush1.msra.mxu0 0.0
  %2979 = vmatprep.subr.mxu0 0.0
  %2980 = vmatpush1.msra.mxu0 0.0
  %2981 = vmatprep.subr.mxu0 0.0
  %2982 = vmatpush1.msra.mxu0 0.0
  %2983 = vmatprep.subr.mxu0 0.0
  %2984 = vmatpush1.msra.mxu0 0.0
  %2985 = vmatprep.subr.mxu0 0.0
  %2986 = vmatpush1.msra.mxu0 0.0
  %2987 = vmatprep.subr.mxu0 0.0
  %2988 = vmatpush1.msra.mxu0 0.0
  %2989 = vmatprep.subr.mxu0 0.0
  %2990 = vmatpush1.msra.mxu0 0.0
  %2991 = vmatprep.subr.mxu0 0.0
  %2992 = vmatpush1.msra.mxu0 0.0
  %2993 = vmatprep.subr.mxu0 0.0
  %2994 = vmatpush1.msra.mxu0 0.0
  %2995 = vmatprep.subr.mxu0 0.0
  %2996 = vmatpush1.msra.mxu0 0.0
  %2997 = vmatprep.subr.mxu0 0.0
  %2998 = vmatpush1.msra.mxu0 0.0
  %2999 = vmatprep.subr.mxu0 0.0
  %3000 = vmatpush1.msra.mxu0 0.0
  %3001 = vmatprep.subr.mxu0 0.0
  %3002 = vmatpush1.msra.mxu0 0.0
  %3003 = vmatprep.subr.mxu0 0.0
  %3004 = vmatpush1.msra.mxu0 0.0
  %3005 = vmatprep.subr.mxu0 0.0
  %3006 = vmatpush1.msra.mxu0 0.0
  %3007 = vmatprep.subr.mxu0 0.0
  %3008 = vmatpush1.msra.mxu0 0.0
  %3009 = vmatprep.subr.mxu0 0.0
  %3010 = vmatpush1.msra.mxu0 0.0
  %3011 = vmatprep.subr.mxu0 0.0
  %3012 = vmatpush1.msra.mxu0 0.0
  %3013 = vmatprep.subr.mxu0 0.0
  %3014 = vmatpush1.msra.mxu0 0.0
  %3015 = vmatprep.subr.mxu0 0.0
  %3016 = vmatpush1.msra.mxu0 0.0
  %3017 = vmatprep.subr.mxu0 0.0
  %3018 = vmatpush1.msra.mxu0 0.0
  %3019 = vmatprep.subr.mxu0 0.0
  %3020 = vmatpush1.msra.mxu0 0.0
  %3021 = vmatprep.mubr.f32.mxu0 0.0
  %3022 = vmatmul.mubr.f32.gmra.mrb[0].mxu0 %v2953
  %v3023 = vpop.f32.mrb[0].mxu0
  %v3024 = vadd.f32 0.0, %v3023
  %v3025 = vpop.f32.mrb[0].mxu0
  %3026 = vmatprep.mubr.f32.mxu0 0.0
  %3027 = vmatmul.mubr.f32.gmra.mrb[0].mxu0 %v2955
  %v3028 = vpop.f32.mrb[0].mxu0
  %v3029 = vadd.f32 0.0, %v3028
  %v3030 = vpop.f32.mrb[0].mxu0
  %3031 = vdwg.mxu0
  %3034 = vrot.lane.b32.xlu0 %v3024, 51
  %v3035 = vpop.permute.xlu0 %3034
  %3036 = vrot.lane.b32.xlu0 %v3029, 51
  %v3037 = vpop.permute.xlu0 %3036
  %3040 = vst.msk [vmem:[#allocation3 + $0x10] sm:$0xff] %vm2234, %v3035
  %3041 = vst.msk [vmem:[#allocation3 + $0x30] sm:$0xff] %vm2234, %v3037
  %v3042 = vld [vmem:[#allocation5 + $0x20] sm:$0xff]
  %v3043 = vld [vmem:[#allocation5 + $0x50] sm:$0xff]
  %v3044 = vld [vmem:[%s18] sm:$0xff]
  %v3045 = vld [vmem:[%s18 + $0x8] sm:$0xff]
  %3048 = vrot.lane.b32.xlu0 %v3042, 57
  %v3049 = vpop.permute.xlu0 %3048
  %3050 = vrot.lane.b32.xlu0 %v3043, 57
  %v3051 = vpop.permute.xlu0 %3050
  %v3052 = vsel %vm1736, %v3049, 0
  %v3054 = vsel %vm1736, %v3051, 0
  %3056 = vmatprep.subr.mxu0 0.0
  %3057 = vmatpush1.msra.mxu0 %v3044
  %3058 = vmatprep.subr.mxu0 0.0
  %3059 = vmatpush1.msra.mxu0 %v3045
  %3060 = vmatprep.subr.mxu0 0.0
  %3061 = vmatpush1.msra.mxu0 0.0
  %3062 = vmatprep.subr.mxu0 0.0
  %3063 = vmatpush1.msra.mxu0 0.0
  %3064 = vmatprep.subr.mxu0 0.0
  %3065 = vmatpush1.msra.mxu0 0.0
  %3066 = vmatprep.subr.mxu0 0.0
  %3067 = vmatpush1.msra.mxu0 0.0
  %3068 = vmatprep.subr.mxu0 0.0
  %3069 = vmatpush1.msra.mxu0 0.0
  %3070 = vmatprep.subr.mxu0 0.0
  %3071 = vmatpush1.msra.mxu0 0.0
  %3072 = vmatprep.subr.mxu0 0.0
  %3073 = vmatpush1.msra.mxu0 0.0
  %3074 = vmatprep.subr.mxu0 0.0
  %3075 = vmatpush1.msra.mxu0 0.0
  %3076 = vmatprep.subr.mxu0 0.0
  %3077 = vmatpush1.msra.mxu0 0.0
  %3078 = vmatprep.subr.mxu0 0.0
  %3079 = vmatpush1.msra.mxu0 0.0
  %3080 = vmatprep.subr.mxu0 0.0
  %3081 = vmatpush1.msra.mxu0 0.0
  %3082 = vmatprep.subr.mxu0 0.0
  %3083 = vmatpush1.msra.mxu0 0.0
  %3084 = vmatprep.subr.mxu0 0.0
  %3085 = vmatpush1.msra.mxu0 0.0
  %3086 = vmatprep.subr.mxu0 0.0
  %3087 = vmatpush1.msra.mxu0 0.0
  %3088 = vmatprep.subr.mxu0 0.0
  %3089 = vmatpush1.msra.mxu0 0.0
  %3090 = vmatprep.subr.mxu0 0.0
  %3091 = vmatpush1.msra.mxu0 0.0
  %3092 = vmatprep.subr.mxu0 0.0
  %3093 = vmatpush1.msra.mxu0 0.0
  %3094 = vmatprep.subr.mxu0 0.0
  %3095 = vmatpush1.msra.mxu0 0.0
  %3096 = vmatprep.subr.mxu0 0.0
  %3097 = vmatpush1.msra.mxu0 0.0
  %3098 = vmatprep.subr.mxu0 0.0
  %3099 = vmatpush1.msra.mxu0 0.0
  %3100 = vmatprep.subr.mxu0 0.0
  %3101 = vmatpush1.msra.mxu0 0.0
  %3102 = vmatprep.subr.mxu0 0.0
  %3103 = vmatpush1.msra.mxu0 0.0
  %3104 = vmatprep.subr.mxu0 0.0
  %3105 = vmatpush1.msra.mxu0 0.0
  %3106 = vmatprep.subr.mxu0 0.0
  %3107 = vmatpush1.msra.mxu0 0.0
  %3108 = vmatprep.subr.mxu0 0.0
  %3109 = vmatpush1.msra.mxu0 0.0
  %3110 = vmatprep.subr.mxu0 0.0
  %3111 = vmatpush1.msra.mxu0 0.0
  %3112 = vmatprep.subr.mxu0 0.0
  %3113 = vmatpush1.msra.mxu0 0.0
  %3114 = vmatprep.subr.mxu0 0.0
  %3115 = vmatpush1.msra.mxu0 0.0
  %3116 = vmatprep.subr.mxu0 0.0
  %3117 = vmatpush1.msra.mxu0 0.0
  %3118 = vmatprep.subr.mxu0 0.0
  %3119 = vmatpush1.msra.mxu0 0.0
  %3120 = vmatprep.mubr.f32.mxu0 0.0
  %3121 = vmatmul.mubr.f32.gmra.mrb[0].mxu0 %v3052
  %v3122 = vpop.f32.mrb[0].mxu0
  %v3123 = vadd.f32 0.0, %v3122
  %v3124 = vpop.f32.mrb[0].mxu0
  %3125 = vmatprep.mubr.f32.mxu0 0.0
  %3126 = vmatmul.mubr.f32.gmra.mrb[0].mxu0 %v3054
  %v3127 = vpop.f32.mrb[0].mxu0
  %v3128 = vadd.f32 0.0, %v3127
  %v3129 = vpop.f32.mrb[0].mxu0
  %3130 = vdwg.mxu0
  %3133 = vrot.lane.b32.xlu0 %v3123, 61
  %v3134 = vpop.permute.xlu0 %3133
  %3135 = vrot.lane.b32.xlu0 %v3128, 61
  %v3136 = vpop.permute.xlu0 %3135
  %3139 = vst.msk [vmem:[#allocation3 + $0x10] sm:$0xff] %vm2334, %v3134
  %3140 = vst.msk [vmem:[#allocation3 + $0x30] sm:$0xff] %vm2334, %v3136
  %v3141 = vld [vmem:[#allocation5 + $0x20] sm:$0xff]
  %v3142 = vld [vmem:[#allocation5 + $0x50] sm:$0xff]
  %v3143 = vld [vmem:[%s18] sm:$0xff]
  %v3144 = vld [vmem:[%s18 + $0x8] sm:$0xff]
  %3147 = vrot.lane.b32.xlu0 %v3141, 21
  %v3148 = vpop.permute.xlu0 %3147
  %3149 = vrot.lane.b32.xlu0 %v3142, 21
  %v3150 = vpop.permute.xlu0 %3149
  %v3151 = vsel %vm1736, %v3148, 0
  %v3153 = vsel %vm1736, %v3150, 0
  %3155 = vmatprep.subr.mxu0 0.0
  %3156 = vmatpush1.msra.mxu0 %v3143
  %3157 = vmatprep.subr.mxu0 0.0
  %3158 = vmatpush1.msra.mxu0 %v3144
  %3159 = vmatprep.subr.mxu0 0.0
  %3160 = vmatpush1.msra.mxu0 0.0
  %3161 = vmatprep.subr.mxu0 0.0
  %3162 = vmatpush1.msra.mxu0 0.0
  %3163 = vmatprep.subr.mxu0 0.0
  %3164 = vmatpush1.msra.mxu0 0.0
  %3165 = vmatprep.subr.mxu0 0.0
  %3166 = vmatpush1.msra.mxu0 0.0
  %3167 = vmatprep.subr.mxu0 0.0
  %3168 = vmatpush1.msra.mxu0 0.0
  %3169 = vmatprep.subr.mxu0 0.0
  %3170 = vmatpush1.msra.mxu0 0.0
  %3171 = vmatprep.subr.mxu0 0.0
  %3172 = vmatpush1.msra.mxu0 0.0
  %3173 = vmatprep.subr.mxu0 0.0
  %3174 = vmatpush1.msra.mxu0 0.0
  %3175 = vmatprep.subr.mxu0 0.0
  %3176 = vmatpush1.msra.mxu0 0.0
  %3177 = vmatprep.subr.mxu0 0.0
  %3178 = vmatpush1.msra.mxu0 0.0
  %3179 = vmatprep.subr.mxu0 0.0
  %3180 = vmatpush1.msra.mxu0 0.0
  %3181 = vmatprep.subr.mxu0 0.0
  %3182 = vmatpush1.msra.mxu0 0.0
  %3183 = vmatprep.subr.mxu0 0.0
  %3184 = vmatpush1.msra.mxu0 0.0
  %3185 = vmatprep.subr.mxu0 0.0
  %3186 = vmatpush1.msra.mxu0 0.0
  %3187 = vmatprep.subr.mxu0 0.0
  %3188 = vmatpush1.msra.mxu0 0.0
  %3189 = vmatprep.subr.mxu0 0.0
  %3190 = vmatpush1.msra.mxu0 0.0
  %3191 = vmatprep.subr.mxu0 0.0
  %3192 = vmatpush1.msra.mxu0 0.0
  %3193 = vmatprep.subr.mxu0 0.0
  %3194 = vmatpush1.msra.mxu0 0.0
  %3195 = vmatprep.subr.mxu0 0.0
  %3196 = vmatpush1.msra.mxu0 0.0
  %3197 = vmatprep.subr.mxu0 0.0
  %3198 = vmatpush1.msra.mxu0 0.0
  %3199 = vmatprep.subr.mxu0 0.0
  %3200 = vmatpush1.msra.mxu0 0.0
  %3201 = vmatprep.subr.mxu0 0.0
  %3202 = vmatpush1.msra.mxu0 0.0
  %3203 = vmatprep.subr.mxu0 0.0
  %3204 = vmatpush1.msra.mxu0 0.0
  %3205 = vmatprep.subr.mxu0 0.0
  %3206 = vmatpush1.msra.mxu0 0.0
  %3207 = vmatprep.subr.mxu0 0.0
  %3208 = vmatpush1.msra.mxu0 0.0
  %3209 = vmatprep.subr.mxu0 0.0
  %3210 = vmatpush1.msra.mxu0 0.0
  %3211 = vmatprep.subr.mxu0 0.0
  %3212 = vmatpush1.msra.mxu0 0.0
  %3213 = vmatprep.subr.mxu0 0.0
  %3214 = vmatpush1.msra.mxu0 0.0
  %3215 = vmatprep.subr.mxu0 0.0
  %3216 = vmatpush1.msra.mxu0 0.0
  %3217 = vmatprep.subr.mxu0 0.0
  %3218 = vmatpush1.msra.mxu0 0.0
  %3219 = vmatprep.mubr.f32.mxu0 0.0
  %3220 = vmatmul.mubr.f32.gmra.mrb[0].mxu0 %v3151
  %v3221 = vpop.f32.mrb[0].mxu0
  %v3222 = vadd.f32 0.0, %v3221
  %v3223 = vpop.f32.mrb[0].mxu0
  %3224 = vmatprep.mubr.f32.mxu0 0.0
  %3225 = vmatmul.mubr.f32.gmra.mrb[0].mxu0 %v3153
  %v3226 = vpop.f32.mrb[0].mxu0
  %v3227 = vadd.f32 0.0, %v3226
  %v3228 = vpop.f32.mrb[0].mxu0
  %3229 = vdwg.mxu0
  %3232 = vrot.lane.b32.xlu0 %v3222, 71
  %v3233 = vpop.permute.xlu0 %3232
  %3234 = vrot.lane.b32.xlu0 %v3227, 71
  %v3235 = vpop.permute.xlu0 %3234
  %3238 = vst.msk [vmem:[#allocation3 + $0x10] sm:$0xff] %vm2434, %v3233
  %3239 = vst.msk [vmem:[#allocation3 + $0x30] sm:$0xff] %vm2434, %v3235
  %v3240 = vld [vmem:[#allocation5 + $0x28] sm:$0xff]
  %v3241 = vld [vmem:[#allocation5 + $0x58] sm:$0xff]
  %v3242 = vld [vmem:[%s18] sm:$0xff]
  %v3243 = vld [vmem:[%s18 + $0x8] sm:$0xff]
  %3246 = vrot.lane.b32.xlu0 %v3240, 113
  %v3247 = vpop.permute.xlu0 %3246
  %3248 = vrot.lane.b32.xlu0 %v3241, 113
  %v3249 = vpop.permute.xlu0 %3248
  %v3250 = vsel %vm1736, %v3247, 0
  %v3252 = vsel %vm1736, %v3249, 0
  %3254 = vmatprep.subr.mxu0 0.0
  %3255 = vmatpush1.msra.mxu0 %v3242
  %3256 = vmatprep.subr.mxu0 0.0
  %3257 = vmatpush1.msra.mxu0 %v3243
  %3258 = vmatprep.subr.mxu0 0.0
  %3259 = vmatpush1.msra.mxu0 0.0
  %3260 = vmatprep.subr.mxu0 0.0
  %3261 = vmatpush1.msra.mxu0 0.0
  %3262 = vmatprep.subr.mxu0 0.0
  %3263 = vmatpush1.msra.mxu0 0.0
  %3264 = vmatprep.subr.mxu0 0.0
  %3265 = vmatpush1.msra.mxu0 0.0
  %3266 = vmatprep.subr.mxu0 0.0
  %3267 = vmatpush1.msra.mxu0 0.0
  %3268 = vmatprep.subr.mxu0 0.0
  %3269 = vmatpush1.msra.mxu0 0.0
  %3270 = vmatprep.subr.mxu0 0.0
  %3271 = vmatpush1.msra.mxu0 0.0
  %3272 = vmatprep.subr.mxu0 0.0
  %3273 = vmatpush1.msra.mxu0 0.0
  %3274 = vmatprep.subr.mxu0 0.0
  %3275 = vmatpush1.msra.mxu0 0.0
  %3276 = vmatprep.subr.mxu0 0.0
  %3277 = vmatpush1.msra.mxu0 0.0
  %3278 = vmatprep.subr.mxu0 0.0
  %3279 = vmatpush1.msra.mxu0 0.0
  %3280 = vmatprep.subr.mxu0 0.0
  %3281 = vmatpush1.msra.mxu0 0.0
  %3282 = vmatprep.subr.mxu0 0.0
  %3283 = vmatpush1.msra.mxu0 0.0
  %3284 = vmatprep.subr.mxu0 0.0
  %3285 = vmatpush1.msra.mxu0 0.0
  %3286 = vmatprep.subr.mxu0 0.0
  %3287 = vmatpush1.msra.mxu0 0.0
  %3288 = vmatprep.subr.mxu0 0.0
  %3289 = vmatpush1.msra.mxu0 0.0
  %3290 = vmatprep.subr.mxu0 0.0
  %3291 = vmatpush1.msra.mxu0 0.0
  %3292 = vmatprep.subr.mxu0 0.0
  %3293 = vmatpush1.msra.mxu0 0.0
  %3294 = vmatprep.subr.mxu0 0.0
  %3295 = vmatpush1.msra.mxu0 0.0
  %3296 = vmatprep.subr.mxu0 0.0
  %3297 = vmatpush1.msra.mxu0 0.0
  %3298 = vmatprep.subr.mxu0 0.0
  %3299 = vmatpush1.msra.mxu0 0.0
  %3300 = vmatprep.subr.mxu0 0.0
  %3301 = vmatpush1.msra.mxu0 0.0
  %3302 = vmatprep.subr.mxu0 0.0
  %3303 = vmatpush1.msra.mxu0 0.0
  %3304 = vmatprep.subr.mxu0 0.0
  %3305 = vmatpush1.msra.mxu0 0.0
  %3306 = vmatprep.subr.mxu0 0.0
  %3307 = vmatpush1.msra.mxu0 0.0
  %3308 = vmatprep.subr.mxu0 0.0
  %3309 = vmatpush1.msra.mxu0 0.0
  %3310 = vmatprep.subr.mxu0 0.0
  %3311 = vmatpush1.msra.mxu0 0.0
  %3312 = vmatprep.subr.mxu0 0.0
  %3313 = vmatpush1.msra.mxu0 0.0
  %3314 = vmatprep.subr.mxu0 0.0
  %3315 = vmatpush1.msra.mxu0 0.0
  %3316 = vmatprep.subr.mxu0 0.0
  %3317 = vmatpush1.msra.mxu0 0.0
  %3318 = vmatprep.mubr.f32.mxu0 0.0
  %3319 = vmatmul.mubr.f32.gmra.mrb[0].mxu0 %v3250
  %v3320 = vpop.f32.mrb[0].mxu0
  %v3321 = vadd.f32 0.0, %v3320
  %v3322 = vpop.f32.mrb[0].mxu0
  %3323 = vmatprep.mubr.f32.mxu0 0.0
  %3324 = vmatmul.mubr.f32.gmra.mrb[0].mxu0 %v3252
  %v3325 = vpop.f32.mrb[0].mxu0
  %v3326 = vadd.f32 0.0, %v3325
  %v3327 = vpop.f32.mrb[0].mxu0
  %3328 = vdwg.mxu0
  %3331 = vrot.lane.b32.xlu0 %v3321, 81
  %v3332 = vpop.permute.xlu0 %3331
  %3333 = vrot.lane.b32.xlu0 %v3326, 81
  %v3334 = vpop.permute.xlu0 %3333
  %3337 = vst.msk [vmem:[#allocation3 + $0x10] sm:$0xff] %vm2534, %v3332
  %3338 = vst.msk [vmem:[#allocation3 + $0x30] sm:$0xff] %vm2534, %v3334
  %v3339 = vld [vmem:[#allocation3] sm:$0xff]
  %v3340 = vld [vmem:[#allocation3 + $0x8] sm:$0xff]
  %v3341 = vld [vmem:[#allocation3 + $0x10] sm:$0xff]
  %v3342 = vld [vmem:[#allocation3 + $0x20] sm:$0xff]
  %v3343 = vld [vmem:[#allocation3 + $0x28] sm:$0xff]
  %v3344 = vld [vmem:[#allocation3 + $0x30] sm:$0xff]
  %3351 = vrot.lane.b32.xlu0 %v3339, 11
  %v3352 = vpop.permute.xlu0 %3351
  %3353 = vrot.lane.b32.xlu0 %v3340, 11
  %v3354 = vpop.permute.xlu0 %3353
  %3355 = vrot.lane.b32.xlu0 %v3341, 11
  %v3356 = vpop.permute.xlu0 %3355
  %3357 = vrot.lane.b32.xlu0 %v3342, 11
  %v3358 = vpop.permute.xlu0 %3357
  %3359 = vrot.lane.b32.xlu0 %v3343, 11
  %v3360 = vpop.permute.xlu0 %3359
  %3361 = vrot.lane.b32.xlu0 %v3344, 11
  %v3362 = vpop.permute.xlu0 %3361
  %vm3363 = vcmask 89088
  %v3364 = vsel %vm3363, %v3352, %v3354
  %v3365 = vsel %vm3363, %v3354, %v3356
  %v3366 = vsel %vm3363, %v3358, %v3360
  %v3367 = vsel %vm3363, %v3360, %v3362
  %3372 = vst [vmem:[#allocation5] sm:$0xff] %v3364
  %3373 = vst [vmem:[#allocation5 + $0x8] sm:$0xff] %v3365
  %3374 = vst [vmem:[#allocation5 + $0x30] sm:$0xff] %v3366
  %3375 = vst [vmem:[#allocation5 + $0x38] sm:$0xff] %v3367
  %v3376 = vld [vmem:[#allocation3] sm:$0xff]
  %v3377 = vld [vmem:[#allocation3 + $0x8] sm:$0xff]
  %v3378 = vld [vmem:[#allocation3 + $0x10] sm:$0xff]
  %v3379 = vld [vmem:[#allocation3 + $0x20] sm:$0xff]
  %v3380 = vld [vmem:[#allocation3 + $0x28] sm:$0xff]
  %v3381 = vld [vmem:[#allocation3 + $0x30] sm:$0xff]
  %3388 = vrot.lane.b32.xlu0 %v3376, 10
  %v3389 = vpop.permute.xlu0 %3388
  %3390 = vrot.lane.b32.xlu0 %v3377, 10
  %v3391 = vpop.permute.xlu0 %3390
  %3392 = vrot.lane.b32.xlu0 %v3378, 10
  %v3393 = vpop.permute.xlu0 %3392
  %3394 = vrot.lane.b32.xlu0 %v3379, 10
  %v3395 = vpop.permute.xlu0 %3394
  %3396 = vrot.lane.b32.xlu0 %v3380, 10
  %v3397 = vpop.permute.xlu0 %3396
  %3398 = vrot.lane.b32.xlu0 %v3381, 10
  %v3399 = vpop.permute.xlu0 %3398
  %vm3400 = vcmask 80896
  %v3401 = vsel %vm3400, %v3389, %v3391
  %v3402 = vsel %vm3400, %v3391, %v3393
  %v3403 = vsel %vm3400, %v3395, %v3397
  %v3404 = vsel %vm3400, %v3397, %v3399
  %3409 = vst [vmem:[#allocation5 + $0x60] sm:$0xff] %v3401
  %3410 = vst [vmem:[#allocation5 + $0x68] sm:$0xff] %v3402
  %3411 = vst [vmem:[#allocation5 + $0x90] sm:$0xff] %v3403
  %3412 = vst [vmem:[#allocation5 + $0x98] sm:$0xff] %v3404
  %v3413 = vld [vmem:[#allocation3] sm:$0xff]
  %v3414 = vld [vmem:[#allocation3 + $0x8] sm:$0xff]
  %v3415 = vld [vmem:[#allocation3 + $0x10] sm:$0xff]
  %v3416 = vld [vmem:[#allocation3 + $0x20] sm:$0xff]
  %v3417 = vld [vmem:[#allocation3 + $0x28] sm:$0xff]
  %v3418 = vld [vmem:[#allocation3 + $0x30] sm:$0xff]
  %3425 = vrot.lane.b32.xlu0 %v3413, 9
  %v3426 = vpop.permute.xlu0 %3425
  %3427 = vrot.lane.b32.xlu0 %v3414, 9
  %v3428 = vpop.permute.xlu0 %3427
  %3429 = vrot.lane.b32.xlu0 %v3415, 9
  %v3430 = vpop.permute.xlu0 %3429
  %3431 = vrot.lane.b32.xlu0 %v3416, 9
  %v3432 = vpop.permute.xlu0 %3431
  %3433 = vrot.lane.b32.xlu0 %v3417, 9
  %v3434 = vpop.permute.xlu0 %3433
  %3435 = vrot.lane.b32.xlu0 %v3418, 9
  %v3436 = vpop.permute.xlu0 %3435
  %vm3437 = vcmask 72704
  %v3438 = vsel %vm3437, %v3426, %v3428
  %v3439 = vsel %vm3437, %v3428, %v3430
  %v3440 = vsel %vm3437, %v3432, %v3434
  %v3441 = vsel %vm3437, %v3434, %v3436
  %3446 = vst [vmem:[#allocation5 + $0xc0] sm:$0xff] %v3438
  %3447 = vst [vmem:[#allocation5 + $0xc8] sm:$0xff] %v3439
  %3448 = vst [vmem:[#allocation5 + $0xf0] sm:$0xff] %v3440
  %3449 = vst [vmem:[#allocation5 + $0xf8] sm:$0xff] %v3441
  %v3450 = vld [vmem:[#allocation3] sm:$0xff]
  %v3451 = vld [vmem:[#allocation3 + $0x8] sm:$0xff]
  %v3452 = vld [vmem:[#allocation3 + $0x10] sm:$0xff]
  %v3453 = vld [vmem:[#allocation3 + $0x20] sm:$0xff]
  %v3454 = vld [vmem:[#allocation3 + $0x28] sm:$0xff]
  %v3455 = vld [vmem:[#allocation3 + $0x30] sm:$0xff]
  %3462 = vrot.lane.b32.xlu0 %v3450, 1
  %v3463 = vpop.permute.xlu0 %3462
  %3464 = vrot.lane.b32.xlu0 %v3451, 1
  %v3465 = vpop.permute.xlu0 %3464
  %3466 = vrot.lane.b32.xlu0 %v3452, 1
  %v3467 = vpop.permute.xlu0 %3466
  %3468 = vrot.lane.b32.xlu0 %v3453, 1
  %v3469 = vpop.permute.xlu0 %3468
  %3470 = vrot.lane.b32.xlu0 %v3454, 1
  %v3471 = vpop.permute.xlu0 %3470
  %3472 = vrot.lane.b32.xlu0 %v3455, 1
  %v3473 = vpop.permute.xlu0 %3472
  %v3474 = vsel %vm926, %v3463, %v3465
  %v3475 = vsel %vm926, %v3465, %v3467
  %v3476 = vsel %vm926, %v3469, %v3471
  %v3477 = vsel %vm926, %v3471, %v3473
  %3482 = vst [vmem:[#allocation5 + $0x120] sm:$0xff] %v3474
  %3483 = vst [vmem:[#allocation5 + $0x128] sm:$0xff] %v3475
  %3484 = vst [vmem:[#allocation5 + $0x150] sm:$0xff] %v3476
  %3485 = vst [vmem:[#allocation5 + $0x158] sm:$0xff] %v3477
  %v3486 = vld [vmem:[#allocation3 + $0x8] sm:$0xff]
  %v3487 = vld [vmem:[#allocation3 + $0x10] sm:$0xff]
  %v3488 = vld [vmem:[#allocation3 + $0x28] sm:$0xff]
  %v3489 = vld [vmem:[#allocation3 + $0x30] sm:$0xff]
  %3490 = vst [vmem:[#allocation5 + $0x180] sm:$0xff] %v3486
  %3491 = vst [vmem:[#allocation5 + $0x188] sm:$0xff] %v3487
  %3492 = vst [vmem:[#allocation5 + $0x1b0] sm:$0xff] %v3488
  %3493 = vst [vmem:[#allocation5 + $0x1b8] sm:$0xff] %v3489
  %v3494 = vld [vmem:[#allocation3 + $0x8] sm:$0xff]
  %v3495 = vld [vmem:[#allocation3 + $0x10] sm:$0xff]
  %v3496 = vld [vmem:[#allocation3 + $0x18] sm:$0xff]
  %v3497 = vld [vmem:[#allocation3 + $0x28] sm:$0xff]
  %v3498 = vld [vmem:[#allocation3 + $0x30] sm:$0xff]
  %v3499 = vld [vmem:[#allocation3 + $0x38] sm:$0xff]
  %3506 = vrot.lane.b32.xlu0 %v3494, 127
  %v3507 = vpop.permute.xlu0 %3506
  %3508 = vrot.lane.b32.xlu0 %v3495, 127
  %v3509 = vpop.permute.xlu0 %3508
  %3510 = vrot.lane.b32.xlu0 %v3496, 127
  %v3511 = vpop.permute.xlu0 %3510
  %3512 = vrot.lane.b32.xlu0 %v3497, 127
  %v3513 = vpop.permute.xlu0 %3512
  %3514 = vrot.lane.b32.xlu0 %v3498, 127
  %v3515 = vpop.permute.xlu0 %3514
  %3516 = vrot.lane.b32.xlu0 %v3499, 127
  %v3517 = vpop.permute.xlu0 %3516
  %v3518 = vsel %vm185, %v3507, %v3509
  %v3519 = vsel %vm185, %v3509, %v3511
  %v3520 = vsel %vm185, %v3513, %v3515
  %v3521 = vsel %vm185, %v3515, %v3517
  %3526 = vst [vmem:[#allocation5 + $0x1e0] sm:$0xff] %v3518
  %3527 = vst [vmem:[#allocation5 + $0x1e8] sm:$0xff] %v3519
  %3528 = vst [vmem:[#allocation5 + $0x210] sm:$0xff] %v3520
  %3529 = vst [vmem:[#allocation5 + $0x218] sm:$0xff] %v3521
  %v3530 = vld [vmem:[#allocation3 + $0x8] sm:$0xff]
  %v3531 = vld [vmem:[#allocation3 + $0x10] sm:$0xff]
  %v3532 = vld [vmem:[#allocation3 + $0x18] sm:$0xff]
  %v3533 = vld [vmem:[#allocation3 + $0x28] sm:$0xff]
  %v3534 = vld [vmem:[#allocation3 + $0x30] sm:$0xff]
  %v3535 = vld [vmem:[#allocation3 + $0x38] sm:$0xff]
  %3542 = vrot.lane.b32.xlu0 %v3530, 119
  %v3543 = vpop.permute.xlu0 %3542
  %3544 = vrot.lane.b32.xlu0 %v3531, 119
  %v3545 = vpop.permute.xlu0 %3544
  %3546 = vrot.lane.b32.xlu0 %v3532, 119
  %v3547 = vpop.permute.xlu0 %3546
  %3548 = vrot.lane.b32.xlu0 %v3533, 119
  %v3549 = vpop.permute.xlu0 %3548
  %3550 = vrot.lane.b32.xlu0 %v3534, 119
  %v3551 = vpop.permute.xlu0 %3550
  %3552 = vrot.lane.b32.xlu0 %v3535, 119
  %v3553 = vpop.permute.xlu0 %3552
  %vm3554 = vcmask 973824
  %v3555 = vsel %vm3554, %v3543, %v3545
  %v3556 = vsel %vm3554, %v3545, %v3547
  %v3557 = vsel %vm3554, %v3549, %v3551
  %v3558 = vsel %vm3554, %v3551, %v3553
  %3563 = vst [vmem:[#allocation5 + $0x240] sm:$0xff] %v3555
  %3564 = vst [vmem:[#allocation5 + $0x248] sm:$0xff] %v3556
  %3565 = vst [vmem:[#allocation5 + $0x270] sm:$0xff] %v3557
  %3566 = vst [vmem:[#allocation5 + $0x278] sm:$0xff] %v3558
  %v3567 = vld [vmem:[#allocation3 + $0x8] sm:$0xff]
  %v3568 = vld [vmem:[#allocation3 + $0x10] sm:$0xff]
  %v3569 = vld [vmem:[#allocation3 + $0x18] sm:$0xff]
  %v3570 = vld [vmem:[#allocation3 + $0x28] sm:$0xff]
  %v3571 = vld [vmem:[#allocation3 + $0x30] sm:$0xff]
  %v3572 = vld [vmem:[#allocation3 + $0x38] sm:$0xff]
  %3579 = vrot.lane.b32.xlu0 %v3567, 118
  %v3580 = vpop.permute.xlu0 %3579
  %3581 = vrot.lane.b32.xlu0 %v3568, 118
  %v3582 = vpop.permute.xlu0 %3581
  %3583 = vrot.lane.b32.xlu0 %v3569, 118
  %v3584 = vpop.permute.xlu0 %3583
  %3585 = vrot.lane.b32.xlu0 %v3570, 118
  %v3586 = vpop.permute.xlu0 %3585
  %3587 = vrot.lane.b32.xlu0 %v3571, 118
  %v3588 = vpop.permute.xlu0 %3587
  %3589 = vrot.lane.b32.xlu0 %v3572, 118
  %v3590 = vpop.permute.xlu0 %3589
  %vm3591 = vcmask 965632
  %v3592 = vsel %vm3591, %v3580, %v3582
  %v3593 = vsel %vm3591, %v3582, %v3584
  %v3594 = vsel %vm3591, %v3586, %v3588
  %v3595 = vsel %vm3591, %v3588, %v3590
  %3600 = vst [vmem:[#allocation5 + $0x2a0] sm:$0xff] %v3592
  %3601 = vst [vmem:[#allocation5 + $0x2a8] sm:$0xff] %v3593
  %3602 = vst [vmem:[#allocation5 + $0x2d0] sm:$0xff] %v3594
  %3603 = vst [vmem:[#allocation5 + $0x2d8] sm:$0xff] %v3595
  %v3604 = vld [vmem:[#allocation3 + $0x8] sm:$0xff]
  %v3605 = vld [vmem:[#allocation3 + $0x10] sm:$0xff]
  %v3606 = vld [vmem:[#allocation3 + $0x18] sm:$0xff]
  %v3607 = vld [vmem:[#allocation3 + $0x28] sm:$0xff]
  %v3608 = vld [vmem:[#allocation3 + $0x30] sm:$0xff]
  %v3609 = vld [vmem:[#allocation3 + $0x38] sm:$0xff]
  %3616 = vrot.lane.b32.xlu0 %v3604, 117
  %v3617 = vpop.permute.xlu0 %3616
  %3618 = vrot.lane.b32.xlu0 %v3605, 117
  %v3619 = vpop.permute.xlu0 %3618
  %3620 = vrot.lane.b32.xlu0 %v3606, 117
  %v3621 = vpop.permute.xlu0 %3620
  %3622 = vrot.lane.b32.xlu0 %v3607, 117
  %v3623 = vpop.permute.xlu0 %3622
  %3624 = vrot.lane.b32.xlu0 %v3608, 117
  %v3625 = vpop.permute.xlu0 %3624
  %3626 = vrot.lane.b32.xlu0 %v3609, 117
  %v3627 = vpop.permute.xlu0 %3626
  %vm3628 = vcmask 957440
  %v3629 = vsel %vm3628, %v3617, %v3619
  %v3630 = vsel %vm3628, %v3619, %v3621
  %v3631 = vsel %vm3628, %v3623, %v3625
  %v3632 = vsel %vm3628, %v3625, %v3627
  %3637 = vst [vmem:[#allocation5 + $0x300] sm:$0xff] %v3629
  %3638 = vst [vmem:[#allocation5 + $0x308] sm:$0xff] %v3630
  %3639 = vst [vmem:[#allocation5 + $0x330] sm:$0xff] %v3631
  %3640 = vst [vmem:[#allocation5 + $0x338] sm:$0xff] %v3632
  %v3641 = vld [vmem:[%s5] sm:$0xff]
  %v3642 = vld [vmem:[%s5 + $0x8] sm:$0xff]
  %v3643 = vld [vmem:[%s5 + $0x10] sm:$0xff]
  %v3644 = vld [vmem:[%s5 + $0x18] sm:$0xff]
  %v3645 = vld [vmem:[#allocation5] sm:$0xff]
  %v3646 = vld [vmem:[#allocation5 + $0x8] sm:$0xff]
  %v3647 = vld [vmem:[#allocation5 + $0x30] sm:$0xff]
  %v3648 = vld [vmem:[#allocation5 + $0x38] sm:$0xff]
  %v3649 = vld [vmem:[#allocation5 + $0x60] sm:$0xff]
  %v3650 = vld [vmem:[#allocation5 + $0x68] sm:$0xff]
  %v3651 = vld [vmem:[#allocation5 + $0x90] sm:$0xff]
  %v3652 = vld [vmem:[#allocation5 + $0x98] sm:$0xff]
  %v3653 = vld [vmem:[#allocation5 + $0xc0] sm:$0xff]
  %v3654 = vld [vmem:[#allocation5 + $0xc8] sm:$0xff]
  %v3655 = vld [vmem:[#allocation5 + $0xf0] sm:$0xff]
  %v3656 = vld [vmem:[#allocation5 + $0xf8] sm:$0xff]
  %v3657 = vld [vmem:[#allocation5 + $0x120] sm:$0xff]
  %v3658 = vld [vmem:[#allocation5 + $0x128] sm:$0xff]
  %v3659 = vld [vmem:[#allocation5 + $0x150] sm:$0xff]
  %v3660 = vld [vmem:[#allocation5 + $0x158] sm:$0xff]
  %v3661 = vld [vmem:[#allocation5 + $0x180] sm:$0xff]
  %v3662 = vld [vmem:[#allocation5 + $0x188] sm:$0xff]
  %v3663 = vld [vmem:[#allocation5 + $0x1b0] sm:$0xff]
  %v3664 = vld [vmem:[#allocation5 + $0x1b8] sm:$0xff]
  %v3665 = vld [vmem:[#allocation5 + $0x1e0] sm:$0xff]
  %v3666 = vld [vmem:[#allocation5 + $0x1e8] sm:$0xff]
  %v3667 = vld [vmem:[#allocation5 + $0x210] sm:$0xff]
  %v3668 = vld [vmem:[#allocation5 + $0x218] sm:$0xff]
  %v3669 = vld [vmem:[#allocation5 + $0x240] sm:$0xff]
  %v3670 = vld [vmem:[#allocation5 + $0x248] sm:$0xff]
  %v3671 = vld [vmem:[#allocation5 + $0x270] sm:$0xff]
  %v3672 = vld [vmem:[#allocation5 + $0x278] sm:$0xff]
  %v3673 = vld [vmem:[#allocation5 + $0x2a0] sm:$0xff]
  %v3674 = vld [vmem:[#allocation5 + $0x2a8] sm:$0xff]
  %v3675 = vld [vmem:[#allocation5 + $0x2d0] sm:$0xff]
  %v3676 = vld [vmem:[#allocation5 + $0x2d8] sm:$0xff]
  %v3677 = vld [vmem:[#allocation5 + $0x300] sm:$0xff]
  %v3678 = vld [vmem:[#allocation5 + $0x308] sm:$0xff]
  %v3679 = vld [vmem:[#allocation5 + $0x330] sm:$0xff]
  %v3680 = vld [vmem:[#allocation5 + $0x338] sm:$0xff]
  %v3681 = vld [vmem:[%s6] sm:$0xff]
  %v3682 = vld [vmem:[%s6 + $0x8] sm:$0xff]
  %3684 = vset.pattern.permute.xlu0 0
  %3685 = vperm.xlu0 %3684, %v3681
  %v3686 = vpop.permute.xlu0 %3685
  %3689 = vset.pattern.permute.xlu0 0
  %3690 = vperm.xlu0 %3689, %v3682
  %v3691 = vpop.permute.xlu0 %3690
  %v3694 = vsel %vm1736, %v3642, 0
  %v3697 = vsel %vm1736, %v3644, 0
  %3699 = vmatprep.subr.mxu0 %v3646
  %3700 = vmatpush1.msra.mxu0 %v3645
  %3701 = vmatprep.subr.mxu0 %v3648
  %3702 = vmatpush1.msra.mxu0 %v3647
  %3703 = vmatprep.subr.mxu0 %v3650
  %3704 = vmatpush1.msra.mxu0 %v3649
  %3705 = vmatprep.subr.mxu0 %v3652
  %3706 = vmatpush1.msra.mxu0 %v3651
  %3707 = vmatprep.subr.mxu0 %v3654
  %3708 = vmatpush1.msra.mxu0 %v3653
  %3709 = vmatprep.subr.mxu0 %v3656
  %3710 = vmatpush1.msra.mxu0 %v3655
  %3711 = vmatprep.subr.mxu0 %v3658
  %3712 = vmatpush1.msra.mxu0 %v3657
  %3713 = vmatprep.subr.mxu0 %v3660
  %3714 = vmatpush1.msra.mxu0 %v3659
  %3715 = vmatprep.subr.mxu0 %v3662
  %3716 = vmatpush1.msra.mxu0 %v3661
  %3717 = vmatprep.subr.mxu0 %v3664
  %3718 = vmatpush1.msra.mxu0 %v3663
  %3719 = vmatprep.subr.mxu0 %v3666
  %3720 = vmatpush1.msra.mxu0 %v3665
  %3721 = vmatprep.subr.mxu0 %v3668
  %3722 = vmatpush1.msra.mxu0 %v3667
  %3723 = vmatprep.subr.mxu0 %v3670
  %3724 = vmatpush1.msra.mxu0 %v3669
  %3725 = vmatprep.subr.mxu0 %v3672
  %3726 = vmatpush1.msra.mxu0 %v3671
  %3727 = vmatprep.subr.mxu0 %v3674
  %3728 = vmatpush1.msra.mxu0 %v3673
  %3729 = vmatprep.subr.mxu0 %v3676
  %3730 = vmatpush1.msra.mxu0 %v3675
  %3731 = vmatprep.subr.mxu0 %v3678
  %3732 = vmatpush1.msra.mxu0 %v3677
  %3733 = vmatprep.subr.mxu0 %v3680
  %3734 = vmatpush1.msra.mxu0 %v3679
  %3735 = vmatprep.subr.mxu0 0.0
  %3736 = vmatpush1.msra.mxu0 0.0
  %3737 = vmatprep.subr.mxu0 0.0
  %3738 = vmatpush1.msra.mxu0 0.0
  %3739 = vmatprep.subr.mxu0 0.0
  %3740 = vmatpush1.msra.mxu0 0.0
  %3741 = vmatprep.subr.mxu0 0.0
  %3742 = vmatpush1.msra.mxu0 0.0
  %3743 = vmatprep.subr.mxu0 0.0
  %3744 = vmatpush1.msra.mxu0 0.0
  %3745 = vmatprep.subr.mxu0 0.0
  %3746 = vmatpush1.msra.mxu0 0.0
  %3747 = vmatprep.subr.mxu0 0.0
  %3748 = vmatpush1.msra.mxu0 0.0
  %3749 = vmatprep.subr.mxu0 0.0
  %3750 = vmatpush1.msra.mxu0 0.0
  %3751 = vmatprep.subr.mxu0 0.0
  %3752 = vmatpush1.msra.mxu0 0.0
  %3753 = vmatprep.subr.mxu0 0.0
  %3754 = vmatpush1.msra.mxu0 0.0
  %3755 = vmatprep.subr.mxu0 0.0
  %3756 = vmatpush1.msra.mxu0 0.0
  %3757 = vmatprep.subr.mxu0 0.0
  %3758 = vmatpush1.msra.mxu0 0.0
  %3759 = vmatprep.subr.mxu0 0.0
  %3760 = vmatpush1.msra.mxu0 0.0
  %3761 = vmatprep.subr.mxu0 0.0
  %3762 = vmatpush1.msra.mxu0 0.0
  %3763 = vmatprep.mubr.f32.mxu0 %v3694
  %3764 = vmatmul.mubr.f32.gmra.mrb[0].mxu0 %v3641
  %v3765 = vpop.f32.mrb[0].mxu0
  %v3766 = vadd.f32 %v3686, %v3765
  %v3767 = vpop.f32.mrb[0].mxu0
  %v3768 = vadd.f32 %v3686, %v3767
  %3769 = vmatprep.mubr.f32.mxu0 %v3697
  %3770 = vmatmul.mubr.f32.gmra.mrb[0].mxu0 %v3643
  %v3771 = vpop.f32.mrb[0].mxu0
  %v3772 = vadd.f32 %v3691, %v3771
  %v3773 = vpop.f32.mrb[0].mxu0
  %v3774 = vadd.f32 %v3691, %v3773
  %3775 = vdwg.mxu0
  %v3776 = vmax.f32 %v3766, 0.0
  %v3777 = vmax.f32 %v3768, 0.0
  %v3778 = vmax.f32 %v3772, 0.0
  %v3779 = vmax.f32 %v3774, 0.0
  %v3780 = vld [vmem:[%s16] sm:$0x3]
  %v3782 = vlaneseq
  %v3783 = vshrl.u32 %v3782, 7
  %v3784 = vsub.s32 0, %v3783
  %v3785 = vrot.slane %v3780, %v3784
  %v3786 = vlaneseq
  %v3787 = vshrl.u32 %v3786, 7
  %v3788 = vsub.s32 1, %v3787
  %v3789 = vrot.slane %v3780, %v3788
  %v3792 = vmul.f32 %v3776, %v3785
  %v3793 = vmul.f32 %v3777, %v3789
  %v3794 = vmul.f32 %v3778, %v3785
  %v3795 = vmul.f32 %v3779, %v3789
  %3796 = vst [vmem:[#allocation3 + $0x8] sm:$0xff] %v3792
  %3797 = vst [vmem:[#allocation3 + $0x10] sm:$0xff] %v3793
  %3798 = vst [vmem:[#allocation3 + $0x28] sm:$0xff] %v3794
  %3799 = vst [vmem:[#allocation3 + $0x30] sm:$0xff] %v3795
  %v3800 = vld [vmem:[#allocation3] sm:$0xff]
  %v3801 = vld [vmem:[#allocation3 + $0x8] sm:$0xff]
  %v3802 = vld [vmem:[#allocation3 + $0x10] sm:$0xff]
  %v3803 = vld [vmem:[#allocation3 + $0x20] sm:$0xff]
  %v3804 = vld [vmem:[#allocation3 + $0x28] sm:$0xff]
  %v3805 = vld [vmem:[#allocation3 + $0x30] sm:$0xff]
  %3812 = vrot.lane.b32.xlu0 %v3800, 11
  %v3813 = vpop.permute.xlu0 %3812
  %3814 = vrot.lane.b32.xlu0 %v3801, 11
  %v3815 = vpop.permute.xlu0 %3814
  %3816 = vrot.lane.b32.xlu0 %v3802, 11
  %v3817 = vpop.permute.xlu0 %3816
  %3818 = vrot.lane.b32.xlu0 %v3803, 11
  %v3819 = vpop.permute.xlu0 %3818
  %3820 = vrot.lane.b32.xlu0 %v3804, 11
  %v3821 = vpop.permute.xlu0 %3820
  %3822 = vrot.lane.b32.xlu0 %v3805, 11
  %v3823 = vpop.permute.xlu0 %3822
  %v3824 = vsel %vm3363, %v3813, %v3815
  %v3825 = vsel %vm3363, %v3815, %v3817
  %v3826 = vsel %vm3363, %v3819, %v3821
  %v3827 = vsel %vm3363, %v3821, %v3823
  %3832 = vst [vmem:[#allocation5] sm:$0xff] %v3824
  %3833 = vst [vmem:[#allocation5 + $0x8] sm:$0xff] %v3825
  %3834 = vst [vmem:[#allocation5 + $0x30] sm:$0xff] %v3826
  %3835 = vst [vmem:[#allocation5 + $0x38] sm:$0xff] %v3827
  %v3836 = vld [vmem:[#allocation3] sm:$0xff]
  %v3837 = vld [vmem:[#allocation3 + $0x8] sm:$0xff]
  %v3838 = vld [vmem:[#allocation3 + $0x10] sm:$0xff]
  %v3839 = vld [vmem:[#allocation3 + $0x20] sm:$0xff]
  %v3840 = vld [vmem:[#allocation3 + $0x28] sm:$0xff]
  %v3841 = vld [vmem:[#allocation3 + $0x30] sm:$0xff]
  %3848 = vrot.lane.b32.xlu0 %v3836, 10
  %v3849 = vpop.permute.xlu0 %3848
  %3850 = vrot.lane.b32.xlu0 %v3837, 10
  %v3851 = vpop.permute.xlu0 %3850
  %3852 = vrot.lane.b32.xlu0 %v3838, 10
  %v3853 = vpop.permute.xlu0 %3852
  %3854 = vrot.lane.b32.xlu0 %v3839, 10
  %v3855 = vpop.permute.xlu0 %3854
  %3856 = vrot.lane.b32.xlu0 %v3840, 10
  %v3857 = vpop.permute.xlu0 %3856
  %3858 = vrot.lane.b32.xlu0 %v3841, 10
  %v3859 = vpop.permute.xlu0 %3858
  %v3860 = vsel %vm3400, %v3849, %v3851
  %v3861 = vsel %vm3400, %v3851, %v3853
  %v3862 = vsel %vm3400, %v3855, %v3857
  %v3863 = vsel %vm3400, %v3857, %v3859
  %3868 = vst [vmem:[#allocation5 + $0x60] sm:$0xff] %v3860
  %3869 = vst [vmem:[#allocation5 + $0x68] sm:$0xff] %v3861
  %3870 = vst [vmem:[#allocation5 + $0x90] sm:$0xff] %v3862
  %3871 = vst [vmem:[#allocation5 + $0x98] sm:$0xff] %v3863
  %v3872 = vld [vmem:[#allocation3] sm:$0xff]
  %v3873 = vld [vmem:[#allocation3 + $0x8] sm:$0xff]
  %v3874 = vld [vmem:[#allocation3 + $0x10] sm:$0xff]
  %v3875 = vld [vmem:[#allocation3 + $0x20] sm:$0xff]
  %v3876 = vld [vmem:[#allocation3 + $0x28] sm:$0xff]
  %v3877 = vld [vmem:[#allocation3 + $0x30] sm:$0xff]
  %3884 = vrot.lane.b32.xlu0 %v3872, 9
  %v3885 = vpop.permute.xlu0 %3884
  %3886 = vrot.lane.b32.xlu0 %v3873, 9
  %v3887 = vpop.permute.xlu0 %3886
  %3888 = vrot.lane.b32.xlu0 %v3874, 9
  %v3889 = vpop.permute.xlu0 %3888
  %3890 = vrot.lane.b32.xlu0 %v3875, 9
  %v3891 = vpop.permute.xlu0 %3890
  %3892 = vrot.lane.b32.xlu0 %v3876, 9
  %v3893 = vpop.permute.xlu0 %3892
  %3894 = vrot.lane.b32.xlu0 %v3877, 9
  %v3895 = vpop.permute.xlu0 %3894
  %v3896 = vsel %vm3437, %v3885, %v3887
  %v3897 = vsel %vm3437, %v3887, %v3889
  %v3898 = vsel %vm3437, %v3891, %v3893
  %v3899 = vsel %vm3437, %v3893, %v3895
  %3904 = vst [vmem:[#allocation5 + $0xc0] sm:$0xff] %v3896
  %3905 = vst [vmem:[#allocation5 + $0xc8] sm:$0xff] %v3897
  %3906 = vst [vmem:[#allocation5 + $0xf0] sm:$0xff] %v3898
  %3907 = vst [vmem:[#allocation5 + $0xf8] sm:$0xff] %v3899
  %v3908 = vld [vmem:[#allocation3] sm:$0xff]
  %v3909 = vld [vmem:[#allocation3 + $0x8] sm:$0xff]
  %v3910 = vld [vmem:[#allocation3 + $0x10] sm:$0xff]
  %v3911 = vld [vmem:[#allocation3 + $0x20] sm:$0xff]
  %v3912 = vld [vmem:[#allocation3 + $0x28] sm:$0xff]
  %v3913 = vld [vmem:[#allocation3 + $0x30] sm:$0xff]
  %3920 = vrot.lane.b32.xlu0 %v3908, 1
  %v3921 = vpop.permute.xlu0 %3920
  %3922 = vrot.lane.b32.xlu0 %v3909, 1
  %v3923 = vpop.permute.xlu0 %3922
  %3924 = vrot.lane.b32.xlu0 %v3910, 1
  %v3925 = vpop.permute.xlu0 %3924
  %3926 = vrot.lane.b32.xlu0 %v3911, 1
  %v3927 = vpop.permute.xlu0 %3926
  %3928 = vrot.lane.b32.xlu0 %v3912, 1
  %v3929 = vpop.permute.xlu0 %3928
  %3930 = vrot.lane.b32.xlu0 %v3913, 1
  %v3931 = vpop.permute.xlu0 %3930
  %v3932 = vsel %vm926, %v3921, %v3923
  %v3933 = vsel %vm926, %v3923, %v3925
  %v3934 = vsel %vm926, %v3927, %v3929
  %v3935 = vsel %vm926, %v3929, %v3931
  %3940 = vst [vmem:[#allocation5 + $0x120] sm:$0xff] %v3932
  %3941 = vst [vmem:[#allocation5 + $0x128] sm:$0xff] %v3933
  %3942 = vst [vmem:[#allocation5 + $0x150] sm:$0xff] %v3934
  %3943 = vst [vmem:[#allocation5 + $0x158] sm:$0xff] %v3935
  %v3944 = vld [vmem:[#allocation3 + $0x8] sm:$0xff]
  %v3945 = vld [vmem:[#allocation3 + $0x10] sm:$0xff]
  %v3946 = vld [vmem:[#allocation3 + $0x28] sm:$0xff]
  %v3947 = vld [vmem:[#allocation3 + $0x30] sm:$0xff]
  %3948 = vst [vmem:[#allocation5 + $0x180] sm:$0xff] %v3944
  %3949 = vst [vmem:[#allocation5 + $0x188] sm:$0xff] %v3945
  %3950 = vst [vmem:[#allocation5 + $0x1b0] sm:$0xff] %v3946
  %3951 = vst [vmem:[#allocation5 + $0x1b8] sm:$0xff] %v3947
  %v3952 = vld [vmem:[#allocation3 + $0x8] sm:$0xff]
  %v3953 = vld [vmem:[#allocation3 + $0x10] sm:$0xff]
  %v3954 = vld [vmem:[#allocation3 + $0x18] sm:$0xff]
  %v3955 = vld [vmem:[#allocation3 + $0x28] sm:$0xff]
  %v3956 = vld [vmem:[#allocation3 + $0x30] sm:$0xff]
  %v3957 = vld [vmem:[#allocation3 + $0x38] sm:$0xff]
  %3964 = vrot.lane.b32.xlu0 %v3952, 127
  %v3965 = vpop.permute.xlu0 %3964
  %3966 = vrot.lane.b32.xlu0 %v3953, 127
  %v3967 = vpop.permute.xlu0 %3966
  %3968 = vrot.lane.b32.xlu0 %v3954, 127
  %v3969 = vpop.permute.xlu0 %3968
  %3970 = vrot.lane.b32.xlu0 %v3955, 127
  %v3971 = vpop.permute.xlu0 %3970
  %3972 = vrot.lane.b32.xlu0 %v3956, 127
  %v3973 = vpop.permute.xlu0 %3972
  %3974 = vrot.lane.b32.xlu0 %v3957, 127
  %v3975 = vpop.permute.xlu0 %3974
  %v3976 = vsel %vm185, %v3965, %v3967
  %v3977 = vsel %vm185, %v3967, %v3969
  %v3978 = vsel %vm185, %v3971, %v3973
  %v3979 = vsel %vm185, %v3973, %v3975
  %3984 = vst [vmem:[#allocation5 + $0x1e0] sm:$0xff] %v3976
  %3985 = vst [vmem:[#allocation5 + $0x1e8] sm:$0xff] %v3977
  %3986 = vst [vmem:[#allocation5 + $0x210] sm:$0xff] %v3978
  %3987 = vst [vmem:[#allocation5 + $0x218] sm:$0xff] %v3979
  %v3988 = vld [vmem:[#allocation3 + $0x8] sm:$0xff]
  %v3989 = vld [vmem:[#allocation3 + $0x10] sm:$0xff]
  %v3990 = vld [vmem:[#allocation3 + $0x18] sm:$0xff]
  %v3991 = vld [vmem:[#allocation3 + $0x28] sm:$0xff]
  %v3992 = vld [vmem:[#allocation3 + $0x30] sm:$0xff]
  %v3993 = vld [vmem:[#allocation3 + $0x38] sm:$0xff]
  %4000 = vrot.lane.b32.xlu0 %v3988, 119
  %v4001 = vpop.permute.xlu0 %4000
  %4002 = vrot.lane.b32.xlu0 %v3989, 119
  %v4003 = vpop.permute.xlu0 %4002
  %4004 = vrot.lane.b32.xlu0 %v3990, 119
  %v4005 = vpop.permute.xlu0 %4004
  %4006 = vrot.lane.b32.xlu0 %v3991, 119
  %v4007 = vpop.permute.xlu0 %4006
  %4008 = vrot.lane.b32.xlu0 %v3992, 119
  %v4009 = vpop.permute.xlu0 %4008
  %4010 = vrot.lane.b32.xlu0 %v3993, 119
  %v4011 = vpop.permute.xlu0 %4010
  %v4012 = vsel %vm3554, %v4001, %v4003
  %v4013 = vsel %vm3554, %v4003, %v4005
  %v4014 = vsel %vm3554, %v4007, %v4009
  %v4015 = vsel %vm3554, %v4009, %v4011
  %4020 = vst [vmem:[#allocation5 + $0x240] sm:$0xff] %v4012
  %4021 = vst [vmem:[#allocation5 + $0x248] sm:$0xff] %v4013
  %4022 = vst [vmem:[#allocation5 + $0x270] sm:$0xff] %v4014
  %4023 = vst [vmem:[#allocation5 + $0x278] sm:$0xff] %v4015
  %v4024 = vld [vmem:[#allocation3 + $0x8] sm:$0xff]
  %v4025 = vld [vmem:[#allocation3 + $0x10] sm:$0xff]
  %v4026 = vld [vmem:[#allocation3 + $0x18] sm:$0xff]
  %v4027 = vld [vmem:[#allocation3 + $0x28] sm:$0xff]
  %v4028 = vld [vmem:[#allocation3 + $0x30] sm:$0xff]
  %v4029 = vld [vmem:[#allocation3 + $0x38] sm:$0xff]
  %4036 = vrot.lane.b32.xlu0 %v4024, 118
  %v4037 = vpop.permute.xlu0 %4036
  %4038 = vrot.lane.b32.xlu0 %v4025, 118
  %v4039 = vpop.permute.xlu0 %4038
  %4040 = vrot.lane.b32.xlu0 %v4026, 118
  %v4041 = vpop.permute.xlu0 %4040
  %4042 = vrot.lane.b32.xlu0 %v4027, 118
  %v4043 = vpop.permute.xlu0 %4042
  %4044 = vrot.lane.b32.xlu0 %v4028, 118
  %v4045 = vpop.permute.xlu0 %4044
  %4046 = vrot.lane.b32.xlu0 %v4029, 118
  %v4047 = vpop.permute.xlu0 %4046
  %v4048 = vsel %vm3591, %v4037, %v4039
  %v4049 = vsel %vm3591, %v4039, %v4041
  %v4050 = vsel %vm3591, %v4043, %v4045
  %v4051 = vsel %vm3591, %v4045, %v4047
  %4056 = vst [vmem:[#allocation5 + $0x2a0] sm:$0xff] %v4048
  %4057 = vst [vmem:[#allocation5 + $0x2a8] sm:$0xff] %v4049
  %4058 = vst [vmem:[#allocation5 + $0x2d0] sm:$0xff] %v4050
  %4059 = vst [vmem:[#allocation5 + $0x2d8] sm:$0xff] %v4051
  %v4060 = vld [vmem:[#allocation3 + $0x8] sm:$0xff]
  %v4061 = vld [vmem:[#allocation3 + $0x10] sm:$0xff]
  %v4062 = vld [vmem:[#allocation3 + $0x18] sm:$0xff]
  %v4063 = vld [vmem:[#allocation3 + $0x28] sm:$0xff]
  %v4064 = vld [vmem:[#allocation3 + $0x30] sm:$0xff]
  %v4065 = vld [vmem:[#allocation3 + $0x38] sm:$0xff]
  %4072 = vrot.lane.b32.xlu0 %v4060, 117
  %v4073 = vpop.permute.xlu0 %4072
  %4074 = vrot.lane.b32.xlu0 %v4061, 117
  %v4075 = vpop.permute.xlu0 %4074
  %4076 = vrot.lane.b32.xlu0 %v4062, 117
  %v4077 = vpop.permute.xlu0 %4076
  %4078 = vrot.lane.b32.xlu0 %v4063, 117
  %v4079 = vpop.permute.xlu0 %4078
  %4080 = vrot.lane.b32.xlu0 %v4064, 117
  %v4081 = vpop.permute.xlu0 %4080
  %4082 = vrot.lane.b32.xlu0 %v4065, 117
  %v4083 = vpop.permute.xlu0 %4082
  %v4084 = vsel %vm3628, %v4073, %v4075
  %v4085 = vsel %vm3628, %v4075, %v4077
  %v4086 = vsel %vm3628, %v4079, %v4081
  %v4087 = vsel %vm3628, %v4081, %v4083
  %4092 = vst [vmem:[#allocation5 + $0x300] sm:$0xff] %v4084
  %4093 = vst [vmem:[#allocation5 + $0x308] sm:$0xff] %v4085
  %4094 = vst [vmem:[#allocation5 + $0x330] sm:$0xff] %v4086
  %4095 = vst [vmem:[#allocation5 + $0x338] sm:$0xff] %v4087
  %v4096 = vld [vmem:[%s7] sm:$0xff]
  %v4097 = vld [vmem:[%s7 + $0x8] sm:$0xff]
  %v4098 = vld [vmem:[%s7 + $0x10] sm:$0xff]
  %v4099 = vld [vmem:[%s7 + $0x18] sm:$0xff]
  %v4100 = vld [vmem:[%s7 + $0x20] sm:$0xff]
  %v4101 = vld [vmem:[%s7 + $0x28] sm:$0xff]
  %v4102 = vld [vmem:[#allocation5] sm:$0xff]
  %v4103 = vld [vmem:[#allocation5 + $0x8] sm:$0xff]
  %v4104 = vld [vmem:[#allocation5 + $0x30] sm:$0xff]
  %v4105 = vld [vmem:[#allocation5 + $0x38] sm:$0xff]
  %v4106 = vld [vmem:[#allocation5 + $0x60] sm:$0xff]
  %v4107 = vld [vmem:[#allocation5 + $0x68] sm:$0xff]
  %v4108 = vld [vmem:[#allocation5 + $0x90] sm:$0xff]
  %v4109 = vld [vmem:[#allocation5 + $0x98] sm:$0xff]
  %v4110 = vld [vmem:[#allocation5 + $0xc0] sm:$0xff]
  %v4111 = vld [vmem:[#allocation5 + $0xc8] sm:$0xff]
  %v4112 = vld [vmem:[#allocation5 + $0xf0] sm:$0xff]
  %v4113 = vld [vmem:[#allocation5 + $0xf8] sm:$0xff]
  %v4114 = vld [vmem:[#allocation5 + $0x120] sm:$0xff]
  %v4115 = vld [vmem:[#allocation5 + $0x128] sm:$0xff]
  %v4116 = vld [vmem:[#allocation5 + $0x150] sm:$0xff]
  %v4117 = vld [vmem:[#allocation5 + $0x158] sm:$0xff]
  %v4118 = vld [vmem:[#allocation5 + $0x180] sm:$0xff]
  %v4119 = vld [vmem:[#allocation5 + $0x188] sm:$0xff]
  %v4120 = vld [vmem:[#allocation5 + $0x1b0] sm:$0xff]
  %v4121 = vld [vmem:[#allocation5 + $0x1b8] sm:$0xff]
  %v4122 = vld [vmem:[#allocation5 + $0x1e0] sm:$0xff]
  %v4123 = vld [vmem:[#allocation5 + $0x1e8] sm:$0xff]
  %v4124 = vld [vmem:[#allocation5 + $0x210] sm:$0xff]
  %v4125 = vld [vmem:[#allocation5 + $0x218] sm:$0xff]
  %v4126 = vld [vmem:[#allocation5 + $0x240] sm:$0xff]
  %v4127 = vld [vmem:[#allocation5 + $0x248] sm:$0xff]
  %v4128 = vld [vmem:[#allocation5 + $0x270] sm:$0xff]
  %v4129 = vld [vmem:[#allocation5 + $0x278] sm:$0xff]
  %v4130 = vld [vmem:[#allocation5 + $0x2a0] sm:$0xff]
  %v4131 = vld [vmem:[#allocation5 + $0x2a8] sm:$0xff]
  %v4132 = vld [vmem:[#allocation5 + $0x2d0] sm:$0xff]
  %v4133 = vld [vmem:[#allocation5 + $0x2d8] sm:$0xff]
  %v4134 = vld [vmem:[#allocation5 + $0x300] sm:$0xff]
  %v4135 = vld [vmem:[#allocation5 + $0x308] sm:$0xff]
  %v4136 = vld [vmem:[#allocation5 + $0x330] sm:$0xff]
  %v4137 = vld [vmem:[#allocation5 + $0x338] sm:$0xff]
  %v4138 = vld [vmem:[%s8] sm:$0xff]
  %v4139 = vld [vmem:[%s8 + $0x8] sm:$0xff]
  %v4140 = vld [vmem:[%s8 + $0x10] sm:$0xff]
  %4142 = vset.pattern.permute.xlu0 0
  %4143 = vperm.xlu0 %4142, %v4138
  %v4144 = vpop.permute.xlu0 %4143
  %4147 = vset.pattern.permute.xlu0 0
  %4148 = vperm.xlu0 %4147, %v4139
  %v4149 = vpop.permute.xlu0 %4148
  %4152 = vset.pattern.permute.xlu0 0
  %4153 = vperm.xlu0 %4152, %v4140
  %v4154 = vpop.permute.xlu0 %4153
  %v4157 = vsel %vm1736, %v4097, 0
  %v4160 = vsel %vm1736, %v4099, 0
  %v4163 = vsel %vm1736, %v4101, 0
  %4165 = vmatprep.subr.mxu0 %v4103
  %4166 = vmatpush1.msra.mxu0 %v4102
  %4167 = vmatprep.subr.mxu0 %v4105
  %4168 = vmatpush1.msra.mxu0 %v4104
  %4169 = vmatprep.subr.mxu0 %v4107
  %4170 = vmatpush1.msra.mxu0 %v4106
  %4171 = vmatprep.subr.mxu0 %v4109
  %4172 = vmatpush1.msra.mxu0 %v4108
  %4173 = vmatprep.subr.mxu0 %v4111
  %4174 = vmatpush1.msra.mxu0 %v4110
  %4175 = vmatprep.subr.mxu0 %v4113
  %4176 = vmatpush1.msra.mxu0 %v4112
  %4177 = vmatprep.subr.mxu0 %v4115
  %4178 = vmatpush1.msra.mxu0 %v4114
  %4179 = vmatprep.subr.mxu0 %v4117
  %4180 = vmatpush1.msra.mxu0 %v4116
  %4181 = vmatprep.subr.mxu0 %v4119
  %4182 = vmatpush1.msra.mxu0 %v4118
  %4183 = vmatprep.subr.mxu0 %v4121
  %4184 = vmatpush1.msra.mxu0 %v4120
  %4185 = vmatprep.subr.mxu0 %v4123
  %4186 = vmatpush1.msra.mxu0 %v4122
  %4187 = vmatprep.subr.mxu0 %v4125
  %4188 = vmatpush1.msra.mxu0 %v4124
  %4189 = vmatprep.subr.mxu0 %v4127
  %4190 = vmatpush1.msra.mxu0 %v4126
  %4191 = vmatprep.subr.mxu0 %v4129
  %4192 = vmatpush1.msra.mxu0 %v4128
  %4193 = vmatprep.subr.mxu0 %v4131
  %4194 = vmatpush1.msra.mxu0 %v4130
  %4195 = vmatprep.subr.mxu0 %v4133
  %4196 = vmatpush1.msra.mxu0 %v4132
  %4197 = vmatprep.subr.mxu0 %v4135
  %4198 = vmatpush1.msra.mxu0 %v4134
  %4199 = vmatprep.subr.mxu0 %v4137
  %4200 = vmatpush1.msra.mxu0 %v4136
  %4201 = vmatprep.subr.mxu0 0.0
  %4202 = vmatpush1.msra.mxu0 0.0
  %4203 = vmatprep.subr.mxu0 0.0
  %4204 = vmatpush1.msra.mxu0 0.0
  %4205 = vmatprep.subr.mxu0 0.0
  %4206 = vmatpush1.msra.mxu0 0.0
  %4207 = vmatprep.subr.mxu0 0.0
  %4208 = vmatpush1.msra.mxu0 0.0
  %4209 = vmatprep.subr.mxu0 0.0
  %4210 = vmatpush1.msra.mxu0 0.0
  %4211 = vmatprep.subr.mxu0 0.0
  %4212 = vmatpush1.msra.mxu0 0.0
  %4213 = vmatprep.subr.mxu0 0.0
  %4214 = vmatpush1.msra.mxu0 0.0
  %4215 = vmatprep.subr.mxu0 0.0
  %4216 = vmatpush1.msra.mxu0 0.0
  %4217 = vmatprep.subr.mxu0 0.0
  %4218 = vmatpush1.msra.mxu0 0.0
  %4219 = vmatprep.subr.mxu0 0.0
  %4220 = vmatpush1.msra.mxu0 0.0
  %4221 = vmatprep.subr.mxu0 0.0
  %4222 = vmatpush1.msra.mxu0 0.0
  %4223 = vmatprep.subr.mxu0 0.0
  %4224 = vmatpush1.msra.mxu0 0.0
  %4225 = vmatprep.subr.mxu0 0.0
  %4226 = vmatpush1.msra.mxu0 0.0
  %4227 = vmatprep.subr.mxu0 0.0
  %4228 = vmatpush1.msra.mxu0 0.0
  %4229 = vmatprep.mubr.f32.mxu0 %v4157
  %4230 = vmatmul.mubr.f32.gmra.mrb[0].mxu0 %v4096
  %v4231 = vpop.f32.mrb[0].mxu0
  %v4232 = vadd.f32 %v4144, %v4231
  %v4233 = vpop.f32.mrb[0].mxu0
  %v4234 = vadd.f32 %v4144, %v4233
  %4235 = vmatprep.mubr.f32.mxu0 %v4160
  %4236 = vmatmul.mubr.f32.gmra.mrb[0].mxu0 %v4098
  %v4237 = vpop.f32.mrb[0].mxu0
  %v4238 = vadd.f32 %v4149, %v4237
  %v4239 = vpop.f32.mrb[0].mxu0
  %v4240 = vadd.f32 %v4149, %v4239
  %4241 = vmatprep.mubr.f32.mxu0 %v4163
  %4242 = vmatmul.mubr.f32.gmra.mrb[0].mxu0 %v4100
  %v4243 = vpop.f32.mrb[0].mxu0
  %v4244 = vadd.f32 %v4154, %v4243
  %v4245 = vpop.f32.mrb[0].mxu0
  %v4246 = vadd.f32 %v4154, %v4245
  %4247 = vdwg.mxu0
  %v4248 = vmax.f32 %v4232, 0.0
  %v4249 = vmax.f32 %v4234, 0.0
  %v4250 = vmax.f32 %v4238, 0.0
  %v4251 = vmax.f32 %v4240, 0.0
  %v4252 = vmax.f32 %v4244, 0.0
  %v4253 = vmax.f32 %v4246, 0.0
  %v4254 = vld [vmem:[%s16] sm:$0x3]
  %v4256 = vlaneseq
  %v4257 = vshrl.u32 %v4256, 7
  %v4258 = vsub.s32 0, %v4257
  %v4259 = vrot.slane %v4254, %v4258
  %v4260 = vlaneseq
  %v4261 = vshrl.u32 %v4260, 7
  %v4262 = vsub.s32 1, %v4261
  %v4263 = vrot.slane %v4254, %v4262
  %v4266 = vmul.f32 %v4248, %v4259
  %v4267 = vmul.f32 %v4249, %v4263
  %v4268 = vmul.f32 %v4250, %v4259
  %v4269 = vmul.f32 %v4251, %v4263
  %v4270 = vmul.f32 %v4252, %v4259
  %v4271 = vmul.f32 %v4253, %v4263
  %4272 = vst [vmem:[#allocation3 + $0x8] sm:$0xff] %v4266
  %4273 = vst [vmem:[#allocation3 + $0x10] sm:$0xff] %v4267
  %4274 = vst [vmem:[#allocation3 + $0x28] sm:$0xff] %v4268
  %4275 = vst [vmem:[#allocation3 + $0x30] sm:$0xff] %v4269
  %4276 = vst [vmem:[#allocation3 + $0x48] sm:$0xff] %v4270
  %4277 = vst [vmem:[#allocation3 + $0x50] sm:$0xff] %v4271
  %v4278 = vld [vmem:[#allocation3 + $0x8] sm:$0xff]
  %v4279 = vld [vmem:[#allocation3 + $0x10] sm:$0xff]
  %v4280 = vld [vmem:[#allocation3 + $0x28] sm:$0xff]
  %v4281 = vld [vmem:[#allocation3 + $0x30] sm:$0xff]
  %v4282 = vld [vmem:[#allocation3 + $0x48] sm:$0xff]
  %v4283 = vld [vmem:[#allocation3 + $0x50] sm:$0xff]
  %v4284 = vld [vmem:[#allocation3 + $0x8] sm:$0xff]
  %v4285 = vld [vmem:[#allocation3 + $0x10] sm:$0xff]
  %v4286 = vld [vmem:[#allocation3 + $0x18] sm:$0xff]
  %v4287 = vld [vmem:[#allocation3 + $0x28] sm:$0xff]
  %v4288 = vld [vmem:[#allocation3 + $0x30] sm:$0xff]
  %v4289 = vld [vmem:[#allocation3 + $0x38] sm:$0xff]
  %v4290 = vld [vmem:[#allocation3 + $0x48] sm:$0xff]
  %v4291 = vld [vmem:[#allocation3 + $0x50] sm:$0xff]
  %v4292 = vld [vmem:[#allocation3 + $0x58] sm:$0xff]
  %4302 = vrot.lane.b32.xlu0 %v4284, 127
  %v4303 = vpop.permute.xlu0 %4302
  %4304 = vrot.lane.b32.xlu0 %v4285, 127
  %v4305 = vpop.permute.xlu0 %4304
  %4306 = vrot.lane.b32.xlu0 %v4286, 127
  %v4307 = vpop.permute.xlu0 %4306
  %4308 = vrot.lane.b32.xlu0 %v4287, 127
  %v4309 = vpop.permute.xlu0 %4308
  %4310 = vrot.lane.b32.xlu0 %v4288, 127
  %v4311 = vpop.permute.xlu0 %4310
  %4312 = vrot.lane.b32.xlu0 %v4289, 127
  %v4313 = vpop.permute.xlu0 %4312
  %4314 = vrot.lane.b32.xlu0 %v4290, 127
  %v4315 = vpop.permute.xlu0 %4314
  %4316 = vrot.lane.b32.xlu0 %v4291, 127
  %v4317 = vpop.permute.xlu0 %4316
  %4318 = vrot.lane.b32.xlu0 %v4292, 127
  %v4319 = vpop.permute.xlu0 %4318
  %v4320 = vsel %vm185, %v4303, %v4305
  %v4321 = vsel %vm185, %v4305, %v4307
  %v4322 = vsel %vm185, %v4309, %v4311
  %v4323 = vsel %vm185, %v4311, %v4313
  %v4324 = vsel %vm185, %v4315, %v4317
  %v4325 = vsel %vm185, %v4317, %v4319
  %v4332 = vmax.f32 %v4278, %v4320
  %v4333 = vmax.f32 %v4279, %v4321
  %v4334 = vmax.f32 %v4280, %v4322
  %v4335 = vmax.f32 %v4281, %v4323
  %v4336 = vmax.f32 %v4282, %v4324
  %v4337 = vmax.f32 %v4283, %v4325
  %v4341 = vmax.f32 %v4284, %v4320
  %v4342 = vmax.f32 %v4285, %v4321
  %v4343 = vmax.f32 %v4286, %v4307
  %v4344 = vmax.f32 %v4287, %v4322
  %v4345 = vmax.f32 %v4288, %v4323
  %v4346 = vmax.f32 %v4289, %v4313
  %v4347 = vmax.f32 %v4290, %v4324
  %v4348 = vmax.f32 %v4291, %v4325
  %v4349 = vmax.f32 %v4292, %v4319
  %4359 = vrot.lane.b32.xlu0 %v4341, 118
  %v4360 = vpop.permute.xlu0 %4359
  %4361 = vrot.lane.b32.xlu0 %v4342, 118
  %v4362 = vpop.permute.xlu0 %4361
  %4363 = vrot.lane.b32.xlu0 %v4343, 118
  %v4364 = vpop.permute.xlu0 %4363
  %4365 = vrot.lane.b32.xlu0 %v4344, 118
  %v4366 = vpop.permute.xlu0 %4365
  %4367 = vrot.lane.b32.xlu0 %v4345, 118
  %v4368 = vpop.permute.xlu0 %4367
  %4369 = vrot.lane.b32.xlu0 %v4346, 118
  %v4370 = vpop.permute.xlu0 %4369
  %4371 = vrot.lane.b32.xlu0 %v4347, 118
  %v4372 = vpop.permute.xlu0 %4371
  %4373 = vrot.lane.b32.xlu0 %v4348, 118
  %v4374 = vpop.permute.xlu0 %4373
  %4375 = vrot.lane.b32.xlu0 %v4349, 118
  %v4376 = vpop.permute.xlu0 %4375
  %v4377 = vsel %vm3591, %v4360, %v4362
  %v4378 = vsel %vm3591, %v4362, %v4364
  %v4379 = vsel %vm3591, %v4366, %v4368
  %v4380 = vsel %vm3591, %v4368, %v4370
  %v4381 = vsel %vm3591, %v4372, %v4374
  %v4382 = vsel %vm3591, %v4374, %v4376
  %v4389 = vmax.f32 %v4332, %v4377
  %v4390 = vmax.f32 %v4333, %v4378
  %v4391 = vmax.f32 %v4334, %v4379
  %v4392 = vmax.f32 %v4335, %v4380
  %v4393 = vmax.f32 %v4336, %v4381
  %v4394 = vmax.f32 %v4337, %v4382
  %4395 = vst [vmem:[#allocation5] sm:$0xff] %v4389
  %4396 = vst [vmem:[#allocation5 + $0x8] sm:$0xff] %v4390
  %4397 = vst [vmem:[#allocation5 + $0x30] sm:$0xff] %v4391
  %4398 = vst [vmem:[#allocation5 + $0x38] sm:$0xff] %v4392
  %4399 = vst [vmem:[#allocation5 + $0x60] sm:$0xff] %v4393
  %4400 = vst [vmem:[#allocation5 + $0x68] sm:$0xff] %v4394
  %v4401 = vld [vmem:[#allocation5] sm:$0xff]
  %v4402 = vld [vmem:[#allocation5 + $0x30] sm:$0xff]
  %v4403 = vld [vmem:[#allocation5 + $0x60] sm:$0xff]
  %v4404 = vld [vmem:[%s19] sm:$0xff]
  %4408 = vrot.lane.b32.xlu0 %v4401, 117
  %v4409 = vpop.permute.xlu0 %4408
  %4410 = vrot.lane.b32.xlu0 %v4402, 117
  %v4411 = vpop.permute.xlu0 %4410
  %4412 = vrot.lane.b32.xlu0 %v4403, 117
  %v4413 = vpop.permute.xlu0 %4412
  %vm4414 = vcmask 64512
  %v4415 = vsel %vm4414, %v4409, 0
  %v4417 = vsel %vm4414, %v4411, 0
  %v4419 = vsel %vm4414, %v4413, 0
  %4421 = vmatprep.subr.mxu0 0.0
  %4422 = vmatpush1.msra.mxu0 %v4404
  %4423 = vmatprep.subr.mxu0 0.0
  %4424 = vmatpush1.msra.mxu0 0.0
  %4425 = vmatprep.subr.mxu0 0.0
  %4426 = vmatpush1.msra.mxu0 0.0
  %4427 = vmatprep.subr.mxu0 0.0
  %4428 = vmatpush1.msra.mxu0 0.0
  %4429 = vmatprep.subr.mxu0 0.0
  %4430 = vmatpush1.msra.mxu0 0.0
  %4431 = vmatprep.subr.mxu0 0.0
  %4432 = vmatpush1.msra.mxu0 0.0
  %4433 = vmatprep.subr.mxu0 0.0
  %4434 = vmatpush1.msra.mxu0 0.0
  %4435 = vmatprep.subr.mxu0 0.0
  %4436 = vmatpush1.msra.mxu0 0.0
  %4437 = vmatprep.subr.mxu0 0.0
  %4438 = vmatpush1.msra.mxu0 0.0
  %4439 = vmatprep.subr.mxu0 0.0
  %4440 = vmatpush1.msra.mxu0 0.0
  %4441 = vmatprep.subr.mxu0 0.0
  %4442 = vmatpush1.msra.mxu0 0.0
  %4443 = vmatprep.subr.mxu0 0.0
  %4444 = vmatpush1.msra.mxu0 0.0
  %4445 = vmatprep.subr.mxu0 0.0
  %4446 = vmatpush1.msra.mxu0 0.0
  %4447 = vmatprep.subr.mxu0 0.0
  %4448 = vmatpush1.msra.mxu0 0.0
  %4449 = vmatprep.subr.mxu0 0.0
  %4450 = vmatpush1.msra.mxu0 0.0
  %4451 = vmatprep.subr.mxu0 0.0
  %4452 = vmatpush1.msra.mxu0 0.0
  %4453 = vmatprep.subr.mxu0 0.0
  %4454 = vmatpush1.msra.mxu0 0.0
  %4455 = vmatprep.subr.mxu0 0.0
  %4456 = vmatpush1.msra.mxu0 0.0
  %4457 = vmatprep.subr.mxu0 0.0
  %4458 = vmatpush1.msra.mxu0 0.0
  %4459 = vmatprep.subr.mxu0 0.0
  %4460 = vmatpush1.msra.mxu0 0.0
  %4461 = vmatprep.subr.mxu0 0.0
  %4462 = vmatpush1.msra.mxu0 0.0
  %4463 = vmatprep.subr.mxu0 0.0
  %4464 = vmatpush1.msra.mxu0 0.0
  %4465 = vmatprep.subr.mxu0 0.0
  %4466 = vmatpush1.msra.mxu0 0.0
  %4467 = vmatprep.subr.mxu0 0.0
  %4468 = vmatpush1.msra.mxu0 0.0
  %4469 = vmatprep.subr.mxu0 0.0
  %4470 = vmatpush1.msra.mxu0 0.0
  %4471 = vmatprep.subr.mxu0 0.0
  %4472 = vmatpush1.msra.mxu0 0.0
  %4473 = vmatprep.subr.mxu0 0.0
  %4474 = vmatpush1.msra.mxu0 0.0
  %4475 = vmatprep.subr.mxu0 0.0
  %4476 = vmatpush1.msra.mxu0 0.0
  %4477 = vmatprep.subr.mxu0 0.0
  %4478 = vmatpush1.msra.mxu0 0.0
  %4479 = vmatprep.subr.mxu0 0.0
  %4480 = vmatpush1.msra.mxu0 0.0
  %4481 = vmatprep.subr.mxu0 0.0
  %4482 = vmatpush1.msra.mxu0 0.0
  %4483 = vmatprep.subr.mxu0 0.0
  %4484 = vmatpush1.msra.mxu0 0.0
  %4485 = vmatprep.mubr.f32.mxu0 0.0
  %4486 = vmatmul.mubr.f32.gmra.mrb[0].mxu0 %v4415
  %v4487 = vpop.f32.mrb[0].mxu0
  %v4488 = vadd.f32 0.0, %v4487
  %v4489 = vpop.f32.mrb[0].mxu0
  %4490 = vmatprep.mubr.f32.mxu0 0.0
  %4491 = vmatmul.mubr.f32.gmra.mrb[0].mxu0 %v4417
  %v4492 = vpop.f32.mrb[0].mxu0
  %v4493 = vadd.f32 0.0, %v4492
  %v4494 = vpop.f32.mrb[0].mxu0
  %4495 = vmatprep.mubr.f32.mxu0 0.0
  %4496 = vmatmul.mubr.f32.gmra.mrb[0].mxu0 %v4419
  %v4497 = vpop.f32.mrb[0].mxu0
  %v4498 = vadd.f32 0.0, %v4497
  %v4499 = vpop.f32.mrb[0].mxu0
  %4500 = vdwg.mxu0
  %4504 = vrot.lane.b32.xlu0 %v4488, 7
  %v4505 = vpop.permute.xlu0 %4504
  %4506 = vrot.lane.b32.xlu0 %v4493, 7
  %v4507 = vpop.permute.xlu0 %4506
  %4508 = vrot.lane.b32.xlu0 %v4498, 7
  %v4509 = vpop.permute.xlu0 %4508
  %vm4513 = vcmask 89144
  %4514 = vst.msk [vmem:[#allocation4 + $0x8] sm:$0xff] %vm4513, %v4505
  %4515 = vst.msk [vmem:[#allocation4 + $0x28] sm:$0xff] %vm4513, %v4507
  %4516 = vst.msk [vmem:[#allocation4 + $0x48] sm:$0xff] %vm4513, %v4509
  %v4517 = vld [vmem:[#allocation5] sm:$0xff]
  %v4518 = vld [vmem:[#allocation5 + $0x30] sm:$0xff]
  %v4519 = vld [vmem:[#allocation5 + $0x60] sm:$0xff]
  %v4520 = vld [vmem:[%s19] sm:$0xff]
  %4524 = vrot.lane.b32.xlu0 %v4517, 97
  %v4525 = vpop.permute.xlu0 %4524
  %4526 = vrot.lane.b32.xlu0 %v4518, 97
  %v4527 = vpop.permute.xlu0 %4526
  %4528 = vrot.lane.b32.xlu0 %v4519, 97
  %v4529 = vpop.permute.xlu0 %4528
  %v4530 = vsel %vm4414, %v4525, 0
  %v4532 = vsel %vm4414, %v4527, 0
  %v4534 = vsel %vm4414, %v4529, 0
  %4536 = vmatprep.subr.mxu0 0.0
  %4537 = vmatpush1.msra.mxu0 %v4520
  %4538 = vmatprep.subr.mxu0 0.0
  %4539 = vmatpush1.msra.mxu0 0.0
  %4540 = vmatprep.subr.mxu0 0.0
  %4541 = vmatpush1.msra.mxu0 0.0
  %4542 = vmatprep.subr.mxu0 0.0
  %4543 = vmatpush1.msra.mxu0 0.0
  %4544 = vmatprep.subr.mxu0 0.0
  %4545 = vmatpush1.msra.mxu0 0.0
  %4546 = vmatprep.subr.mxu0 0.0
  %4547 = vmatpush1.msra.mxu0 0.0
  %4548 = vmatprep.subr.mxu0 0.0
  %4549 = vmatpush1.msra.mxu0 0.0
  %4550 = vmatprep.subr.mxu0 0.0
  %4551 = vmatpush1.msra.mxu0 0.0
  %4552 = vmatprep.subr.mxu0 0.0
  %4553 = vmatpush1.msra.mxu0 0.0
  %4554 = vmatprep.subr.mxu0 0.0
  %4555 = vmatpush1.msra.mxu0 0.0
  %4556 = vmatprep.subr.mxu0 0.0
  %4557 = vmatpush1.msra.mxu0 0.0
  %4558 = vmatprep.subr.mxu0 0.0
  %4559 = vmatpush1.msra.mxu0 0.0
  %4560 = vmatprep.subr.mxu0 0.0
  %4561 = vmatpush1.msra.mxu0 0.0
  %4562 = vmatprep.subr.mxu0 0.0
  %4563 = vmatpush1.msra.mxu0 0.0
  %4564 = vmatprep.subr.mxu0 0.0
  %4565 = vmatpush1.msra.mxu0 0.0
  %4566 = vmatprep.subr.mxu0 0.0
  %4567 = vmatpush1.msra.mxu0 0.0
  %4568 = vmatprep.subr.mxu0 0.0
  %4569 = vmatpush1.msra.mxu0 0.0
  %4570 = vmatprep.subr.mxu0 0.0
  %4571 = vmatpush1.msra.mxu0 0.0
  %4572 = vmatprep.subr.mxu0 0.0
  %4573 = vmatpush1.msra.mxu0 0.0
  %4574 = vmatprep.subr.mxu0 0.0
  %4575 = vmatpush1.msra.mxu0 0.0
  %4576 = vmatprep.subr.mxu0 0.0
  %4577 = vmatpush1.msra.mxu0 0.0
  %4578 = vmatprep.subr.mxu0 0.0
  %4579 = vmatpush1.msra.mxu0 0.0
  %4580 = vmatprep.subr.mxu0 0.0
  %4581 = vmatpush1.msra.mxu0 0.0
  %4582 = vmatprep.subr.mxu0 0.0
  %4583 = vmatpush1.msra.mxu0 0.0
  %4584 = vmatprep.subr.mxu0 0.0
  %4585 = vmatpush1.msra.mxu0 0.0
  %4586 = vmatprep.subr.mxu0 0.0
  %4587 = vmatpush1.msra.mxu0 0.0
  %4588 = vmatprep.subr.mxu0 0.0
  %4589 = vmatpush1.msra.mxu0 0.0
  %4590 = vmatprep.subr.mxu0 0.0
  %4591 = vmatpush1.msra.mxu0 0.0
  %4592 = vmatprep.subr.mxu0 0.0
  %4593 = vmatpush1.msra.mxu0 0.0
  %4594 = vmatprep.subr.mxu0 0.0
  %4595 = vmatpush1.msra.mxu0 0.0
  %4596 = vmatprep.subr.mxu0 0.0
  %4597 = vmatpush1.msra.mxu0 0.0
  %4598 = vmatprep.subr.mxu0 0.0
  %4599 = vmatpush1.msra.mxu0 0.0
  %4600 = vmatprep.mubr.f32.mxu0 0.0
  %4601 = vmatmul.mubr.f32.gmra.mrb[0].mxu0 %v4530
  %v4602 = vpop.f32.mrb[0].mxu0
  %v4603 = vadd.f32 0.0, %v4602
  %v4604 = vpop.f32.mrb[0].mxu0
  %4605 = vmatprep.mubr.f32.mxu0 0.0
  %4606 = vmatmul.mubr.f32.gmra.mrb[0].mxu0 %v4532
  %v4607 = vpop.f32.mrb[0].mxu0
  %v4608 = vadd.f32 0.0, %v4607
  %v4609 = vpop.f32.mrb[0].mxu0
  %4610 = vmatprep.mubr.f32.mxu0 0.0
  %4611 = vmatmul.mubr.f32.gmra.mrb[0].mxu0 %v4534
  %v4612 = vpop.f32.mrb[0].mxu0
  %v4613 = vadd.f32 0.0, %v4612
  %v4614 = vpop.f32.mrb[0].mxu0
  %4615 = vdwg.mxu0
  %4619 = vrot.lane.b32.xlu0 %v4603, 13
  %v4620 = vpop.permute.xlu0 %4619
  %4621 = vrot.lane.b32.xlu0 %v4608, 13
  %v4622 = vpop.permute.xlu0 %4621
  %4623 = vrot.lane.b32.xlu0 %v4613, 13
  %v4624 = vpop.permute.xlu0 %4623
  %vm4628 = vcmask 138344
  %4629 = vst.msk [vmem:[#allocation4 + $0x8] sm:$0xff] %vm4628, %v4620
  %4630 = vst.msk [vmem:[#allocation4 + $0x28] sm:$0xff] %vm4628, %v4622
  %4631 = vst.msk [vmem:[#allocation4 + $0x48] sm:$0xff] %vm4628, %v4624
  %v4632 = vld [vmem:[#allocation5] sm:$0xff]
  %v4633 = vld [vmem:[#allocation5 + $0x30] sm:$0xff]
  %v4634 = vld [vmem:[#allocation5 + $0x60] sm:$0xff]
  %v4635 = vld [vmem:[%s19] sm:$0xff]
  %4639 = vrot.lane.b32.xlu0 %v4632, 77
  %v4640 = vpop.permute.xlu0 %4639
  %4641 = vrot.lane.b32.xlu0 %v4633, 77
  %v4642 = vpop.permute.xlu0 %4641
  %4643 = vrot.lane.b32.xlu0 %v4634, 77
  %v4644 = vpop.permute.xlu0 %4643
  %v4645 = vsel %vm4414, %v4640, 0
  %v4647 = vsel %vm4414, %v4642, 0
  %v4649 = vsel %vm4414, %v4644, 0
  %4651 = vmatprep.subr.mxu0 0.0
  %4652 = vmatpush1.msra.mxu0 %v4635
  %4653 = vmatprep.subr.mxu0 0.0
  %4654 = vmatpush1.msra.mxu0 0.0
  %4655 = vmatprep.subr.mxu0 0.0
  %4656 = vmatpush1.msra.mxu0 0.0
  %4657 = vmatprep.subr.mxu0 0.0
  %4658 = vmatpush1.msra.mxu0 0.0
  %4659 = vmatprep.subr.mxu0 0.0
  %4660 = vmatpush1.msra.mxu0 0.0
  %4661 = vmatprep.subr.mxu0 0.0
  %4662 = vmatpush1.msra.mxu0 0.0
  %4663 = vmatprep.subr.mxu0 0.0
  %4664 = vmatpush1.msra.mxu0 0.0
  %4665 = vmatprep.subr.mxu0 0.0
  %4666 = vmatpush1.msra.mxu0 0.0
  %4667 = vmatprep.subr.mxu0 0.0
  %4668 = vmatpush1.msra.mxu0 0.0
  %4669 = vmatprep.subr.mxu0 0.0
  %4670 = vmatpush1.msra.mxu0 0.0
  %4671 = vmatprep.subr.mxu0 0.0
  %4672 = vmatpush1.msra.mxu0 0.0
  %4673 = vmatprep.subr.mxu0 0.0
  %4674 = vmatpush1.msra.mxu0 0.0
  %4675 = vmatprep.subr.mxu0 0.0
  %4676 = vmatpush1.msra.mxu0 0.0
  %4677 = vmatprep.subr.mxu0 0.0
  %4678 = vmatpush1.msra.mxu0 0.0
  %4679 = vmatprep.subr.mxu0 0.0
  %4680 = vmatpush1.msra.mxu0 0.0
  %4681 = vmatprep.subr.mxu0 0.0
  %4682 = vmatpush1.msra.mxu0 0.0
  %4683 = vmatprep.subr.mxu0 0.0
  %4684 = vmatpush1.msra.mxu0 0.0
  %4685 = vmatprep.subr.mxu0 0.0
  %4686 = vmatpush1.msra.mxu0 0.0
  %4687 = vmatprep.subr.mxu0 0.0
  %4688 = vmatpush1.msra.mxu0 0.0
  %4689 = vmatprep.subr.mxu0 0.0
  %4690 = vmatpush1.msra.mxu0 0.0
  %4691 = vmatprep.subr.mxu0 0.0
  %4692 = vmatpush1.msra.mxu0 0.0
  %4693 = vmatprep.subr.mxu0 0.0
  %4694 = vmatpush1.msra.mxu0 0.0
  %4695 = vmatprep.subr.mxu0 0.0
  %4696 = vmatpush1.msra.mxu0 0.0
  %4697 = vmatprep.subr.mxu0 0.0
  %4698 = vmatpush1.msra.mxu0 0.0
  %4699 = vmatprep.subr.mxu0 0.0
  %4700 = vmatpush1.msra.mxu0 0.0
  %4701 = vmatprep.subr.mxu0 0.0
  %4702 = vmatpush1.msra.mxu0 0.0
  %4703 = vmatprep.subr.mxu0 0.0
  %4704 = vmatpush1.msra.mxu0 0.0
  %4705 = vmatprep.subr.mxu0 0.0
  %4706 = vmatpush1.msra.mxu0 0.0
  %4707 = vmatprep.subr.mxu0 0.0
  %4708 = vmatpush1.msra.mxu0 0.0
  %4709 = vmatprep.subr.mxu0 0.0
  %4710 = vmatpush1.msra.mxu0 0.0
  %4711 = vmatprep.subr.mxu0 0.0
  %4712 = vmatpush1.msra.mxu0 0.0
  %4713 = vmatprep.subr.mxu0 0.0
  %4714 = vmatpush1.msra.mxu0 0.0
  %4715 = vmatprep.mubr.f32.mxu0 0.0
  %4716 = vmatmul.mubr.f32.gmra.mrb[0].mxu0 %v4645
  %v4717 = vpop.f32.mrb[0].mxu0
  %v4718 = vadd.f32 0.0, %v4717
  %v4719 = vpop.f32.mrb[0].mxu0
  %4720 = vmatprep.mubr.f32.mxu0 0.0
  %4721 = vmatmul.mubr.f32.gmra.mrb[0].mxu0 %v4647
  %v4722 = vpop.f32.mrb[0].mxu0
  %v4723 = vadd.f32 0.0, %v4722
  %v4724 = vpop.f32.mrb[0].mxu0
  %4725 = vmatprep.mubr.f32.mxu0 0.0
  %4726 = vmatmul.mubr.f32.gmra.mrb[0].mxu0 %v4649
  %v4727 = vpop.f32.mrb[0].mxu0
  %v4728 = vadd.f32 0.0, %v4727
  %v4729 = vpop.f32.mrb[0].mxu0
  %4730 = vdwg.mxu0
  %4734 = vrot.lane.b32.xlu0 %v4718, 19
  %v4735 = vpop.permute.xlu0 %4734
  %4736 = vrot.lane.b32.xlu0 %v4723, 19
  %v4737 = vpop.permute.xlu0 %4736
  %4738 = vrot.lane.b32.xlu0 %v4728, 19
  %v4739 = vpop.permute.xlu0 %4738
  %vm4743 = vcmask 187544
  %4744 = vst.msk [vmem:[#allocation4 + $0x8] sm:$0xff] %vm4743, %v4735
  %4745 = vst.msk [vmem:[#allocation4 + $0x28] sm:$0xff] %vm4743, %v4737
  %4746 = vst.msk [vmem:[#allocation4 + $0x48] sm:$0xff] %vm4743, %v4739
  %v4747 = vld [vmem:[#allocation5] sm:$0xff]
  %v4748 = vld [vmem:[#allocation5 + $0x30] sm:$0xff]
  %v4749 = vld [vmem:[#allocation5 + $0x60] sm:$0xff]
  %v4750 = vld [vmem:[%s19] sm:$0xff]
  %4754 = vrot.lane.b32.xlu0 %v4747, 57
  %v4755 = vpop.permute.xlu0 %4754
  %4756 = vrot.lane.b32.xlu0 %v4748, 57
  %v4757 = vpop.permute.xlu0 %4756
  %4758 = vrot.lane.b32.xlu0 %v4749, 57
  %v4759 = vpop.permute.xlu0 %4758
  %v4760 = vsel %vm4414, %v4755, 0
  %v4762 = vsel %vm4414, %v4757, 0
  %v4764 = vsel %vm4414, %v4759, 0
  %4766 = vmatprep.subr.mxu0 0.0
  %4767 = vmatpush1.msra.mxu0 %v4750
  %4768 = vmatprep.subr.mxu0 0.0
  %4769 = vmatpush1.msra.mxu0 0.0
  %4770 = vmatprep.subr.mxu0 0.0
  %4771 = vmatpush1.msra.mxu0 0.0
  %4772 = vmatprep.subr.mxu0 0.0
  %4773 = vmatpush1.msra.mxu0 0.0
  %4774 = vmatprep.subr.mxu0 0.0
  %4775 = vmatpush1.msra.mxu0 0.0
  %4776 = vmatprep.subr.mxu0 0.0
  %4777 = vmatpush1.msra.mxu0 0.0
  %4778 = vmatprep.subr.mxu0 0.0
  %4779 = vmatpush1.msra.mxu0 0.0
  %4780 = vmatprep.subr.mxu0 0.0
  %4781 = vmatpush1.msra.mxu0 0.0
  %4782 = vmatprep.subr.mxu0 0.0
  %4783 = vmatpush1.msra.mxu0 0.0
  %4784 = vmatprep.subr.mxu0 0.0
  %4785 = vmatpush1.msra.mxu0 0.0
  %4786 = vmatprep.subr.mxu0 0.0
  %4787 = vmatpush1.msra.mxu0 0.0
  %4788 = vmatprep.subr.mxu0 0.0
  %4789 = vmatpush1.msra.mxu0 0.0
  %4790 = vmatprep.subr.mxu0 0.0
  %4791 = vmatpush1.msra.mxu0 0.0
  %4792 = vmatprep.subr.mxu0 0.0
  %4793 = vmatpush1.msra.mxu0 0.0
  %4794 = vmatprep.subr.mxu0 0.0
  %4795 = vmatpush1.msra.mxu0 0.0
  %4796 = vmatprep.subr.mxu0 0.0
  %4797 = vmatpush1.msra.mxu0 0.0
  %4798 = vmatprep.subr.mxu0 0.0
  %4799 = vmatpush1.msra.mxu0 0.0
  %4800 = vmatprep.subr.mxu0 0.0
  %4801 = vmatpush1.msra.mxu0 0.0
  %4802 = vmatprep.subr.mxu0 0.0
  %4803 = vmatpush1.msra.mxu0 0.0
  %4804 = vmatprep.subr.mxu0 0.0
  %4805 = vmatpush1.msra.mxu0 0.0
  %4806 = vmatprep.subr.mxu0 0.0
  %4807 = vmatpush1.msra.mxu0 0.0
  %4808 = vmatprep.subr.mxu0 0.0
  %4809 = vmatpush1.msra.mxu0 0.0
  %4810 = vmatprep.subr.mxu0 0.0
  %4811 = vmatpush1.msra.mxu0 0.0
  %4812 = vmatprep.subr.mxu0 0.0
  %4813 = vmatpush1.msra.mxu0 0.0
  %4814 = vmatprep.subr.mxu0 0.0
  %4815 = vmatpush1.msra.mxu0 0.0
  %4816 = vmatprep.subr.mxu0 0.0
  %4817 = vmatpush1.msra.mxu0 0.0
  %4818 = vmatprep.subr.mxu0 0.0
  %4819 = vmatpush1.msra.mxu0 0.0
  %4820 = vmatprep.subr.mxu0 0.0
  %4821 = vmatpush1.msra.mxu0 0.0
  %4822 = vmatprep.subr.mxu0 0.0
  %4823 = vmatpush1.msra.mxu0 0.0
  %4824 = vmatprep.subr.mxu0 0.0
  %4825 = vmatpush1.msra.mxu0 0.0
  %4826 = vmatprep.subr.mxu0 0.0
  %4827 = vmatpush1.msra.mxu0 0.0
  %4828 = vmatprep.subr.mxu0 0.0
  %4829 = vmatpush1.msra.mxu0 0.0
  %4830 = vmatprep.mubr.f32.mxu0 0.0
  %4831 = vmatmul.mubr.f32.gmra.mrb[0].mxu0 %v4760
  %v4832 = vpop.f32.mrb[0].mxu0
  %v4833 = vadd.f32 0.0, %v4832
  %v4834 = vpop.f32.mrb[0].mxu0
  %4835 = vmatprep.mubr.f32.mxu0 0.0
  %4836 = vmatmul.mubr.f32.gmra.mrb[0].mxu0 %v4762
  %v4837 = vpop.f32.mrb[0].mxu0
  %v4838 = vadd.f32 0.0, %v4837
  %v4839 = vpop.f32.mrb[0].mxu0
  %4840 = vmatprep.mubr.f32.mxu0 0.0
  %4841 = vmatmul.mubr.f32.gmra.mrb[0].mxu0 %v4764
  %v4842 = vpop.f32.mrb[0].mxu0
  %v4843 = vadd.f32 0.0, %v4842
  %v4844 = vpop.f32.mrb[0].mxu0
  %4845 = vdwg.mxu0
  %4849 = vrot.lane.b32.xlu0 %v4833, 25
  %v4850 = vpop.permute.xlu0 %4849
  %4851 = vrot.lane.b32.xlu0 %v4838, 25
  %v4852 = vpop.permute.xlu0 %4851
  %4853 = vrot.lane.b32.xlu0 %v4843, 25
  %v4854 = vpop.permute.xlu0 %4853
  %vm4858 = vcmask 236744
  %4859 = vst.msk [vmem:[#allocation4 + $0x8] sm:$0xff] %vm4858, %v4850
  %4860 = vst.msk [vmem:[#allocation4 + $0x28] sm:$0xff] %vm4858, %v4852
  %4861 = vst.msk [vmem:[#allocation4 + $0x48] sm:$0xff] %vm4858, %v4854
  %v4862 = vld [vmem:[#allocation5 + $0x8] sm:$0xff]
  %v4863 = vld [vmem:[#allocation5 + $0x38] sm:$0xff]
  %v4864 = vld [vmem:[#allocation5 + $0x68] sm:$0xff]
  %v4865 = vld [vmem:[%s19] sm:$0xff]
  %4869 = vrot.lane.b32.xlu0 %v4862, 117
  %v4870 = vpop.permute.xlu0 %4869
  %4871 = vrot.lane.b32.xlu0 %v4863, 117
  %v4872 = vpop.permute.xlu0 %4871
  %4873 = vrot.lane.b32.xlu0 %v4864, 117
  %v4874 = vpop.permute.xlu0 %4873
  %v4875 = vsel %vm4414, %v4870, 0
  %v4877 = vsel %vm4414, %v4872, 0
  %v4879 = vsel %vm4414, %v4874, 0
  %4881 = vmatprep.subr.mxu0 0.0
  %4882 = vmatpush1.msra.mxu0 %v4865
  %4883 = vmatprep.subr.mxu0 0.0
  %4884 = vmatpush1.msra.mxu0 0.0
  %4885 = vmatprep.subr.mxu0 0.0
  %4886 = vmatpush1.msra.mxu0 0.0
  %4887 = vmatprep.subr.mxu0 0.0
  %4888 = vmatpush1.msra.mxu0 0.0
  %4889 = vmatprep.subr.mxu0 0.0
  %4890 = vmatpush1.msra.mxu0 0.0
  %4891 = vmatprep.subr.mxu0 0.0
  %4892 = vmatpush1.msra.mxu0 0.0
  %4893 = vmatprep.subr.mxu0 0.0
  %4894 = vmatpush1.msra.mxu0 0.0
  %4895 = vmatprep.subr.mxu0 0.0
  %4896 = vmatpush1.msra.mxu0 0.0
  %4897 = vmatprep.subr.mxu0 0.0
  %4898 = vmatpush1.msra.mxu0 0.0
  %4899 = vmatprep.subr.mxu0 0.0
  %4900 = vmatpush1.msra.mxu0 0.0
  %4901 = vmatprep.subr.mxu0 0.0
  %4902 = vmatpush1.msra.mxu0 0.0
  %4903 = vmatprep.subr.mxu0 0.0
  %4904 = vmatpush1.msra.mxu0 0.0
  %4905 = vmatprep.subr.mxu0 0.0
  %4906 = vmatpush1.msra.mxu0 0.0
  %4907 = vmatprep.subr.mxu0 0.0
  %4908 = vmatpush1.msra.mxu0 0.0
  %4909 = vmatprep.subr.mxu0 0.0
  %4910 = vmatpush1.msra.mxu0 0.0
  %4911 = vmatprep.subr.mxu0 0.0
  %4912 = vmatpush1.msra.mxu0 0.0
  %4913 = vmatprep.subr.mxu0 0.0
  %4914 = vmatpush1.msra.mxu0 0.0
  %4915 = vmatprep.subr.mxu0 0.0
  %4916 = vmatpush1.msra.mxu0 0.0
  %4917 = vmatprep.subr.mxu0 0.0
  %4918 = vmatpush1.msra.mxu0 0.0
  %4919 = vmatprep.subr.mxu0 0.0
  %4920 = vmatpush1.msra.mxu0 0.0
  %4921 = vmatprep.subr.mxu0 0.0
  %4922 = vmatpush1.msra.mxu0 0.0
  %4923 = vmatprep.subr.mxu0 0.0
  %4924 = vmatpush1.msra.mxu0 0.0
  %4925 = vmatprep.subr.mxu0 0.0
  %4926 = vmatpush1.msra.mxu0 0.0
  %4927 = vmatprep.subr.mxu0 0.0
  %4928 = vmatpush1.msra.mxu0 0.0
  %4929 = vmatprep.subr.mxu0 0.0
  %4930 = vmatpush1.msra.mxu0 0.0
  %4931 = vmatprep.subr.mxu0 0.0
  %4932 = vmatpush1.msra.mxu0 0.0
  %4933 = vmatprep.subr.mxu0 0.0
  %4934 = vmatpush1.msra.mxu0 0.0
  %4935 = vmatprep.subr.mxu0 0.0
  %4936 = vmatpush1.msra.mxu0 0.0
  %4937 = vmatprep.subr.mxu0 0.0
  %4938 = vmatpush1.msra.mxu0 0.0
  %4939 = vmatprep.subr.mxu0 0.0
  %4940 = vmatpush1.msra.mxu0 0.0
  %4941 = vmatprep.subr.mxu0 0.0
  %4942 = vmatpush1.msra.mxu0 0.0
  %4943 = vmatprep.subr.mxu0 0.0
  %4944 = vmatpush1.msra.mxu0 0.0
  %4945 = vmatprep.mubr.f32.mxu0 0.0
  %4946 = vmatmul.mubr.f32.gmra.mrb[0].mxu0 %v4875
  %v4947 = vpop.f32.mrb[0].mxu0
  %v4948 = vadd.f32 0.0, %v4947
  %v4949 = vpop.f32.mrb[0].mxu0
  %4950 = vmatprep.mubr.f32.mxu0 0.0
  %4951 = vmatmul.mubr.f32.gmra.mrb[0].mxu0 %v4877
  %v4952 = vpop.f32.mrb[0].mxu0
  %v4953 = vadd.f32 0.0, %v4952
  %v4954 = vpop.f32.mrb[0].mxu0
  %4955 = vmatprep.mubr.f32.mxu0 0.0
  %4956 = vmatmul.mubr.f32.gmra.mrb[0].mxu0 %v4879
  %v4957 = vpop.f32.mrb[0].mxu0
  %v4958 = vadd.f32 0.0, %v4957
  %v4959 = vpop.f32.mrb[0].mxu0
  %4960 = vdwg.mxu0
  %4964 = vrot.lane.b32.xlu0 %v4948, 7
  %v4965 = vpop.permute.xlu0 %4964
  %4966 = vrot.lane.b32.xlu0 %v4953, 7
  %v4967 = vpop.permute.xlu0 %4966
  %4968 = vrot.lane.b32.xlu0 %v4958, 7
  %v4969 = vpop.permute.xlu0 %4968
  %4973 = vst.msk [vmem:[#allocation4 + $0x10] sm:$0xff] %vm4513, %v4965
  %4974 = vst.msk [vmem:[#allocation4 + $0x30] sm:$0xff] %vm4513, %v4967
  %4975 = vst.msk [vmem:[#allocation4 + $0x50] sm:$0xff] %vm4513, %v4969
  %v4976 = vld [vmem:[#allocation5 + $0x8] sm:$0xff]
  %v4977 = vld [vmem:[#allocation5 + $0x38] sm:$0xff]
  %v4978 = vld [vmem:[#allocation5 + $0x68] sm:$0xff]
  %v4979 = vld [vmem:[%s19] sm:$0xff]
  %4983 = vrot.lane.b32.xlu0 %v4976, 97
  %v4984 = vpop.permute.xlu0 %4983
  %4985 = vrot.lane.b32.xlu0 %v4977, 97
  %v4986 = vpop.permute.xlu0 %4985
  %4987 = vrot.lane.b32.xlu0 %v4978, 97
  %v4988 = vpop.permute.xlu0 %4987
  %v4989 = vsel %vm4414, %v4984, 0
  %v4991 = vsel %vm4414, %v4986, 0
  %v4993 = vsel %vm4414, %v4988, 0
  %4995 = vmatprep.subr.mxu0 0.0
  %4996 = vmatpush1.msra.mxu0 %v4979
  %4997 = vmatprep.subr.mxu0 0.0
  %4998 = vmatpush1.msra.mxu0 0.0
  %4999 = vmatprep.subr.mxu0 0.0
  %5000 = vmatpush1.msra.mxu0 0.0
  %5001 = vmatprep.subr.mxu0 0.0
  %5002 = vmatpush1.msra.mxu0 0.0
  %5003 = vmatprep.subr.mxu0 0.0
  %5004 = vmatpush1.msra.mxu0 0.0
  %5005 = vmatprep.subr.mxu0 0.0
  %5006 = vmatpush1.msra.mxu0 0.0
  %5007 = vmatprep.subr.mxu0 0.0
  %5008 = vmatpush1.msra.mxu0 0.0
  %5009 = vmatprep.subr.mxu0 0.0
  %5010 = vmatpush1.msra.mxu0 0.0
  %5011 = vmatprep.subr.mxu0 0.0
  %5012 = vmatpush1.msra.mxu0 0.0
  %5013 = vmatprep.subr.mxu0 0.0
  %5014 = vmatpush1.msra.mxu0 0.0
  %5015 = vmatprep.subr.mxu0 0.0
  %5016 = vmatpush1.msra.mxu0 0.0
  %5017 = vmatprep.subr.mxu0 0.0
  %5018 = vmatpush1.msra.mxu0 0.0
  %5019 = vmatprep.subr.mxu0 0.0
  %5020 = vmatpush1.msra.mxu0 0.0
  %5021 = vmatprep.subr.mxu0 0.0
  %5022 = vmatpush1.msra.mxu0 0.0
  %5023 = vmatprep.subr.mxu0 0.0
  %5024 = vmatpush1.msra.mxu0 0.0
  %5025 = vmatprep.subr.mxu0 0.0
  %5026 = vmatpush1.msra.mxu0 0.0
  %5027 = vmatprep.subr.mxu0 0.0
  %5028 = vmatpush1.msra.mxu0 0.0
  %5029 = vmatprep.subr.mxu0 0.0
  %5030 = vmatpush1.msra.mxu0 0.0
  %5031 = vmatprep.subr.mxu0 0.0
  %5032 = vmatpush1.msra.mxu0 0.0
  %5033 = vmatprep.subr.mxu0 0.0
  %5034 = vmatpush1.msra.mxu0 0.0
  %5035 = vmatprep.subr.mxu0 0.0
  %5036 = vmatpush1.msra.mxu0 0.0
  %5037 = vmatprep.subr.mxu0 0.0
  %5038 = vmatpush1.msra.mxu0 0.0
  %5039 = vmatprep.subr.mxu0 0.0
  %5040 = vmatpush1.msra.mxu0 0.0
  %5041 = vmatprep.subr.mxu0 0.0
  %5042 = vmatpush1.msra.mxu0 0.0
  %5043 = vmatprep.subr.mxu0 0.0
  %5044 = vmatpush1.msra.mxu0 0.0
  %5045 = vmatprep.subr.mxu0 0.0
  %5046 = vmatpush1.msra.mxu0 0.0
  %5047 = vmatprep.subr.mxu0 0.0
  %5048 = vmatpush1.msra.mxu0 0.0
  %5049 = vmatprep.subr.mxu0 0.0
  %5050 = vmatpush1.msra.mxu0 0.0
  %5051 = vmatprep.subr.mxu0 0.0
  %5052 = vmatpush1.msra.mxu0 0.0
  %5053 = vmatprep.subr.mxu0 0.0
  %5054 = vmatpush1.msra.mxu0 0.0
  %5055 = vmatprep.subr.mxu0 0.0
  %5056 = vmatpush1.msra.mxu0 0.0
  %5057 = vmatprep.subr.mxu0 0.0
  %5058 = vmatpush1.msra.mxu0 0.0
  %5059 = vmatprep.mubr.f32.mxu0 0.0
  %5060 = vmatmul.mubr.f32.gmra.mrb[0].mxu0 %v4989
  %v5061 = vpop.f32.mrb[0].mxu0
  %v5062 = vadd.f32 0.0, %v5061
  %v5063 = vpop.f32.mrb[0].mxu0
  %5064 = vmatprep.mubr.f32.mxu0 0.0
  %5065 = vmatmul.mubr.f32.gmra.mrb[0].mxu0 %v4991
  %v5066 = vpop.f32.mrb[0].mxu0
  %v5067 = vadd.f32 0.0, %v5066
  %v5068 = vpop.f32.mrb[0].mxu0
  %5069 = vmatprep.mubr.f32.mxu0 0.0
  %5070 = vmatmul.mubr.f32.gmra.mrb[0].mxu0 %v4993
  %v5071 = vpop.f32.mrb[0].mxu0
  %v5072 = vadd.f32 0.0, %v5071
  %v5073 = vpop.f32.mrb[0].mxu0
  %5074 = vdwg.mxu0
  %5078 = vrot.lane.b32.xlu0 %v5062, 13
  %v5079 = vpop.permute.xlu0 %5078
  %5080 = vrot.lane.b32.xlu0 %v5067, 13
  %v5081 = vpop.permute.xlu0 %5080
  %5082 = vrot.lane.b32.xlu0 %v5072, 13
  %v5083 = vpop.permute.xlu0 %5082
  %5087 = vst.msk [vmem:[#allocation4 + $0x10] sm:$0xff] %vm4628, %v5079
  %5088 = vst.msk [vmem:[#allocation4 + $0x30] sm:$0xff] %vm4628, %v5081
  %5089 = vst.msk [vmem:[#allocation4 + $0x50] sm:$0xff] %vm4628, %v5083
  %v5090 = vld [vmem:[#allocation5 + $0x8] sm:$0xff]
  %v5091 = vld [vmem:[#allocation5 + $0x38] sm:$0xff]
  %v5092 = vld [vmem:[#allocation5 + $0x68] sm:$0xff]
  %v5093 = vld [vmem:[%s19] sm:$0xff]
  %5097 = vrot.lane.b32.xlu0 %v5090, 77
  %v5098 = vpop.permute.xlu0 %5097
  %5099 = vrot.lane.b32.xlu0 %v5091, 77
  %v5100 = vpop.permute.xlu0 %5099
  %5101 = vrot.lane.b32.xlu0 %v5092, 77
  %v5102 = vpop.permute.xlu0 %5101
  %v5103 = vsel %vm4414, %v5098, 0
  %v5105 = vsel %vm4414, %v5100, 0
  %v5107 = vsel %vm4414, %v5102, 0
  %5109 = vmatprep.subr.mxu0 0.0
  %5110 = vmatpush1.msra.mxu0 %v5093
  %5111 = vmatprep.subr.mxu0 0.0
  %5112 = vmatpush1.msra.mxu0 0.0
  %5113 = vmatprep.subr.mxu0 0.0
  %5114 = vmatpush1.msra.mxu0 0.0
  %5115 = vmatprep.subr.mxu0 0.0
  %5116 = vmatpush1.msra.mxu0 0.0
  %5117 = vmatprep.subr.mxu0 0.0
  %5118 = vmatpush1.msra.mxu0 0.0
  %5119 = vmatprep.subr.mxu0 0.0
  %5120 = vmatpush1.msra.mxu0 0.0
  %5121 = vmatprep.subr.mxu0 0.0
  %5122 = vmatpush1.msra.mxu0 0.0
  %5123 = vmatprep.subr.mxu0 0.0
  %5124 = vmatpush1.msra.mxu0 0.0
  %5125 = vmatprep.subr.mxu0 0.0
  %5126 = vmatpush1.msra.mxu0 0.0
  %5127 = vmatprep.subr.mxu0 0.0
  %5128 = vmatpush1.msra.mxu0 0.0
  %5129 = vmatprep.subr.mxu0 0.0
  %5130 = vmatpush1.msra.mxu0 0.0
  %5131 = vmatprep.subr.mxu0 0.0
  %5132 = vmatpush1.msra.mxu0 0.0
  %5133 = vmatprep.subr.mxu0 0.0
  %5134 = vmatpush1.msra.mxu0 0.0
  %5135 = vmatprep.subr.mxu0 0.0
  %5136 = vmatpush1.msra.mxu0 0.0
  %5137 = vmatprep.subr.mxu0 0.0
  %5138 = vmatpush1.msra.mxu0 0.0
  %5139 = vmatprep.subr.mxu0 0.0
  %5140 = vmatpush1.msra.mxu0 0.0
  %5141 = vmatprep.subr.mxu0 0.0
  %5142 = vmatpush1.msra.mxu0 0.0
  %5143 = vmatprep.subr.mxu0 0.0
  %5144 = vmatpush1.msra.mxu0 0.0
  %5145 = vmatprep.subr.mxu0 0.0
  %5146 = vmatpush1.msra.mxu0 0.0
  %5147 = vmatprep.subr.mxu0 0.0
  %5148 = vmatpush1.msra.mxu0 0.0
  %5149 = vmatprep.subr.mxu0 0.0
  %5150 = vmatpush1.msra.mxu0 0.0
  %5151 = vmatprep.subr.mxu0 0.0
  %5152 = vmatpush1.msra.mxu0 0.0
  %5153 = vmatprep.subr.mxu0 0.0
  %5154 = vmatpush1.msra.mxu0 0.0
  %5155 = vmatprep.subr.mxu0 0.0
  %5156 = vmatpush1.msra.mxu0 0.0
  %5157 = vmatprep.subr.mxu0 0.0
  %5158 = vmatpush1.msra.mxu0 0.0
  %5159 = vmatprep.subr.mxu0 0.0
  %5160 = vmatpush1.msra.mxu0 0.0
  %5161 = vmatprep.subr.mxu0 0.0
  %5162 = vmatpush1.msra.mxu0 0.0
  %5163 = vmatprep.subr.mxu0 0.0
  %5164 = vmatpush1.msra.mxu0 0.0
  %5165 = vmatprep.subr.mxu0 0.0
  %5166 = vmatpush1.msra.mxu0 0.0
  %5167 = vmatprep.subr.mxu0 0.0
  %5168 = vmatpush1.msra.mxu0 0.0
  %5169 = vmatprep.subr.mxu0 0.0
  %5170 = vmatpush1.msra.mxu0 0.0
  %5171 = vmatprep.subr.mxu0 0.0
  %5172 = vmatpush1.msra.mxu0 0.0
  %5173 = vmatprep.mubr.f32.mxu0 0.0
  %5174 = vmatmul.mubr.f32.gmra.mrb[0].mxu0 %v5103
  %v5175 = vpop.f32.mrb[0].mxu0
  %v5176 = vadd.f32 0.0, %v5175
  %v5177 = vpop.f32.mrb[0].mxu0
  %5178 = vmatprep.mubr.f32.mxu0 0.0
  %5179 = vmatmul.mubr.f32.gmra.mrb[0].mxu0 %v5105
  %v5180 = vpop.f32.mrb[0].mxu0
  %v5181 = vadd.f32 0.0, %v5180
  %v5182 = vpop.f32.mrb[0].mxu0
  %5183 = vmatprep.mubr.f32.mxu0 0.0
  %5184 = vmatmul.mubr.f32.gmra.mrb[0].mxu0 %v5107
  %v5185 = vpop.f32.mrb[0].mxu0
  %v5186 = vadd.f32 0.0, %v5185
  %v5187 = vpop.f32.mrb[0].mxu0
  %5188 = vdwg.mxu0
  %5192 = vrot.lane.b32.xlu0 %v5176, 19
  %v5193 = vpop.permute.xlu0 %5192
  %5194 = vrot.lane.b32.xlu0 %v5181, 19
  %v5195 = vpop.permute.xlu0 %5194
  %5196 = vrot.lane.b32.xlu0 %v5186, 19
  %v5197 = vpop.permute.xlu0 %5196
  %5201 = vst.msk [vmem:[#allocation4 + $0x10] sm:$0xff] %vm4743, %v5193
  %5202 = vst.msk [vmem:[#allocation4 + $0x30] sm:$0xff] %vm4743, %v5195
  %5203 = vst.msk [vmem:[#allocation4 + $0x50] sm:$0xff] %vm4743, %v5197
  %v5204 = vld [vmem:[#allocation5 + $0x8] sm:$0xff]
  %v5205 = vld [vmem:[#allocation5 + $0x38] sm:$0xff]
  %v5206 = vld [vmem:[#allocation5 + $0x68] sm:$0xff]
  %v5207 = vld [vmem:[%s19] sm:$0xff]
  %5211 = vrot.lane.b32.xlu0 %v5204, 57
  %v5212 = vpop.permute.xlu0 %5211
  %5213 = vrot.lane.b32.xlu0 %v5205, 57
  %v5214 = vpop.permute.xlu0 %5213
  %5215 = vrot.lane.b32.xlu0 %v5206, 57
  %v5216 = vpop.permute.xlu0 %5215
  %v5217 = vsel %vm4414, %v5212, 0
  %v5219 = vsel %vm4414, %v5214, 0
  %v5221 = vsel %vm4414, %v5216, 0
  %5223 = vmatprep.subr.mxu0 0.0
  %5224 = vmatpush1.msra.mxu0 %v5207
  %5225 = vmatprep.subr.mxu0 0.0
  %5226 = vmatpush1.msra.mxu0 0.0
  %5227 = vmatprep.subr.mxu0 0.0
  %5228 = vmatpush1.msra.mxu0 0.0
  %5229 = vmatprep.subr.mxu0 0.0
  %5230 = vmatpush1.msra.mxu0 0.0
  %5231 = vmatprep.subr.mxu0 0.0
  %5232 = vmatpush1.msra.mxu0 0.0
  %5233 = vmatprep.subr.mxu0 0.0
  %5234 = vmatpush1.msra.mxu0 0.0
  %5235 = vmatprep.subr.mxu0 0.0
  %5236 = vmatpush1.msra.mxu0 0.0
  %5237 = vmatprep.subr.mxu0 0.0
  %5238 = vmatpush1.msra.mxu0 0.0
  %5239 = vmatprep.subr.mxu0 0.0
  %5240 = vmatpush1.msra.mxu0 0.0
  %5241 = vmatprep.subr.mxu0 0.0
  %5242 = vmatpush1.msra.mxu0 0.0
  %5243 = vmatprep.subr.mxu0 0.0
  %5244 = vmatpush1.msra.mxu0 0.0
  %5245 = vmatprep.subr.mxu0 0.0
  %5246 = vmatpush1.msra.mxu0 0.0
  %5247 = vmatprep.subr.mxu0 0.0
  %5248 = vmatpush1.msra.mxu0 0.0
  %5249 = vmatprep.subr.mxu0 0.0
  %5250 = vmatpush1.msra.mxu0 0.0
  %5251 = vmatprep.subr.mxu0 0.0
  %5252 = vmatpush1.msra.mxu0 0.0
  %5253 = vmatprep.subr.mxu0 0.0
  %5254 = vmatpush1.msra.mxu0 0.0
  %5255 = vmatprep.subr.mxu0 0.0
  %5256 = vmatpush1.msra.mxu0 0.0
  %5257 = vmatprep.subr.mxu0 0.0
  %5258 = vmatpush1.msra.mxu0 0.0
  %5259 = vmatprep.subr.mxu0 0.0
  %5260 = vmatpush1.msra.mxu0 0.0
  %5261 = vmatprep.subr.mxu0 0.0
  %5262 = vmatpush1.msra.mxu0 0.0
  %5263 = vmatprep.subr.mxu0 0.0
  %5264 = vmatpush1.msra.mxu0 0.0
  %5265 = vmatprep.subr.mxu0 0.0
  %5266 = vmatpush1.msra.mxu0 0.0
  %5267 = vmatprep.subr.mxu0 0.0
  %5268 = vmatpush1.msra.mxu0 0.0
  %5269 = vmatprep.subr.mxu0 0.0
  %5270 = vmatpush1.msra.mxu0 0.0
  %5271 = vmatprep.subr.mxu0 0.0
  %5272 = vmatpush1.msra.mxu0 0.0
  %5273 = vmatprep.subr.mxu0 0.0
  %5274 = vmatpush1.msra.mxu0 0.0
  %5275 = vmatprep.subr.mxu0 0.0
  %5276 = vmatpush1.msra.mxu0 0.0
  %5277 = vmatprep.subr.mxu0 0.0
  %5278 = vmatpush1.msra.mxu0 0.0
  %5279 = vmatprep.subr.mxu0 0.0
  %5280 = vmatpush1.msra.mxu0 0.0
  %5281 = vmatprep.subr.mxu0 0.0
  %5282 = vmatpush1.msra.mxu0 0.0
  %5283 = vmatprep.subr.mxu0 0.0
  %5284 = vmatpush1.msra.mxu0 0.0
  %5285 = vmatprep.subr.mxu0 0.0
  %5286 = vmatpush1.msra.mxu0 0.0
  %5287 = vmatprep.mubr.f32.mxu0 0.0
  %5288 = vmatmul.mubr.f32.gmra.mrb[0].mxu0 %v5217
  %v5289 = vpop.f32.mrb[0].mxu0
  %v5290 = vadd.f32 0.0, %v5289
  %v5291 = vpop.f32.mrb[0].mxu0
  %5292 = vmatprep.mubr.f32.mxu0 0.0
  %5293 = vmatmul.mubr.f32.gmra.mrb[0].mxu0 %v5219
  %v5294 = vpop.f32.mrb[0].mxu0
  %v5295 = vadd.f32 0.0, %v5294
  %v5296 = vpop.f32.mrb[0].mxu0
  %5297 = vmatprep.mubr.f32.mxu0 0.0
  %5298 = vmatmul.mubr.f32.gmra.mrb[0].mxu0 %v5221
  %v5299 = vpop.f32.mrb[0].mxu0
  %v5300 = vadd.f32 0.0, %v5299
  %v5301 = vpop.f32.mrb[0].mxu0
  %5302 = vdwg.mxu0
  %5306 = vrot.lane.b32.xlu0 %v5290, 25
  %v5307 = vpop.permute.xlu0 %5306
  %5308 = vrot.lane.b32.xlu0 %v5295, 25
  %v5309 = vpop.permute.xlu0 %5308
  %5310 = vrot.lane.b32.xlu0 %v5300, 25
  %v5311 = vpop.permute.xlu0 %5310
  %5315 = vst.msk [vmem:[#allocation4 + $0x10] sm:$0xff] %vm4858, %v5307
  %5316 = vst.msk [vmem:[#allocation4 + $0x30] sm:$0xff] %vm4858, %v5309
  %5317 = vst.msk [vmem:[#allocation4 + $0x50] sm:$0xff] %vm4858, %v5311
  %v5318 = vld [vmem:[#allocation4] sm:$0xff]
  %v5319 = vld [vmem:[#allocation4 + $0x8] sm:$0xff]
  %v5320 = vld [vmem:[#allocation4 + $0x10] sm:$0xff]
  %v5321 = vld [vmem:[#allocation4 + $0x20] sm:$0xff]
  %v5322 = vld [vmem:[#allocation4 + $0x28] sm:$0xff]
  %v5323 = vld [vmem:[#allocation4 + $0x30] sm:$0xff]
  %v5324 = vld [vmem:[#allocation4 + $0x40] sm:$0xff]
  %v5325 = vld [vmem:[#allocation4 + $0x48] sm:$0xff]
  %v5326 = vld [vmem:[#allocation4 + $0x50] sm:$0xff]
  %5336 = vrot.lane.b32.xlu0 %v5318, 7
  %v5337 = vpop.permute.xlu0 %5336
  %5338 = vrot.lane.b32.xlu0 %v5319, 7
  %v5339 = vpop.permute.xlu0 %5338
  %5340 = vrot.lane.b32.xlu0 %v5320, 7
  %v5341 = vpop.permute.xlu0 %5340
  %5342 = vrot.lane.b32.xlu0 %v5321, 7
  %v5343 = vpop.permute.xlu0 %5342
  %5344 = vrot.lane.b32.xlu0 %v5322, 7
  %v5345 = vpop.permute.xlu0 %5344
  %5346 = vrot.lane.b32.xlu0 %v5323, 7
  %v5347 = vpop.permute.xlu0 %5346
  %5348 = vrot.lane.b32.xlu0 %v5324, 7
  %v5349 = vpop.permute.xlu0 %5348
  %5350 = vrot.lane.b32.xlu0 %v5325, 7
  %v5351 = vpop.permute.xlu0 %5350
  %5352 = vrot.lane.b32.xlu0 %v5326, 7
  %v5353 = vpop.permute.xlu0 %5352
  %vm5354 = vcmask 56320
  %v5355 = vsel %vm5354, %v5337, %v5339
  %v5356 = vsel %vm5354, %v5339, %v5341
  %v5357 = vsel %vm5354, %v5343, %v5345
  %v5358 = vsel %vm5354, %v5345, %v5347
  %v5359 = vsel %vm5354, %v5349, %v5351
  %v5360 = vsel %vm5354, %v5351, %v5353
  %5367 = vst [vmem:[#allocation5] sm:$0xff] %v5355
  %5368 = vst [vmem:[#allocation5 + $0x8] sm:$0xff] %v5356
  %5369 = vst [vmem:[#allocation5 + $0x30] sm:$0xff] %v5357
  %5370 = vst [vmem:[#allocation5 + $0x38] sm:$0xff] %v5358
  %5371 = vst [vmem:[#allocation5 + $0x60] sm:$0xff] %v5359
  %5372 = vst [vmem:[#allocation5 + $0x68] sm:$0xff] %v5360
  %v5373 = vld [vmem:[#allocation4] sm:$0xff]
  %v5374 = vld [vmem:[#allocation4 + $0x8] sm:$0xff]
  %v5375 = vld [vmem:[#allocation4 + $0x10] sm:$0xff]
  %v5376 = vld [vmem:[#allocation4 + $0x20] sm:$0xff]
  %v5377 = vld [vmem:[#allocation4 + $0x28] sm:$0xff]
  %v5378 = vld [vmem:[#allocation4 + $0x30] sm:$0xff]
  %v5379 = vld [vmem:[#allocation4 + $0x40] sm:$0xff]
  %v5380 = vld [vmem:[#allocation4 + $0x48] sm:$0xff]
  %v5381 = vld [vmem:[#allocation4 + $0x50] sm:$0xff]
  %5391 = vrot.lane.b32.xlu0 %v5373, 6
  %v5392 = vpop.permute.xlu0 %5391
  %5393 = vrot.lane.b32.xlu0 %v5374, 6
  %v5394 = vpop.permute.xlu0 %5393
  %5395 = vrot.lane.b32.xlu0 %v5375, 6
  %v5396 = vpop.permute.xlu0 %5395
  %5397 = vrot.lane.b32.xlu0 %v5376, 6
  %v5398 = vpop.permute.xlu0 %5397
  %5399 = vrot.lane.b32.xlu0 %v5377, 6
  %v5400 = vpop.permute.xlu0 %5399
  %5401 = vrot.lane.b32.xlu0 %v5378, 6
  %v5402 = vpop.permute.xlu0 %5401
  %5403 = vrot.lane.b32.xlu0 %v5379, 6
  %v5404 = vpop.permute.xlu0 %5403
  %5405 = vrot.lane.b32.xlu0 %v5380, 6
  %v5406 = vpop.permute.xlu0 %5405
  %5407 = vrot.lane.b32.xlu0 %v5381, 6
  %v5408 = vpop.permute.xlu0 %5407
  %vm5409 = vcmask 48128
  %v5410 = vsel %vm5409, %v5392, %v5394
  %v5411 = vsel %vm5409, %v5394, %v5396
  %v5412 = vsel %vm5409, %v5398, %v5400
  %v5413 = vsel %vm5409, %v5400, %v5402
  %v5414 = vsel %vm5409, %v5404, %v5406
  %v5415 = vsel %vm5409, %v5406, %v5408
  %5422 = vst [vmem:[#allocation5 + $0x90] sm:$0xff] %v5410
  %5423 = vst [vmem:[#allocation5 + $0x98] sm:$0xff] %v5411
  %5424 = vst [vmem:[#allocation5 + $0xc0] sm:$0xff] %v5412
  %5425 = vst [vmem:[#allocation5 + $0xc8] sm:$0xff] %v5413
  %5426 = vst [vmem:[#allocation5 + $0xf0] sm:$0xff] %v5414
  %5427 = vst [vmem:[#allocation5 + $0xf8] sm:$0xff] %v5415
  %v5428 = vld [vmem:[#allocation4] sm:$0xff]
  %v5429 = vld [vmem:[#allocation4 + $0x8] sm:$0xff]
  %v5430 = vld [vmem:[#allocation4 + $0x10] sm:$0xff]
  %v5431 = vld [vmem:[#allocation4 + $0x20] sm:$0xff]
  %v5432 = vld [vmem:[#allocation4 + $0x28] sm:$0xff]
  %v5433 = vld [vmem:[#allocation4 + $0x30] sm:$0xff]
  %v5434 = vld [vmem:[#allocation4 + $0x40] sm:$0xff]
  %v5435 = vld [vmem:[#allocation4 + $0x48] sm:$0xff]
  %v5436 = vld [vmem:[#allocation4 + $0x50] sm:$0xff]
  %5446 = vrot.lane.b32.xlu0 %v5428, 5
  %v5447 = vpop.permute.xlu0 %5446
  %5448 = vrot.lane.b32.xlu0 %v5429, 5
  %v5449 = vpop.permute.xlu0 %5448
  %5450 = vrot.lane.b32.xlu0 %v5430, 5
  %v5451 = vpop.permute.xlu0 %5450
  %5452 = vrot.lane.b32.xlu0 %v5431, 5
  %v5453 = vpop.permute.xlu0 %5452
  %5454 = vrot.lane.b32.xlu0 %v5432, 5
  %v5455 = vpop.permute.xlu0 %5454
  %5456 = vrot.lane.b32.xlu0 %v5433, 5
  %v5457 = vpop.permute.xlu0 %5456
  %5458 = vrot.lane.b32.xlu0 %v5434, 5
  %v5459 = vpop.permute.xlu0 %5458
  %5460 = vrot.lane.b32.xlu0 %v5435, 5
  %v5461 = vpop.permute.xlu0 %5460
  %5462 = vrot.lane.b32.xlu0 %v5436, 5
  %v5463 = vpop.permute.xlu0 %5462
  %vm5464 = vcmask 39936
  %v5465 = vsel %vm5464, %v5447, %v5449
  %v5466 = vsel %vm5464, %v5449, %v5451
  %v5467 = vsel %vm5464, %v5453, %v5455
  %v5468 = vsel %vm5464, %v5455, %v5457
  %v5469 = vsel %vm5464, %v5459, %v5461
  %v5470 = vsel %vm5464, %v5461, %v5463
  %5477 = vst [vmem:[#allocation5 + $0x120] sm:$0xff] %v5465
  %5478 = vst [vmem:[#allocation5 + $0x128] sm:$0xff] %v5466
  %5479 = vst [vmem:[#allocation5 + $0x150] sm:$0xff] %v5467
  %5480 = vst [vmem:[#allocation5 + $0x158] sm:$0xff] %v5468
  %5481 = vst [vmem:[#allocation5 + $0x180] sm:$0xff] %v5469
  %5482 = vst [vmem:[#allocation5 + $0x188] sm:$0xff] %v5470
  %v5483 = vld [vmem:[#allocation4] sm:$0xff]
  %v5484 = vld [vmem:[#allocation4 + $0x8] sm:$0xff]
  %v5485 = vld [vmem:[#allocation4 + $0x10] sm:$0xff]
  %v5486 = vld [vmem:[#allocation4 + $0x20] sm:$0xff]
  %v5487 = vld [vmem:[#allocation4 + $0x28] sm:$0xff]
  %v5488 = vld [vmem:[#allocation4 + $0x30] sm:$0xff]
  %v5489 = vld [vmem:[#allocation4 + $0x40] sm:$0xff]
  %v5490 = vld [vmem:[#allocation4 + $0x48] sm:$0xff]
  %v5491 = vld [vmem:[#allocation4 + $0x50] sm:$0xff]
  %5501 = vrot.lane.b32.xlu0 %v5483, 1
  %v5502 = vpop.permute.xlu0 %5501
  %5503 = vrot.lane.b32.xlu0 %v5484, 1
  %v5504 = vpop.permute.xlu0 %5503
  %5505 = vrot.lane.b32.xlu0 %v5485, 1
  %v5506 = vpop.permute.xlu0 %5505
  %5507 = vrot.lane.b32.xlu0 %v5486, 1
  %v5508 = vpop.permute.xlu0 %5507
  %5509 = vrot.lane.b32.xlu0 %v5487, 1
  %v5510 = vpop.permute.xlu0 %5509
  %5511 = vrot.lane.b32.xlu0 %v5488, 1
  %v5512 = vpop.permute.xlu0 %5511
  %5513 = vrot.lane.b32.xlu0 %v5489, 1
  %v5514 = vpop.permute.xlu0 %5513
  %5515 = vrot.lane.b32.xlu0 %v5490, 1
  %v5516 = vpop.permute.xlu0 %5515
  %5517 = vrot.lane.b32.xlu0 %v5491, 1
  %v5518 = vpop.permute.xlu0 %5517
  %v5519 = vsel %vm926, %v5502, %v5504
  %v5520 = vsel %vm926, %v5504, %v5506
  %v5521 = vsel %vm926, %v5508, %v5510
  %v5522 = vsel %vm926, %v5510, %v5512
  %v5523 = vsel %vm926, %v5514, %v5516
  %v5524 = vsel %vm926, %v5516, %v5518
  %5531 = vst [vmem:[#allocation5 + $0x1b0] sm:$0xff] %v5519
  %5532 = vst [vmem:[#allocation5 + $0x1b8] sm:$0xff] %v5520
  %5533 = vst [vmem:[#allocation5 + $0x1e0] sm:$0xff] %v5521
  %5534 = vst [vmem:[#allocation5 + $0x1e8] sm:$0xff] %v5522
  %5535 = vst [vmem:[#allocation5 + $0x210] sm:$0xff] %v5523
  %5536 = vst [vmem:[#allocation5 + $0x218] sm:$0xff] %v5524
  %v5537 = vld [vmem:[#allocation4 + $0x8] sm:$0xff]
  %v5538 = vld [vmem:[#allocation4 + $0x10] sm:$0xff]
  %v5539 = vld [vmem:[#allocation4 + $0x28] sm:$0xff]
  %v5540 = vld [vmem:[#allocation4 + $0x30] sm:$0xff]
  %v5541 = vld [vmem:[#allocation4 + $0x48] sm:$0xff]
  %v5542 = vld [vmem:[#allocation4 + $0x50] sm:$0xff]
  %5543 = vst [vmem:[#allocation5 + $0x240] sm:$0xff] %v5537
  %5544 = vst [vmem:[#allocation5 + $0x248] sm:$0xff] %v5538
  %5545 = vst [vmem:[#allocation5 + $0x270] sm:$0xff] %v5539
  %5546 = vst [vmem:[#allocation5 + $0x278] sm:$0xff] %v5540
  %5547 = vst [vmem:[#allocation5 + $0x2a0] sm:$0xff] %v5541
  %5548 = vst [vmem:[#allocation5 + $0x2a8] sm:$0xff] %v5542
  %v5549 = vld [vmem:[#allocation4 + $0x8] sm:$0xff]
  %v5550 = vld [vmem:[#allocation4 + $0x10] sm:$0xff]
  %v5551 = vld [vmem:[#allocation4 + $0x18] sm:$0xff]
  %v5552 = vld [vmem:[#allocation4 + $0x28] sm:$0xff]
  %v5553 = vld [vmem:[#allocation4 + $0x30] sm:$0xff]
  %v5554 = vld [vmem:[#allocation4 + $0x38] sm:$0xff]
  %v5555 = vld [vmem:[#allocation4 + $0x48] sm:$0xff]
  %v5556 = vld [vmem:[#allocation4 + $0x50] sm:$0xff]
  %v5557 = vld [vmem:[#allocation4 + $0x58] sm:$0xff]
  %5567 = vrot.lane.b32.xlu0 %v5549, 127
  %v5568 = vpop.permute.xlu0 %5567
  %5569 = vrot.lane.b32.xlu0 %v5550, 127
  %v5570 = vpop.permute.xlu0 %5569
  %5571 = vrot.lane.b32.xlu0 %v5551, 127
  %v5572 = vpop.permute.xlu0 %5571
  %5573 = vrot.lane.b32.xlu0 %v5552, 127
  %v5574 = vpop.permute.xlu0 %5573
  %5575 = vrot.lane.b32.xlu0 %v5553, 127
  %v5576 = vpop.permute.xlu0 %5575
  %5577 = vrot.lane.b32.xlu0 %v5554, 127
  %v5578 = vpop.permute.xlu0 %5577
  %5579 = vrot.lane.b32.xlu0 %v5555, 127
  %v5580 = vpop.permute.xlu0 %5579
  %5581 = vrot.lane.b32.xlu0 %v5556, 127
  %v5582 = vpop.permute.xlu0 %5581
  %5583 = vrot.lane.b32.xlu0 %v5557, 127
  %v5584 = vpop.permute.xlu0 %5583
  %v5585 = vsel %vm185, %v5568, %v5570
  %v5586 = vsel %vm185, %v5570, %v5572
  %v5587 = vsel %vm185, %v5574, %v5576
  %v5588 = vsel %vm185, %v5576, %v5578
  %v5589 = vsel %vm185, %v5580, %v5582
  %v5590 = vsel %vm185, %v5582, %v5584
  %5597 = vst [vmem:[#allocation5 + $0x2d0] sm:$0xff] %v5585
  %5598 = vst [vmem:[#allocation5 + $0x2d8] sm:$0xff] %v5586
  %5599 = vst [vmem:[#allocation5 + $0x300] sm:$0xff] %v5587
  %5600 = vst [vmem:[#allocation5 + $0x308] sm:$0xff] %v5588
  %5601 = vst [vmem:[#allocation5 + $0x330] sm:$0xff] %v5589
  %5602 = vst [vmem:[#allocation5 + $0x338] sm:$0xff] %v5590
  %v5603 = vld [vmem:[#allocation4 + $0x8] sm:$0xff]
  %v5604 = vld [vmem:[#allocation4 + $0x10] sm:$0xff]
  %v5605 = vld [vmem:[#allocation4 + $0x18] sm:$0xff]
  %v5606 = vld [vmem:[#allocation4 + $0x28] sm:$0xff]
  %v5607 = vld [vmem:[#allocation4 + $0x30] sm:$0xff]
  %v5608 = vld [vmem:[#allocation4 + $0x38] sm:$0xff]
  %v5609 = vld [vmem:[#allocation4 + $0x48] sm:$0xff]
  %v5610 = vld [vmem:[#allocation4 + $0x50] sm:$0xff]
  %v5611 = vld [vmem:[#allocation4 + $0x58] sm:$0xff]
  %5621 = vrot.lane.b32.xlu0 %v5603, 123
  %v5622 = vpop.permute.xlu0 %5621
  %5623 = vrot.lane.b32.xlu0 %v5604, 123
  %v5624 = vpop.permute.xlu0 %5623
  %5625 = vrot.lane.b32.xlu0 %v5605, 123
  %v5626 = vpop.permute.xlu0 %5625
  %5627 = vrot.lane.b32.xlu0 %v5606, 123
  %v5628 = vpop.permute.xlu0 %5627
  %5629 = vrot.lane.b32.xlu0 %v5607, 123
  %v5630 = vpop.permute.xlu0 %5629
  %5631 = vrot.lane.b32.xlu0 %v5608, 123
  %v5632 = vpop.permute.xlu0 %5631
  %5633 = vrot.lane.b32.xlu0 %v5609, 123
  %v5634 = vpop.permute.xlu0 %5633
  %5635 = vrot.lane.b32.xlu0 %v5610, 123
  %v5636 = vpop.permute.xlu0 %5635
  %5637 = vrot.lane.b32.xlu0 %v5611, 123
  %v5638 = vpop.permute.xlu0 %5637
  %vm5639 = vcmask 1006592
  %v5640 = vsel %vm5639, %v5622, %v5624
  %v5641 = vsel %vm5639, %v5624, %v5626
  %v5642 = vsel %vm5639, %v5628, %v5630
  %v5643 = vsel %vm5639, %v5630, %v5632
  %v5644 = vsel %vm5639, %v5634, %v5636
  %v5645 = vsel %vm5639, %v5636, %v5638
  %5652 = vst [vmem:[#allocation5 + $0x360] sm:$0xff] %v5640
  %5653 = vst [vmem:[#allocation5 + $0x368] sm:$0xff] %v5641
  %5654 = vst [vmem:[#allocation5 + $0x390] sm:$0xff] %v5642
  %5655 = vst [vmem:[#allocation5 + $0x398] sm:$0xff] %v5643
  %5656 = vst [vmem:[#allocation5 + $0x3c0] sm:$0xff] %v5644
  %5657 = vst [vmem:[#allocation5 + $0x3c8] sm:$0xff] %v5645
  %v5658 = vld [vmem:[#allocation4 + $0x8] sm:$0xff]
  %v5659 = vld [vmem:[#allocation4 + $0x10] sm:$0xff]
  %v5660 = vld [vmem:[#allocation4 + $0x18] sm:$0xff]
  %v5661 = vld [vmem:[#allocation4 + $0x28] sm:$0xff]
  %v5662 = vld [vmem:[#allocation4 + $0x30] sm:$0xff]
  %v5663 = vld [vmem:[#allocation4 + $0x38] sm:$0xff]
  %v5664 = vld [vmem:[#allocation4 + $0x48] sm:$0xff]
  %v5665 = vld [vmem:[#allocation4 + $0x50] sm:$0xff]
  %v5666 = vld [vmem:[#allocation4 + $0x58] sm:$0xff]
  %5676 = vrot.lane.b32.xlu0 %v5658, 122
  %v5677 = vpop.permute.xlu0 %5676
  %5678 = vrot.lane.b32.xlu0 %v5659, 122
  %v5679 = vpop.permute.xlu0 %5678
  %5680 = vrot.lane.b32.xlu0 %v5660, 122
  %v5681 = vpop.permute.xlu0 %5680
  %5682 = vrot.lane.b32.xlu0 %v5661, 122
  %v5683 = vpop.permute.xlu0 %5682
  %5684 = vrot.lane.b32.xlu0 %v5662, 122
  %v5685 = vpop.permute.xlu0 %5684
  %5686 = vrot.lane.b32.xlu0 %v5663, 122
  %v5687 = vpop.permute.xlu0 %5686
  %5688 = vrot.lane.b32.xlu0 %v5664, 122
  %v5689 = vpop.permute.xlu0 %5688
  %5690 = vrot.lane.b32.xlu0 %v5665, 122
  %v5691 = vpop.permute.xlu0 %5690
  %5692 = vrot.lane.b32.xlu0 %v5666, 122
  %v5693 = vpop.permute.xlu0 %5692
  %vm5694 = vcmask 998400
  %v5695 = vsel %vm5694, %v5677, %v5679
  %v5696 = vsel %vm5694, %v5679, %v5681
  %v5697 = vsel %vm5694, %v5683, %v5685
  %v5698 = vsel %vm5694, %v5685, %v5687
  %v5699 = vsel %vm5694, %v5689, %v5691
  %v5700 = vsel %vm5694, %v5691, %v5693
  %5707 = vst [vmem:[#allocation5 + $0x3f0] sm:$0xff] %v5695
  %5708 = vst [vmem:[#allocation5 + $0x3f8] sm:$0xff] %v5696
  %5709 = vst [vmem:[#allocation5 + $0x420] sm:$0xff] %v5697
  %5710 = vst [vmem:[#allocation5 + $0x428] sm:$0xff] %v5698
  %5711 = vst [vmem:[#allocation5 + $0x450] sm:$0xff] %v5699
  %5712 = vst [vmem:[#allocation5 + $0x458] sm:$0xff] %v5700
  %v5713 = vld [vmem:[#allocation4 + $0x8] sm:$0xff]
  %v5714 = vld [vmem:[#allocation4 + $0x10] sm:$0xff]
  %v5715 = vld [vmem:[#allocation4 + $0x18] sm:$0xff]
  %v5716 = vld [vmem:[#allocation4 + $0x28] sm:$0xff]
  %v5717 = vld [vmem:[#allocation4 + $0x30] sm:$0xff]
  %v5718 = vld [vmem:[#allocation4 + $0x38] sm:$0xff]
  %v5719 = vld [vmem:[#allocation4 + $0x48] sm:$0xff]
  %v5720 = vld [vmem:[#allocation4 + $0x50] sm:$0xff]
  %v5721 = vld [vmem:[#allocation4 + $0x58] sm:$0xff]
  %5731 = vrot.lane.b32.xlu0 %v5713, 121
  %v5732 = vpop.permute.xlu0 %5731
  %5733 = vrot.lane.b32.xlu0 %v5714, 121
  %v5734 = vpop.permute.xlu0 %5733
  %5735 = vrot.lane.b32.xlu0 %v5715, 121
  %v5736 = vpop.permute.xlu0 %5735
  %5737 = vrot.lane.b32.xlu0 %v5716, 121
  %v5738 = vpop.permute.xlu0 %5737
  %5739 = vrot.lane.b32.xlu0 %v5717, 121
  %v5740 = vpop.permute.xlu0 %5739
  %5741 = vrot.lane.b32.xlu0 %v5718, 121
  %v5742 = vpop.permute.xlu0 %5741
  %5743 = vrot.lane.b32.xlu0 %v5719, 121
  %v5744 = vpop.permute.xlu0 %5743
  %5745 = vrot.lane.b32.xlu0 %v5720, 121
  %v5746 = vpop.permute.xlu0 %5745
  %5747 = vrot.lane.b32.xlu0 %v5721, 121
  %v5748 = vpop.permute.xlu0 %5747
  %vm5749 = vcmask 990208
  %v5750 = vsel %vm5749, %v5732, %v5734
  %v5751 = vsel %vm5749, %v5734, %v5736
  %v5752 = vsel %vm5749, %v5738, %v5740
  %v5753 = vsel %vm5749, %v5740, %v5742
  %v5754 = vsel %vm5749, %v5744, %v5746
  %v5755 = vsel %vm5749, %v5746, %v5748
  %5762 = vst [vmem:[#allocation5 + $0x480] sm:$0xff] %v5750
  %5763 = vst [vmem:[#allocation5 + $0x488] sm:$0xff] %v5751
  %5764 = vst [vmem:[#allocation5 + $0x4b0] sm:$0xff] %v5752
  %5765 = vst [vmem:[#allocation5 + $0x4b8] sm:$0xff] %v5753
  %5766 = vst [vmem:[#allocation5 + $0x4e0] sm:$0xff] %v5754
  %5767 = vst [vmem:[#allocation5 + $0x4e8] sm:$0xff] %v5755
  %v5768 = vld [vmem:[%s9] sm:$0xff]
  %v5769 = vld [vmem:[%s9 + $0x8] sm:$0xff]
  %v5770 = vld [vmem:[%s9 + $0x10] sm:$0xff]
  %v5771 = vld [vmem:[%s9 + $0x18] sm:$0xff]
  %v5772 = vld [vmem:[%s9 + $0x20] sm:$0xff]
  %v5773 = vld [vmem:[%s9 + $0x28] sm:$0xff]
  %v5774 = vld [vmem:[#allocation5] sm:$0xff]
  %v5775 = vld [vmem:[#allocation5 + $0x8] sm:$0xff]
  %v5776 = vld [vmem:[#allocation5 + $0x30] sm:$0xff]
  %v5777 = vld [vmem:[#allocation5 + $0x38] sm:$0xff]
  %v5778 = vld [vmem:[#allocation5 + $0x60] sm:$0xff]
  %v5779 = vld [vmem:[#allocation5 + $0x68] sm:$0xff]
  %v5780 = vld [vmem:[#allocation5 + $0x90] sm:$0xff]
  %v5781 = vld [vmem:[#allocation5 + $0x98] sm:$0xff]
  %v5782 = vld [vmem:[#allocation5 + $0xc0] sm:$0xff]
  %v5783 = vld [vmem:[#allocation5 + $0xc8] sm:$0xff]
  %v5784 = vld [vmem:[#allocation5 + $0xf0] sm:$0xff]
  %v5785 = vld [vmem:[#allocation5 + $0xf8] sm:$0xff]
  %v5786 = vld [vmem:[#allocation5 + $0x120] sm:$0xff]
  %v5787 = vld [vmem:[#allocation5 + $0x128] sm:$0xff]
  %v5788 = vld [vmem:[#allocation5 + $0x150] sm:$0xff]
  %v5789 = vld [vmem:[#allocation5 + $0x158] sm:$0xff]
  %v5790 = vld [vmem:[#allocation5 + $0x180] sm:$0xff]
  %v5791 = vld [vmem:[#allocation5 + $0x188] sm:$0xff]
  %v5792 = vld [vmem:[#allocation5 + $0x1b0] sm:$0xff]
  %v5793 = vld [vmem:[#allocation5 + $0x1b8] sm:$0xff]
  %v5794 = vld [vmem:[#allocation5 + $0x1e0] sm:$0xff]
  %v5795 = vld [vmem:[#allocation5 + $0x1e8] sm:$0xff]
  %v5796 = vld [vmem:[#allocation5 + $0x210] sm:$0xff]
  %v5797 = vld [vmem:[#allocation5 + $0x218] sm:$0xff]
  %v5798 = vld [vmem:[#allocation5 + $0x240] sm:$0xff]
  %v5799 = vld [vmem:[#allocation5 + $0x248] sm:$0xff]
  %v5800 = vld [vmem:[#allocation5 + $0x270] sm:$0xff]
  %v5801 = vld [vmem:[#allocation5 + $0x278] sm:$0xff]
  %v5802 = vld [vmem:[#allocation5 + $0x2a0] sm:$0xff]
  %v5803 = vld [vmem:[#allocation5 + $0x2a8] sm:$0xff]
  %v5804 = vld [vmem:[#allocation5 + $0x2d0] sm:$0xff]
  %v5805 = vld [vmem:[#allocation5 + $0x2d8] sm:$0xff]
  %v5806 = vld [vmem:[#allocation5 + $0x300] sm:$0xff]
  %v5807 = vld [vmem:[#allocation5 + $0x308] sm:$0xff]
  %v5808 = vld [vmem:[#allocation5 + $0x330] sm:$0xff]
  %v5809 = vld [vmem:[#allocation5 + $0x338] sm:$0xff]
  %v5810 = vld [vmem:[#allocation5 + $0x360] sm:$0xff]
  %v5811 = vld [vmem:[#allocation5 + $0x368] sm:$0xff]
  %v5812 = vld [vmem:[#allocation5 + $0x390] sm:$0xff]
  %v5813 = vld [vmem:[#allocation5 + $0x398] sm:$0xff]
  %v5814 = vld [vmem:[#allocation5 + $0x3c0] sm:$0xff]
  %v5815 = vld [vmem:[#allocation5 + $0x3c8] sm:$0xff]
  %v5816 = vld [vmem:[#allocation5 + $0x3f0] sm:$0xff]
  %v5817 = vld [vmem:[#allocation5 + $0x3f8] sm:$0xff]
  %v5818 = vld [vmem:[#allocation5 + $0x420] sm:$0xff]
  %v5819 = vld [vmem:[#allocation5 + $0x428] sm:$0xff]
  %v5820 = vld [vmem:[#allocation5 + $0x450] sm:$0xff]
  %v5821 = vld [vmem:[#allocation5 + $0x458] sm:$0xff]
  %v5822 = vld [vmem:[#allocation5 + $0x480] sm:$0xff]
  %v5823 = vld [vmem:[#allocation5 + $0x488] sm:$0xff]
  %v5824 = vld [vmem:[#allocation5 + $0x4b0] sm:$0xff]
  %v5825 = vld [vmem:[#allocation5 + $0x4b8] sm:$0xff]
  %v5826 = vld [vmem:[#allocation5 + $0x4e0] sm:$0xff]
  %v5827 = vld [vmem:[#allocation5 + $0x4e8] sm:$0xff]
  %v5828 = vld [vmem:[%s10] sm:$0xff]
  %v5829 = vld [vmem:[%s10 + $0x8] sm:$0xff]
  %v5830 = vld [vmem:[%s10 + $0x10] sm:$0xff]
  %5832 = vset.pattern.permute.xlu0 0
  %5833 = vperm.xlu0 %5832, %v5828
  %v5834 = vpop.permute.xlu0 %5833
  %5837 = vset.pattern.permute.xlu0 0
  %5838 = vperm.xlu0 %5837, %v5829
  %v5839 = vpop.permute.xlu0 %5838
  %5842 = vset.pattern.permute.xlu0 0
  %5843 = vperm.xlu0 %5842, %v5830
  %v5844 = vpop.permute.xlu0 %5843
  %vm5846 = vcmask 719872
  %v5848 = vsel %vm5846, %v5769, 0
  %v5851 = vsel %vm5846, %v5771, 0
  %v5854 = vsel %vm5846, %v5773, 0
  %5856 = vmatprep.subr.mxu0 %v5775
  %5857 = vmatpush1.msra.mxu0 %v5774
  %5858 = vmatprep.subr.mxu0 %v5777
  %5859 = vmatpush1.msra.mxu0 %v5776
  %5860 = vmatprep.subr.mxu0 %v5779
  %5861 = vmatpush1.msra.mxu0 %v5778
  %5862 = vmatprep.subr.mxu0 %v5781
  %5863 = vmatpush1.msra.mxu0 %v5780
  %5864 = vmatprep.subr.mxu0 %v5783
  %5865 = vmatpush1.msra.mxu0 %v5782
  %5866 = vmatprep.subr.mxu0 %v5785
  %5867 = vmatpush1.msra.mxu0 %v5784
  %5868 = vmatprep.subr.mxu0 %v5787
  %5869 = vmatpush1.msra.mxu0 %v5786
  %5870 = vmatprep.subr.mxu0 %v5789
  %5871 = vmatpush1.msra.mxu0 %v5788
  %5872 = vmatprep.subr.mxu0 %v5791
  %5873 = vmatpush1.msra.mxu0 %v5790
  %5874 = vmatprep.subr.mxu0 %v5793
  %5875 = vmatpush1.msra.mxu0 %v5792
  %5876 = vmatprep.subr.mxu0 %v5795
  %5877 = vmatpush1.msra.mxu0 %v5794
  %5878 = vmatprep.subr.mxu0 %v5797
  %5879 = vmatpush1.msra.mxu0 %v5796
  %5880 = vmatprep.subr.mxu0 %v5799
  %5881 = vmatpush1.msra.mxu0 %v5798
  %5882 = vmatprep.subr.mxu0 %v5801
  %5883 = vmatpush1.msra.mxu0 %v5800
  %5884 = vmatprep.subr.mxu0 %v5803
  %5885 = vmatpush1.msra.mxu0 %v5802
  %5886 = vmatprep.subr.mxu0 %v5805
  %5887 = vmatpush1.msra.mxu0 %v5804
  %5888 = vmatprep.subr.mxu0 %v5807
  %5889 = vmatpush1.msra.mxu0 %v5806
  %5890 = vmatprep.subr.mxu0 %v5809
  %5891 = vmatpush1.msra.mxu0 %v5808
  %5892 = vmatprep.subr.mxu0 %v5811
  %5893 = vmatpush1.msra.mxu0 %v5810
  %5894 = vmatprep.subr.mxu0 %v5813
  %5895 = vmatpush1.msra.mxu0 %v5812
  %5896 = vmatprep.subr.mxu0 %v5815
  %5897 = vmatpush1.msra.mxu0 %v5814
  %5898 = vmatprep.subr.mxu0 %v5817
  %5899 = vmatpush1.msra.mxu0 %v5816
  %5900 = vmatprep.subr.mxu0 %v5819
  %5901 = vmatpush1.msra.mxu0 %v5818
  %5902 = vmatprep.subr.mxu0 %v5821
  %5903 = vmatpush1.msra.mxu0 %v5820
  %5904 = vmatprep.subr.mxu0 %v5823
  %5905 = vmatpush1.msra.mxu0 %v5822
  %5906 = vmatprep.subr.mxu0 %v5825
  %5907 = vmatpush1.msra.mxu0 %v5824
  %5908 = vmatprep.subr.mxu0 %v5827
  %5909 = vmatpush1.msra.mxu0 %v5826
  %5910 = vmatprep.subr.mxu0 0.0
  %5911 = vmatpush1.msra.mxu0 0.0
  %5912 = vmatprep.subr.mxu0 0.0
  %5913 = vmatpush1.msra.mxu0 0.0
  %5914 = vmatprep.subr.mxu0 0.0
  %5915 = vmatpush1.msra.mxu0 0.0
  %5916 = vmatprep.subr.mxu0 0.0
  %5917 = vmatpush1.msra.mxu0 0.0
  %5918 = vmatprep.subr.mxu0 0.0
  %5919 = vmatpush1.msra.mxu0 0.0
  %5920 = vmatprep.mubr.f32.mxu0 %v5848
  %5921 = vmatmul.mubr.f32.gmra.mrb[0].mxu0 %v5768
  %v5922 = vpop.f32.mrb[0].mxu0
  %v5923 = vadd.f32 %v5834, %v5922
  %v5924 = vpop.f32.mrb[0].mxu0
  %v5925 = vadd.f32 %v5834, %v5924
  %5926 = vmatprep.mubr.f32.mxu0 %v5851
  %5927 = vmatmul.mubr.f32.gmra.mrb[0].mxu0 %v5770
  %v5928 = vpop.f32.mrb[0].mxu0
  %v5929 = vadd.f32 %v5839, %v5928
  %v5930 = vpop.f32.mrb[0].mxu0
  %v5931 = vadd.f32 %v5839, %v5930
  %5932 = vmatprep.mubr.f32.mxu0 %v5854
  %5933 = vmatmul.mubr.f32.gmra.mrb[0].mxu0 %v5772
  %v5934 = vpop.f32.mrb[0].mxu0
  %v5935 = vadd.f32 %v5844, %v5934
  %v5936 = vpop.f32.mrb[0].mxu0
  %v5937 = vadd.f32 %v5844, %v5936
  %5938 = vdwg.mxu0
  %v5939 = vmax.f32 %v5923, 0.0
  %v5940 = vmax.f32 %v5925, 0.0
  %v5941 = vmax.f32 %v5929, 0.0
  %v5942 = vmax.f32 %v5931, 0.0
  %v5943 = vmax.f32 %v5935, 0.0
  %v5944 = vmax.f32 %v5937, 0.0
  %v5945 = vld [vmem:[%s17] sm:$0x3]
  %v5947 = vlaneseq
  %v5948 = vshrl.u32 %v5947, 7
  %v5949 = vsub.s32 0, %v5948
  %v5950 = vrot.slane %v5945, %v5949
  %v5951 = vlaneseq
  %v5952 = vshrl.u32 %v5951, 7
  %v5953 = vsub.s32 1, %v5952
  %v5954 = vrot.slane %v5945, %v5953
  %v5957 = vmul.f32 %v5939, %v5950
  %v5958 = vmul.f32 %v5940, %v5954
  %v5959 = vmul.f32 %v5941, %v5950
  %v5960 = vmul.f32 %v5942, %v5954
  %v5961 = vmul.f32 %v5943, %v5950
  %v5962 = vmul.f32 %v5944, %v5954
  %v5963 = vld [vmem:[%s11] sm:$0xff]
  %v5964 = vld [vmem:[%s11 + $0x8] sm:$0xff]
  %v5965 = vld [vmem:[%s12] sm:$0xff]
  %v5966 = vld [vmem:[%s12 + $0x8] sm:$0xff]
  %5968 = vset.pattern.permute.xlu0 0
  %5969 = vperm.xlu0 %5968, %v5965
  %v5970 = vpop.permute.xlu0 %5969
  %5973 = vset.pattern.permute.xlu0 0
  %5974 = vperm.xlu0 %5973, %v5966
  %v5975 = vpop.permute.xlu0 %5974
  %vm5977 = vcmask 195584
  %v5979 = vsel %vm5977, %v5963, 0
  %v5982 = vsel %vm5977, %v5964, 0
  %5984 = vmatprep.subr.mxu0 %v5958
  %5985 = vmatpush1.msra.mxu0 %v5957
  %5986 = vmatprep.subr.mxu0 %v5960
  %5987 = vmatpush1.msra.mxu0 %v5959
  %5988 = vmatprep.subr.mxu0 %v5962
  %5989 = vmatpush1.msra.mxu0 %v5961
  %5990 = vmatprep.subr.mxu0 0.0
  %5991 = vmatpush1.msra.mxu0 0.0
  %5992 = vmatprep.subr.mxu0 0.0
  %5993 = vmatpush1.msra.mxu0 0.0
  %5994 = vmatprep.subr.mxu0 0.0
  %5995 = vmatpush1.msra.mxu0 0.0
  %5996 = vmatprep.subr.mxu0 0.0
  %5997 = vmatpush1.msra.mxu0 0.0
  %5998 = vmatprep.subr.mxu0 0.0
  %5999 = vmatpush1.msra.mxu0 0.0
  %6000 = vmatprep.subr.mxu0 0.0
  %6001 = vmatpush1.msra.mxu0 0.0
  %6002 = vmatprep.subr.mxu0 0.0
  %6003 = vmatpush1.msra.mxu0 0.0
  %6004 = vmatprep.subr.mxu0 0.0
  %6005 = vmatpush1.msra.mxu0 0.0
  %6006 = vmatprep.subr.mxu0 0.0
  %6007 = vmatpush1.msra.mxu0 0.0
  %6008 = vmatprep.subr.mxu0 0.0
  %6009 = vmatpush1.msra.mxu0 0.0
  %6010 = vmatprep.subr.mxu0 0.0
  %6011 = vmatpush1.msra.mxu0 0.0
  %6012 = vmatprep.subr.mxu0 0.0
  %6013 = vmatpush1.msra.mxu0 0.0
  %6014 = vmatprep.subr.mxu0 0.0
  %6015 = vmatpush1.msra.mxu0 0.0
  %6016 = vmatprep.subr.mxu0 0.0
  %6017 = vmatpush1.msra.mxu0 0.0
  %6018 = vmatprep.subr.mxu0 0.0
  %6019 = vmatpush1.msra.mxu0 0.0
  %6020 = vmatprep.subr.mxu0 0.0
  %6021 = vmatpush1.msra.mxu0 0.0
  %6022 = vmatprep.subr.mxu0 0.0
  %6023 = vmatpush1.msra.mxu0 0.0
  %6024 = vmatprep.subr.mxu0 0.0
  %6025 = vmatpush1.msra.mxu0 0.0
  %6026 = vmatprep.subr.mxu0 0.0
  %6027 = vmatpush1.msra.mxu0 0.0
  %6028 = vmatprep.subr.mxu0 0.0
  %6029 = vmatpush1.msra.mxu0 0.0
  %6030 = vmatprep.subr.mxu0 0.0
  %6031 = vmatpush1.msra.mxu0 0.0
  %6032 = vmatprep.subr.mxu0 0.0
  %6033 = vmatpush1.msra.mxu0 0.0
  %6034 = vmatprep.subr.mxu0 0.0
  %6035 = vmatpush1.msra.mxu0 0.0
  %6036 = vmatprep.subr.mxu0 0.0
  %6037 = vmatpush1.msra.mxu0 0.0
  %6038 = vmatprep.subr.mxu0 0.0
  %6039 = vmatpush1.msra.mxu0 0.0
  %6040 = vmatprep.subr.mxu0 0.0
  %6041 = vmatpush1.msra.mxu0 0.0
  %6042 = vmatprep.subr.mxu0 0.0
  %6043 = vmatpush1.msra.mxu0 0.0
  %6044 = vmatprep.subr.mxu0 0.0
  %6045 = vmatpush1.msra.mxu0 0.0
  %6046 = vmatprep.subr.mxu0 0.0
  %6047 = vmatpush1.msra.mxu0 0.0
  %6048 = vmatprep.mubr.f32.mxu0 0.0
  %6049 = vmatmul.mubr.f32.gmra.mrb[0].mxu0 %v5979
  %v6050 = vpop.f32.mrb[0].mxu0
  %v6051 = vadd.f32 %v5970, %v6050
  %v6052 = vpop.f32.mrb[0].mxu0
  %v6053 = vadd.f32 %v5970, %v6052
  %6054 = vmatprep.mubr.f32.mxu0 0.0
  %6055 = vmatmul.mubr.f32.gmra.mrb[0].mxu0 %v5982
  %v6056 = vpop.f32.mrb[0].mxu0
  %v6057 = vadd.f32 %v5975, %v6056
  %v6058 = vpop.f32.mrb[0].mxu0
  %v6059 = vadd.f32 %v5975, %v6058
  %6060 = vdwg.mxu0
  %v6061 = vmax.f32 %v6051, 0.0
  %v6062 = vmax.f32 %v6053, 0.0
  %v6063 = vmax.f32 %v6057, 0.0
  %v6064 = vmax.f32 %v6059, 0.0
  %v6065 = vmul.f32 %v6061, %v5950
  %v6066 = vmul.f32 %v6062, %v5954
  %v6067 = vmul.f32 %v6063, %v5950
  %v6068 = vmul.f32 %v6064, %v5954
  %v6069 = vld [vmem:[%s20] sm:$0xff]
  %v6070 = vld [vmem:[%s20 + $0x8] sm:$0xff]
  %v6071 = vld [vmem:[%s20 + $0x10] sm:$0xff]
  %v6072 = vld [vmem:[%s20 + $0x18] sm:$0xff]
  %v6073 = vld [vmem:[%s20 + $0x20] sm:$0xff]
  %v6074 = vld [vmem:[%s20 + $0x28] sm:$0xff]
  %v6075 = vld [vmem:[%s20 + $0x30] sm:$0xff]
  %v6076 = vld [vmem:[%s20 + $0x38] sm:$0xff]
  %v6077 = vld [vmem:[%s20 + $0x40] sm:$0xff]
  %v6078 = vld [vmem:[%s20 + $0x48] sm:$0xff]
  %v6079 = vld [vmem:[%s20 + $0x50] sm:$0xff]
  %v6080 = vld [vmem:[%s20 + $0x58] sm:$0xff]
  %v6081 = vld [vmem:[%s20 + $0x60] sm:$0xff]
  %v6082 = vld [vmem:[%s20 + $0x68] sm:$0xff]
  %v6083 = vld [vmem:[%s20 + $0x70] sm:$0xff]
  %v6084 = vld [vmem:[%s20 + $0x78] sm:$0xff]
  %v6085 = vld [vmem:[%s20 + $0x80] sm:$0xff]
  %v6086 = vld [vmem:[%s20 + $0x88] sm:$0xff]
  %v6087 = vld [vmem:[%s20 + $0x90] sm:$0xff]
  %v6088 = vld [vmem:[%s20 + $0x98] sm:$0xff]
  %v6089 = vld [vmem:[%s20 + $0xa0] sm:$0xff]
  %v6090 = vld [vmem:[%s20 + $0xa8] sm:$0xff]
  %v6091 = vld [vmem:[%s20 + $0xb0] sm:$0xff]
  %v6092 = vld [vmem:[%s20 + $0xb8] sm:$0xff]
  %v6093 = vld [vmem:[%s20 + $0xc0] sm:$0xff]
  %v6094 = vld [vmem:[%s20 + $0xc8] sm:$0xff]
  %v6095 = vld [vmem:[%s20 + $0xd0] sm:$0xff]
  %v6096 = vld [vmem:[%s20 + $0xd8] sm:$0xff]
  %v6097 = vld [vmem:[%s20 + $0xe0] sm:$0xff]
  %v6098 = vld [vmem:[%s20 + $0xe8] sm:$0xff]
  %v6099 = vld [vmem:[%s20 + $0xf0] sm:$0xff]
  %v6100 = vld [vmem:[%s20 + $0xf8] sm:$0xff]
  %6101 = vmatprep.subr.mxu0 0.0
  %6102 = vmatpush1.msra.mxu0 %v6069
  %6103 = vmatprep.subr.mxu0 0.0
  %6104 = vmatpush1.msra.mxu0 %v6070
  %6105 = vmatprep.subr.mxu0 0.0
  %6106 = vmatpush1.msra.mxu0 %v6071
  %6107 = vmatprep.subr.mxu0 0.0
  %6108 = vmatpush1.msra.mxu0 %v6072
  %6109 = vmatprep.subr.mxu0 0.0
  %6110 = vmatpush1.msra.mxu0 %v6073
  %6111 = vmatprep.subr.mxu0 0.0
  %6112 = vmatpush1.msra.mxu0 %v6074
  %6113 = vmatprep.subr.mxu0 0.0
  %6114 = vmatpush1.msra.mxu0 %v6075
  %6115 = vmatprep.subr.mxu0 0.0
  %6116 = vmatpush1.msra.mxu0 %v6076
  %6117 = vmatprep.subr.mxu0 0.0
  %6118 = vmatpush1.msra.mxu0 %v6077
  %6119 = vmatprep.subr.mxu0 0.0
  %6120 = vmatpush1.msra.mxu0 %v6078
  %6121 = vmatprep.subr.mxu0 0.0
  %6122 = vmatpush1.msra.mxu0 %v6079
  %6123 = vmatprep.subr.mxu0 0.0
  %6124 = vmatpush1.msra.mxu0 %v6080
  %6125 = vmatprep.subr.mxu0 0.0
  %6126 = vmatpush1.msra.mxu0 %v6081
  %6127 = vmatprep.subr.mxu0 0.0
  %6128 = vmatpush1.msra.mxu0 %v6082
  %6129 = vmatprep.subr.mxu0 0.0
  %6130 = vmatpush1.msra.mxu0 %v6083
  %6131 = vmatprep.subr.mxu0 0.0
  %6132 = vmatpush1.msra.mxu0 %v6084
  %6133 = vmatprep.subr.mxu0 0.0
  %6134 = vmatpush1.msra.mxu0 %v6085
  %6135 = vmatprep.subr.mxu0 0.0
  %6136 = vmatpush1.msra.mxu0 %v6086
  %6137 = vmatprep.subr.mxu0 0.0
  %6138 = vmatpush1.msra.mxu0 %v6087
  %6139 = vmatprep.subr.mxu0 0.0
  %6140 = vmatpush1.msra.mxu0 %v6088
  %6141 = vmatprep.subr.mxu0 0.0
  %6142 = vmatpush1.msra.mxu0 %v6089
  %6143 = vmatprep.subr.mxu0 0.0
  %6144 = vmatpush1.msra.mxu0 %v6090
  %6145 = vmatprep.subr.mxu0 0.0
  %6146 = vmatpush1.msra.mxu0 %v6091
  %6147 = vmatprep.subr.mxu0 0.0
  %6148 = vmatpush1.msra.mxu0 %v6092
  %6149 = vmatprep.subr.mxu0 0.0
  %6150 = vmatpush1.msra.mxu0 %v6093
  %6151 = vmatprep.subr.mxu0 0.0
  %6152 = vmatpush1.msra.mxu0 %v6094
  %6153 = vmatprep.subr.mxu0 0.0
  %6154 = vmatpush1.msra.mxu0 %v6095
  %6155 = vmatprep.subr.mxu0 0.0
  %6156 = vmatpush1.msra.mxu0 %v6096
  %6157 = vmatprep.subr.mxu0 0.0
  %6158 = vmatpush1.msra.mxu0 %v6097
  %6159 = vmatprep.subr.mxu0 0.0
  %6160 = vmatpush1.msra.mxu0 %v6098
  %6161 = vmatprep.subr.mxu0 0.0
  %6162 = vmatpush1.msra.mxu0 %v6099
  %6163 = vmatprep.subr.mxu0 0.0
  %6164 = vmatpush1.msra.mxu0 %v6100
  %6165 = vmatprep.mubr.f32.mxu0 %v6066
  %6166 = vmatmul.mubr.f32.gmra.mrb[0].mxu0 %v6065
  %v6167 = vpop.f32.mrb[0].mxu0
  %v6168 = vadd.f32 0.0, %v6167
  %v6169 = vpop.f32.mrb[0].mxu0
  %6170 = vmatprep.mubr.f32.mxu0 %v6068
  %6171 = vmatmul.mubr.f32.gmra.mrb[0].mxu0 %v6067
  %v6172 = vpop.f32.mrb[0].mxu0
  %v6173 = vadd.f32 0.0, %v6172
  %v6174 = vpop.f32.mrb[0].mxu0
  %6175 = vdwg.mxu0
  %v6176 = vld [vmem:[%s13] sm:$0xff]
  %v6177 = vld [vmem:[%s13 + $0x8] sm:$0xff]
  %v6178 = vld [vmem:[%s14] sm:$0xff]
  %v6179 = vld [vmem:[%s14 + $0x8] sm:$0xff]
  %6181 = vset.pattern.permute.xlu0 0
  %6182 = vperm.xlu0 %6181, %v6178
  %v6183 = vpop.permute.xlu0 %6182
  %6186 = vset.pattern.permute.xlu0 0
  %6187 = vperm.xlu0 %6186, %v6179
  %v6188 = vpop.permute.xlu0 %6187
  %v6191 = vsel %vm1736, %v6176, 0
  %v6194 = vsel %vm1736, %v6177, 0
  %6196 = vmatprep.subr.mxu0 0.0
  %6197 = vmatpush1.msra.mxu0 %v6168
  %6198 = vmatprep.subr.mxu0 0.0
  %6199 = vmatpush1.msra.mxu0 %v6173
  %6200 = vmatprep.subr.mxu0 0.0
  %6201 = vmatpush1.msra.mxu0 0.0
  %6202 = vmatprep.subr.mxu0 0.0
  %6203 = vmatpush1.msra.mxu0 0.0
  %6204 = vmatprep.subr.mxu0 0.0
  %6205 = vmatpush1.msra.mxu0 0.0
  %6206 = vmatprep.subr.mxu0 0.0
  %6207 = vmatpush1.msra.mxu0 0.0
  %6208 = vmatprep.subr.mxu0 0.0
  %6209 = vmatpush1.msra.mxu0 0.0
  %6210 = vmatprep.subr.mxu0 0.0
  %6211 = vmatpush1.msra.mxu0 0.0
  %6212 = vmatprep.subr.mxu0 0.0
  %6213 = vmatpush1.msra.mxu0 0.0
  %6214 = vmatprep.subr.mxu0 0.0
  %6215 = vmatpush1.msra.mxu0 0.0
  %6216 = vmatprep.subr.mxu0 0.0
  %6217 = vmatpush1.msra.mxu0 0.0
  %6218 = vmatprep.subr.mxu0 0.0
  %6219 = vmatpush1.msra.mxu0 0.0
  %6220 = vmatprep.subr.mxu0 0.0
  %6221 = vmatpush1.msra.mxu0 0.0
  %6222 = vmatprep.subr.mxu0 0.0
  %6223 = vmatpush1.msra.mxu0 0.0
  %6224 = vmatprep.subr.mxu0 0.0
  %6225 = vmatpush1.msra.mxu0 0.0
  %6226 = vmatprep.subr.mxu0 0.0
  %6227 = vmatpush1.msra.mxu0 0.0
  %6228 = vmatprep.subr.mxu0 0.0
  %6229 = vmatpush1.msra.mxu0 0.0
  %6230 = vmatprep.subr.mxu0 0.0
  %6231 = vmatpush1.msra.mxu0 0.0
  %6232 = vmatprep.subr.mxu0 0.0
  %6233 = vmatpush1.msra.mxu0 0.0
  %6234 = vmatprep.subr.mxu0 0.0
  %6235 = vmatpush1.msra.mxu0 0.0
  %6236 = vmatprep.subr.mxu0 0.0
  %6237 = vmatpush1.msra.mxu0 0.0
  %6238 = vmatprep.subr.mxu0 0.0
  %6239 = vmatpush1.msra.mxu0 0.0
  %6240 = vmatprep.subr.mxu0 0.0
  %6241 = vmatpush1.msra.mxu0 0.0
  %6242 = vmatprep.subr.mxu0 0.0
  %6243 = vmatpush1.msra.mxu0 0.0
  %6244 = vmatprep.subr.mxu0 0.0
  %6245 = vmatpush1.msra.mxu0 0.0
  %6246 = vmatprep.subr.mxu0 0.0
  %6247 = vmatpush1.msra.mxu0 0.0
  %6248 = vmatprep.subr.mxu0 0.0
  %6249 = vmatpush1.msra.mxu0 0.0
  %6250 = vmatprep.subr.mxu0 0.0
  %6251 = vmatpush1.msra.mxu0 0.0
  %6252 = vmatprep.subr.mxu0 0.0
  %6253 = vmatpush1.msra.mxu0 0.0
  %6254 = vmatprep.subr.mxu0 0.0
  %6255 = vmatpush1.msra.mxu0 0.0
  %6256 = vmatprep.subr.mxu0 0.0
  %6257 = vmatpush1.msra.mxu0 0.0
  %6258 = vmatprep.subr.mxu0 0.0
  %6259 = vmatpush1.msra.mxu0 0.0
  %6260 = vmatprep.mubr.f32.mxu0 0.0
  %6261 = vmatmul.mubr.f32.gmra.mrb[0].mxu0 %v6191
  %v6262 = vpop.f32.mrb[0].mxu0
  %v6263 = vadd.f32 %v6183, %v6262
  %v6264 = vpop.f32.mrb[0].mxu0
  %6265 = vmatprep.mubr.f32.mxu0 0.0
  %6266 = vmatmul.mubr.f32.gmra.mrb[0].mxu0 %v6194
  %v6267 = vpop.f32.mrb[0].mxu0
  %v6268 = vadd.f32 %v6188, %v6267
  %v6269 = vpop.f32.mrb[0].mxu0
  %6270 = vdwg.mxu0
  %vm6271 = vcmask 15360
  %v6272 = vsel %vm6271, %v6263, -inf
  %v6273 = vsel %vm6271, %v6268, -inf
  %v6274 = vmax.f32 %v6272, %v6273
  %v6275 = vrot.slane %v6274, 4
  %v6276 = vmax.f32 %v6274, %v6275
  %v6277 = vrot.slane %v6276, 2
  %v6278 = vmax.f32 %v6276, %v6277
  %v6279 = vrot.slane %v6278, 1
  %v6280 = vmax.f32 %v6278, %v6279
  %v6281 = vsub.f32 %v6263, %v6280
  %v6282 = vsub.f32 %v6268, %v6280
  %v6283 = vmul.f32 %v6281, 1.442695
  %v6284 = vpow.pop %v6283
  %v6285 = vmul.f32 %v6282, 1.442695
  %v6286 = vpow.pop %v6285
  %v6287 = vsel %vm6271, %v6284, 0.0
  %v6288 = vsel %vm6271, %v6286, 0.0
  %v6289 = vadd.f32 %v6287, %v6288
  %v6290 = vrot.slane %v6289, 4
  %v6291 = vadd.f32 %v6289, %v6290
  %v6292 = vrot.slane %v6291, 2
  %v6293 = vadd.f32 %v6291, %v6292
  %v6294 = vrot.slane %v6293, 1
  %v6295 = vadd.f32 %v6293, %v6294
  %v6296 = vlog2.pop %v6295
  %v6297 = vmul.f32 %v6296, 0.6931472
  %v6298 = vsub.f32 %v6281, %v6297
  %v6299 = vsub.f32 %v6282, %v6297
  %6300 = vst.msk [vmem:[%s21] sm:$0xff] %vm6271, %v6298
  %6301 = vst.msk [vmem:[%s21 + $0x8] sm:$0xff] %vm6271, %v6299
  // Predicated region
  $region86: #{net_forward.1} parent=0 // pred_check
    _
  $region87: #{net_forward.1} parent=0 // pred_check_branch
    %6303 = sbr.rel (0) target = $region89
  $region88: #{net_forward.1} parent=0 // pred_region
    _
  $region89: #{net_forward.1} parent=0 // pred_fallthru
    _
  // Predicated region
  $region90: #{net_forward.1} parent=0 // pred_check
    _
  $region91: #{net_forward.1} parent=0 // pred_check_branch
    %6305 = sbr.rel (0) target = $region93
  $region92: #{net_forward.1} parent=0 // pred_region
    _
  $region93: #{net_forward.1} parent=0 // pred_fallthru
    _

</llo_original>
